<compile_context>
chip_gen: v6e
topology: v6e:2x2x1
jax: 0.10.0
libtpu: 0.0.40
codegen_flags: <defaults>
</compile_context>

<pallas_src>
from functools import partial

import jax
import jax.numpy as jnp
from jax.experimental import pallas as pl
from jax.experimental.pallas import tpu as pltpu

_LANE = 128
_TARGET_BLOCK_BYTES = 2 << 20   # ~2 MiB per array per grid step
_MAX_ROW_BYTES = 1 << 20        # fused path: one (2R) row must stay <= 1 MiB
_SMALL_N = 1 << 16              # per-channel elems below which plain jnp wins


# --------------------------------------------------------------------------- #
# Kernels
# --------------------------------------------------------------------------- #
def _fused_state_kernel(params_ref, x_ref, o_ref, *, half, is_complete):
    """x_ref is a (b_tile, 2R) view of state: lanes [0,R) = q, [R,2R) = p."""
    dt = x_ref.dtype
    w = params_ref[0].astype(dt)
    q = x_ref[:, :half]
    p = x_ref[:, half:]
    o_ref[:, :half] = p                       # dq/dt = p (same pass, no concat)
    dpdt = -w * jnp.sin(q)                    # EUP sin + VPU mul
    if is_complete:
        dpdt = dpdt - params_ref[1].astype(dt) * p
    o_ref[:, half:] = dpdt.astype(dt)


def _dpdt_only_kernel(params_ref, q_ref, dp_ref):
    dt = q_ref.dtype
    w = params_ref[0].astype(dt)
    dp_ref[...] = (-w * jnp.sin(q_ref[...])).astype(dt)


def _dpdt_damped_kernel(params_ref, q_ref, p_ref, dp_ref):
    dt = q_ref.dtype
    w = params_ref[0].astype(dt)
    a = params_ref[1].astype(dt)
    dp_ref[...] = (-w * jnp.sin(q_ref[...]) - a * p_ref[...]).astype(dt)


# --------------------------------------------------------------------------- #
# Tiling helpers
# --------------------------------------------------------------------------- #
def _sublane(itemsize):
    return max(8, 32 // itemsize)


def _round_up(x, m):
    return ((x + m - 1) // m) * m


def _pick_rows_per_block(rows, itemsize, row_bytes):
    """Rows per block + number of blocks: <= ~2 MiB/block, >= 2 blocks when
    possible (v7x megacore), multiple of the sublane count, minimal waste."""
    sub = _sublane(itemsize)
    if rows <= sub:
        return rows, 1
    max_rows = max(sub, (_TARGET_BLOCK_BYTES // max(row_bytes, 1)) // sub * sub)
    nblk = pl.cdiv(rows, max_rows)
    if nblk == 1 and rows >= 2 * sub:
        nblk = 2                               # feed both TensorCores on v7x
    tile = _round_up(pl.cdiv(rows, nblk), sub)
    if tile >= rows:
        return rows, 1                         # single full-extent block
    return tile, pl.cdiv(rows, tile)


# --------------------------------------------------------------------------- #
# Wrapper paths
# --------------------------------------------------------------------------- #
def _pendulum_jnp(state, params, is_complete):
    dt = state.dtype
    q = state[:, 0:1]
    p = state[:, 1:2]
    dpdt = -params[0].astype(dt) * jnp.sin(q)
    if is_complete:
        dpdt = dpdt - params[1].astype(dt) * p
    return jnp.concatenate([p, dpdt.astype(dt)], axis=1)


def _pendulum_fused(state, params, B, R, rest, dtype, itemsize, is_complete):
    """Zero-copy path: channels are lane-aligned (R % 128 == 0)."""
    two_r = 2 * R
    n = B * R
    x = state.reshape(B, two_r)                       # pure view, no copy
    b_tile, nblk = _pick_rows_per_block(B, itemsize, two_r * itemsize)
    blk = pl.BlockSpec((b_tile, two_r), lambda i: (i, 0))
    cost = pl.CostEstimate(
        flops=(4 if is_complete else 2) * n,
        transcendentals=n,
        bytes_accessed=4 * n * itemsize,
    )
    out = pl.pallas_call(
        partial(_fused_state_kernel, half=R, is_complete=is_complete),
        out_shape=jax.ShapeDtypeStruct((B, two_r), dtype),
        grid=(nblk,),
        in_specs=[
            pl.BlockSpec(memory_space=pltpu.SMEM),    # [omega0_square, alpha]
            blk,                                      # state view (B, 2R)
        ],
        out_specs=blk,
        compiler_params=pltpu.CompilerParams(dimension_semantics=("parallel",)),
        cost_estimate=cost,
    )(params, x)
    return out.reshape((B, 2) + rest)                 # pure view back


def _pendulum_slab(state, params, B, R, rest, dtype, itemsize, is_complete):
    """General path: per-channel lane-dense (rows, 128) slab; p is NOT routed
    through the kernel in the incomplete case (the concat copies it)."""
    n = B * R
    rows = pl.cdiv(n, _LANE)
    pad = rows * _LANE - n

    def to_slab(channel):
        flat = state[:, channel].reshape(-1)
        if pad:
            flat = jnp.pad(flat, (0, pad))
        return flat.reshape(rows, _LANE)

    q2d = to_slab(0)
    tile_rows, nblk = _pick_rows_per_block(rows, itemsize, _LANE * itemsize)
    blk = pl.BlockSpec((tile_rows, _LANE), lambda i: (i, 0))
    cost = pl.CostEstimate(
        flops=(4 if is_complete else 2) * n,
        transcendentals=n,
        bytes_accessed=(3 if is_complete else 2) * n * itemsize,
    )
    common = dict(
        out_shape=jax.ShapeDtypeStruct((rows, _LANE), dtype),
        grid=(nblk,),
        out_specs=blk,
        compiler_params=pltpu.CompilerParams(dimension_semantics=("parallel",)),
        cost_estimate=cost,
    )
    if is_complete:
        p2d = to_slab(1)
        dp2d = pl.pallas_call(
            _dpdt_damped_kernel,
            in_specs=[pl.BlockSpec(memory_space=pltpu.SMEM), blk, blk],
            **common,
        )(params, q2d, p2d)
    else:
        dp2d = pl.pallas_call(
            _dpdt_only_kernel,
            in_specs=[pl.BlockSpec(memory_space=pltpu.SMEM), blk],
            **common,
        )(params, q2d)

    dpdt = dp2d.reshape(-1)[:n].reshape((B, 1) + rest)
    # dq/dt == p: let the final concatenate copy it straight from `state`.
    return jnp.concatenate([state[:, 1:2], dpdt], axis=1)


def damped_pendulum_param_pde(state, omega0_square, alpha=None, *,
                              is_complete=False, force_pallas=False):
    """Pallas equivalent of DampedPendulumParamPDE.forward(state).

    state: (B, 2, *rest) with channel 0 = q, channel 1 = p.
    """
    if state.ndim < 2 or state.shape[1] != 2:
        raise ValueError(f"expected state of shape (B, 2, ...), got {state.shape}")
    if is_complete and alpha is None:
        raise ValueError("is_complete=True requires a (real) alpha parameter")

    B = state.shape[0]
    rest = state.shape[2:]
    dtype = state.dtype
    itemsize = jnp.dtype(dtype).itemsize
    R = 1
    for d in rest:
        R *= d
    n = B * R

    params = jnp.stack([
        jnp.asarray(omega0_square, dtype=jnp.float32),
        jnp.asarray(0.0 if alpha is None else alpha, dtype=jnp.float32),
    ])

    # Nominal pendulum states (e.g. (B, 2) inside an ODE step) are far below
    # kernel-launch scale: let XLA fuse the plain expression instead.
    if n < _SMALL_N and not force_pallas:
        return _pendulum_jnp(state, params, is_complete)

    if R % _LANE == 0 and 2 * R * itemsize <= _MAX_ROW_BYTES:
        return _pendulum_fused(state, params, B, R, rest, dtype, itemsize,
                               is_complete)
    return _pendulum_slab(state, params, B, R, rest, dtype, itemsize,
                          is_complete)


# --------------------------------------------------------------------------- #
# Self-test
# --------------------------------------------------------------------------- #
if __name__ == "__main__":
    key = jax.random.PRNGKey(0)
    omega0_square = jnp.float32(0.2)   # matches nn.Parameter(torch.tensor(0.2))
    alpha = jnp.float32(0.1)           # matches nn.Parameter(torch.tensor(0.1))

    def reference(state, is_complete):
        dt = state.dtype
        q = state[:, 0:1]
        p = state[:, 1:2]
        dpdt = -jnp.asarray(omega0_square, dt) * jnp.sin(q)
        if is_complete:
            dpdt = dpdt - jnp.asarray(alpha, dt) * p
        return jnp.concatenate([p, dpdt.astype(dt)], axis=1)

    k1, k2, k3 = jax.random.split(key, 3)
    # 1) nominal pendulum state -> plain-jnp fallback path
    s_small = jax.random.normal(key, (8, 2), dtype=jnp.float32)
    # 2) lane-aligned channels (R = 1024) -> fused zero-copy Pallas path
    s_fused = jax.random.normal(k1, (128, 2, 32, 32), dtype=jnp.float32)
    # 3) non-aligned channels (R = 80) -> per-channel slab Pallas path
    s_slab = jax.random.normal(k2, (1024, 2, 80), dtype=jnp.float32)
    # 4) bf16, aligned, B not a multiple of the row block (edge masking)
    s_bf16 = jax.random.normal(k3, (200, 2, 128), dtype=jnp.bfloat16)

    cases = [
        (s_small, False, False), (s_small, True, False),
        (s_fused, False, False), (s_fused, True, False),
        (s_slab, False, False), (s_slab, True, False),
        (s_bf16, False, True), (s_bf16, True, True),
    ]
    for state, complete, force in cases:
        out = jax.block_until_ready(
            damped_pendulum_param_pde(state, omega0_square, alpha,
                                      is_complete=complete,
                                      force_pallas=force))
        ref = reference(state, complete)
        assert out.shape == state.shape and out.dtype == state.dtype
        tol = 2e-2 if state.dtype == jnp.bfloat16 else 1e-6
        assert jnp.allclose(out.astype(jnp.float32), ref.astype(jnp.float32),
                            atol=tol, rtol=tol), (state.shape, complete)

    # TODO(synk): nn.ParameterDict / real_params bookkeeping is host-side Python;
    # only the forward math is implemented as a kernel (params passed as scalars).
    print("KERNEL_OK")
</pallas_src>

<mosaic_0001>
module attributes {stable_mosaic.version = 11 : i64} {
  func.func @_fused_state_kernel(%arg0: i32, %arg1: memref<2xf32, #tpu.memory_space<smem>>, %arg2: memref<64x2048xf32, #tpu.memory_space<vmem>>, %arg3: memref<64x2048xf32, #tpu.memory_space<vmem>>) attributes {dimension_semantics = [#tpu.dimension_semantics<parallel>], iteration_bounds = array<i64: 2>, scalar_prefetch = 0 : i64, scratch_operands = 0 : i64, tpu.core_type = #tpu.core_type<tc>, window_params = [{transform_indices = @transform_0, window_bounds = array<i64: 2>}, {transform_indices = @transform_1, window_bounds = array<i64: 64, 2048>}, {transform_indices = @transform_2, window_bounds = array<i64: 64, 2048>}]} {
    %c0 = arith.constant 0 : index
    %0 = memref.load %arg1[%c0] : memref<2xf32, #tpu.memory_space<smem>>
    %c0_0 = arith.constant 0 : index
    %c0_1 = arith.constant 0 : index
    %1 = vector.load %arg2[%c0_0, %c0_1] : memref<64x2048xf32, #tpu.memory_space<vmem>>, vector<64x1024xf32>
    %c0_2 = arith.constant 0 : index
    %c1024 = arith.constant 1024 : index
    %2 = vector.load %arg2[%c0_2, %c1024] : memref<64x2048xf32, #tpu.memory_space<vmem>>, vector<64x1024xf32>
    %c0_3 = arith.constant 0 : index
    %c0_4 = arith.constant 0 : index
    %3 = vector.load %arg3[%c0_3, %c0_4] : memref<64x2048xf32, #tpu.memory_space<vmem>>, vector<64x1024xf32>
    tpu.vector_store %arg3[%c0_3, %c0_4], %2 {strides = array<i32>} : memref<64x2048xf32, #tpu.memory_space<vmem>>, vector<64x1024xf32>,
    %cst = arith.constant 0.000000e+00 : f32
    %4 = arith.subf %cst, %0 : f32
    %5 = math.sin %1 : vector<64x1024xf32>
    %6 = vector.broadcast %4 : f32 to vector<64x1024xf32>
    %7 = arith.mulf %6, %5 : vector<64x1024xf32>
    %c0_5 = arith.constant 0 : index
    %c1024_6 = arith.constant 1024 : index
    %8 = vector.load %arg3[%c0_5, %c1024_6] : memref<64x2048xf32, #tpu.memory_space<vmem>>, vector<64x1024xf32>
    tpu.vector_store %arg3[%c0_5, %c1024_6], %7 {strides = array<i32>} : memref<64x2048xf32, #tpu.memory_space<vmem>>, vector<64x1024xf32>,
    return
  }
  func.func @transform_0(%arg0: i32) -> i32 {
    %c0_i32 = arith.constant 0 : i32
    %c0_i32_0 = arith.constant 0 : i32
    return %c0_i32 : i32
  }
  func.func @transform_1(%arg0: i32) -> (i32, i32) {
    %c0_i32 = arith.constant 0 : i32
    %c0_i32_0 = arith.constant 0 : i32
    return %arg0, %c0_i32 : i32, i32
  }
  func.func @transform_2(%arg0: i32) -> (i32, i32) {
    %c0_i32 = arith.constant 0 : i32
    %c0_i32_0 = arith.constant 0 : i32
    return %arg0, %c0_i32 : i32, i32
  }
}

</mosaic_0001>

<llo_original>
// kernel: tpu_custom_call.1
$region0: #{tpu_custom_call.1}
  #allocation0 [shape = 'u32[]', space=smem, size = 0x4, offset = 0x4, fixed_abs, tag = 'smem constant byte address 0x4 - core index']
  #allocation1 [shape = 'u32[144,128]{1,0:T(1,128)}', space=vmem, size = 0x12000, scoped, tag = 'internal scratch']
  %s0 = inlined_call_operand.hbm [shape: f32[2], index: 0, kind: input, shape index: {}]
  %s1 = inlined_call_operand.hbm [shape: f32[128,2048], index: 1, kind: input, shape index: {}]
  %s2 = inlined_call_operand.hbm [shape: f32[128,2048], index: 2, kind: output, shape index: {}]
  %s3 = sld [smem:[#allocation0]]
  $region49: #{tpu_custom_call.1} parent=0
    _
  %s5 = ssub.s32 1, %s3
  %s6 = scalar_select 0, %s5, %s3
  $region1: #{tpu_custom_call.1} parent=0
    #allocation2 [shape = 'u8[512]{0}', space=smem, size = 0x200, scoped, tag = 'input window, operand 0, single buffered']
    #allocation3 [shape = 's32[2]{0}', space=sflag, size = 0x8, scoped, tag = 'scoped memory for tpu_custom_call.1']
    #allocation4 [shape = 's32[2]{0}', space=sflag, size = 0x8, scoped, tag = 'scoped memory for tpu_custom_call.1']
    #allocation5 [shape = 's32[2]{0}', space=sflag, size = 0x8, scoped, tag = 'scoped memory for tpu_custom_call.1']
    #allocation6 [shape = 'u8[1048576]{0}', space=vmem, size = 0x100000, scoped, tag = 'input window, operand 1']
    #allocation7 [shape = 'u8[1048576]{0}', space=vmem, size = 0x100000, scoped, tag = 'output window, operand 0']
    %7 = vsyncpa [#allocation5], 0
    %8 = vsyncpa [#allocation3], 0
    %s9 = scalar_lea.sflag [#allocation3], 1
    %10 = vsyncpa %s9, 0
    %11 = vsyncpa [#allocation4], 0
    %s12 = scalar_lea.sflag [#allocation4], 1
    %13 = vsyncpa %s12, 0
    loop: start=0, step=1, limit=4
    $region2: #{tpu_custom_call.1} parent=1 // loop_pre_header
      _
    $region3: #{tpu_custom_call.1} parent=1 // loop_header
      %s15 = sphi 0, %s19
      %p16 = scmp.ge.s32.totalorder %s15, 4
      %s23 = sphi 0, %s23
      %s25 = sphi 0, %s23
      %s26 = sphi 0, %s25
      %s40 = sphi 0, %s26
      %s46 = sphi 0, %s48
      %s49 = sphi 0, %s46
      %s50 = sphi 0, %s49
      %s66 = sphi 0, %s50
      %s72 = sphi 0, %s74
      %s75 = sphi 0, %s72
      %s76 = sphi 0, %s75
      %s92 = sphi 0, %s76
    $region4: #{tpu_custom_call.1} parent=1 // loop_header_branch
      %18 = sbr.rel (%p16) target = $region8
    $region5: #{tpu_custom_call.1} parent=1 // loop_body
      %s20 = ssub.s32 %s15, 1
      %s21 = ssub.s32 %s15, 2
      %s22 = sadd.s32 %s15, 1
      %s24 = sadd.s32 %s23, 1
      %p27 = scmp.eq.s32.totalorder %s15, 1
      %p28 = scmp.ne.s32.totalorder %s23, %s25
      %p29 = scmp.eq.s32.totalorder %s15, 0
      %p30 = por %p28, %p29
      %p31 = scmp.ne.s32.totalorder %s23, %s25
      %p32 = scmp.eq.s32.totalorder %s20, 1
      %p33 = por %p31, %p32
      %p34 = scmp.ne.s32.totalorder %s25, %s26
      %p35 = scmp.eq.s32.totalorder %s20, 0
      %p36 = por %p34, %p35
      %p37 = scmp.ne.s32.totalorder %s25, %s26
      %p38 = scmp.eq.s32.totalorder %s21, 1
      %p39 = por %p37, %p38
      %p41 = scmp.ne.s32.totalorder %s26, %s40
      %p42 = scmp.eq.s32.totalorder %s21, 0
      %p43 = por %p41, %p42
      %s44 = ssub.s32 %s15, %s22
      %p45 = scmp.eq.s32.totalorder %s44, 0
      %s47 = sadd.s32 %s46, 1
      %s48 = scalar_select %p45, %s46, %s47
      %p51 = pneg %p45
      %p52 = scmp.eq.s32.totalorder %s15, 1
      %p53 = por %p51, %p52
      %p54 = scmp.ne.s32.totalorder %s46, %s49
      %p55 = scmp.eq.s32.totalorder %s15, 0
      %p56 = por %p54, %p55
      %p57 = scmp.ne.s32.totalorder %s46, %s49
      %p58 = scmp.eq.s32.totalorder %s20, 1
      %p59 = por %p57, %p58
      %p60 = scmp.ne.s32.totalorder %s49, %s50
      %p61 = scmp.eq.s32.totalorder %s20, 0
      %p62 = por %p60, %p61
      %p63 = scmp.ne.s32.totalorder %s49, %s50
      %p64 = scmp.eq.s32.totalorder %s21, 1
      %p65 = por %p63, %p64
      %p67 = scmp.ne.s32.totalorder %s50, %s66
      %p68 = scmp.eq.s32.totalorder %s21, 0
      %p69 = por %p67, %p68
      %s70 = ssub.s32 %s15, %s22
      %p71 = scmp.eq.s32.totalorder %s70, 0
      %s73 = sadd.s32 %s72, 1
      %s74 = scalar_select %p71, %s72, %s73
      %p77 = pneg %p71
      %p78 = scmp.eq.s32.totalorder %s15, 1
      %p79 = por %p77, %p78
      %p80 = scmp.ne.s32.totalorder %s72, %s75
      %p81 = scmp.eq.s32.totalorder %s15, 0
      %p82 = por %p80, %p81
      %p83 = scmp.ne.s32.totalorder %s72, %s75
      %p84 = scmp.eq.s32.totalorder %s20, 1
      %p85 = por %p83, %p84
      %p86 = scmp.ne.s32.totalorder %s75, %s76
      %p87 = scmp.eq.s32.totalorder %s20, 0
      %p88 = por %p86, %p87
      %p89 = scmp.ne.s32.totalorder %s75, %s76
      %p90 = scmp.eq.s32.totalorder %s21, 1
      %p91 = por %p89, %p90
      %p93 = scmp.ne.s32.totalorder %s76, %s92
      %p94 = scmp.eq.s32.totalorder %s21, 0
      %p95 = por %p93, %p94
      %p96 = scmp.le.s32.totalorder 1, %s15
      %p97 = scmp.lt.s32.totalorder %s15, 3
      %p98 = pnand %p96, %p97
      %p99 = pneg %p98
      // Predicated region
      $region9: #{tpu_custom_call.1} parent=5 // pred_check
        _
      $region10: #{tpu_custom_call.1} parent=5 // pred_check_branch
        %101 = sbr.rel (%p98) target = $region12
      $region11: #{tpu_custom_call.1} parent=5 // pred_region
        %s102 = ssub.s32 %s15, 1
        // Predicated region
        $region13: #{tpu_custom_call.1} parent=11 // pred_check
          %p103 = pneg %p36
        $region14: #{tpu_custom_call.1} parent=11 // pred_check_branch
          %105 = sbr.rel (%p103) target = $region16
        $region15: #{tpu_custom_call.1} parent=11 // pred_region
          %s107 = ssub.s32 16, 16
          %108 = vsyncadd [#allocation5], %s107
          %111 = dma.hbm_to_smem %s0, 16, [#allocation2], [#allocation5]
        $region16: #{tpu_custom_call.1} parent=11 // pred_fallthru
          _
      $region12: #{tpu_custom_call.1} parent=5 // pred_fallthru
        _
      %p112 = scmp.lt.s32.totalorder %s15, 2
      // Predicated region
      $region17: #{tpu_custom_call.1} parent=5 // pred_check
        %p113 = pneg %p112
      $region18: #{tpu_custom_call.1} parent=5 // pred_check_branch
        %115 = sbr.rel (%p113) target = $region20
      $region19: #{tpu_custom_call.1} parent=5 // pred_region
        // Predicated region
        $region21: #{tpu_custom_call.1} parent=19 // pred_check
          %p116 = pneg %p56
        $region22: #{tpu_custom_call.1} parent=19 // pred_check_branch
          %118 = sbr.rel (%p116) target = $region24
        $region23: #{tpu_custom_call.1} parent=19 // pred_region
          %s119 = sand.u32 %s46, 1
          %s120 = scalar_lea.sflag [#allocation3], %s119
          %s121 = sand.u32 %s46, 1
          %s122 = smul.addr %s121, 1024
          %s123 = scalar_lea.vmem [#allocation6], %s122
          %s124 = smul.u32 8, %s15
          %s126 = ssub.s32 16384, 16384
          %127 = vsyncadd %s120, %s126
          %s128 = smul.addr %s124, 16
          %s129 = smul.addr %s128, 128
          %s130 = scalar_lea.hbm %s1, %s129
          %s131 = sshll.u32 %s123, 4
          %s132 = int_to_ptr.vmem [resolvable:$true] %s131
          %137 = dma.hbm_to_vmem [thread:$0]  %s130, 16384, %s132, %s120, 2048, 2048, 128
        $region24: #{tpu_custom_call.1} parent=19 // pred_fallthru
          _
      $region20: #{tpu_custom_call.1} parent=5 // pred_fallthru
        _
      %p138 = scmp.le.s32.totalorder 1, %s15
      %p139 = scmp.lt.s32.totalorder %s15, 3
      %p140 = pnand %p138, %p139
      %p141 = pneg %p140
      // Predicated region
      $region25: #{tpu_custom_call.1} parent=5 // pred_check
        _
      $region26: #{tpu_custom_call.1} parent=5 // pred_check_branch
        %143 = sbr.rel (%p140) target = $region28
      $region27: #{tpu_custom_call.1} parent=5 // pred_region
        %s144 = ssub.s32 %s15, 1
        // Predicated region
        $region29: #{tpu_custom_call.1} parent=27 // pred_check
          %p145 = pneg %p36
        $region30: #{tpu_custom_call.1} parent=27 // pred_check_branch
          %147 = sbr.rel (%p145) target = $region32
        $region31: #{tpu_custom_call.1} parent=27 // pred_region
          %148 = dma.done [#allocation5], 16
        $region32: #{tpu_custom_call.1} parent=27 // pred_fallthru
          _
        %s149 = sand.u32 %s49, 1
        %s150 = scalar_lea.sflag [#allocation3], %s149
        %s151 = sand.u32 %s49, 1
        %s152 = smul.addr %s151, 1024
        %s153 = scalar_lea.vmem [#allocation6], %s152
        // Predicated region
        $region33: #{tpu_custom_call.1} parent=27 // pred_check
          %p154 = pneg %p62
        $region34: #{tpu_custom_call.1} parent=27 // pred_check_branch
          %156 = sbr.rel (%p154) target = $region36
        $region35: #{tpu_custom_call.1} parent=27 // pred_region
          %157 = dma.done %s150, 16384
        $region36: #{tpu_custom_call.1} parent=27 // pred_fallthru
          _
        %158 = sfence
        %p159 = pneg %p36
        %p160 = pneg %p33
        %s161 = sand.u32 %s49, 1
        %s162 = scalar_lea.sflag [#allocation3], %s161
        %s163 = sand.u32 %s49, 1
        %s164 = smul.addr %s163, 1024
        %s165 = scalar_lea.vmem [#allocation6], %s164
        %p166 = pneg %p62
        %p167 = pneg %p59
        %p168 = pneg %p88
        %p169 = pneg %p85
        %s170 = sand.u32 %s75, 1
        %s171 = scalar_lea.sflag [#allocation4], %s170
        %s172 = sand.u32 %s75, 1
        %s173 = smul.addr %s172, 1024
        %s174 = scalar_lea.vmem [#allocation7], %s173
        %s175 = smul.u32 8, %s20
        %s176 = smul.u32 8, %s20
        %s177 = sld [smem:[#allocation2]]
        %v178 = vld [vmem:[%s153] sm:$0xff]
        %v179 = vld [vmem:[%s153 + $0x8] sm:$0xff]
        %v180 = vld [vmem:[%s153 + $0x10] sm:$0xff]
        %v181 = vld [vmem:[%s153 + $0x18] sm:$0xff]
        %v182 = vld [vmem:[%s153 + $0x20] sm:$0xff]
        %v183 = vld [vmem:[%s153 + $0x28] sm:$0xff]
        %v184 = vld [vmem:[%s153 + $0x30] sm:$0xff]
        %v185 = vld [vmem:[%s153 + $0x38] sm:$0xff]
        %v186 = vld [vmem:[%s153 + $0x80] sm:$0xff]
        %v187 = vld [vmem:[%s153 + $0x88] sm:$0xff]
        %v188 = vld [vmem:[%s153 + $0x90] sm:$0xff]
        %v189 = vld [vmem:[%s153 + $0x98] sm:$0xff]
        %v190 = vld [vmem:[%s153 + $0xa0] sm:$0xff]
        %v191 = vld [vmem:[%s153 + $0xa8] sm:$0xff]
        %v192 = vld [vmem:[%s153 + $0xb0] sm:$0xff]
        %v193 = vld [vmem:[%s153 + $0xb8] sm:$0xff]
        %v194 = vld [vmem:[%s153 + $0x100] sm:$0xff]
        %v195 = vld [vmem:[%s153 + $0x108] sm:$0xff]
        %v196 = vld [vmem:[%s153 + $0x110] sm:$0xff]
        %v197 = vld [vmem:[%s153 + $0x118] sm:$0xff]
        %v198 = vld [vmem:[%s153 + $0x120] sm:$0xff]
        %v199 = vld [vmem:[%s153 + $0x128] sm:$0xff]
        %v200 = vld [vmem:[%s153 + $0x130] sm:$0xff]
        %v201 = vld [vmem:[%s153 + $0x138] sm:$0xff]
        %v202 = vld [vmem:[%s153 + $0x180] sm:$0xff]
        %v203 = vld [vmem:[%s153 + $0x188] sm:$0xff]
        %v204 = vld [vmem:[%s153 + $0x190] sm:$0xff]
        %v205 = vld [vmem:[%s153 + $0x198] sm:$0xff]
        %v206 = vld [vmem:[%s153 + $0x1a0] sm:$0xff]
        %v207 = vld [vmem:[%s153 + $0x1a8] sm:$0xff]
        %v208 = vld [vmem:[%s153 + $0x1b0] sm:$0xff]
        %v209 = vld [vmem:[%s153 + $0x1b8] sm:$0xff]
        %v210 = vld [vmem:[%s153 + $0x200] sm:$0xff]
        %v211 = vld [vmem:[%s153 + $0x208] sm:$0xff]
        %v212 = vld [vmem:[%s153 + $0x210] sm:$0xff]
        %v213 = vld [vmem:[%s153 + $0x218] sm:$0xff]
        %v214 = vld [vmem:[%s153 + $0x220] sm:$0xff]
        %v215 = vld [vmem:[%s153 + $0x228] sm:$0xff]
        %v216 = vld [vmem:[%s153 + $0x230] sm:$0xff]
        %v217 = vld [vmem:[%s153 + $0x238] sm:$0xff]
        %v218 = vld [vmem:[%s153 + $0x280] sm:$0xff]
        %v219 = vld [vmem:[%s153 + $0x288] sm:$0xff]
        %v220 = vld [vmem:[%s153 + $0x290] sm:$0xff]
        %v221 = vld [vmem:[%s153 + $0x298] sm:$0xff]
        %v222 = vld [vmem:[%s153 + $0x2a0] sm:$0xff]
        %v223 = vld [vmem:[%s153 + $0x2a8] sm:$0xff]
        %v224 = vld [vmem:[%s153 + $0x2b0] sm:$0xff]
        %v225 = vld [vmem:[%s153 + $0x2b8] sm:$0xff]
        %v226 = vld [vmem:[%s153 + $0x300] sm:$0xff]
        %v227 = vld [vmem:[%s153 + $0x308] sm:$0xff]
        %v228 = vld [vmem:[%s153 + $0x310] sm:$0xff]
        %v229 = vld [vmem:[%s153 + $0x318] sm:$0xff]
        %v230 = vld [vmem:[%s153 + $0x320] sm:$0xff]
        %v231 = vld [vmem:[%s153 + $0x328] sm:$0xff]
        %v232 = vld [vmem:[%s153 + $0x330] sm:$0xff]
        %v233 = vld [vmem:[%s153 + $0x338] sm:$0xff]
        %v234 = vld [vmem:[%s153 + $0x380] sm:$0xff]
        %v235 = vld [vmem:[%s153 + $0x388] sm:$0xff]
        %v236 = vld [vmem:[%s153 + $0x390] sm:$0xff]
        %v237 = vld [vmem:[%s153 + $0x398] sm:$0xff]
        %v238 = vld [vmem:[%s153 + $0x3a0] sm:$0xff]
        %v239 = vld [vmem:[%s153 + $0x3a8] sm:$0xff]
        %v240 = vld [vmem:[%s153 + $0x3b0] sm:$0xff]
        %v241 = vld [vmem:[%s153 + $0x3b8] sm:$0xff]
        %v242 = vld [vmem:[%s153 + $0x40] sm:$0xff]
        %v243 = vld [vmem:[%s153 + $0x48] sm:$0xff]
        %v244 = vld [vmem:[%s153 + $0x50] sm:$0xff]
        %v245 = vld [vmem:[%s153 + $0x58] sm:$0xff]
        %v246 = vld [vmem:[%s153 + $0x60] sm:$0xff]
        %v247 = vld [vmem:[%s153 + $0x68] sm:$0xff]
        %v248 = vld [vmem:[%s153 + $0x70] sm:$0xff]
        %v249 = vld [vmem:[%s153 + $0x78] sm:$0xff]
        %v250 = vld [vmem:[%s153 + $0xc0] sm:$0xff]
        %v251 = vld [vmem:[%s153 + $0xc8] sm:$0xff]
        %v252 = vld [vmem:[%s153 + $0xd0] sm:$0xff]
        %v253 = vld [vmem:[%s153 + $0xd8] sm:$0xff]
        %v254 = vld [vmem:[%s153 + $0xe0] sm:$0xff]
        %v255 = vld [vmem:[%s153 + $0xe8] sm:$0xff]
        %v256 = vld [vmem:[%s153 + $0xf0] sm:$0xff]
        %v257 = vld [vmem:[%s153 + $0xf8] sm:$0xff]
        %v258 = vld [vmem:[%s153 + $0x140] sm:$0xff]
        %v259 = vld [vmem:[%s153 + $0x148] sm:$0xff]
        %v260 = vld [vmem:[%s153 + $0x150] sm:$0xff]
        %v261 = vld [vmem:[%s153 + $0x158] sm:$0xff]
        %v262 = vld [vmem:[%s153 + $0x160] sm:$0xff]
        %v263 = vld [vmem:[%s153 + $0x168] sm:$0xff]
        %v264 = vld [vmem:[%s153 + $0x170] sm:$0xff]
        %v265 = vld [vmem:[%s153 + $0x178] sm:$0xff]
        %v266 = vld [vmem:[%s153 + $0x1c0] sm:$0xff]
        %v267 = vld [vmem:[%s153 + $0x1c8] sm:$0xff]
        %v268 = vld [vmem:[%s153 + $0x1d0] sm:$0xff]
        %v269 = vld [vmem:[%s153 + $0x1d8] sm:$0xff]
        %v270 = vld [vmem:[%s153 + $0x1e0] sm:$0xff]
        %v271 = vld [vmem:[%s153 + $0x1e8] sm:$0xff]
        %v272 = vld [vmem:[%s153 + $0x1f0] sm:$0xff]
        %v273 = vld [vmem:[%s153 + $0x1f8] sm:$0xff]
        %v274 = vld [vmem:[%s153 + $0x240] sm:$0xff]
        %v275 = vld [vmem:[%s153 + $0x248] sm:$0xff]
        %v276 = vld [vmem:[%s153 + $0x250] sm:$0xff]
        %v277 = vld [vmem:[%s153 + $0x258] sm:$0xff]
        %v278 = vld [vmem:[%s153 + $0x260] sm:$0xff]
        %v279 = vld [vmem:[%s153 + $0x268] sm:$0xff]
        %v280 = vld [vmem:[%s153 + $0x270] sm:$0xff]
        %v281 = vld [vmem:[%s153 + $0x278] sm:$0xff]
        %v282 = vld [vmem:[%s153 + $0x2c0] sm:$0xff]
        %v283 = vld [vmem:[%s153 + $0x2c8] sm:$0xff]
        %v284 = vld [vmem:[%s153 + $0x2d0] sm:$0xff]
        %v285 = vld [vmem:[%s153 + $0x2d8] sm:$0xff]
        %v286 = vld [vmem:[%s153 + $0x2e0] sm:$0xff]
        %v287 = vld [vmem:[%s153 + $0x2e8] sm:$0xff]
        %v288 = vld [vmem:[%s153 + $0x2f0] sm:$0xff]
        %v289 = vld [vmem:[%s153 + $0x2f8] sm:$0xff]
        %v290 = vld [vmem:[%s153 + $0x340] sm:$0xff]
        %v291 = vld [vmem:[%s153 + $0x348] sm:$0xff]
        %v292 = vld [vmem:[%s153 + $0x350] sm:$0xff]
        %v293 = vld [vmem:[%s153 + $0x358] sm:$0xff]
        %v294 = vld [vmem:[%s153 + $0x360] sm:$0xff]
        %v295 = vld [vmem:[%s153 + $0x368] sm:$0xff]
        %v296 = vld [vmem:[%s153 + $0x370] sm:$0xff]
        %v297 = vld [vmem:[%s153 + $0x378] sm:$0xff]
        %v298 = vld [vmem:[%s153 + $0x3c0] sm:$0xff]
        %v299 = vld [vmem:[%s153 + $0x3c8] sm:$0xff]
        %v300 = vld [vmem:[%s153 + $0x3d0] sm:$0xff]
        %v301 = vld [vmem:[%s153 + $0x3d8] sm:$0xff]
        %v302 = vld [vmem:[%s153 + $0x3e0] sm:$0xff]
        %v303 = vld [vmem:[%s153 + $0x3e8] sm:$0xff]
        %v304 = vld [vmem:[%s153 + $0x3f0] sm:$0xff]
        %v305 = vld [vmem:[%s153 + $0x3f8] sm:$0xff]
        %306 = vst [vmem:[%s174] sm:$0xff] %v242
        %307 = vst [vmem:[%s174 + $0x8] sm:$0xff] %v243
        %308 = vst [vmem:[%s174 + $0x10] sm:$0xff] %v244
        %309 = vst [vmem:[%s174 + $0x18] sm:$0xff] %v245
        %310 = vst [vmem:[%s174 + $0x20] sm:$0xff] %v246
        %311 = vst [vmem:[%s174 + $0x28] sm:$0xff] %v247
        %312 = vst [vmem:[%s174 + $0x30] sm:$0xff] %v248
        %313 = vst [vmem:[%s174 + $0x38] sm:$0xff] %v249
        %314 = vst [vmem:[%s174 + $0x80] sm:$0xff] %v250
        %315 = vst [vmem:[%s174 + $0x88] sm:$0xff] %v251
        %316 = vst [vmem:[%s174 + $0x90] sm:$0xff] %v252
        %317 = vst [vmem:[%s174 + $0x98] sm:$0xff] %v253
        %318 = vst [vmem:[%s174 + $0xa0] sm:$0xff] %v254
        %319 = vst [vmem:[%s174 + $0xa8] sm:$0xff] %v255
        %320 = vst [vmem:[%s174 + $0xb0] sm:$0xff] %v256
        %321 = vst [vmem:[%s174 + $0xb8] sm:$0xff] %v257
        %322 = vst [vmem:[%s174 + $0x100] sm:$0xff] %v258
        %323 = vst [vmem:[%s174 + $0x108] sm:$0xff] %v259
        %324 = vst [vmem:[%s174 + $0x110] sm:$0xff] %v260
        %325 = vst [vmem:[%s174 + $0x118] sm:$0xff] %v261
        %326 = vst [vmem:[%s174 + $0x120] sm:$0xff] %v262
        %327 = vst [vmem:[%s174 + $0x128] sm:$0xff] %v263
        %328 = vst [vmem:[%s174 + $0x130] sm:$0xff] %v264
        %329 = vst [vmem:[%s174 + $0x138] sm:$0xff] %v265
        %330 = vst [vmem:[%s174 + $0x180] sm:$0xff] %v266
        %331 = vst [vmem:[%s174 + $0x188] sm:$0xff] %v267
        %332 = vst [vmem:[%s174 + $0x190] sm:$0xff] %v268
        %333 = vst [vmem:[%s174 + $0x198] sm:$0xff] %v269
        %334 = vst [vmem:[%s174 + $0x1a0] sm:$0xff] %v270
        %335 = vst [vmem:[%s174 + $0x1a8] sm:$0xff] %v271
        %336 = vst [vmem:[%s174 + $0x1b0] sm:$0xff] %v272
        %337 = vst [vmem:[%s174 + $0x1b8] sm:$0xff] %v273
        %338 = vst [vmem:[%s174 + $0x200] sm:$0xff] %v274
        %339 = vst [vmem:[%s174 + $0x208] sm:$0xff] %v275
        %340 = vst [vmem:[%s174 + $0x210] sm:$0xff] %v276
        %341 = vst [vmem:[%s174 + $0x218] sm:$0xff] %v277
        %342 = vst [vmem:[%s174 + $0x220] sm:$0xff] %v278
        %343 = vst [vmem:[%s174 + $0x228] sm:$0xff] %v279
        %344 = vst [vmem:[%s174 + $0x230] sm:$0xff] %v280
        %345 = vst [vmem:[%s174 + $0x238] sm:$0xff] %v281
        %346 = vst [vmem:[%s174 + $0x280] sm:$0xff] %v282
        %347 = vst [vmem:[%s174 + $0x288] sm:$0xff] %v283
        %348 = vst [vmem:[%s174 + $0x290] sm:$0xff] %v284
        %349 = vst [vmem:[%s174 + $0x298] sm:$0xff] %v285
        %350 = vst [vmem:[%s174 + $0x2a0] sm:$0xff] %v286
        %351 = vst [vmem:[%s174 + $0x2a8] sm:$0xff] %v287
        %352 = vst [vmem:[%s174 + $0x2b0] sm:$0xff] %v288
        %353 = vst [vmem:[%s174 + $0x2b8] sm:$0xff] %v289
        %354 = vst [vmem:[%s174 + $0x300] sm:$0xff] %v290
        %355 = vst [vmem:[%s174 + $0x308] sm:$0xff] %v291
        %356 = vst [vmem:[%s174 + $0x310] sm:$0xff] %v292
        %357 = vst [vmem:[%s174 + $0x318] sm:$0xff] %v293
        %358 = vst [vmem:[%s174 + $0x320] sm:$0xff] %v294
        %359 = vst [vmem:[%s174 + $0x328] sm:$0xff] %v295
        %360 = vst [vmem:[%s174 + $0x330] sm:$0xff] %v296
        %361 = vst [vmem:[%s174 + $0x338] sm:$0xff] %v297
        %362 = vst [vmem:[%s174 + $0x380] sm:$0xff] %v298
        %363 = vst [vmem:[%s174 + $0x388] sm:$0xff] %v299
        %364 = vst [vmem:[%s174 + $0x390] sm:$0xff] %v300
        %365 = vst [vmem:[%s174 + $0x398] sm:$0xff] %v301
        %366 = vst [vmem:[%s174 + $0x3a0] sm:$0xff] %v302
        %367 = vst [vmem:[%s174 + $0x3a8] sm:$0xff] %v303
        %368 = vst [vmem:[%s174 + $0x3b0] sm:$0xff] %v304
        %369 = vst [vmem:[%s174 + $0x3b8] sm:$0xff] %v305
        %s370 = ssub.f32 0.0, %s177
        %v371 = vand.u32 2147483647, %v178
        %vm372 = vcmp.le.f32.partialorder %v371, 0.7853982
        %vm373 = vcmp.lt.s32.totalorder %v178, 0
        %v374 = vand.u32 %v178, 2139095040
        %v375 = vshrl.u32 %v374, 23
        %v376 = vsub.s32 %v375, 127
        %v377 = vand.u32 2147483647, %v178
        %v378 = vand.u32 %v377, 8388607
        %v379 = vor.u32 %v378, 8388608
        %v380 = vsub.s32 0, %v379
        %v381 = vadd.s32 %v376, 1
        %vm382 = vcmp.gt.s32.totalorder %v381, 0
        %v383 = vsel %vm382, %v381, 0
        %v384 = vshrl.u32 %v383, 5
        %v385 = vand.u32 %v383, 31
        %v386 = vsub.s32 32, %v385
        %v387 = vshrl.u32 683565275, %v386
        %v388 = vshll.u32 683565275, %v385
        %v389 = vshrl.u32 2475754826, %v386
        %v390 = vor.u32 %v388, %v389
        %v391 = vshll.u32 2475754826, %v385
        %v392 = vshrl.u32 2131351028, %v386
        %v393 = vor.u32 %v391, %v392
        %v394 = vshll.u32 2131351028, %v385
        %v395 = vshrl.u32 2102212464, %v386
        %v396 = vor.u32 %v394, %v395
        %v397 = vshll.u32 2102212464, %v385
        %v398 = vshrl.u32 920167782, %v386
        %v399 = vor.u32 %v397, %v398
        %v400 = vshll.u32 920167782, %v385
        %v401 = vshrl.u32 1326507024, %v386
        %v402 = vor.u32 %v400, %v401
        %vm403 = vcmp.lt.s32.totalorder %v384, 1
        %vm404 = vcmp.lt.s32.totalorder %v384, 2
        %vm405 = vcmp.lt.s32.totalorder %v384, 3
        %vm406 = vcmp.lt.s32.totalorder %v384, 4
        %v407 = vsel %vm403, %v387, %v390
        %v408 = vsel %vm406, %v396, 2102212464
        %v409 = vsel %vm405, %v393, %v408
        %v410 = vsel %vm404, %v407, %v409
        %v411 = vsel %vm403, %v390, %v393
        %v412 = vsel %vm406, %v399, 920167782
        %v413 = vsel %vm405, %v396, %v412
        %v414 = vsel %vm404, %v411, %v413
        %v415 = vsel %vm403, %v393, %v396
        %v416 = vsel %vm406, %v402, 1326507024
        %v417 = vsel %vm405, %v399, %v416
        %v418 = vsel %vm404, %v415, %v417
        %v419 = vshll.u32 %v379, 8
        %v420 = vmul.u32.u64.compose %v419, %v418
        %v421 = vextract.low.u32 %v420
        %v422 = vextract.high.u32 %v420
        %v423 = vmul.u32.u64.compose %v419, %v414
        %v424 = vextract.low.u32 %v423
        %v425 = vextract.high.u32 %v423
        %v426 = vmul.u32 %v419, %v410
        %v427 = vadd.s32 %v422, %v424
        %vm428 = vc.u32 %v422, %v424
        %v429 = vadd.s32 %v425, 1
        %v430 = vsel %vm428, %v429, %v425
        %v431 = vadd.s32 %v426, %v430
        %v432 = vadd.s32 %v431, 536870912
        %v433 = vshrl.u32 %v432, 30
        %v434 = vshll.u32 %v433, 30
        %v435 = vsub.s32 %v431, %v434
        %vm436 = vcmp.lt.s32.totalorder %v435, 0
        %v437 = vsub.s32 0, %v435
        %v438 = vsel %vm436, %v437, %v435
        %v439 = vclz %v438
        %v440 = vsub.s32 %v439, 2
        %vm441 = vcmp.gt.s32.totalorder 0, %v440
        %v442 = vsel %vm441, 0, %v440
        %v443 = vsub.s32 32, %v442
        %v444 = vshll.u32 %v435, %v442
        %v445 = vshrl.u32 %v427, %v443
        %v446 = vor.u32 %v444, %v445
        %v447 = vsub.s32 4294967266, %v442
        %v448 = vadd.s32 %v447, 127
        %v449 = vshll.u32 %v448, 23
        %v450 = vor.u32 4788187, %v449
        %v451 = vand.u32 2147483647, %v450
        %v453 = vcvt.s32.f32 %v446
        %v454 = vmul.f32 %v453, %v451
        %v455 = vxor.u32 %v454, 2147483648
        %v456 = vsel %vm373, %v455, %v454
        %v457 = vsub.s32 4, %v433
        %v458 = vsel %vm373, %v457, %v433
        %v459 = vsel %vm372, %v178, %v456
        %v460 = vsel %vm372, 0, %v458
        %v461 = vcosq.f32.pop %v459
        %v462 = vsinq.f32.pop %v459
        %vm463 = vweird.f32 %v178
        %v464 = vadd.s32 %v460, 3
        %v465 = vand.u32 %v464, 3
        %vm466 = vcmp.lt.s32.totalorder %v465, 2
        %vm467 = vcmp.eq.s32.totalorder %v465, 0
        %v468 = vxor.u32 %v462, 2147483648
        %v469 = vsel %vm467, %v461, %v468
        %vm470 = vcmp.eq.s32.totalorder %v465, 2
        %v471 = vxor.u32 %v461, 2147483648
        %v472 = vsel %vm470, %v471, %v462
        %v473 = vsel %vm466, %v469, %v472
        %v474 = vsel %vm463, nan, %v473
        %v475 = vand.u32 2147483647, %v179
        %vm476 = vcmp.le.f32.partialorder %v475, 0.7853982
        %vm477 = vcmp.lt.s32.totalorder %v179, 0
        %v478 = vand.u32 %v179, 2139095040
        %v479 = vshrl.u32 %v478, 23
        %v480 = vsub.s32 %v479, 127
        %v481 = vand.u32 2147483647, %v179
        %v482 = vand.u32 %v481, 8388607
        %v483 = vor.u32 %v482, 8388608
        %v484 = vsub.s32 0, %v483
        %v485 = vadd.s32 %v480, 1
        %vm486 = vcmp.gt.s32.totalorder %v485, 0
        %v487 = vsel %vm486, %v485, 0
        %v488 = vshrl.u32 %v487, 5
        %v489 = vand.u32 %v487, 31
        %v490 = vsub.s32 32, %v489
        %v491 = vshrl.u32 683565275, %v490
        %v492 = vshll.u32 683565275, %v489
        %v493 = vshrl.u32 2475754826, %v490
        %v494 = vor.u32 %v492, %v493
        %v495 = vshll.u32 2475754826, %v489
        %v496 = vshrl.u32 2131351028, %v490
        %v497 = vor.u32 %v495, %v496
        %v498 = vshll.u32 2131351028, %v489
        %v499 = vshrl.u32 2102212464, %v490
        %v500 = vor.u32 %v498, %v499
        %v501 = vshll.u32 2102212464, %v489
        %v502 = vshrl.u32 920167782, %v490
        %v503 = vor.u32 %v501, %v502
        %v504 = vshll.u32 920167782, %v489
        %v505 = vshrl.u32 1326507024, %v490
        %v506 = vor.u32 %v504, %v505
        %vm507 = vcmp.lt.s32.totalorder %v488, 1
        %vm508 = vcmp.lt.s32.totalorder %v488, 2
        %vm509 = vcmp.lt.s32.totalorder %v488, 3
        %vm510 = vcmp.lt.s32.totalorder %v488, 4
        %v511 = vsel %vm507, %v491, %v494
        %v512 = vsel %vm510, %v500, 2102212464
        %v513 = vsel %vm509, %v497, %v512
        %v514 = vsel %vm508, %v511, %v513
        %v515 = vsel %vm507, %v494, %v497
        %v516 = vsel %vm510, %v503, 920167782
        %v517 = vsel %vm509, %v500, %v516
        %v518 = vsel %vm508, %v515, %v517
        %v519 = vsel %vm507, %v497, %v500
        %v520 = vsel %vm510, %v506, 1326507024
        %v521 = vsel %vm509, %v503, %v520
        %v522 = vsel %vm508, %v519, %v521
        %v523 = vshll.u32 %v483, 8
        %v524 = vmul.u32.u64.compose %v523, %v522
        %v525 = vextract.low.u32 %v524
        %v526 = vextract.high.u32 %v524
        %v527 = vmul.u32.u64.compose %v523, %v518
        %v528 = vextract.low.u32 %v527
        %v529 = vextract.high.u32 %v527
        %v530 = vmul.u32 %v523, %v514
        %v531 = vadd.s32 %v526, %v528
        %vm532 = vc.u32 %v526, %v528
        %v533 = vadd.s32 %v529, 1
        %v534 = vsel %vm532, %v533, %v529
        %v535 = vadd.s32 %v530, %v534
        %v536 = vadd.s32 %v535, 536870912
        %v537 = vshrl.u32 %v536, 30
        %v538 = vshll.u32 %v537, 30
        %v539 = vsub.s32 %v535, %v538
        %vm540 = vcmp.lt.s32.totalorder %v539, 0
        %v541 = vsub.s32 0, %v539
        %v542 = vsel %vm540, %v541, %v539
        %v543 = vclz %v542
        %v544 = vsub.s32 %v543, 2
        %vm545 = vcmp.gt.s32.totalorder 0, %v544
        %v546 = vsel %vm545, 0, %v544
        %v547 = vsub.s32 32, %v546
        %v548 = vshll.u32 %v539, %v546
        %v549 = vshrl.u32 %v531, %v547
        %v550 = vor.u32 %v548, %v549
        %v551 = vsub.s32 4294967266, %v546
        %v552 = vadd.s32 %v551, 127
        %v553 = vshll.u32 %v552, 23
        %v554 = vor.u32 4788187, %v553
        %v555 = vand.u32 2147483647, %v554
        %v557 = vcvt.s32.f32 %v550
        %v558 = vmul.f32 %v557, %v555
        %v559 = vxor.u32 %v558, 2147483648
        %v560 = vsel %vm477, %v559, %v558
        %v561 = vsub.s32 4, %v537
        %v562 = vsel %vm477, %v561, %v537
        %v563 = vsel %vm476, %v179, %v560
        %v564 = vsel %vm476, 0, %v562
        %v565 = vcosq.f32.pop %v563
        %v566 = vsinq.f32.pop %v563
        %vm567 = vweird.f32 %v179
        %v568 = vadd.s32 %v564, 3
        %v569 = vand.u32 %v568, 3
        %vm570 = vcmp.lt.s32.totalorder %v569, 2
        %vm571 = vcmp.eq.s32.totalorder %v569, 0
        %v572 = vxor.u32 %v566, 2147483648
        %v573 = vsel %vm571, %v565, %v572
        %vm574 = vcmp.eq.s32.totalorder %v569, 2
        %v575 = vxor.u32 %v565, 2147483648
        %v576 = vsel %vm574, %v575, %v566
        %v577 = vsel %vm570, %v573, %v576
        %v578 = vsel %vm567, nan, %v577
        %v579 = vand.u32 2147483647, %v180
        %vm580 = vcmp.le.f32.partialorder %v579, 0.7853982
        %vm581 = vcmp.lt.s32.totalorder %v180, 0
        %v582 = vand.u32 %v180, 2139095040
        %v583 = vshrl.u32 %v582, 23
        %v584 = vsub.s32 %v583, 127
        %v585 = vand.u32 2147483647, %v180
        %v586 = vand.u32 %v585, 8388607
        %v587 = vor.u32 %v586, 8388608
        %v588 = vsub.s32 0, %v587
        %v589 = vadd.s32 %v584, 1
        %vm590 = vcmp.gt.s32.totalorder %v589, 0
        %v591 = vsel %vm590, %v589, 0
        %v592 = vshrl.u32 %v591, 5
        %v593 = vand.u32 %v591, 31
        %v594 = vsub.s32 32, %v593
        %v595 = vshrl.u32 683565275, %v594
        %v596 = vshll.u32 683565275, %v593
        %v597 = vshrl.u32 2475754826, %v594
        %v598 = vor.u32 %v596, %v597
        %v599 = vshll.u32 2475754826, %v593
        %v600 = vshrl.u32 2131351028, %v594
        %v601 = vor.u32 %v599, %v600
        %v602 = vshll.u32 2131351028, %v593
        %v603 = vshrl.u32 2102212464, %v594
        %v604 = vor.u32 %v602, %v603
        %v605 = vshll.u32 2102212464, %v593
        %v606 = vshrl.u32 920167782, %v594
        %v607 = vor.u32 %v605, %v606
        %v608 = vshll.u32 920167782, %v593
        %v609 = vshrl.u32 1326507024, %v594
        %v610 = vor.u32 %v608, %v609
        %vm611 = vcmp.lt.s32.totalorder %v592, 1
        %vm612 = vcmp.lt.s32.totalorder %v592, 2
        %vm613 = vcmp.lt.s32.totalorder %v592, 3
        %vm614 = vcmp.lt.s32.totalorder %v592, 4
        %v615 = vsel %vm611, %v595, %v598
        %v616 = vsel %vm614, %v604, 2102212464
        %v617 = vsel %vm613, %v601, %v616
        %v618 = vsel %vm612, %v615, %v617
        %v619 = vsel %vm611, %v598, %v601
        %v620 = vsel %vm614, %v607, 920167782
        %v621 = vsel %vm613, %v604, %v620
        %v622 = vsel %vm612, %v619, %v621
        %v623 = vsel %vm611, %v601, %v604
        %v624 = vsel %vm614, %v610, 1326507024
        %v625 = vsel %vm613, %v607, %v624
        %v626 = vsel %vm612, %v623, %v625
        %v627 = vshll.u32 %v587, 8
        %v628 = vmul.u32.u64.compose %v627, %v626
        %v629 = vextract.low.u32 %v628
        %v630 = vextract.high.u32 %v628
        %v631 = vmul.u32.u64.compose %v627, %v622
        %v632 = vextract.low.u32 %v631
        %v633 = vextract.high.u32 %v631
        %v634 = vmul.u32 %v627, %v618
        %v635 = vadd.s32 %v630, %v632
        %vm636 = vc.u32 %v630, %v632
        %v637 = vadd.s32 %v633, 1
        %v638 = vsel %vm636, %v637, %v633
        %v639 = vadd.s32 %v634, %v638
        %v640 = vadd.s32 %v639, 536870912
        %v641 = vshrl.u32 %v640, 30
        %v642 = vshll.u32 %v641, 30
        %v643 = vsub.s32 %v639, %v642
        %vm644 = vcmp.lt.s32.totalorder %v643, 0
        %v645 = vsub.s32 0, %v643
        %v646 = vsel %vm644, %v645, %v643
        %v647 = vclz %v646
        %v648 = vsub.s32 %v647, 2
        %vm649 = vcmp.gt.s32.totalorder 0, %v648
        %v650 = vsel %vm649, 0, %v648
        %v651 = vsub.s32 32, %v650
        %v652 = vshll.u32 %v643, %v650
        %v653 = vshrl.u32 %v635, %v651
        %v654 = vor.u32 %v652, %v653
        %v655 = vsub.s32 4294967266, %v650
        %v656 = vadd.s32 %v655, 127
        %v657 = vshll.u32 %v656, 23
        %v658 = vor.u32 4788187, %v657
        %v659 = vand.u32 2147483647, %v658
        %v661 = vcvt.s32.f32 %v654
        %v662 = vmul.f32 %v661, %v659
        %v663 = vxor.u32 %v662, 2147483648
        %v664 = vsel %vm581, %v663, %v662
        %v665 = vsub.s32 4, %v641
        %v666 = vsel %vm581, %v665, %v641
        %v667 = vsel %vm580, %v180, %v664
        %v668 = vsel %vm580, 0, %v666
        %v669 = vcosq.f32.pop %v667
        %v670 = vsinq.f32.pop %v667
        %vm671 = vweird.f32 %v180
        %v672 = vadd.s32 %v668, 3
        %v673 = vand.u32 %v672, 3
        %vm674 = vcmp.lt.s32.totalorder %v673, 2
        %vm675 = vcmp.eq.s32.totalorder %v673, 0
        %v676 = vxor.u32 %v670, 2147483648
        %v677 = vsel %vm675, %v669, %v676
        %vm678 = vcmp.eq.s32.totalorder %v673, 2
        %v679 = vxor.u32 %v669, 2147483648
        %v680 = vsel %vm678, %v679, %v670
        %v681 = vsel %vm674, %v677, %v680
        %v682 = vsel %vm671, nan, %v681
        %v683 = vand.u32 2147483647, %v181
        %vm684 = vcmp.le.f32.partialorder %v683, 0.7853982
        %vm685 = vcmp.lt.s32.totalorder %v181, 0
        %v686 = vand.u32 %v181, 2139095040
        %v687 = vshrl.u32 %v686, 23
        %v688 = vsub.s32 %v687, 127
        %v689 = vand.u32 2147483647, %v181
        %v690 = vand.u32 %v689, 8388607
        %v691 = vor.u32 %v690, 8388608
        %v692 = vsub.s32 0, %v691
        %v693 = vadd.s32 %v688, 1
        %vm694 = vcmp.gt.s32.totalorder %v693, 0
        %v695 = vsel %vm694, %v693, 0
        %v696 = vshrl.u32 %v695, 5
        %v697 = vand.u32 %v695, 31
        %v698 = vsub.s32 32, %v697
        %v699 = vshrl.u32 683565275, %v698
        %v700 = vshll.u32 683565275, %v697
        %v701 = vshrl.u32 2475754826, %v698
        %v702 = vor.u32 %v700, %v701
        %v703 = vshll.u32 2475754826, %v697
        %v704 = vshrl.u32 2131351028, %v698
        %v705 = vor.u32 %v703, %v704
        %v706 = vshll.u32 2131351028, %v697
        %v707 = vshrl.u32 2102212464, %v698
        %v708 = vor.u32 %v706, %v707
        %v709 = vshll.u32 2102212464, %v697
        %v710 = vshrl.u32 920167782, %v698
        %v711 = vor.u32 %v709, %v710
        %v712 = vshll.u32 920167782, %v697
        %v713 = vshrl.u32 1326507024, %v698
        %v714 = vor.u32 %v712, %v713
        %vm715 = vcmp.lt.s32.totalorder %v696, 1
        %vm716 = vcmp.lt.s32.totalorder %v696, 2
        %vm717 = vcmp.lt.s32.totalorder %v696, 3
        %vm718 = vcmp.lt.s32.totalorder %v696, 4
        %v719 = vsel %vm715, %v699, %v702
        %v720 = vsel %vm718, %v708, 2102212464
        %v721 = vsel %vm717, %v705, %v720
        %v722 = vsel %vm716, %v719, %v721
        %v723 = vsel %vm715, %v702, %v705
        %v724 = vsel %vm718, %v711, 920167782
        %v725 = vsel %vm717, %v708, %v724
        %v726 = vsel %vm716, %v723, %v725
        %v727 = vsel %vm715, %v705, %v708
        %v728 = vsel %vm718, %v714, 1326507024
        %v729 = vsel %vm717, %v711, %v728
        %v730 = vsel %vm716, %v727, %v729
        %v731 = vshll.u32 %v691, 8
        %v732 = vmul.u32.u64.compose %v731, %v730
        %v733 = vextract.low.u32 %v732
        %v734 = vextract.high.u32 %v732
        %v735 = vmul.u32.u64.compose %v731, %v726
        %v736 = vextract.low.u32 %v735
        %v737 = vextract.high.u32 %v735
        %v738 = vmul.u32 %v731, %v722
        %v739 = vadd.s32 %v734, %v736
        %vm740 = vc.u32 %v734, %v736
        %v741 = vadd.s32 %v737, 1
        %v742 = vsel %vm740, %v741, %v737
        %v743 = vadd.s32 %v738, %v742
        %v744 = vadd.s32 %v743, 536870912
        %v745 = vshrl.u32 %v744, 30
        %v746 = vshll.u32 %v745, 30
        %v747 = vsub.s32 %v743, %v746
        %vm748 = vcmp.lt.s32.totalorder %v747, 0
        %v749 = vsub.s32 0, %v747
        %v750 = vsel %vm748, %v749, %v747
        %v751 = vclz %v750
        %v752 = vsub.s32 %v751, 2
        %vm753 = vcmp.gt.s32.totalorder 0, %v752
        %v754 = vsel %vm753, 0, %v752
        %v755 = vsub.s32 32, %v754
        %v756 = vshll.u32 %v747, %v754
        %v757 = vshrl.u32 %v739, %v755
        %v758 = vor.u32 %v756, %v757
        %v759 = vsub.s32 4294967266, %v754
        %v760 = vadd.s32 %v759, 127
        %v761 = vshll.u32 %v760, 23
        %v762 = vor.u32 4788187, %v761
        %v763 = vand.u32 2147483647, %v762
        %v765 = vcvt.s32.f32 %v758
        %v766 = vmul.f32 %v765, %v763
        %v767 = vxor.u32 %v766, 2147483648
        %v768 = vsel %vm685, %v767, %v766
        %v769 = vsub.s32 4, %v745
        %v770 = vsel %vm685, %v769, %v745
        %v771 = vsel %vm684, %v181, %v768
        %v772 = vsel %vm684, 0, %v770
        %v773 = vcosq.f32.pop %v771
        %v774 = vsinq.f32.pop %v771
        %vm775 = vweird.f32 %v181
        %v776 = vadd.s32 %v772, 3
        %v777 = vand.u32 %v776, 3
        %vm778 = vcmp.lt.s32.totalorder %v777, 2
        %vm779 = vcmp.eq.s32.totalorder %v777, 0
        %v780 = vxor.u32 %v774, 2147483648
        %v781 = vsel %vm779, %v773, %v780
        %vm782 = vcmp.eq.s32.totalorder %v777, 2
        %v783 = vxor.u32 %v773, 2147483648
        %v784 = vsel %vm782, %v783, %v774
        %v785 = vsel %vm778, %v781, %v784
        %v786 = vsel %vm775, nan, %v785
        %v787 = vand.u32 2147483647, %v182
        %vm788 = vcmp.le.f32.partialorder %v787, 0.7853982
        %vm789 = vcmp.lt.s32.totalorder %v182, 0
        %v790 = vand.u32 %v182, 2139095040
        %v791 = vshrl.u32 %v790, 23
        %v792 = vsub.s32 %v791, 127
        %v793 = vand.u32 2147483647, %v182
        %v794 = vand.u32 %v793, 8388607
        %v795 = vor.u32 %v794, 8388608
        %v796 = vsub.s32 0, %v795
        %v797 = vadd.s32 %v792, 1
        %vm798 = vcmp.gt.s32.totalorder %v797, 0
        %v799 = vsel %vm798, %v797, 0
        %v800 = vshrl.u32 %v799, 5
        %v801 = vand.u32 %v799, 31
        %v802 = vsub.s32 32, %v801
        %v803 = vshrl.u32 683565275, %v802
        %v804 = vshll.u32 683565275, %v801
        %v805 = vshrl.u32 2475754826, %v802
        %v806 = vor.u32 %v804, %v805
        %v807 = vshll.u32 2475754826, %v801
        %v808 = vshrl.u32 2131351028, %v802
        %v809 = vor.u32 %v807, %v808
        %v810 = vshll.u32 2131351028, %v801
        %v811 = vshrl.u32 2102212464, %v802
        %v812 = vor.u32 %v810, %v811
        %v813 = vshll.u32 2102212464, %v801
        %v814 = vshrl.u32 920167782, %v802
        %v815 = vor.u32 %v813, %v814
        %v816 = vshll.u32 920167782, %v801
        %v817 = vshrl.u32 1326507024, %v802
        %v818 = vor.u32 %v816, %v817
        %vm819 = vcmp.lt.s32.totalorder %v800, 1
        %vm820 = vcmp.lt.s32.totalorder %v800, 2
        %vm821 = vcmp.lt.s32.totalorder %v800, 3
        %vm822 = vcmp.lt.s32.totalorder %v800, 4
        %v823 = vsel %vm819, %v803, %v806
        %v824 = vsel %vm822, %v812, 2102212464
        %v825 = vsel %vm821, %v809, %v824
        %v826 = vsel %vm820, %v823, %v825
        %v827 = vsel %vm819, %v806, %v809
        %v828 = vsel %vm822, %v815, 920167782
        %v829 = vsel %vm821, %v812, %v828
        %v830 = vsel %vm820, %v827, %v829
        %v831 = vsel %vm819, %v809, %v812
        %v832 = vsel %vm822, %v818, 1326507024
        %v833 = vsel %vm821, %v815, %v832
        %v834 = vsel %vm820, %v831, %v833
        %v835 = vshll.u32 %v795, 8
        %v836 = vmul.u32.u64.compose %v835, %v834
        %v837 = vextract.low.u32 %v836
        %v838 = vextract.high.u32 %v836
        %v839 = vmul.u32.u64.compose %v835, %v830
        %v840 = vextract.low.u32 %v839
        %v841 = vextract.high.u32 %v839
        %v842 = vmul.u32 %v835, %v826
        %v843 = vadd.s32 %v838, %v840
        %vm844 = vc.u32 %v838, %v840
        %v845 = vadd.s32 %v841, 1
        %v846 = vsel %vm844, %v845, %v841
        %v847 = vadd.s32 %v842, %v846
        %v848 = vadd.s32 %v847, 536870912
        %v849 = vshrl.u32 %v848, 30
        %v850 = vshll.u32 %v849, 30
        %v851 = vsub.s32 %v847, %v850
        %vm852 = vcmp.lt.s32.totalorder %v851, 0
        %v853 = vsub.s32 0, %v851
        %v854 = vsel %vm852, %v853, %v851
        %v855 = vclz %v854
        %v856 = vsub.s32 %v855, 2
        %vm857 = vcmp.gt.s32.totalorder 0, %v856
        %v858 = vsel %vm857, 0, %v856
        %v859 = vsub.s32 32, %v858
        %v860 = vshll.u32 %v851, %v858
        %v861 = vshrl.u32 %v843, %v859
        %v862 = vor.u32 %v860, %v861
        %v863 = vsub.s32 4294967266, %v858
        %v864 = vadd.s32 %v863, 127
        %v865 = vshll.u32 %v864, 23
        %v866 = vor.u32 4788187, %v865
        %v867 = vand.u32 2147483647, %v866
        %v869 = vcvt.s32.f32 %v862
        %v870 = vmul.f32 %v869, %v867
        %v871 = vxor.u32 %v870, 2147483648
        %v872 = vsel %vm789, %v871, %v870
        %v873 = vsub.s32 4, %v849
        %v874 = vsel %vm789, %v873, %v849
        %v875 = vsel %vm788, %v182, %v872
        %v876 = vsel %vm788, 0, %v874
        %v877 = vcosq.f32.pop %v875
        %v878 = vsinq.f32.pop %v875
        %vm879 = vweird.f32 %v182
        %v880 = vadd.s32 %v876, 3
        %v881 = vand.u32 %v880, 3
        %vm882 = vcmp.lt.s32.totalorder %v881, 2
        %vm883 = vcmp.eq.s32.totalorder %v881, 0
        %v884 = vxor.u32 %v878, 2147483648
        %v885 = vsel %vm883, %v877, %v884
        %vm886 = vcmp.eq.s32.totalorder %v881, 2
        %v887 = vxor.u32 %v877, 2147483648
        %v888 = vsel %vm886, %v887, %v878
        %v889 = vsel %vm882, %v885, %v888
        %v890 = vsel %vm879, nan, %v889
        %v891 = vand.u32 2147483647, %v183
        %vm892 = vcmp.le.f32.partialorder %v891, 0.7853982
        %vm893 = vcmp.lt.s32.totalorder %v183, 0
        %v894 = vand.u32 %v183, 2139095040
        %v895 = vshrl.u32 %v894, 23
        %v896 = vsub.s32 %v895, 127
        %v897 = vand.u32 2147483647, %v183
        %v898 = vand.u32 %v897, 8388607
        %v899 = vor.u32 %v898, 8388608
        %v900 = vsub.s32 0, %v899
        %v901 = vadd.s32 %v896, 1
        %vm902 = vcmp.gt.s32.totalorder %v901, 0
        %v903 = vsel %vm902, %v901, 0
        %v904 = vshrl.u32 %v903, 5
        %v905 = vand.u32 %v903, 31
        %v906 = vsub.s32 32, %v905
        %v907 = vshrl.u32 683565275, %v906
        %v908 = vshll.u32 683565275, %v905
        %v909 = vshrl.u32 2475754826, %v906
        %v910 = vor.u32 %v908, %v909
        %v911 = vshll.u32 2475754826, %v905
        %v912 = vshrl.u32 2131351028, %v906
        %v913 = vor.u32 %v911, %v912
        %v914 = vshll.u32 2131351028, %v905
        %v915 = vshrl.u32 2102212464, %v906
        %v916 = vor.u32 %v914, %v915
        %v917 = vshll.u32 2102212464, %v905
        %v918 = vshrl.u32 920167782, %v906
        %v919 = vor.u32 %v917, %v918
        %v920 = vshll.u32 920167782, %v905
        %v921 = vshrl.u32 1326507024, %v906
        %v922 = vor.u32 %v920, %v921
        %vm923 = vcmp.lt.s32.totalorder %v904, 1
        %vm924 = vcmp.lt.s32.totalorder %v904, 2
        %vm925 = vcmp.lt.s32.totalorder %v904, 3
        %vm926 = vcmp.lt.s32.totalorder %v904, 4
        %v927 = vsel %vm923, %v907, %v910
        %v928 = vsel %vm926, %v916, 2102212464
        %v929 = vsel %vm925, %v913, %v928
        %v930 = vsel %vm924, %v927, %v929
        %v931 = vsel %vm923, %v910, %v913
        %v932 = vsel %vm926, %v919, 920167782
        %v933 = vsel %vm925, %v916, %v932
        %v934 = vsel %vm924, %v931, %v933
        %v935 = vsel %vm923, %v913, %v916
        %v936 = vsel %vm926, %v922, 1326507024
        %v937 = vsel %vm925, %v919, %v936
        %v938 = vsel %vm924, %v935, %v937
        %v939 = vshll.u32 %v899, 8
        %v940 = vmul.u32.u64.compose %v939, %v938
        %v941 = vextract.low.u32 %v940
        %v942 = vextract.high.u32 %v940
        %v943 = vmul.u32.u64.compose %v939, %v934
        %v944 = vextract.low.u32 %v943
        %v945 = vextract.high.u32 %v943
        %v946 = vmul.u32 %v939, %v930
        %v947 = vadd.s32 %v942, %v944
        %vm948 = vc.u32 %v942, %v944
        %v949 = vadd.s32 %v945, 1
        %v950 = vsel %vm948, %v949, %v945
        %v951 = vadd.s32 %v946, %v950
        %v952 = vadd.s32 %v951, 536870912
        %v953 = vshrl.u32 %v952, 30
        %v954 = vshll.u32 %v953, 30
        %v955 = vsub.s32 %v951, %v954
        %vm956 = vcmp.lt.s32.totalorder %v955, 0
        %v957 = vsub.s32 0, %v955
        %v958 = vsel %vm956, %v957, %v955
        %v959 = vclz %v958
        %v960 = vsub.s32 %v959, 2
        %vm961 = vcmp.gt.s32.totalorder 0, %v960
        %v962 = vsel %vm961, 0, %v960
        %v963 = vsub.s32 32, %v962
        %v964 = vshll.u32 %v955, %v962
        %v965 = vshrl.u32 %v947, %v963
        %v966 = vor.u32 %v964, %v965
        %v967 = vsub.s32 4294967266, %v962
        %v968 = vadd.s32 %v967, 127
        %v969 = vshll.u32 %v968, 23
        %v970 = vor.u32 4788187, %v969
        %v971 = vand.u32 2147483647, %v970
        %v973 = vcvt.s32.f32 %v966
        %v974 = vmul.f32 %v973, %v971
        %v975 = vxor.u32 %v974, 2147483648
        %v976 = vsel %vm893, %v975, %v974
        %v977 = vsub.s32 4, %v953
        %v978 = vsel %vm893, %v977, %v953
        %v979 = vsel %vm892, %v183, %v976
        %v980 = vsel %vm892, 0, %v978
        %v981 = vcosq.f32.pop %v979
        %v982 = vsinq.f32.pop %v979
        %vm983 = vweird.f32 %v183
        %v984 = vadd.s32 %v980, 3
        %v985 = vand.u32 %v984, 3
        %vm986 = vcmp.lt.s32.totalorder %v985, 2
        %vm987 = vcmp.eq.s32.totalorder %v985, 0
        %v988 = vxor.u32 %v982, 2147483648
        %v989 = vsel %vm987, %v981, %v988
        %vm990 = vcmp.eq.s32.totalorder %v985, 2
        %v991 = vxor.u32 %v981, 2147483648
        %v992 = vsel %vm990, %v991, %v982
        %v993 = vsel %vm986, %v989, %v992
        %v994 = vsel %vm983, nan, %v993
        %v995 = vand.u32 2147483647, %v184
        %vm996 = vcmp.le.f32.partialorder %v995, 0.7853982
        %vm997 = vcmp.lt.s32.totalorder %v184, 0
        %v998 = vand.u32 %v184, 2139095040
        %v999 = vshrl.u32 %v998, 23
        %v1000 = vsub.s32 %v999, 127
        %v1001 = vand.u32 2147483647, %v184
        %v1002 = vand.u32 %v1001, 8388607
        %v1003 = vor.u32 %v1002, 8388608
        %v1004 = vsub.s32 0, %v1003
        %v1005 = vadd.s32 %v1000, 1
        %vm1006 = vcmp.gt.s32.totalorder %v1005, 0
        %v1007 = vsel %vm1006, %v1005, 0
        %v1008 = vshrl.u32 %v1007, 5
        %v1009 = vand.u32 %v1007, 31
        %v1010 = vsub.s32 32, %v1009
        %v1011 = vshrl.u32 683565275, %v1010
        %v1012 = vshll.u32 683565275, %v1009
        %v1013 = vshrl.u32 2475754826, %v1010
        %v1014 = vor.u32 %v1012, %v1013
        %v1015 = vshll.u32 2475754826, %v1009
        %v1016 = vshrl.u32 2131351028, %v1010
        %v1017 = vor.u32 %v1015, %v1016
        %v1018 = vshll.u32 2131351028, %v1009
        %v1019 = vshrl.u32 2102212464, %v1010
        %v1020 = vor.u32 %v1018, %v1019
        %v1021 = vshll.u32 2102212464, %v1009
        %v1022 = vshrl.u32 920167782, %v1010
        %v1023 = vor.u32 %v1021, %v1022
        %v1024 = vshll.u32 920167782, %v1009
        %v1025 = vshrl.u32 1326507024, %v1010
        %v1026 = vor.u32 %v1024, %v1025
        %vm1027 = vcmp.lt.s32.totalorder %v1008, 1
        %vm1028 = vcmp.lt.s32.totalorder %v1008, 2
        %vm1029 = vcmp.lt.s32.totalorder %v1008, 3
        %vm1030 = vcmp.lt.s32.totalorder %v1008, 4
        %v1031 = vsel %vm1027, %v1011, %v1014
        %v1032 = vsel %vm1030, %v1020, 2102212464
        %v1033 = vsel %vm1029, %v1017, %v1032
        %v1034 = vsel %vm1028, %v1031, %v1033
        %v1035 = vsel %vm1027, %v1014, %v1017
        %v1036 = vsel %vm1030, %v1023, 920167782
        %v1037 = vsel %vm1029, %v1020, %v1036
        %v1038 = vsel %vm1028, %v1035, %v1037
        %v1039 = vsel %vm1027, %v1017, %v1020
        %v1040 = vsel %vm1030, %v1026, 1326507024
        %v1041 = vsel %vm1029, %v1023, %v1040
        %v1042 = vsel %vm1028, %v1039, %v1041
        %v1043 = vshll.u32 %v1003, 8
        %v1044 = vmul.u32.u64.compose %v1043, %v1042
        %v1045 = vextract.low.u32 %v1044
        %v1046 = vextract.high.u32 %v1044
        %v1047 = vmul.u32.u64.compose %v1043, %v1038
        %v1048 = vextract.low.u32 %v1047
        %v1049 = vextract.high.u32 %v1047
        %v1050 = vmul.u32 %v1043, %v1034
        %v1051 = vadd.s32 %v1046, %v1048
        %vm1052 = vc.u32 %v1046, %v1048
        %v1053 = vadd.s32 %v1049, 1
        %v1054 = vsel %vm1052, %v1053, %v1049
        %v1055 = vadd.s32 %v1050, %v1054
        %v1056 = vadd.s32 %v1055, 536870912
        %v1057 = vshrl.u32 %v1056, 30
        %v1058 = vshll.u32 %v1057, 30
        %v1059 = vsub.s32 %v1055, %v1058
        %vm1060 = vcmp.lt.s32.totalorder %v1059, 0
        %v1061 = vsub.s32 0, %v1059
        %v1062 = vsel %vm1060, %v1061, %v1059
        %v1063 = vclz %v1062
        %v1064 = vsub.s32 %v1063, 2
        %vm1065 = vcmp.gt.s32.totalorder 0, %v1064
        %v1066 = vsel %vm1065, 0, %v1064
        %v1067 = vsub.s32 32, %v1066
        %v1068 = vshll.u32 %v1059, %v1066
        %v1069 = vshrl.u32 %v1051, %v1067
        %v1070 = vor.u32 %v1068, %v1069
        %v1071 = vsub.s32 4294967266, %v1066
        %v1072 = vadd.s32 %v1071, 127
        %v1073 = vshll.u32 %v1072, 23
        %v1074 = vor.u32 4788187, %v1073
        %v1075 = vand.u32 2147483647, %v1074
        %v1077 = vcvt.s32.f32 %v1070
        %v1078 = vmul.f32 %v1077, %v1075
        %v1079 = vxor.u32 %v1078, 2147483648
        %v1080 = vsel %vm997, %v1079, %v1078
        %v1081 = vsub.s32 4, %v1057
        %v1082 = vsel %vm997, %v1081, %v1057
        %v1083 = vsel %vm996, %v184, %v1080
        %v1084 = vsel %vm996, 0, %v1082
        %v1085 = vcosq.f32.pop %v1083
        %v1086 = vsinq.f32.pop %v1083
        %vm1087 = vweird.f32 %v184
        %v1088 = vadd.s32 %v1084, 3
        %v1089 = vand.u32 %v1088, 3
        %vm1090 = vcmp.lt.s32.totalorder %v1089, 2
        %vm1091 = vcmp.eq.s32.totalorder %v1089, 0
        %v1092 = vxor.u32 %v1086, 2147483648
        %v1093 = vsel %vm1091, %v1085, %v1092
        %vm1094 = vcmp.eq.s32.totalorder %v1089, 2
        %v1095 = vxor.u32 %v1085, 2147483648
        %v1096 = vsel %vm1094, %v1095, %v1086
        %v1097 = vsel %vm1090, %v1093, %v1096
        %v1098 = vsel %vm1087, nan, %v1097
        %v1099 = vand.u32 2147483647, %v185
        %vm1100 = vcmp.le.f32.partialorder %v1099, 0.7853982
        %vm1101 = vcmp.lt.s32.totalorder %v185, 0
        %v1102 = vand.u32 %v185, 2139095040
        %v1103 = vshrl.u32 %v1102, 23
        %v1104 = vsub.s32 %v1103, 127
        %v1105 = vand.u32 2147483647, %v185
        %v1106 = vand.u32 %v1105, 8388607
        %v1107 = vor.u32 %v1106, 8388608
        %v1108 = vsub.s32 0, %v1107
        %v1109 = vadd.s32 %v1104, 1
        %vm1110 = vcmp.gt.s32.totalorder %v1109, 0
        %v1111 = vsel %vm1110, %v1109, 0
        %v1112 = vshrl.u32 %v1111, 5
        %v1113 = vand.u32 %v1111, 31
        %v1114 = vsub.s32 32, %v1113
        %v1115 = vshrl.u32 683565275, %v1114
        %v1116 = vshll.u32 683565275, %v1113
        %v1117 = vshrl.u32 2475754826, %v1114
        %v1118 = vor.u32 %v1116, %v1117
        %v1119 = vshll.u32 2475754826, %v1113
        %v1120 = vshrl.u32 2131351028, %v1114
        %v1121 = vor.u32 %v1119, %v1120
        %v1122 = vshll.u32 2131351028, %v1113
        %v1123 = vshrl.u32 2102212464, %v1114
        %v1124 = vor.u32 %v1122, %v1123
        %v1125 = vshll.u32 2102212464, %v1113
        %v1126 = vshrl.u32 920167782, %v1114
        %v1127 = vor.u32 %v1125, %v1126
        %v1128 = vshll.u32 920167782, %v1113
        %v1129 = vshrl.u32 1326507024, %v1114
        %v1130 = vor.u32 %v1128, %v1129
        %vm1131 = vcmp.lt.s32.totalorder %v1112, 1
        %vm1132 = vcmp.lt.s32.totalorder %v1112, 2
        %vm1133 = vcmp.lt.s32.totalorder %v1112, 3
        %vm1134 = vcmp.lt.s32.totalorder %v1112, 4
        %v1135 = vsel %vm1131, %v1115, %v1118
        %v1136 = vsel %vm1134, %v1124, 2102212464
        %v1137 = vsel %vm1133, %v1121, %v1136
        %v1138 = vsel %vm1132, %v1135, %v1137
        %v1139 = vsel %vm1131, %v1118, %v1121
        %v1140 = vsel %vm1134, %v1127, 920167782
        %v1141 = vsel %vm1133, %v1124, %v1140
        %v1142 = vsel %vm1132, %v1139, %v1141
        %v1143 = vsel %vm1131, %v1121, %v1124
        %v1144 = vsel %vm1134, %v1130, 1326507024
        %v1145 = vsel %vm1133, %v1127, %v1144
        %v1146 = vsel %vm1132, %v1143, %v1145
        %v1147 = vshll.u32 %v1107, 8
        %v1148 = vmul.u32.u64.compose %v1147, %v1146
        %v1149 = vextract.low.u32 %v1148
        %v1150 = vextract.high.u32 %v1148
        %v1151 = vmul.u32.u64.compose %v1147, %v1142
        %v1152 = vextract.low.u32 %v1151
        %v1153 = vextract.high.u32 %v1151
        %v1154 = vmul.u32 %v1147, %v1138
        %v1155 = vadd.s32 %v1150, %v1152
        %vm1156 = vc.u32 %v1150, %v1152
        %v1157 = vadd.s32 %v1153, 1
        %v1158 = vsel %vm1156, %v1157, %v1153
        %v1159 = vadd.s32 %v1154, %v1158
        %v1160 = vadd.s32 %v1159, 536870912
        %v1161 = vshrl.u32 %v1160, 30
        %v1162 = vshll.u32 %v1161, 30
        %v1163 = vsub.s32 %v1159, %v1162
        %vm1164 = vcmp.lt.s32.totalorder %v1163, 0
        %v1165 = vsub.s32 0, %v1163
        %v1166 = vsel %vm1164, %v1165, %v1163
        %v1167 = vclz %v1166
        %v1168 = vsub.s32 %v1167, 2
        %vm1169 = vcmp.gt.s32.totalorder 0, %v1168
        %v1170 = vsel %vm1169, 0, %v1168
        %v1171 = vsub.s32 32, %v1170
        %v1172 = vshll.u32 %v1163, %v1170
        %v1173 = vshrl.u32 %v1155, %v1171
        %v1174 = vor.u32 %v1172, %v1173
        %v1175 = vsub.s32 4294967266, %v1170
        %v1176 = vadd.s32 %v1175, 127
        %v1177 = vshll.u32 %v1176, 23
        %v1178 = vor.u32 4788187, %v1177
        %v1179 = vand.u32 2147483647, %v1178
        %v1181 = vcvt.s32.f32 %v1174
        %v1182 = vmul.f32 %v1181, %v1179
        %v1183 = vxor.u32 %v1182, 2147483648
        %v1184 = vsel %vm1101, %v1183, %v1182
        %v1185 = vsub.s32 4, %v1161
        %v1186 = vsel %vm1101, %v1185, %v1161
        %v1187 = vsel %vm1100, %v185, %v1184
        %v1188 = vsel %vm1100, 0, %v1186
        %v1189 = vcosq.f32.pop %v1187
        %v1190 = vsinq.f32.pop %v1187
        %vm1191 = vweird.f32 %v185
        %v1192 = vadd.s32 %v1188, 3
        %v1193 = vand.u32 %v1192, 3
        %vm1194 = vcmp.lt.s32.totalorder %v1193, 2
        %vm1195 = vcmp.eq.s32.totalorder %v1193, 0
        %v1196 = vxor.u32 %v1190, 2147483648
        %v1197 = vsel %vm1195, %v1189, %v1196
        %vm1198 = vcmp.eq.s32.totalorder %v1193, 2
        %v1199 = vxor.u32 %v1189, 2147483648
        %v1200 = vsel %vm1198, %v1199, %v1190
        %v1201 = vsel %vm1194, %v1197, %v1200
        %v1202 = vsel %vm1191, nan, %v1201
        %v1203 = vand.u32 2147483647, %v186
        %vm1204 = vcmp.le.f32.partialorder %v1203, 0.7853982
        %vm1205 = vcmp.lt.s32.totalorder %v186, 0
        %v1206 = vand.u32 %v186, 2139095040
        %v1207 = vshrl.u32 %v1206, 23
        %v1208 = vsub.s32 %v1207, 127
        %v1209 = vand.u32 2147483647, %v186
        %v1210 = vand.u32 %v1209, 8388607
        %v1211 = vor.u32 %v1210, 8388608
        %v1212 = vsub.s32 0, %v1211
        %v1213 = vadd.s32 %v1208, 1
        %vm1214 = vcmp.gt.s32.totalorder %v1213, 0
        %v1215 = vsel %vm1214, %v1213, 0
        %v1216 = vshrl.u32 %v1215, 5
        %v1217 = vand.u32 %v1215, 31
        %v1218 = vsub.s32 32, %v1217
        %v1219 = vshrl.u32 683565275, %v1218
        %v1220 = vshll.u32 683565275, %v1217
        %v1221 = vshrl.u32 2475754826, %v1218
        %v1222 = vor.u32 %v1220, %v1221
        %v1223 = vshll.u32 2475754826, %v1217
        %v1224 = vshrl.u32 2131351028, %v1218
        %v1225 = vor.u32 %v1223, %v1224
        %v1226 = vshll.u32 2131351028, %v1217
        %v1227 = vshrl.u32 2102212464, %v1218
        %v1228 = vor.u32 %v1226, %v1227
        %v1229 = vshll.u32 2102212464, %v1217
        %v1230 = vshrl.u32 920167782, %v1218
        %v1231 = vor.u32 %v1229, %v1230
        %v1232 = vshll.u32 920167782, %v1217
        %v1233 = vshrl.u32 1326507024, %v1218
        %v1234 = vor.u32 %v1232, %v1233
        %vm1235 = vcmp.lt.s32.totalorder %v1216, 1
        %vm1236 = vcmp.lt.s32.totalorder %v1216, 2
        %vm1237 = vcmp.lt.s32.totalorder %v1216, 3
        %vm1238 = vcmp.lt.s32.totalorder %v1216, 4
        %v1239 = vsel %vm1235, %v1219, %v1222
        %v1240 = vsel %vm1238, %v1228, 2102212464
        %v1241 = vsel %vm1237, %v1225, %v1240
        %v1242 = vsel %vm1236, %v1239, %v1241
        %v1243 = vsel %vm1235, %v1222, %v1225
        %v1244 = vsel %vm1238, %v1231, 920167782
        %v1245 = vsel %vm1237, %v1228, %v1244
        %v1246 = vsel %vm1236, %v1243, %v1245
        %v1247 = vsel %vm1235, %v1225, %v1228
        %v1248 = vsel %vm1238, %v1234, 1326507024
        %v1249 = vsel %vm1237, %v1231, %v1248
        %v1250 = vsel %vm1236, %v1247, %v1249
        %v1251 = vshll.u32 %v1211, 8
        %v1252 = vmul.u32.u64.compose %v1251, %v1250
        %v1253 = vextract.low.u32 %v1252
        %v1254 = vextract.high.u32 %v1252
        %v1255 = vmul.u32.u64.compose %v1251, %v1246
        %v1256 = vextract.low.u32 %v1255
        %v1257 = vextract.high.u32 %v1255
        %v1258 = vmul.u32 %v1251, %v1242
        %v1259 = vadd.s32 %v1254, %v1256
        %vm1260 = vc.u32 %v1254, %v1256
        %v1261 = vadd.s32 %v1257, 1
        %v1262 = vsel %vm1260, %v1261, %v1257
        %v1263 = vadd.s32 %v1258, %v1262
        %v1264 = vadd.s32 %v1263, 536870912
        %v1265 = vshrl.u32 %v1264, 30
        %v1266 = vshll.u32 %v1265, 30
        %v1267 = vsub.s32 %v1263, %v1266
        %vm1268 = vcmp.lt.s32.totalorder %v1267, 0
        %v1269 = vsub.s32 0, %v1267
        %v1270 = vsel %vm1268, %v1269, %v1267
        %v1271 = vclz %v1270
        %v1272 = vsub.s32 %v1271, 2
        %vm1273 = vcmp.gt.s32.totalorder 0, %v1272
        %v1274 = vsel %vm1273, 0, %v1272
        %v1275 = vsub.s32 32, %v1274
        %v1276 = vshll.u32 %v1267, %v1274
        %v1277 = vshrl.u32 %v1259, %v1275
        %v1278 = vor.u32 %v1276, %v1277
        %v1279 = vsub.s32 4294967266, %v1274
        %v1280 = vadd.s32 %v1279, 127
        %v1281 = vshll.u32 %v1280, 23
        %v1282 = vor.u32 4788187, %v1281
        %v1283 = vand.u32 2147483647, %v1282
        %v1285 = vcvt.s32.f32 %v1278
        %v1286 = vmul.f32 %v1285, %v1283
        %v1287 = vxor.u32 %v1286, 2147483648
        %v1288 = vsel %vm1205, %v1287, %v1286
        %v1289 = vsub.s32 4, %v1265
        %v1290 = vsel %vm1205, %v1289, %v1265
        %v1291 = vsel %vm1204, %v186, %v1288
        %v1292 = vsel %vm1204, 0, %v1290
        %v1293 = vcosq.f32.pop %v1291
        %v1294 = vsinq.f32.pop %v1291
        %vm1295 = vweird.f32 %v186
        %v1296 = vadd.s32 %v1292, 3
        %v1297 = vand.u32 %v1296, 3
        %vm1298 = vcmp.lt.s32.totalorder %v1297, 2
        %vm1299 = vcmp.eq.s32.totalorder %v1297, 0
        %v1300 = vxor.u32 %v1294, 2147483648
        %v1301 = vsel %vm1299, %v1293, %v1300
        %vm1302 = vcmp.eq.s32.totalorder %v1297, 2
        %v1303 = vxor.u32 %v1293, 2147483648
        %v1304 = vsel %vm1302, %v1303, %v1294
        %v1305 = vsel %vm1298, %v1301, %v1304
        %v1306 = vsel %vm1295, nan, %v1305
        %v1307 = vand.u32 2147483647, %v187
        %vm1308 = vcmp.le.f32.partialorder %v1307, 0.7853982
        %vm1309 = vcmp.lt.s32.totalorder %v187, 0
        %v1310 = vand.u32 %v187, 2139095040
        %v1311 = vshrl.u32 %v1310, 23
        %v1312 = vsub.s32 %v1311, 127
        %v1313 = vand.u32 2147483647, %v187
        %v1314 = vand.u32 %v1313, 8388607
        %v1315 = vor.u32 %v1314, 8388608
        %v1316 = vsub.s32 0, %v1315
        %v1317 = vadd.s32 %v1312, 1
        %vm1318 = vcmp.gt.s32.totalorder %v1317, 0
        %v1319 = vsel %vm1318, %v1317, 0
        %v1320 = vshrl.u32 %v1319, 5
        %v1321 = vand.u32 %v1319, 31
        %v1322 = vsub.s32 32, %v1321
        %v1323 = vshrl.u32 683565275, %v1322
        %v1324 = vshll.u32 683565275, %v1321
        %v1325 = vshrl.u32 2475754826, %v1322
        %v1326 = vor.u32 %v1324, %v1325
        %v1327 = vshll.u32 2475754826, %v1321
        %v1328 = vshrl.u32 2131351028, %v1322
        %v1329 = vor.u32 %v1327, %v1328
        %v1330 = vshll.u32 2131351028, %v1321
        %v1331 = vshrl.u32 2102212464, %v1322
        %v1332 = vor.u32 %v1330, %v1331
        %v1333 = vshll.u32 2102212464, %v1321
        %v1334 = vshrl.u32 920167782, %v1322
        %v1335 = vor.u32 %v1333, %v1334
        %v1336 = vshll.u32 920167782, %v1321
        %v1337 = vshrl.u32 1326507024, %v1322
        %v1338 = vor.u32 %v1336, %v1337
        %vm1339 = vcmp.lt.s32.totalorder %v1320, 1
        %vm1340 = vcmp.lt.s32.totalorder %v1320, 2
        %vm1341 = vcmp.lt.s32.totalorder %v1320, 3
        %vm1342 = vcmp.lt.s32.totalorder %v1320, 4
        %v1343 = vsel %vm1339, %v1323, %v1326
        %v1344 = vsel %vm1342, %v1332, 2102212464
        %v1345 = vsel %vm1341, %v1329, %v1344
        %v1346 = vsel %vm1340, %v1343, %v1345
        %v1347 = vsel %vm1339, %v1326, %v1329
        %v1348 = vsel %vm1342, %v1335, 920167782
        %v1349 = vsel %vm1341, %v1332, %v1348
        %v1350 = vsel %vm1340, %v1347, %v1349
        %v1351 = vsel %vm1339, %v1329, %v1332
        %v1352 = vsel %vm1342, %v1338, 1326507024
        %v1353 = vsel %vm1341, %v1335, %v1352
        %v1354 = vsel %vm1340, %v1351, %v1353
        %v1355 = vshll.u32 %v1315, 8
        %v1356 = vmul.u32.u64.compose %v1355, %v1354
        %v1357 = vextract.low.u32 %v1356
        %v1358 = vextract.high.u32 %v1356
        %v1359 = vmul.u32.u64.compose %v1355, %v1350
        %v1360 = vextract.low.u32 %v1359
        %v1361 = vextract.high.u32 %v1359
        %v1362 = vmul.u32 %v1355, %v1346
        %v1363 = vadd.s32 %v1358, %v1360
        %vm1364 = vc.u32 %v1358, %v1360
        %v1365 = vadd.s32 %v1361, 1
        %v1366 = vsel %vm1364, %v1365, %v1361
        %v1367 = vadd.s32 %v1362, %v1366
        %v1368 = vadd.s32 %v1367, 536870912
        %v1369 = vshrl.u32 %v1368, 30
        %v1370 = vshll.u32 %v1369, 30
        %v1371 = vsub.s32 %v1367, %v1370
        %vm1372 = vcmp.lt.s32.totalorder %v1371, 0
        %v1373 = vsub.s32 0, %v1371
        %v1374 = vsel %vm1372, %v1373, %v1371
        %v1375 = vclz %v1374
        %v1376 = vsub.s32 %v1375, 2
        %vm1377 = vcmp.gt.s32.totalorder 0, %v1376
        %v1378 = vsel %vm1377, 0, %v1376
        %v1379 = vsub.s32 32, %v1378
        %v1380 = vshll.u32 %v1371, %v1378
        %v1381 = vshrl.u32 %v1363, %v1379
        %v1382 = vor.u32 %v1380, %v1381
        %v1383 = vsub.s32 4294967266, %v1378
        %v1384 = vadd.s32 %v1383, 127
        %v1385 = vshll.u32 %v1384, 23
        %v1386 = vor.u32 4788187, %v1385
        %v1387 = vand.u32 2147483647, %v1386
        %v1389 = vcvt.s32.f32 %v1382
        %v1390 = vmul.f32 %v1389, %v1387
        %v1391 = vxor.u32 %v1390, 2147483648
        %v1392 = vsel %vm1309, %v1391, %v1390
        %v1393 = vsub.s32 4, %v1369
        %v1394 = vsel %vm1309, %v1393, %v1369
        %v1395 = vsel %vm1308, %v187, %v1392
        %v1396 = vsel %vm1308, 0, %v1394
        %v1397 = vcosq.f32.pop %v1395
        %v1398 = vsinq.f32.pop %v1395
        %vm1399 = vweird.f32 %v187
        %v1400 = vadd.s32 %v1396, 3
        %v1401 = vand.u32 %v1400, 3
        %vm1402 = vcmp.lt.s32.totalorder %v1401, 2
        %vm1403 = vcmp.eq.s32.totalorder %v1401, 0
        %v1404 = vxor.u32 %v1398, 2147483648
        %v1405 = vsel %vm1403, %v1397, %v1404
        %vm1406 = vcmp.eq.s32.totalorder %v1401, 2
        %v1407 = vxor.u32 %v1397, 2147483648
        %v1408 = vsel %vm1406, %v1407, %v1398
        %v1409 = vsel %vm1402, %v1405, %v1408
        %v1410 = vsel %vm1399, nan, %v1409
        %v1411 = vand.u32 2147483647, %v188
        %vm1412 = vcmp.le.f32.partialorder %v1411, 0.7853982
        %vm1413 = vcmp.lt.s32.totalorder %v188, 0
        %v1414 = vand.u32 %v188, 2139095040
        %v1415 = vshrl.u32 %v1414, 23
        %v1416 = vsub.s32 %v1415, 127
        %v1417 = vand.u32 2147483647, %v188
        %v1418 = vand.u32 %v1417, 8388607
        %v1419 = vor.u32 %v1418, 8388608
        %v1420 = vsub.s32 0, %v1419
        %v1421 = vadd.s32 %v1416, 1
        %vm1422 = vcmp.gt.s32.totalorder %v1421, 0
        %v1423 = vsel %vm1422, %v1421, 0
        %v1424 = vshrl.u32 %v1423, 5
        %v1425 = vand.u32 %v1423, 31
        %v1426 = vsub.s32 32, %v1425
        %v1427 = vshrl.u32 683565275, %v1426
        %v1428 = vshll.u32 683565275, %v1425
        %v1429 = vshrl.u32 2475754826, %v1426
        %v1430 = vor.u32 %v1428, %v1429
        %v1431 = vshll.u32 2475754826, %v1425
        %v1432 = vshrl.u32 2131351028, %v1426
        %v1433 = vor.u32 %v1431, %v1432
        %v1434 = vshll.u32 2131351028, %v1425
        %v1435 = vshrl.u32 2102212464, %v1426
        %v1436 = vor.u32 %v1434, %v1435
        %v1437 = vshll.u32 2102212464, %v1425
        %v1438 = vshrl.u32 920167782, %v1426
        %v1439 = vor.u32 %v1437, %v1438
        %v1440 = vshll.u32 920167782, %v1425
        %v1441 = vshrl.u32 1326507024, %v1426
        %v1442 = vor.u32 %v1440, %v1441
        %vm1443 = vcmp.lt.s32.totalorder %v1424, 1
        %vm1444 = vcmp.lt.s32.totalorder %v1424, 2
        %vm1445 = vcmp.lt.s32.totalorder %v1424, 3
        %vm1446 = vcmp.lt.s32.totalorder %v1424, 4
        %v1447 = vsel %vm1443, %v1427, %v1430
        %v1448 = vsel %vm1446, %v1436, 2102212464
        %v1449 = vsel %vm1445, %v1433, %v1448
        %v1450 = vsel %vm1444, %v1447, %v1449
        %v1451 = vsel %vm1443, %v1430, %v1433
        %v1452 = vsel %vm1446, %v1439, 920167782
        %v1453 = vsel %vm1445, %v1436, %v1452
        %v1454 = vsel %vm1444, %v1451, %v1453
        %v1455 = vsel %vm1443, %v1433, %v1436
        %v1456 = vsel %vm1446, %v1442, 1326507024
        %v1457 = vsel %vm1445, %v1439, %v1456
        %v1458 = vsel %vm1444, %v1455, %v1457
        %v1459 = vshll.u32 %v1419, 8
        %v1460 = vmul.u32.u64.compose %v1459, %v1458
        %v1461 = vextract.low.u32 %v1460
        %v1462 = vextract.high.u32 %v1460
        %v1463 = vmul.u32.u64.compose %v1459, %v1454
        %v1464 = vextract.low.u32 %v1463
        %v1465 = vextract.high.u32 %v1463
        %v1466 = vmul.u32 %v1459, %v1450
        %v1467 = vadd.s32 %v1462, %v1464
        %vm1468 = vc.u32 %v1462, %v1464
        %v1469 = vadd.s32 %v1465, 1
        %v1470 = vsel %vm1468, %v1469, %v1465
        %v1471 = vadd.s32 %v1466, %v1470
        %v1472 = vadd.s32 %v1471, 536870912
        %v1473 = vshrl.u32 %v1472, 30
        %v1474 = vshll.u32 %v1473, 30
        %v1475 = vsub.s32 %v1471, %v1474
        %vm1476 = vcmp.lt.s32.totalorder %v1475, 0
        %v1477 = vsub.s32 0, %v1475
        %v1478 = vsel %vm1476, %v1477, %v1475
        %v1479 = vclz %v1478
        %v1480 = vsub.s32 %v1479, 2
        %vm1481 = vcmp.gt.s32.totalorder 0, %v1480
        %v1482 = vsel %vm1481, 0, %v1480
        %v1483 = vsub.s32 32, %v1482
        %v1484 = vshll.u32 %v1475, %v1482
        %v1485 = vshrl.u32 %v1467, %v1483
        %v1486 = vor.u32 %v1484, %v1485
        %v1487 = vsub.s32 4294967266, %v1482
        %v1488 = vadd.s32 %v1487, 127
        %v1489 = vshll.u32 %v1488, 23
        %v1490 = vor.u32 4788187, %v1489
        %v1491 = vand.u32 2147483647, %v1490
        %v1493 = vcvt.s32.f32 %v1486
        %v1494 = vmul.f32 %v1493, %v1491
        %v1495 = vxor.u32 %v1494, 2147483648
        %v1496 = vsel %vm1413, %v1495, %v1494
        %v1497 = vsub.s32 4, %v1473
        %v1498 = vsel %vm1413, %v1497, %v1473
        %v1499 = vsel %vm1412, %v188, %v1496
        %v1500 = vsel %vm1412, 0, %v1498
        %v1501 = vcosq.f32.pop %v1499
        %v1502 = vsinq.f32.pop %v1499
        %vm1503 = vweird.f32 %v188
        %v1504 = vadd.s32 %v1500, 3
        %v1505 = vand.u32 %v1504, 3
        %vm1506 = vcmp.lt.s32.totalorder %v1505, 2
        %vm1507 = vcmp.eq.s32.totalorder %v1505, 0
        %v1508 = vxor.u32 %v1502, 2147483648
        %v1509 = vsel %vm1507, %v1501, %v1508
        %vm1510 = vcmp.eq.s32.totalorder %v1505, 2
        %v1511 = vxor.u32 %v1501, 2147483648
        %v1512 = vsel %vm1510, %v1511, %v1502
        %v1513 = vsel %vm1506, %v1509, %v1512
        %v1514 = vsel %vm1503, nan, %v1513
        %v1515 = vand.u32 2147483647, %v189
        %vm1516 = vcmp.le.f32.partialorder %v1515, 0.7853982
        %vm1517 = vcmp.lt.s32.totalorder %v189, 0
        %v1518 = vand.u32 %v189, 2139095040
        %v1519 = vshrl.u32 %v1518, 23
        %v1520 = vsub.s32 %v1519, 127
        %v1521 = vand.u32 2147483647, %v189
        %v1522 = vand.u32 %v1521, 8388607
        %v1523 = vor.u32 %v1522, 8388608
        %v1524 = vsub.s32 0, %v1523
        %v1525 = vadd.s32 %v1520, 1
        %vm1526 = vcmp.gt.s32.totalorder %v1525, 0
        %v1527 = vsel %vm1526, %v1525, 0
        %v1528 = vshrl.u32 %v1527, 5
        %v1529 = vand.u32 %v1527, 31
        %v1530 = vsub.s32 32, %v1529
        %v1531 = vshrl.u32 683565275, %v1530
        %v1532 = vshll.u32 683565275, %v1529
        %v1533 = vshrl.u32 2475754826, %v1530
        %v1534 = vor.u32 %v1532, %v1533
        %v1535 = vshll.u32 2475754826, %v1529
        %v1536 = vshrl.u32 2131351028, %v1530
        %v1537 = vor.u32 %v1535, %v1536
        %v1538 = vshll.u32 2131351028, %v1529
        %v1539 = vshrl.u32 2102212464, %v1530
        %v1540 = vor.u32 %v1538, %v1539
        %v1541 = vshll.u32 2102212464, %v1529
        %v1542 = vshrl.u32 920167782, %v1530
        %v1543 = vor.u32 %v1541, %v1542
        %v1544 = vshll.u32 920167782, %v1529
        %v1545 = vshrl.u32 1326507024, %v1530
        %v1546 = vor.u32 %v1544, %v1545
        %vm1547 = vcmp.lt.s32.totalorder %v1528, 1
        %vm1548 = vcmp.lt.s32.totalorder %v1528, 2
        %vm1549 = vcmp.lt.s32.totalorder %v1528, 3
        %vm1550 = vcmp.lt.s32.totalorder %v1528, 4
        %v1551 = vsel %vm1547, %v1531, %v1534
        %v1552 = vsel %vm1550, %v1540, 2102212464
        %v1553 = vsel %vm1549, %v1537, %v1552
        %v1554 = vsel %vm1548, %v1551, %v1553
        %v1555 = vsel %vm1547, %v1534, %v1537
        %v1556 = vsel %vm1550, %v1543, 920167782
        %v1557 = vsel %vm1549, %v1540, %v1556
        %v1558 = vsel %vm1548, %v1555, %v1557
        %v1559 = vsel %vm1547, %v1537, %v1540
        %v1560 = vsel %vm1550, %v1546, 1326507024
        %v1561 = vsel %vm1549, %v1543, %v1560
        %v1562 = vsel %vm1548, %v1559, %v1561
        %v1563 = vshll.u32 %v1523, 8
        %v1564 = vmul.u32.u64.compose %v1563, %v1562
        %v1565 = vextract.low.u32 %v1564
        %v1566 = vextract.high.u32 %v1564
        %v1567 = vmul.u32.u64.compose %v1563, %v1558
        %v1568 = vextract.low.u32 %v1567
        %v1569 = vextract.high.u32 %v1567
        %v1570 = vmul.u32 %v1563, %v1554
        %v1571 = vadd.s32 %v1566, %v1568
        %vm1572 = vc.u32 %v1566, %v1568
        %v1573 = vadd.s32 %v1569, 1
        %v1574 = vsel %vm1572, %v1573, %v1569
        %v1575 = vadd.s32 %v1570, %v1574
        %v1576 = vadd.s32 %v1575, 536870912
        %v1577 = vshrl.u32 %v1576, 30
        %v1578 = vshll.u32 %v1577, 30
        %v1579 = vsub.s32 %v1575, %v1578
        %vm1580 = vcmp.lt.s32.totalorder %v1579, 0
        %v1581 = vsub.s32 0, %v1579
        %v1582 = vsel %vm1580, %v1581, %v1579
        %v1583 = vclz %v1582
        %v1584 = vsub.s32 %v1583, 2
        %vm1585 = vcmp.gt.s32.totalorder 0, %v1584
        %v1586 = vsel %vm1585, 0, %v1584
        %v1587 = vsub.s32 32, %v1586
        %v1588 = vshll.u32 %v1579, %v1586
        %v1589 = vshrl.u32 %v1571, %v1587
        %v1590 = vor.u32 %v1588, %v1589
        %v1591 = vsub.s32 4294967266, %v1586
        %v1592 = vadd.s32 %v1591, 127
        %v1593 = vshll.u32 %v1592, 23
        %v1594 = vor.u32 4788187, %v1593
        %v1595 = vand.u32 2147483647, %v1594
        %v1597 = vcvt.s32.f32 %v1590
        %v1598 = vmul.f32 %v1597, %v1595
        %v1599 = vxor.u32 %v1598, 2147483648
        %v1600 = vsel %vm1517, %v1599, %v1598
        %v1601 = vsub.s32 4, %v1577
        %v1602 = vsel %vm1517, %v1601, %v1577
        %v1603 = vsel %vm1516, %v189, %v1600
        %v1604 = vsel %vm1516, 0, %v1602
        %v1605 = vcosq.f32.pop %v1603
        %v1606 = vsinq.f32.pop %v1603
        %vm1607 = vweird.f32 %v189
        %v1608 = vadd.s32 %v1604, 3
        %v1609 = vand.u32 %v1608, 3
        %vm1610 = vcmp.lt.s32.totalorder %v1609, 2
        %vm1611 = vcmp.eq.s32.totalorder %v1609, 0
        %v1612 = vxor.u32 %v1606, 2147483648
        %v1613 = vsel %vm1611, %v1605, %v1612
        %vm1614 = vcmp.eq.s32.totalorder %v1609, 2
        %v1615 = vxor.u32 %v1605, 2147483648
        %v1616 = vsel %vm1614, %v1615, %v1606
        %v1617 = vsel %vm1610, %v1613, %v1616
        %v1618 = vsel %vm1607, nan, %v1617
        %v1619 = vand.u32 2147483647, %v190
        %vm1620 = vcmp.le.f32.partialorder %v1619, 0.7853982
        %vm1621 = vcmp.lt.s32.totalorder %v190, 0
        %v1622 = vand.u32 %v190, 2139095040
        %v1623 = vshrl.u32 %v1622, 23
        %v1624 = vsub.s32 %v1623, 127
        %v1625 = vand.u32 2147483647, %v190
        %v1626 = vand.u32 %v1625, 8388607
        %v1627 = vor.u32 %v1626, 8388608
        %v1628 = vsub.s32 0, %v1627
        %v1629 = vadd.s32 %v1624, 1
        %vm1630 = vcmp.gt.s32.totalorder %v1629, 0
        %v1631 = vsel %vm1630, %v1629, 0
        %v1632 = vshrl.u32 %v1631, 5
        %v1633 = vand.u32 %v1631, 31
        %v1634 = vsub.s32 32, %v1633
        %v1635 = vshrl.u32 683565275, %v1634
        %v1636 = vshll.u32 683565275, %v1633
        %v1637 = vshrl.u32 2475754826, %v1634
        %v1638 = vor.u32 %v1636, %v1637
        %v1639 = vshll.u32 2475754826, %v1633
        %v1640 = vshrl.u32 2131351028, %v1634
        %v1641 = vor.u32 %v1639, %v1640
        %v1642 = vshll.u32 2131351028, %v1633
        %v1643 = vshrl.u32 2102212464, %v1634
        %v1644 = vor.u32 %v1642, %v1643
        %v1645 = vshll.u32 2102212464, %v1633
        %v1646 = vshrl.u32 920167782, %v1634
        %v1647 = vor.u32 %v1645, %v1646
        %v1648 = vshll.u32 920167782, %v1633
        %v1649 = vshrl.u32 1326507024, %v1634
        %v1650 = vor.u32 %v1648, %v1649
        %vm1651 = vcmp.lt.s32.totalorder %v1632, 1
        %vm1652 = vcmp.lt.s32.totalorder %v1632, 2
        %vm1653 = vcmp.lt.s32.totalorder %v1632, 3
        %vm1654 = vcmp.lt.s32.totalorder %v1632, 4
        %v1655 = vsel %vm1651, %v1635, %v1638
        %v1656 = vsel %vm1654, %v1644, 2102212464
        %v1657 = vsel %vm1653, %v1641, %v1656
        %v1658 = vsel %vm1652, %v1655, %v1657
        %v1659 = vsel %vm1651, %v1638, %v1641
        %v1660 = vsel %vm1654, %v1647, 920167782
        %v1661 = vsel %vm1653, %v1644, %v1660
        %v1662 = vsel %vm1652, %v1659, %v1661
        %v1663 = vsel %vm1651, %v1641, %v1644
        %v1664 = vsel %vm1654, %v1650, 1326507024
        %v1665 = vsel %vm1653, %v1647, %v1664
        %v1666 = vsel %vm1652, %v1663, %v1665
        %v1667 = vshll.u32 %v1627, 8
        %v1668 = vmul.u32.u64.compose %v1667, %v1666
        %v1669 = vextract.low.u32 %v1668
        %v1670 = vextract.high.u32 %v1668
        %v1671 = vmul.u32.u64.compose %v1667, %v1662
        %v1672 = vextract.low.u32 %v1671
        %v1673 = vextract.high.u32 %v1671
        %v1674 = vmul.u32 %v1667, %v1658
        %v1675 = vadd.s32 %v1670, %v1672
        %vm1676 = vc.u32 %v1670, %v1672
        %v1677 = vadd.s32 %v1673, 1
        %v1678 = vsel %vm1676, %v1677, %v1673
        %v1679 = vadd.s32 %v1674, %v1678
        %v1680 = vadd.s32 %v1679, 536870912
        %v1681 = vshrl.u32 %v1680, 30
        %v1682 = vshll.u32 %v1681, 30
        %v1683 = vsub.s32 %v1679, %v1682
        %vm1684 = vcmp.lt.s32.totalorder %v1683, 0
        %v1685 = vsub.s32 0, %v1683
        %v1686 = vsel %vm1684, %v1685, %v1683
        %v1687 = vclz %v1686
        %v1688 = vsub.s32 %v1687, 2
        %vm1689 = vcmp.gt.s32.totalorder 0, %v1688
        %v1690 = vsel %vm1689, 0, %v1688
        %v1691 = vsub.s32 32, %v1690
        %v1692 = vshll.u32 %v1683, %v1690
        %v1693 = vshrl.u32 %v1675, %v1691
        %v1694 = vor.u32 %v1692, %v1693
        %v1695 = vsub.s32 4294967266, %v1690
        %v1696 = vadd.s32 %v1695, 127
        %v1697 = vshll.u32 %v1696, 23
        %v1698 = vor.u32 4788187, %v1697
        %v1699 = vand.u32 2147483647, %v1698
        %v1701 = vcvt.s32.f32 %v1694
        %v1702 = vmul.f32 %v1701, %v1699
        %v1703 = vxor.u32 %v1702, 2147483648
        %v1704 = vsel %vm1621, %v1703, %v1702
        %v1705 = vsub.s32 4, %v1681
        %v1706 = vsel %vm1621, %v1705, %v1681
        %v1707 = vsel %vm1620, %v190, %v1704
        %v1708 = vsel %vm1620, 0, %v1706
        %v1709 = vcosq.f32.pop %v1707
        %v1710 = vsinq.f32.pop %v1707
        %vm1711 = vweird.f32 %v190
        %v1712 = vadd.s32 %v1708, 3
        %v1713 = vand.u32 %v1712, 3
        %vm1714 = vcmp.lt.s32.totalorder %v1713, 2
        %vm1715 = vcmp.eq.s32.totalorder %v1713, 0
        %v1716 = vxor.u32 %v1710, 2147483648
        %v1717 = vsel %vm1715, %v1709, %v1716
        %vm1718 = vcmp.eq.s32.totalorder %v1713, 2
        %v1719 = vxor.u32 %v1709, 2147483648
        %v1720 = vsel %vm1718, %v1719, %v1710
        %v1721 = vsel %vm1714, %v1717, %v1720
        %v1722 = vsel %vm1711, nan, %v1721
        %v1723 = vand.u32 2147483647, %v191
        %vm1724 = vcmp.le.f32.partialorder %v1723, 0.7853982
        %vm1725 = vcmp.lt.s32.totalorder %v191, 0
        %v1726 = vand.u32 %v191, 2139095040
        %v1727 = vshrl.u32 %v1726, 23
        %v1728 = vsub.s32 %v1727, 127
        %v1729 = vand.u32 2147483647, %v191
        %v1730 = vand.u32 %v1729, 8388607
        %v1731 = vor.u32 %v1730, 8388608
        %v1732 = vsub.s32 0, %v1731
        %v1733 = vadd.s32 %v1728, 1
        %vm1734 = vcmp.gt.s32.totalorder %v1733, 0
        %v1735 = vsel %vm1734, %v1733, 0
        %v1736 = vshrl.u32 %v1735, 5
        %v1737 = vand.u32 %v1735, 31
        %v1738 = vsub.s32 32, %v1737
        %v1739 = vshrl.u32 683565275, %v1738
        %v1740 = vshll.u32 683565275, %v1737
        %v1741 = vshrl.u32 2475754826, %v1738
        %v1742 = vor.u32 %v1740, %v1741
        %v1743 = vshll.u32 2475754826, %v1737
        %v1744 = vshrl.u32 2131351028, %v1738
        %v1745 = vor.u32 %v1743, %v1744
        %v1746 = vshll.u32 2131351028, %v1737
        %v1747 = vshrl.u32 2102212464, %v1738
        %v1748 = vor.u32 %v1746, %v1747
        %v1749 = vshll.u32 2102212464, %v1737
        %v1750 = vshrl.u32 920167782, %v1738
        %v1751 = vor.u32 %v1749, %v1750
        %v1752 = vshll.u32 920167782, %v1737
        %v1753 = vshrl.u32 1326507024, %v1738
        %v1754 = vor.u32 %v1752, %v1753
        %vm1755 = vcmp.lt.s32.totalorder %v1736, 1
        %vm1756 = vcmp.lt.s32.totalorder %v1736, 2
        %vm1757 = vcmp.lt.s32.totalorder %v1736, 3
        %vm1758 = vcmp.lt.s32.totalorder %v1736, 4
        %v1759 = vsel %vm1755, %v1739, %v1742
        %v1760 = vsel %vm1758, %v1748, 2102212464
        %v1761 = vsel %vm1757, %v1745, %v1760
        %v1762 = vsel %vm1756, %v1759, %v1761
        %v1763 = vsel %vm1755, %v1742, %v1745
        %v1764 = vsel %vm1758, %v1751, 920167782
        %v1765 = vsel %vm1757, %v1748, %v1764
        %v1766 = vsel %vm1756, %v1763, %v1765
        %v1767 = vsel %vm1755, %v1745, %v1748
        %v1768 = vsel %vm1758, %v1754, 1326507024
        %v1769 = vsel %vm1757, %v1751, %v1768
        %v1770 = vsel %vm1756, %v1767, %v1769
        %v1771 = vshll.u32 %v1731, 8
        %v1772 = vmul.u32.u64.compose %v1771, %v1770
        %v1773 = vextract.low.u32 %v1772
        %v1774 = vextract.high.u32 %v1772
        %v1775 = vmul.u32.u64.compose %v1771, %v1766
        %v1776 = vextract.low.u32 %v1775
        %v1777 = vextract.high.u32 %v1775
        %v1778 = vmul.u32 %v1771, %v1762
        %v1779 = vadd.s32 %v1774, %v1776
        %vm1780 = vc.u32 %v1774, %v1776
        %v1781 = vadd.s32 %v1777, 1
        %v1782 = vsel %vm1780, %v1781, %v1777
        %v1783 = vadd.s32 %v1778, %v1782
        %v1784 = vadd.s32 %v1783, 536870912
        %v1785 = vshrl.u32 %v1784, 30
        %v1786 = vshll.u32 %v1785, 30
        %v1787 = vsub.s32 %v1783, %v1786
        %vm1788 = vcmp.lt.s32.totalorder %v1787, 0
        %v1789 = vsub.s32 0, %v1787
        %v1790 = vsel %vm1788, %v1789, %v1787
        %v1791 = vclz %v1790
        %v1792 = vsub.s32 %v1791, 2
        %vm1793 = vcmp.gt.s32.totalorder 0, %v1792
        %v1794 = vsel %vm1793, 0, %v1792
        %v1795 = vsub.s32 32, %v1794
        %v1796 = vshll.u32 %v1787, %v1794
        %v1797 = vshrl.u32 %v1779, %v1795
        %v1798 = vor.u32 %v1796, %v1797
        %v1799 = vsub.s32 4294967266, %v1794
        %v1800 = vadd.s32 %v1799, 127
        %v1801 = vshll.u32 %v1800, 23
        %v1802 = vor.u32 4788187, %v1801
        %v1803 = vand.u32 2147483647, %v1802
        %v1805 = vcvt.s32.f32 %v1798
        %v1806 = vmul.f32 %v1805, %v1803
        %v1807 = vxor.u32 %v1806, 2147483648
        %v1808 = vsel %vm1725, %v1807, %v1806
        %v1809 = vsub.s32 4, %v1785
        %v1810 = vsel %vm1725, %v1809, %v1785
        %v1811 = vsel %vm1724, %v191, %v1808
        %v1812 = vsel %vm1724, 0, %v1810
        %v1813 = vcosq.f32.pop %v1811
        %v1814 = vsinq.f32.pop %v1811
        %vm1815 = vweird.f32 %v191
        %v1816 = vadd.s32 %v1812, 3
        %v1817 = vand.u32 %v1816, 3
        %vm1818 = vcmp.lt.s32.totalorder %v1817, 2
        %vm1819 = vcmp.eq.s32.totalorder %v1817, 0
        %v1820 = vxor.u32 %v1814, 2147483648
        %v1821 = vsel %vm1819, %v1813, %v1820
        %vm1822 = vcmp.eq.s32.totalorder %v1817, 2
        %v1823 = vxor.u32 %v1813, 2147483648
        %v1824 = vsel %vm1822, %v1823, %v1814
        %v1825 = vsel %vm1818, %v1821, %v1824
        %v1826 = vsel %vm1815, nan, %v1825
        %v1827 = vand.u32 2147483647, %v192
        %vm1828 = vcmp.le.f32.partialorder %v1827, 0.7853982
        %vm1829 = vcmp.lt.s32.totalorder %v192, 0
        %v1830 = vand.u32 %v192, 2139095040
        %v1831 = vshrl.u32 %v1830, 23
        %v1832 = vsub.s32 %v1831, 127
        %v1833 = vand.u32 2147483647, %v192
        %v1834 = vand.u32 %v1833, 8388607
        %v1835 = vor.u32 %v1834, 8388608
        %v1836 = vsub.s32 0, %v1835
        %v1837 = vadd.s32 %v1832, 1
        %vm1838 = vcmp.gt.s32.totalorder %v1837, 0
        %v1839 = vsel %vm1838, %v1837, 0
        %v1840 = vshrl.u32 %v1839, 5
        %v1841 = vand.u32 %v1839, 31
        %v1842 = vsub.s32 32, %v1841
        %v1843 = vshrl.u32 683565275, %v1842
        %v1844 = vshll.u32 683565275, %v1841
        %v1845 = vshrl.u32 2475754826, %v1842
        %v1846 = vor.u32 %v1844, %v1845
        %v1847 = vshll.u32 2475754826, %v1841
        %v1848 = vshrl.u32 2131351028, %v1842
        %v1849 = vor.u32 %v1847, %v1848
        %v1850 = vshll.u32 2131351028, %v1841
        %v1851 = vshrl.u32 2102212464, %v1842
        %v1852 = vor.u32 %v1850, %v1851
        %v1853 = vshll.u32 2102212464, %v1841
        %v1854 = vshrl.u32 920167782, %v1842
        %v1855 = vor.u32 %v1853, %v1854
        %v1856 = vshll.u32 920167782, %v1841
        %v1857 = vshrl.u32 1326507024, %v1842
        %v1858 = vor.u32 %v1856, %v1857
        %vm1859 = vcmp.lt.s32.totalorder %v1840, 1
        %vm1860 = vcmp.lt.s32.totalorder %v1840, 2
        %vm1861 = vcmp.lt.s32.totalorder %v1840, 3
        %vm1862 = vcmp.lt.s32.totalorder %v1840, 4
        %v1863 = vsel %vm1859, %v1843, %v1846
        %v1864 = vsel %vm1862, %v1852, 2102212464
        %v1865 = vsel %vm1861, %v1849, %v1864
        %v1866 = vsel %vm1860, %v1863, %v1865
        %v1867 = vsel %vm1859, %v1846, %v1849
        %v1868 = vsel %vm1862, %v1855, 920167782
        %v1869 = vsel %vm1861, %v1852, %v1868
        %v1870 = vsel %vm1860, %v1867, %v1869
        %v1871 = vsel %vm1859, %v1849, %v1852
        %v1872 = vsel %vm1862, %v1858, 1326507024
        %v1873 = vsel %vm1861, %v1855, %v1872
        %v1874 = vsel %vm1860, %v1871, %v1873
        %v1875 = vshll.u32 %v1835, 8
        %v1876 = vmul.u32.u64.compose %v1875, %v1874
        %v1877 = vextract.low.u32 %v1876
        %v1878 = vextract.high.u32 %v1876
        %v1879 = vmul.u32.u64.compose %v1875, %v1870
        %v1880 = vextract.low.u32 %v1879
        %v1881 = vextract.high.u32 %v1879
        %v1882 = vmul.u32 %v1875, %v1866
        %v1883 = vadd.s32 %v1878, %v1880
        %vm1884 = vc.u32 %v1878, %v1880
        %v1885 = vadd.s32 %v1881, 1
        %v1886 = vsel %vm1884, %v1885, %v1881
        %v1887 = vadd.s32 %v1882, %v1886
        %v1888 = vadd.s32 %v1887, 536870912
        %v1889 = vshrl.u32 %v1888, 30
        %v1890 = vshll.u32 %v1889, 30
        %v1891 = vsub.s32 %v1887, %v1890
        %vm1892 = vcmp.lt.s32.totalorder %v1891, 0
        %v1893 = vsub.s32 0, %v1891
        %v1894 = vsel %vm1892, %v1893, %v1891
        %v1895 = vclz %v1894
        %v1896 = vsub.s32 %v1895, 2
        %vm1897 = vcmp.gt.s32.totalorder 0, %v1896
        %v1898 = vsel %vm1897, 0, %v1896
        %v1899 = vsub.s32 32, %v1898
        %v1900 = vshll.u32 %v1891, %v1898
        %v1901 = vshrl.u32 %v1883, %v1899
        %v1902 = vor.u32 %v1900, %v1901
        %v1903 = vsub.s32 4294967266, %v1898
        %v1904 = vadd.s32 %v1903, 127
        %v1905 = vshll.u32 %v1904, 23
        %v1906 = vor.u32 4788187, %v1905
        %v1907 = vand.u32 2147483647, %v1906
        %v1909 = vcvt.s32.f32 %v1902
        %v1910 = vmul.f32 %v1909, %v1907
        %v1911 = vxor.u32 %v1910, 2147483648
        %v1912 = vsel %vm1829, %v1911, %v1910
        %v1913 = vsub.s32 4, %v1889
        %v1914 = vsel %vm1829, %v1913, %v1889
        %v1915 = vsel %vm1828, %v192, %v1912
        %v1916 = vsel %vm1828, 0, %v1914
        %v1917 = vcosq.f32.pop %v1915
        %v1918 = vsinq.f32.pop %v1915
        %vm1919 = vweird.f32 %v192
        %v1920 = vadd.s32 %v1916, 3
        %v1921 = vand.u32 %v1920, 3
        %vm1922 = vcmp.lt.s32.totalorder %v1921, 2
        %vm1923 = vcmp.eq.s32.totalorder %v1921, 0
        %v1924 = vxor.u32 %v1918, 2147483648
        %v1925 = vsel %vm1923, %v1917, %v1924
        %vm1926 = vcmp.eq.s32.totalorder %v1921, 2
        %v1927 = vxor.u32 %v1917, 2147483648
        %v1928 = vsel %vm1926, %v1927, %v1918
        %v1929 = vsel %vm1922, %v1925, %v1928
        %v1930 = vsel %vm1919, nan, %v1929
        %v1931 = vand.u32 2147483647, %v193
        %vm1932 = vcmp.le.f32.partialorder %v1931, 0.7853982
        %vm1933 = vcmp.lt.s32.totalorder %v193, 0
        %v1934 = vand.u32 %v193, 2139095040
        %v1935 = vshrl.u32 %v1934, 23
        %v1936 = vsub.s32 %v1935, 127
        %v1937 = vand.u32 2147483647, %v193
        %v1938 = vand.u32 %v1937, 8388607
        %v1939 = vor.u32 %v1938, 8388608
        %v1940 = vsub.s32 0, %v1939
        %v1941 = vadd.s32 %v1936, 1
        %vm1942 = vcmp.gt.s32.totalorder %v1941, 0
        %v1943 = vsel %vm1942, %v1941, 0
        %v1944 = vshrl.u32 %v1943, 5
        %v1945 = vand.u32 %v1943, 31
        %v1946 = vsub.s32 32, %v1945
        %v1947 = vshrl.u32 683565275, %v1946
        %v1948 = vshll.u32 683565275, %v1945
        %v1949 = vshrl.u32 2475754826, %v1946
        %v1950 = vor.u32 %v1948, %v1949
        %v1951 = vshll.u32 2475754826, %v1945
        %v1952 = vshrl.u32 2131351028, %v1946
        %v1953 = vor.u32 %v1951, %v1952
        %v1954 = vshll.u32 2131351028, %v1945
        %v1955 = vshrl.u32 2102212464, %v1946
        %v1956 = vor.u32 %v1954, %v1955
        %v1957 = vshll.u32 2102212464, %v1945
        %v1958 = vshrl.u32 920167782, %v1946
        %v1959 = vor.u32 %v1957, %v1958
        %v1960 = vshll.u32 920167782, %v1945
        %v1961 = vshrl.u32 1326507024, %v1946
        %v1962 = vor.u32 %v1960, %v1961
        %vm1963 = vcmp.lt.s32.totalorder %v1944, 1
        %vm1964 = vcmp.lt.s32.totalorder %v1944, 2
        %vm1965 = vcmp.lt.s32.totalorder %v1944, 3
        %vm1966 = vcmp.lt.s32.totalorder %v1944, 4
        %v1967 = vsel %vm1963, %v1947, %v1950
        %v1968 = vsel %vm1966, %v1956, 2102212464
        %v1969 = vsel %vm1965, %v1953, %v1968
        %v1970 = vsel %vm1964, %v1967, %v1969
        %v1971 = vsel %vm1963, %v1950, %v1953
        %v1972 = vsel %vm1966, %v1959, 920167782
        %v1973 = vsel %vm1965, %v1956, %v1972
        %v1974 = vsel %vm1964, %v1971, %v1973
        %v1975 = vsel %vm1963, %v1953, %v1956
        %v1976 = vsel %vm1966, %v1962, 1326507024
        %v1977 = vsel %vm1965, %v1959, %v1976
        %v1978 = vsel %vm1964, %v1975, %v1977
        %v1979 = vshll.u32 %v1939, 8
        %v1980 = vmul.u32.u64.compose %v1979, %v1978
        %v1981 = vextract.low.u32 %v1980
        %v1982 = vextract.high.u32 %v1980
        %v1983 = vmul.u32.u64.compose %v1979, %v1974
        %v1984 = vextract.low.u32 %v1983
        %v1985 = vextract.high.u32 %v1983
        %v1986 = vmul.u32 %v1979, %v1970
        %v1987 = vadd.s32 %v1982, %v1984
        %vm1988 = vc.u32 %v1982, %v1984
        %v1989 = vadd.s32 %v1985, 1
        %v1990 = vsel %vm1988, %v1989, %v1985
        %v1991 = vadd.s32 %v1986, %v1990
        %v1992 = vadd.s32 %v1991, 536870912
        %v1993 = vshrl.u32 %v1992, 30
        %v1994 = vshll.u32 %v1993, 30
        %v1995 = vsub.s32 %v1991, %v1994
        %vm1996 = vcmp.lt.s32.totalorder %v1995, 0
        %v1997 = vsub.s32 0, %v1995
        %v1998 = vsel %vm1996, %v1997, %v1995
        %v1999 = vclz %v1998
        %v2000 = vsub.s32 %v1999, 2
        %vm2001 = vcmp.gt.s32.totalorder 0, %v2000
        %v2002 = vsel %vm2001, 0, %v2000
        %v2003 = vsub.s32 32, %v2002
        %v2004 = vshll.u32 %v1995, %v2002
        %v2005 = vshrl.u32 %v1987, %v2003
        %v2006 = vor.u32 %v2004, %v2005
        %v2007 = vsub.s32 4294967266, %v2002
        %v2008 = vadd.s32 %v2007, 127
        %v2009 = vshll.u32 %v2008, 23
        %v2010 = vor.u32 4788187, %v2009
        %v2011 = vand.u32 2147483647, %v2010
        %v2013 = vcvt.s32.f32 %v2006
        %v2014 = vmul.f32 %v2013, %v2011
        %v2015 = vxor.u32 %v2014, 2147483648
        %v2016 = vsel %vm1933, %v2015, %v2014
        %v2017 = vsub.s32 4, %v1993
        %v2018 = vsel %vm1933, %v2017, %v1993
        %v2019 = vsel %vm1932, %v193, %v2016
        %v2020 = vsel %vm1932, 0, %v2018
        %v2021 = vcosq.f32.pop %v2019
        %v2022 = vsinq.f32.pop %v2019
        %vm2023 = vweird.f32 %v193
        %v2024 = vadd.s32 %v2020, 3
        %v2025 = vand.u32 %v2024, 3
        %vm2026 = vcmp.lt.s32.totalorder %v2025, 2
        %vm2027 = vcmp.eq.s32.totalorder %v2025, 0
        %v2028 = vxor.u32 %v2022, 2147483648
        %v2029 = vsel %vm2027, %v2021, %v2028
        %vm2030 = vcmp.eq.s32.totalorder %v2025, 2
        %v2031 = vxor.u32 %v2021, 2147483648
        %v2032 = vsel %vm2030, %v2031, %v2022
        %v2033 = vsel %vm2026, %v2029, %v2032
        %v2034 = vsel %vm2023, nan, %v2033
        %v2035 = vand.u32 2147483647, %v194
        %vm2036 = vcmp.le.f32.partialorder %v2035, 0.7853982
        %vm2037 = vcmp.lt.s32.totalorder %v194, 0
        %v2038 = vand.u32 %v194, 2139095040
        %v2039 = vshrl.u32 %v2038, 23
        %v2040 = vsub.s32 %v2039, 127
        %v2041 = vand.u32 2147483647, %v194
        %v2042 = vand.u32 %v2041, 8388607
        %v2043 = vor.u32 %v2042, 8388608
        %v2044 = vsub.s32 0, %v2043
        %v2045 = vadd.s32 %v2040, 1
        %vm2046 = vcmp.gt.s32.totalorder %v2045, 0
        %v2047 = vsel %vm2046, %v2045, 0
        %v2048 = vshrl.u32 %v2047, 5
        %v2049 = vand.u32 %v2047, 31
        %v2050 = vsub.s32 32, %v2049
        %v2051 = vshrl.u32 683565275, %v2050
        %v2052 = vshll.u32 683565275, %v2049
        %v2053 = vshrl.u32 2475754826, %v2050
        %v2054 = vor.u32 %v2052, %v2053
        %v2055 = vshll.u32 2475754826, %v2049
        %v2056 = vshrl.u32 2131351028, %v2050
        %v2057 = vor.u32 %v2055, %v2056
        %v2058 = vshll.u32 2131351028, %v2049
        %v2059 = vshrl.u32 2102212464, %v2050
        %v2060 = vor.u32 %v2058, %v2059
        %v2061 = vshll.u32 2102212464, %v2049
        %v2062 = vshrl.u32 920167782, %v2050
        %v2063 = vor.u32 %v2061, %v2062
        %v2064 = vshll.u32 920167782, %v2049
        %v2065 = vshrl.u32 1326507024, %v2050
        %v2066 = vor.u32 %v2064, %v2065
        %vm2067 = vcmp.lt.s32.totalorder %v2048, 1
        %vm2068 = vcmp.lt.s32.totalorder %v2048, 2
        %vm2069 = vcmp.lt.s32.totalorder %v2048, 3
        %vm2070 = vcmp.lt.s32.totalorder %v2048, 4
        %v2071 = vsel %vm2067, %v2051, %v2054
        %v2072 = vsel %vm2070, %v2060, 2102212464
        %v2073 = vsel %vm2069, %v2057, %v2072
        %v2074 = vsel %vm2068, %v2071, %v2073
        %v2075 = vsel %vm2067, %v2054, %v2057
        %v2076 = vsel %vm2070, %v2063, 920167782
        %v2077 = vsel %vm2069, %v2060, %v2076
        %v2078 = vsel %vm2068, %v2075, %v2077
        %v2079 = vsel %vm2067, %v2057, %v2060
        %v2080 = vsel %vm2070, %v2066, 1326507024
        %v2081 = vsel %vm2069, %v2063, %v2080
        %v2082 = vsel %vm2068, %v2079, %v2081
        %v2083 = vshll.u32 %v2043, 8
        %v2084 = vmul.u32.u64.compose %v2083, %v2082
        %v2085 = vextract.low.u32 %v2084
        %v2086 = vextract.high.u32 %v2084
        %v2087 = vmul.u32.u64.compose %v2083, %v2078
        %v2088 = vextract.low.u32 %v2087
        %v2089 = vextract.high.u32 %v2087
        %v2090 = vmul.u32 %v2083, %v2074
        %v2091 = vadd.s32 %v2086, %v2088
        %vm2092 = vc.u32 %v2086, %v2088
        %v2093 = vadd.s32 %v2089, 1
        %v2094 = vsel %vm2092, %v2093, %v2089
        %v2095 = vadd.s32 %v2090, %v2094
        %v2096 = vadd.s32 %v2095, 536870912
        %v2097 = vshrl.u32 %v2096, 30
        %v2098 = vshll.u32 %v2097, 30
        %v2099 = vsub.s32 %v2095, %v2098
        %vm2100 = vcmp.lt.s32.totalorder %v2099, 0
        %v2101 = vsub.s32 0, %v2099
        %v2102 = vsel %vm2100, %v2101, %v2099
        %v2103 = vclz %v2102
        %v2104 = vsub.s32 %v2103, 2
        %vm2105 = vcmp.gt.s32.totalorder 0, %v2104
        %v2106 = vsel %vm2105, 0, %v2104
        %v2107 = vsub.s32 32, %v2106
        %v2108 = vshll.u32 %v2099, %v2106
        %v2109 = vshrl.u32 %v2091, %v2107
        %v2110 = vor.u32 %v2108, %v2109
        %v2111 = vsub.s32 4294967266, %v2106
        %v2112 = vadd.s32 %v2111, 127
        %v2113 = vshll.u32 %v2112, 23
        %v2114 = vor.u32 4788187, %v2113
        %v2115 = vand.u32 2147483647, %v2114
        %v2117 = vcvt.s32.f32 %v2110
        %v2118 = vmul.f32 %v2117, %v2115
        %v2119 = vxor.u32 %v2118, 2147483648
        %v2120 = vsel %vm2037, %v2119, %v2118
        %v2121 = vsub.s32 4, %v2097
        %v2122 = vsel %vm2037, %v2121, %v2097
        %v2123 = vsel %vm2036, %v194, %v2120
        %v2124 = vsel %vm2036, 0, %v2122
        %v2125 = vcosq.f32.pop %v2123
        %v2126 = vsinq.f32.pop %v2123
        %vm2127 = vweird.f32 %v194
        %v2128 = vadd.s32 %v2124, 3
        %v2129 = vand.u32 %v2128, 3
        %vm2130 = vcmp.lt.s32.totalorder %v2129, 2
        %vm2131 = vcmp.eq.s32.totalorder %v2129, 0
        %v2132 = vxor.u32 %v2126, 2147483648
        %v2133 = vsel %vm2131, %v2125, %v2132
        %vm2134 = vcmp.eq.s32.totalorder %v2129, 2
        %v2135 = vxor.u32 %v2125, 2147483648
        %v2136 = vsel %vm2134, %v2135, %v2126
        %v2137 = vsel %vm2130, %v2133, %v2136
        %v2138 = vsel %vm2127, nan, %v2137
        %v2139 = vand.u32 2147483647, %v195
        %vm2140 = vcmp.le.f32.partialorder %v2139, 0.7853982
        %vm2141 = vcmp.lt.s32.totalorder %v195, 0
        %v2142 = vand.u32 %v195, 2139095040
        %v2143 = vshrl.u32 %v2142, 23
        %v2144 = vsub.s32 %v2143, 127
        %v2145 = vand.u32 2147483647, %v195
        %v2146 = vand.u32 %v2145, 8388607
        %v2147 = vor.u32 %v2146, 8388608
        %v2148 = vsub.s32 0, %v2147
        %v2149 = vadd.s32 %v2144, 1
        %vm2150 = vcmp.gt.s32.totalorder %v2149, 0
        %v2151 = vsel %vm2150, %v2149, 0
        %v2152 = vshrl.u32 %v2151, 5
        %v2153 = vand.u32 %v2151, 31
        %v2154 = vsub.s32 32, %v2153
        %v2155 = vshrl.u32 683565275, %v2154
        %v2156 = vshll.u32 683565275, %v2153
        %v2157 = vshrl.u32 2475754826, %v2154
        %v2158 = vor.u32 %v2156, %v2157
        %v2159 = vshll.u32 2475754826, %v2153
        %v2160 = vshrl.u32 2131351028, %v2154
        %v2161 = vor.u32 %v2159, %v2160
        %v2162 = vshll.u32 2131351028, %v2153
        %v2163 = vshrl.u32 2102212464, %v2154
        %v2164 = vor.u32 %v2162, %v2163
        %v2165 = vshll.u32 2102212464, %v2153
        %v2166 = vshrl.u32 920167782, %v2154
        %v2167 = vor.u32 %v2165, %v2166
        %v2168 = vshll.u32 920167782, %v2153
        %v2169 = vshrl.u32 1326507024, %v2154
        %v2170 = vor.u32 %v2168, %v2169
        %vm2171 = vcmp.lt.s32.totalorder %v2152, 1
        %vm2172 = vcmp.lt.s32.totalorder %v2152, 2
        %vm2173 = vcmp.lt.s32.totalorder %v2152, 3
        %vm2174 = vcmp.lt.s32.totalorder %v2152, 4
        %v2175 = vsel %vm2171, %v2155, %v2158
        %v2176 = vsel %vm2174, %v2164, 2102212464
        %v2177 = vsel %vm2173, %v2161, %v2176
        %v2178 = vsel %vm2172, %v2175, %v2177
        %v2179 = vsel %vm2171, %v2158, %v2161
        %v2180 = vsel %vm2174, %v2167, 920167782
        %v2181 = vsel %vm2173, %v2164, %v2180
        %v2182 = vsel %vm2172, %v2179, %v2181
        %v2183 = vsel %vm2171, %v2161, %v2164
        %v2184 = vsel %vm2174, %v2170, 1326507024
        %v2185 = vsel %vm2173, %v2167, %v2184
        %v2186 = vsel %vm2172, %v2183, %v2185
        %v2187 = vshll.u32 %v2147, 8
        %v2188 = vmul.u32.u64.compose %v2187, %v2186
        %v2189 = vextract.low.u32 %v2188
        %v2190 = vextract.high.u32 %v2188
        %v2191 = vmul.u32.u64.compose %v2187, %v2182
        %v2192 = vextract.low.u32 %v2191
        %v2193 = vextract.high.u32 %v2191
        %v2194 = vmul.u32 %v2187, %v2178
        %v2195 = vadd.s32 %v2190, %v2192
        %vm2196 = vc.u32 %v2190, %v2192
        %v2197 = vadd.s32 %v2193, 1
        %v2198 = vsel %vm2196, %v2197, %v2193
        %v2199 = vadd.s32 %v2194, %v2198
        %v2200 = vadd.s32 %v2199, 536870912
        %v2201 = vshrl.u32 %v2200, 30
        %v2202 = vshll.u32 %v2201, 30
        %v2203 = vsub.s32 %v2199, %v2202
        %vm2204 = vcmp.lt.s32.totalorder %v2203, 0
        %v2205 = vsub.s32 0, %v2203
        %v2206 = vsel %vm2204, %v2205, %v2203
        %v2207 = vclz %v2206
        %v2208 = vsub.s32 %v2207, 2
        %vm2209 = vcmp.gt.s32.totalorder 0, %v2208
        %v2210 = vsel %vm2209, 0, %v2208
        %v2211 = vsub.s32 32, %v2210
        %v2212 = vshll.u32 %v2203, %v2210
        %v2213 = vshrl.u32 %v2195, %v2211
        %v2214 = vor.u32 %v2212, %v2213
        %v2215 = vsub.s32 4294967266, %v2210
        %v2216 = vadd.s32 %v2215, 127
        %v2217 = vshll.u32 %v2216, 23
        %v2218 = vor.u32 4788187, %v2217
        %v2219 = vand.u32 2147483647, %v2218
        %v2221 = vcvt.s32.f32 %v2214
        %v2222 = vmul.f32 %v2221, %v2219
        %v2223 = vxor.u32 %v2222, 2147483648
        %v2224 = vsel %vm2141, %v2223, %v2222
        %v2225 = vsub.s32 4, %v2201
        %v2226 = vsel %vm2141, %v2225, %v2201
        %v2227 = vsel %vm2140, %v195, %v2224
        %v2228 = vsel %vm2140, 0, %v2226
        %v2229 = vcosq.f32.pop %v2227
        %v2230 = vsinq.f32.pop %v2227
        %vm2231 = vweird.f32 %v195
        %v2232 = vadd.s32 %v2228, 3
        %v2233 = vand.u32 %v2232, 3
        %vm2234 = vcmp.lt.s32.totalorder %v2233, 2
        %vm2235 = vcmp.eq.s32.totalorder %v2233, 0
        %v2236 = vxor.u32 %v2230, 2147483648
        %v2237 = vsel %vm2235, %v2229, %v2236
        %vm2238 = vcmp.eq.s32.totalorder %v2233, 2
        %v2239 = vxor.u32 %v2229, 2147483648
        %v2240 = vsel %vm2238, %v2239, %v2230
        %v2241 = vsel %vm2234, %v2237, %v2240
        %v2242 = vsel %vm2231, nan, %v2241
        %v2243 = vand.u32 2147483647, %v196
        %vm2244 = vcmp.le.f32.partialorder %v2243, 0.7853982
        %vm2245 = vcmp.lt.s32.totalorder %v196, 0
        %v2246 = vand.u32 %v196, 2139095040
        %v2247 = vshrl.u32 %v2246, 23
        %v2248 = vsub.s32 %v2247, 127
        %v2249 = vand.u32 2147483647, %v196
        %v2250 = vand.u32 %v2249, 8388607
        %v2251 = vor.u32 %v2250, 8388608
        %v2252 = vsub.s32 0, %v2251
        %v2253 = vadd.s32 %v2248, 1
        %vm2254 = vcmp.gt.s32.totalorder %v2253, 0
        %v2255 = vsel %vm2254, %v2253, 0
        %v2256 = vshrl.u32 %v2255, 5
        %v2257 = vand.u32 %v2255, 31
        %v2258 = vsub.s32 32, %v2257
        %v2259 = vshrl.u32 683565275, %v2258
        %v2260 = vshll.u32 683565275, %v2257
        %v2261 = vshrl.u32 2475754826, %v2258
        %v2262 = vor.u32 %v2260, %v2261
        %v2263 = vshll.u32 2475754826, %v2257
        %v2264 = vshrl.u32 2131351028, %v2258
        %v2265 = vor.u32 %v2263, %v2264
        %v2266 = vshll.u32 2131351028, %v2257
        %v2267 = vshrl.u32 2102212464, %v2258
        %v2268 = vor.u32 %v2266, %v2267
        %v2269 = vshll.u32 2102212464, %v2257
        %v2270 = vshrl.u32 920167782, %v2258
        %v2271 = vor.u32 %v2269, %v2270
        %v2272 = vshll.u32 920167782, %v2257
        %v2273 = vshrl.u32 1326507024, %v2258
        %v2274 = vor.u32 %v2272, %v2273
        %vm2275 = vcmp.lt.s32.totalorder %v2256, 1
        %vm2276 = vcmp.lt.s32.totalorder %v2256, 2
        %vm2277 = vcmp.lt.s32.totalorder %v2256, 3
        %vm2278 = vcmp.lt.s32.totalorder %v2256, 4
        %v2279 = vsel %vm2275, %v2259, %v2262
        %v2280 = vsel %vm2278, %v2268, 2102212464
        %v2281 = vsel %vm2277, %v2265, %v2280
        %v2282 = vsel %vm2276, %v2279, %v2281
        %v2283 = vsel %vm2275, %v2262, %v2265
        %v2284 = vsel %vm2278, %v2271, 920167782
        %v2285 = vsel %vm2277, %v2268, %v2284
        %v2286 = vsel %vm2276, %v2283, %v2285
        %v2287 = vsel %vm2275, %v2265, %v2268
        %v2288 = vsel %vm2278, %v2274, 1326507024
        %v2289 = vsel %vm2277, %v2271, %v2288
        %v2290 = vsel %vm2276, %v2287, %v2289
        %v2291 = vshll.u32 %v2251, 8
        %v2292 = vmul.u32.u64.compose %v2291, %v2290
        %v2293 = vextract.low.u32 %v2292
        %v2294 = vextract.high.u32 %v2292
        %v2295 = vmul.u32.u64.compose %v2291, %v2286
        %v2296 = vextract.low.u32 %v2295
        %v2297 = vextract.high.u32 %v2295
        %v2298 = vmul.u32 %v2291, %v2282
        %v2299 = vadd.s32 %v2294, %v2296
        %vm2300 = vc.u32 %v2294, %v2296
        %v2301 = vadd.s32 %v2297, 1
        %v2302 = vsel %vm2300, %v2301, %v2297
        %v2303 = vadd.s32 %v2298, %v2302
        %v2304 = vadd.s32 %v2303, 536870912
        %v2305 = vshrl.u32 %v2304, 30
        %v2306 = vshll.u32 %v2305, 30
        %v2307 = vsub.s32 %v2303, %v2306
        %vm2308 = vcmp.lt.s32.totalorder %v2307, 0
        %v2309 = vsub.s32 0, %v2307
        %v2310 = vsel %vm2308, %v2309, %v2307
        %v2311 = vclz %v2310
        %v2312 = vsub.s32 %v2311, 2
        %vm2313 = vcmp.gt.s32.totalorder 0, %v2312
        %v2314 = vsel %vm2313, 0, %v2312
        %v2315 = vsub.s32 32, %v2314
        %v2316 = vshll.u32 %v2307, %v2314
        %v2317 = vshrl.u32 %v2299, %v2315
        %v2318 = vor.u32 %v2316, %v2317
        %v2319 = vsub.s32 4294967266, %v2314
        %v2320 = vadd.s32 %v2319, 127
        %v2321 = vshll.u32 %v2320, 23
        %v2322 = vor.u32 4788187, %v2321
        %v2323 = vand.u32 2147483647, %v2322
        %v2325 = vcvt.s32.f32 %v2318
        %v2326 = vmul.f32 %v2325, %v2323
        %v2327 = vxor.u32 %v2326, 2147483648
        %v2328 = vsel %vm2245, %v2327, %v2326
        %v2329 = vsub.s32 4, %v2305
        %v2330 = vsel %vm2245, %v2329, %v2305
        %v2331 = vsel %vm2244, %v196, %v2328
        %v2332 = vsel %vm2244, 0, %v2330
        %v2333 = vcosq.f32.pop %v2331
        %v2334 = vsinq.f32.pop %v2331
        %vm2335 = vweird.f32 %v196
        %v2336 = vadd.s32 %v2332, 3
        %v2337 = vand.u32 %v2336, 3
        %vm2338 = vcmp.lt.s32.totalorder %v2337, 2
        %vm2339 = vcmp.eq.s32.totalorder %v2337, 0
        %v2340 = vxor.u32 %v2334, 2147483648
        %v2341 = vsel %vm2339, %v2333, %v2340
        %vm2342 = vcmp.eq.s32.totalorder %v2337, 2
        %v2343 = vxor.u32 %v2333, 2147483648
        %v2344 = vsel %vm2342, %v2343, %v2334
        %v2345 = vsel %vm2338, %v2341, %v2344
        %v2346 = vsel %vm2335, nan, %v2345
        %v2347 = vand.u32 2147483647, %v197
        %vm2348 = vcmp.le.f32.partialorder %v2347, 0.7853982
        %vm2349 = vcmp.lt.s32.totalorder %v197, 0
        %v2350 = vand.u32 %v197, 2139095040
        %v2351 = vshrl.u32 %v2350, 23
        %v2352 = vsub.s32 %v2351, 127
        %v2353 = vand.u32 2147483647, %v197
        %v2354 = vand.u32 %v2353, 8388607
        %v2355 = vor.u32 %v2354, 8388608
        %v2356 = vsub.s32 0, %v2355
        %v2357 = vadd.s32 %v2352, 1
        %vm2358 = vcmp.gt.s32.totalorder %v2357, 0
        %v2359 = vsel %vm2358, %v2357, 0
        %v2360 = vshrl.u32 %v2359, 5
        %v2361 = vand.u32 %v2359, 31
        %v2362 = vsub.s32 32, %v2361
        %v2363 = vshrl.u32 683565275, %v2362
        %v2364 = vshll.u32 683565275, %v2361
        %v2365 = vshrl.u32 2475754826, %v2362
        %v2366 = vor.u32 %v2364, %v2365
        %v2367 = vshll.u32 2475754826, %v2361
        %v2368 = vshrl.u32 2131351028, %v2362
        %v2369 = vor.u32 %v2367, %v2368
        %v2370 = vshll.u32 2131351028, %v2361
        %v2371 = vshrl.u32 2102212464, %v2362
        %v2372 = vor.u32 %v2370, %v2371
        %v2373 = vshll.u32 2102212464, %v2361
        %v2374 = vshrl.u32 920167782, %v2362
        %v2375 = vor.u32 %v2373, %v2374
        %v2376 = vshll.u32 920167782, %v2361
        %v2377 = vshrl.u32 1326507024, %v2362
        %v2378 = vor.u32 %v2376, %v2377
        %vm2379 = vcmp.lt.s32.totalorder %v2360, 1
        %vm2380 = vcmp.lt.s32.totalorder %v2360, 2
        %vm2381 = vcmp.lt.s32.totalorder %v2360, 3
        %vm2382 = vcmp.lt.s32.totalorder %v2360, 4
        %v2383 = vsel %vm2379, %v2363, %v2366
        %v2384 = vsel %vm2382, %v2372, 2102212464
        %v2385 = vsel %vm2381, %v2369, %v2384
        %v2386 = vsel %vm2380, %v2383, %v2385
        %v2387 = vsel %vm2379, %v2366, %v2369
        %v2388 = vsel %vm2382, %v2375, 920167782
        %v2389 = vsel %vm2381, %v2372, %v2388
        %v2390 = vsel %vm2380, %v2387, %v2389
        %v2391 = vsel %vm2379, %v2369, %v2372
        %v2392 = vsel %vm2382, %v2378, 1326507024
        %v2393 = vsel %vm2381, %v2375, %v2392
        %v2394 = vsel %vm2380, %v2391, %v2393
        %v2395 = vshll.u32 %v2355, 8
        %v2396 = vmul.u32.u64.compose %v2395, %v2394
        %v2397 = vextract.low.u32 %v2396
        %v2398 = vextract.high.u32 %v2396
        %v2399 = vmul.u32.u64.compose %v2395, %v2390
        %v2400 = vextract.low.u32 %v2399
        %v2401 = vextract.high.u32 %v2399
        %v2402 = vmul.u32 %v2395, %v2386
        %v2403 = vadd.s32 %v2398, %v2400
        %vm2404 = vc.u32 %v2398, %v2400
        %v2405 = vadd.s32 %v2401, 1
        %v2406 = vsel %vm2404, %v2405, %v2401
        %v2407 = vadd.s32 %v2402, %v2406
        %v2408 = vadd.s32 %v2407, 536870912
        %v2409 = vshrl.u32 %v2408, 30
        %v2410 = vshll.u32 %v2409, 30
        %v2411 = vsub.s32 %v2407, %v2410
        %vm2412 = vcmp.lt.s32.totalorder %v2411, 0
        %v2413 = vsub.s32 0, %v2411
        %v2414 = vsel %vm2412, %v2413, %v2411
        %v2415 = vclz %v2414
        %v2416 = vsub.s32 %v2415, 2
        %vm2417 = vcmp.gt.s32.totalorder 0, %v2416
        %v2418 = vsel %vm2417, 0, %v2416
        %v2419 = vsub.s32 32, %v2418
        %v2420 = vshll.u32 %v2411, %v2418
        %v2421 = vshrl.u32 %v2403, %v2419
        %v2422 = vor.u32 %v2420, %v2421
        %v2423 = vsub.s32 4294967266, %v2418
        %v2424 = vadd.s32 %v2423, 127
        %v2425 = vshll.u32 %v2424, 23
        %v2426 = vor.u32 4788187, %v2425
        %v2427 = vand.u32 2147483647, %v2426
        %v2429 = vcvt.s32.f32 %v2422
        %v2430 = vmul.f32 %v2429, %v2427
        %v2431 = vxor.u32 %v2430, 2147483648
        %v2432 = vsel %vm2349, %v2431, %v2430
        %v2433 = vsub.s32 4, %v2409
        %v2434 = vsel %vm2349, %v2433, %v2409
        %v2435 = vsel %vm2348, %v197, %v2432
        %v2436 = vsel %vm2348, 0, %v2434
        %v2437 = vcosq.f32.pop %v2435
        %v2438 = vsinq.f32.pop %v2435
        %vm2439 = vweird.f32 %v197
        %v2440 = vadd.s32 %v2436, 3
        %v2441 = vand.u32 %v2440, 3
        %vm2442 = vcmp.lt.s32.totalorder %v2441, 2
        %vm2443 = vcmp.eq.s32.totalorder %v2441, 0
        %v2444 = vxor.u32 %v2438, 2147483648
        %v2445 = vsel %vm2443, %v2437, %v2444
        %vm2446 = vcmp.eq.s32.totalorder %v2441, 2
        %v2447 = vxor.u32 %v2437, 2147483648
        %v2448 = vsel %vm2446, %v2447, %v2438
        %v2449 = vsel %vm2442, %v2445, %v2448
        %v2450 = vsel %vm2439, nan, %v2449
        %v2451 = vand.u32 2147483647, %v198
        %vm2452 = vcmp.le.f32.partialorder %v2451, 0.7853982
        %vm2453 = vcmp.lt.s32.totalorder %v198, 0
        %v2454 = vand.u32 %v198, 2139095040
        %v2455 = vshrl.u32 %v2454, 23
        %v2456 = vsub.s32 %v2455, 127
        %v2457 = vand.u32 2147483647, %v198
        %v2458 = vand.u32 %v2457, 8388607
        %v2459 = vor.u32 %v2458, 8388608
        %v2460 = vsub.s32 0, %v2459
        %v2461 = vadd.s32 %v2456, 1
        %vm2462 = vcmp.gt.s32.totalorder %v2461, 0
        %v2463 = vsel %vm2462, %v2461, 0
        %v2464 = vshrl.u32 %v2463, 5
        %v2465 = vand.u32 %v2463, 31
        %v2466 = vsub.s32 32, %v2465
        %v2467 = vshrl.u32 683565275, %v2466
        %v2468 = vshll.u32 683565275, %v2465
        %v2469 = vshrl.u32 2475754826, %v2466
        %v2470 = vor.u32 %v2468, %v2469
        %v2471 = vshll.u32 2475754826, %v2465
        %v2472 = vshrl.u32 2131351028, %v2466
        %v2473 = vor.u32 %v2471, %v2472
        %v2474 = vshll.u32 2131351028, %v2465
        %v2475 = vshrl.u32 2102212464, %v2466
        %v2476 = vor.u32 %v2474, %v2475
        %v2477 = vshll.u32 2102212464, %v2465
        %v2478 = vshrl.u32 920167782, %v2466
        %v2479 = vor.u32 %v2477, %v2478
        %v2480 = vshll.u32 920167782, %v2465
        %v2481 = vshrl.u32 1326507024, %v2466
        %v2482 = vor.u32 %v2480, %v2481
        %vm2483 = vcmp.lt.s32.totalorder %v2464, 1
        %vm2484 = vcmp.lt.s32.totalorder %v2464, 2
        %vm2485 = vcmp.lt.s32.totalorder %v2464, 3
        %vm2486 = vcmp.lt.s32.totalorder %v2464, 4
        %v2487 = vsel %vm2483, %v2467, %v2470
        %v2488 = vsel %vm2486, %v2476, 2102212464
        %v2489 = vsel %vm2485, %v2473, %v2488
        %v2490 = vsel %vm2484, %v2487, %v2489
        %v2491 = vsel %vm2483, %v2470, %v2473
        %v2492 = vsel %vm2486, %v2479, 920167782
        %v2493 = vsel %vm2485, %v2476, %v2492
        %v2494 = vsel %vm2484, %v2491, %v2493
        %v2495 = vsel %vm2483, %v2473, %v2476
        %v2496 = vsel %vm2486, %v2482, 1326507024
        %v2497 = vsel %vm2485, %v2479, %v2496
        %v2498 = vsel %vm2484, %v2495, %v2497
        %v2499 = vshll.u32 %v2459, 8
        %v2500 = vmul.u32.u64.compose %v2499, %v2498
        %v2501 = vextract.low.u32 %v2500
        %v2502 = vextract.high.u32 %v2500
        %v2503 = vmul.u32.u64.compose %v2499, %v2494
        %v2504 = vextract.low.u32 %v2503
        %v2505 = vextract.high.u32 %v2503
        %v2506 = vmul.u32 %v2499, %v2490
        %v2507 = vadd.s32 %v2502, %v2504
        %vm2508 = vc.u32 %v2502, %v2504
        %v2509 = vadd.s32 %v2505, 1
        %v2510 = vsel %vm2508, %v2509, %v2505
        %v2511 = vadd.s32 %v2506, %v2510
        %v2512 = vadd.s32 %v2511, 536870912
        %v2513 = vshrl.u32 %v2512, 30
        %v2514 = vshll.u32 %v2513, 30
        %v2515 = vsub.s32 %v2511, %v2514
        %vm2516 = vcmp.lt.s32.totalorder %v2515, 0
        %v2517 = vsub.s32 0, %v2515
        %v2518 = vsel %vm2516, %v2517, %v2515
        %v2519 = vclz %v2518
        %v2520 = vsub.s32 %v2519, 2
        %vm2521 = vcmp.gt.s32.totalorder 0, %v2520
        %v2522 = vsel %vm2521, 0, %v2520
        %v2523 = vsub.s32 32, %v2522
        %v2524 = vshll.u32 %v2515, %v2522
        %v2525 = vshrl.u32 %v2507, %v2523
        %v2526 = vor.u32 %v2524, %v2525
        %v2527 = vsub.s32 4294967266, %v2522
        %v2528 = vadd.s32 %v2527, 127
        %v2529 = vshll.u32 %v2528, 23
        %v2530 = vor.u32 4788187, %v2529
        %v2531 = vand.u32 2147483647, %v2530
        %v2533 = vcvt.s32.f32 %v2526
        %v2534 = vmul.f32 %v2533, %v2531
        %v2535 = vxor.u32 %v2534, 2147483648
        %v2536 = vsel %vm2453, %v2535, %v2534
        %v2537 = vsub.s32 4, %v2513
        %v2538 = vsel %vm2453, %v2537, %v2513
        %v2539 = vsel %vm2452, %v198, %v2536
        %v2540 = vsel %vm2452, 0, %v2538
        %v2541 = vcosq.f32.pop %v2539
        %v2542 = vsinq.f32.pop %v2539
        %vm2543 = vweird.f32 %v198
        %v2544 = vadd.s32 %v2540, 3
        %v2545 = vand.u32 %v2544, 3
        %vm2546 = vcmp.lt.s32.totalorder %v2545, 2
        %vm2547 = vcmp.eq.s32.totalorder %v2545, 0
        %v2548 = vxor.u32 %v2542, 2147483648
        %v2549 = vsel %vm2547, %v2541, %v2548
        %vm2550 = vcmp.eq.s32.totalorder %v2545, 2
        %v2551 = vxor.u32 %v2541, 2147483648
        %v2552 = vsel %vm2550, %v2551, %v2542
        %v2553 = vsel %vm2546, %v2549, %v2552
        %v2554 = vsel %vm2543, nan, %v2553
        %v2555 = vand.u32 2147483647, %v199
        %vm2556 = vcmp.le.f32.partialorder %v2555, 0.7853982
        %vm2557 = vcmp.lt.s32.totalorder %v199, 0
        %v2558 = vand.u32 %v199, 2139095040
        %v2559 = vshrl.u32 %v2558, 23
        %v2560 = vsub.s32 %v2559, 127
        %v2561 = vand.u32 2147483647, %v199
        %v2562 = vand.u32 %v2561, 8388607
        %v2563 = vor.u32 %v2562, 8388608
        %v2564 = vsub.s32 0, %v2563
        %v2565 = vadd.s32 %v2560, 1
        %vm2566 = vcmp.gt.s32.totalorder %v2565, 0
        %v2567 = vsel %vm2566, %v2565, 0
        %v2568 = vshrl.u32 %v2567, 5
        %v2569 = vand.u32 %v2567, 31
        %v2570 = vsub.s32 32, %v2569
        %v2571 = vshrl.u32 683565275, %v2570
        %v2572 = vshll.u32 683565275, %v2569
        %v2573 = vshrl.u32 2475754826, %v2570
        %v2574 = vor.u32 %v2572, %v2573
        %v2575 = vshll.u32 2475754826, %v2569
        %v2576 = vshrl.u32 2131351028, %v2570
        %v2577 = vor.u32 %v2575, %v2576
        %v2578 = vshll.u32 2131351028, %v2569
        %v2579 = vshrl.u32 2102212464, %v2570
        %v2580 = vor.u32 %v2578, %v2579
        %v2581 = vshll.u32 2102212464, %v2569
        %v2582 = vshrl.u32 920167782, %v2570
        %v2583 = vor.u32 %v2581, %v2582
        %v2584 = vshll.u32 920167782, %v2569
        %v2585 = vshrl.u32 1326507024, %v2570
        %v2586 = vor.u32 %v2584, %v2585
        %vm2587 = vcmp.lt.s32.totalorder %v2568, 1
        %vm2588 = vcmp.lt.s32.totalorder %v2568, 2
        %vm2589 = vcmp.lt.s32.totalorder %v2568, 3
        %vm2590 = vcmp.lt.s32.totalorder %v2568, 4
        %v2591 = vsel %vm2587, %v2571, %v2574
        %v2592 = vsel %vm2590, %v2580, 2102212464
        %v2593 = vsel %vm2589, %v2577, %v2592
        %v2594 = vsel %vm2588, %v2591, %v2593
        %v2595 = vsel %vm2587, %v2574, %v2577
        %v2596 = vsel %vm2590, %v2583, 920167782
        %v2597 = vsel %vm2589, %v2580, %v2596
        %v2598 = vsel %vm2588, %v2595, %v2597
        %v2599 = vsel %vm2587, %v2577, %v2580
        %v2600 = vsel %vm2590, %v2586, 1326507024
        %v2601 = vsel %vm2589, %v2583, %v2600
        %v2602 = vsel %vm2588, %v2599, %v2601
        %v2603 = vshll.u32 %v2563, 8
        %v2604 = vmul.u32.u64.compose %v2603, %v2602
        %v2605 = vextract.low.u32 %v2604
        %v2606 = vextract.high.u32 %v2604
        %v2607 = vmul.u32.u64.compose %v2603, %v2598
        %v2608 = vextract.low.u32 %v2607
        %v2609 = vextract.high.u32 %v2607
        %v2610 = vmul.u32 %v2603, %v2594
        %v2611 = vadd.s32 %v2606, %v2608
        %vm2612 = vc.u32 %v2606, %v2608
        %v2613 = vadd.s32 %v2609, 1
        %v2614 = vsel %vm2612, %v2613, %v2609
        %v2615 = vadd.s32 %v2610, %v2614
        %v2616 = vadd.s32 %v2615, 536870912
        %v2617 = vshrl.u32 %v2616, 30
        %v2618 = vshll.u32 %v2617, 30
        %v2619 = vsub.s32 %v2615, %v2618
        %vm2620 = vcmp.lt.s32.totalorder %v2619, 0
        %v2621 = vsub.s32 0, %v2619
        %v2622 = vsel %vm2620, %v2621, %v2619
        %v2623 = vclz %v2622
        %v2624 = vsub.s32 %v2623, 2
        %vm2625 = vcmp.gt.s32.totalorder 0, %v2624
        %v2626 = vsel %vm2625, 0, %v2624
        %v2627 = vsub.s32 32, %v2626
        %v2628 = vshll.u32 %v2619, %v2626
        %v2629 = vshrl.u32 %v2611, %v2627
        %v2630 = vor.u32 %v2628, %v2629
        %v2631 = vsub.s32 4294967266, %v2626
        %v2632 = vadd.s32 %v2631, 127
        %v2633 = vshll.u32 %v2632, 23
        %v2634 = vor.u32 4788187, %v2633
        %v2635 = vand.u32 2147483647, %v2634
        %v2637 = vcvt.s32.f32 %v2630
        %v2638 = vmul.f32 %v2637, %v2635
        %v2639 = vxor.u32 %v2638, 2147483648
        %v2640 = vsel %vm2557, %v2639, %v2638
        %v2641 = vsub.s32 4, %v2617
        %v2642 = vsel %vm2557, %v2641, %v2617
        %v2643 = vsel %vm2556, %v199, %v2640
        %v2644 = vsel %vm2556, 0, %v2642
        %v2645 = vcosq.f32.pop %v2643
        %v2646 = vsinq.f32.pop %v2643
        %vm2647 = vweird.f32 %v199
        %v2648 = vadd.s32 %v2644, 3
        %v2649 = vand.u32 %v2648, 3
        %vm2650 = vcmp.lt.s32.totalorder %v2649, 2
        %vm2651 = vcmp.eq.s32.totalorder %v2649, 0
        %v2652 = vxor.u32 %v2646, 2147483648
        %v2653 = vsel %vm2651, %v2645, %v2652
        %vm2654 = vcmp.eq.s32.totalorder %v2649, 2
        %v2655 = vxor.u32 %v2645, 2147483648
        %v2656 = vsel %vm2654, %v2655, %v2646
        %v2657 = vsel %vm2650, %v2653, %v2656
        %v2658 = vsel %vm2647, nan, %v2657
        %v2659 = vand.u32 2147483647, %v200
        %vm2660 = vcmp.le.f32.partialorder %v2659, 0.7853982
        %vm2661 = vcmp.lt.s32.totalorder %v200, 0
        %v2662 = vand.u32 %v200, 2139095040
        %v2663 = vshrl.u32 %v2662, 23
        %v2664 = vsub.s32 %v2663, 127
        %v2665 = vand.u32 2147483647, %v200
        %v2666 = vand.u32 %v2665, 8388607
        %v2667 = vor.u32 %v2666, 8388608
        %v2668 = vsub.s32 0, %v2667
        %v2669 = vadd.s32 %v2664, 1
        %vm2670 = vcmp.gt.s32.totalorder %v2669, 0
        %v2671 = vsel %vm2670, %v2669, 0
        %v2672 = vshrl.u32 %v2671, 5
        %v2673 = vand.u32 %v2671, 31
        %v2674 = vsub.s32 32, %v2673
        %v2675 = vshrl.u32 683565275, %v2674
        %v2676 = vshll.u32 683565275, %v2673
        %v2677 = vshrl.u32 2475754826, %v2674
        %v2678 = vor.u32 %v2676, %v2677
        %v2679 = vshll.u32 2475754826, %v2673
        %v2680 = vshrl.u32 2131351028, %v2674
        %v2681 = vor.u32 %v2679, %v2680
        %v2682 = vshll.u32 2131351028, %v2673
        %v2683 = vshrl.u32 2102212464, %v2674
        %v2684 = vor.u32 %v2682, %v2683
        %v2685 = vshll.u32 2102212464, %v2673
        %v2686 = vshrl.u32 920167782, %v2674
        %v2687 = vor.u32 %v2685, %v2686
        %v2688 = vshll.u32 920167782, %v2673
        %v2689 = vshrl.u32 1326507024, %v2674
        %v2690 = vor.u32 %v2688, %v2689
        %vm2691 = vcmp.lt.s32.totalorder %v2672, 1
        %vm2692 = vcmp.lt.s32.totalorder %v2672, 2
        %vm2693 = vcmp.lt.s32.totalorder %v2672, 3
        %vm2694 = vcmp.lt.s32.totalorder %v2672, 4
        %v2695 = vsel %vm2691, %v2675, %v2678
        %v2696 = vsel %vm2694, %v2684, 2102212464
        %v2697 = vsel %vm2693, %v2681, %v2696
        %v2698 = vsel %vm2692, %v2695, %v2697
        %v2699 = vsel %vm2691, %v2678, %v2681
        %v2700 = vsel %vm2694, %v2687, 920167782
        %v2701 = vsel %vm2693, %v2684, %v2700
        %v2702 = vsel %vm2692, %v2699, %v2701
        %v2703 = vsel %vm2691, %v2681, %v2684
        %v2704 = vsel %vm2694, %v2690, 1326507024
        %v2705 = vsel %vm2693, %v2687, %v2704
        %v2706 = vsel %vm2692, %v2703, %v2705
        %v2707 = vshll.u32 %v2667, 8
        %v2708 = vmul.u32.u64.compose %v2707, %v2706
        %v2709 = vextract.low.u32 %v2708
        %v2710 = vextract.high.u32 %v2708
        %v2711 = vmul.u32.u64.compose %v2707, %v2702
        %v2712 = vextract.low.u32 %v2711
        %v2713 = vextract.high.u32 %v2711
        %v2714 = vmul.u32 %v2707, %v2698
        %v2715 = vadd.s32 %v2710, %v2712
        %vm2716 = vc.u32 %v2710, %v2712
        %v2717 = vadd.s32 %v2713, 1
        %v2718 = vsel %vm2716, %v2717, %v2713
        %v2719 = vadd.s32 %v2714, %v2718
        %v2720 = vadd.s32 %v2719, 536870912
        %v2721 = vshrl.u32 %v2720, 30
        %v2722 = vshll.u32 %v2721, 30
        %v2723 = vsub.s32 %v2719, %v2722
        %vm2724 = vcmp.lt.s32.totalorder %v2723, 0
        %v2725 = vsub.s32 0, %v2723
        %v2726 = vsel %vm2724, %v2725, %v2723
        %v2727 = vclz %v2726
        %v2728 = vsub.s32 %v2727, 2
        %vm2729 = vcmp.gt.s32.totalorder 0, %v2728
        %v2730 = vsel %vm2729, 0, %v2728
        %v2731 = vsub.s32 32, %v2730
        %v2732 = vshll.u32 %v2723, %v2730
        %v2733 = vshrl.u32 %v2715, %v2731
        %v2734 = vor.u32 %v2732, %v2733
        %v2735 = vsub.s32 4294967266, %v2730
        %v2736 = vadd.s32 %v2735, 127
        %v2737 = vshll.u32 %v2736, 23
        %v2738 = vor.u32 4788187, %v2737
        %v2739 = vand.u32 2147483647, %v2738
        %v2741 = vcvt.s32.f32 %v2734
        %v2742 = vmul.f32 %v2741, %v2739
        %v2743 = vxor.u32 %v2742, 2147483648
        %v2744 = vsel %vm2661, %v2743, %v2742
        %v2745 = vsub.s32 4, %v2721
        %v2746 = vsel %vm2661, %v2745, %v2721
        %v2747 = vsel %vm2660, %v200, %v2744
        %v2748 = vsel %vm2660, 0, %v2746
        %v2749 = vcosq.f32.pop %v2747
        %v2750 = vsinq.f32.pop %v2747
        %vm2751 = vweird.f32 %v200
        %v2752 = vadd.s32 %v2748, 3
        %v2753 = vand.u32 %v2752, 3
        %vm2754 = vcmp.lt.s32.totalorder %v2753, 2
        %vm2755 = vcmp.eq.s32.totalorder %v2753, 0
        %v2756 = vxor.u32 %v2750, 2147483648
        %v2757 = vsel %vm2755, %v2749, %v2756
        %vm2758 = vcmp.eq.s32.totalorder %v2753, 2
        %v2759 = vxor.u32 %v2749, 2147483648
        %v2760 = vsel %vm2758, %v2759, %v2750
        %v2761 = vsel %vm2754, %v2757, %v2760
        %v2762 = vsel %vm2751, nan, %v2761
        %v2763 = vand.u32 2147483647, %v201
        %vm2764 = vcmp.le.f32.partialorder %v2763, 0.7853982
        %vm2765 = vcmp.lt.s32.totalorder %v201, 0
        %v2766 = vand.u32 %v201, 2139095040
        %v2767 = vshrl.u32 %v2766, 23
        %v2768 = vsub.s32 %v2767, 127
        %v2769 = vand.u32 2147483647, %v201
        %v2770 = vand.u32 %v2769, 8388607
        %v2771 = vor.u32 %v2770, 8388608
        %v2772 = vsub.s32 0, %v2771
        %v2773 = vadd.s32 %v2768, 1
        %vm2774 = vcmp.gt.s32.totalorder %v2773, 0
        %v2775 = vsel %vm2774, %v2773, 0
        %v2776 = vshrl.u32 %v2775, 5
        %v2777 = vand.u32 %v2775, 31
        %v2778 = vsub.s32 32, %v2777
        %v2779 = vshrl.u32 683565275, %v2778
        %v2780 = vshll.u32 683565275, %v2777
        %v2781 = vshrl.u32 2475754826, %v2778
        %v2782 = vor.u32 %v2780, %v2781
        %v2783 = vshll.u32 2475754826, %v2777
        %v2784 = vshrl.u32 2131351028, %v2778
        %v2785 = vor.u32 %v2783, %v2784
        %v2786 = vshll.u32 2131351028, %v2777
        %v2787 = vshrl.u32 2102212464, %v2778
        %v2788 = vor.u32 %v2786, %v2787
        %v2789 = vshll.u32 2102212464, %v2777
        %v2790 = vshrl.u32 920167782, %v2778
        %v2791 = vor.u32 %v2789, %v2790
        %v2792 = vshll.u32 920167782, %v2777
        %v2793 = vshrl.u32 1326507024, %v2778
        %v2794 = vor.u32 %v2792, %v2793
        %vm2795 = vcmp.lt.s32.totalorder %v2776, 1
        %vm2796 = vcmp.lt.s32.totalorder %v2776, 2
        %vm2797 = vcmp.lt.s32.totalorder %v2776, 3
        %vm2798 = vcmp.lt.s32.totalorder %v2776, 4
        %v2799 = vsel %vm2795, %v2779, %v2782
        %v2800 = vsel %vm2798, %v2788, 2102212464
        %v2801 = vsel %vm2797, %v2785, %v2800
        %v2802 = vsel %vm2796, %v2799, %v2801
        %v2803 = vsel %vm2795, %v2782, %v2785
        %v2804 = vsel %vm2798, %v2791, 920167782
        %v2805 = vsel %vm2797, %v2788, %v2804
        %v2806 = vsel %vm2796, %v2803, %v2805
        %v2807 = vsel %vm2795, %v2785, %v2788
        %v2808 = vsel %vm2798, %v2794, 1326507024
        %v2809 = vsel %vm2797, %v2791, %v2808
        %v2810 = vsel %vm2796, %v2807, %v2809
        %v2811 = vshll.u32 %v2771, 8
        %v2812 = vmul.u32.u64.compose %v2811, %v2810
        %v2813 = vextract.low.u32 %v2812
        %v2814 = vextract.high.u32 %v2812
        %v2815 = vmul.u32.u64.compose %v2811, %v2806
        %v2816 = vextract.low.u32 %v2815
        %v2817 = vextract.high.u32 %v2815
        %v2818 = vmul.u32 %v2811, %v2802
        %v2819 = vadd.s32 %v2814, %v2816
        %vm2820 = vc.u32 %v2814, %v2816
        %v2821 = vadd.s32 %v2817, 1
        %v2822 = vsel %vm2820, %v2821, %v2817
        %v2823 = vadd.s32 %v2818, %v2822
        %v2824 = vadd.s32 %v2823, 536870912
        %v2825 = vshrl.u32 %v2824, 30
        %v2826 = vshll.u32 %v2825, 30
        %v2827 = vsub.s32 %v2823, %v2826
        %vm2828 = vcmp.lt.s32.totalorder %v2827, 0
        %v2829 = vsub.s32 0, %v2827
        %v2830 = vsel %vm2828, %v2829, %v2827
        %v2831 = vclz %v2830
        %v2832 = vsub.s32 %v2831, 2
        %vm2833 = vcmp.gt.s32.totalorder 0, %v2832
        %v2834 = vsel %vm2833, 0, %v2832
        %v2835 = vsub.s32 32, %v2834
        %v2836 = vshll.u32 %v2827, %v2834
        %v2837 = vshrl.u32 %v2819, %v2835
        %v2838 = vor.u32 %v2836, %v2837
        %v2839 = vsub.s32 4294967266, %v2834
        %v2840 = vadd.s32 %v2839, 127
        %v2841 = vshll.u32 %v2840, 23
        %v2842 = vor.u32 4788187, %v2841
        %v2843 = vand.u32 2147483647, %v2842
        %v2845 = vcvt.s32.f32 %v2838
        %v2846 = vmul.f32 %v2845, %v2843
        %v2847 = vxor.u32 %v2846, 2147483648
        %v2848 = vsel %vm2765, %v2847, %v2846
        %v2849 = vsub.s32 4, %v2825
        %v2850 = vsel %vm2765, %v2849, %v2825
        %v2851 = vsel %vm2764, %v201, %v2848
        %v2852 = vsel %vm2764, 0, %v2850
        %v2853 = vcosq.f32.pop %v2851
        %v2854 = vsinq.f32.pop %v2851
        %vm2855 = vweird.f32 %v201
        %v2856 = vadd.s32 %v2852, 3
        %v2857 = vand.u32 %v2856, 3
        %vm2858 = vcmp.lt.s32.totalorder %v2857, 2
        %vm2859 = vcmp.eq.s32.totalorder %v2857, 0
        %v2860 = vxor.u32 %v2854, 2147483648
        %v2861 = vsel %vm2859, %v2853, %v2860
        %vm2862 = vcmp.eq.s32.totalorder %v2857, 2
        %v2863 = vxor.u32 %v2853, 2147483648
        %v2864 = vsel %vm2862, %v2863, %v2854
        %v2865 = vsel %vm2858, %v2861, %v2864
        %v2866 = vsel %vm2855, nan, %v2865
        %v2867 = vand.u32 2147483647, %v202
        %vm2868 = vcmp.le.f32.partialorder %v2867, 0.7853982
        %vm2869 = vcmp.lt.s32.totalorder %v202, 0
        %v2870 = vand.u32 %v202, 2139095040
        %v2871 = vshrl.u32 %v2870, 23
        %v2872 = vsub.s32 %v2871, 127
        %v2873 = vand.u32 2147483647, %v202
        %v2874 = vand.u32 %v2873, 8388607
        %v2875 = vor.u32 %v2874, 8388608
        %v2876 = vsub.s32 0, %v2875
        %v2877 = vadd.s32 %v2872, 1
        %vm2878 = vcmp.gt.s32.totalorder %v2877, 0
        %v2879 = vsel %vm2878, %v2877, 0
        %v2880 = vshrl.u32 %v2879, 5
        %v2881 = vand.u32 %v2879, 31
        %v2882 = vsub.s32 32, %v2881
        %v2883 = vshrl.u32 683565275, %v2882
        %v2884 = vshll.u32 683565275, %v2881
        %v2885 = vshrl.u32 2475754826, %v2882
        %v2886 = vor.u32 %v2884, %v2885
        %v2887 = vshll.u32 2475754826, %v2881
        %v2888 = vshrl.u32 2131351028, %v2882
        %v2889 = vor.u32 %v2887, %v2888
        %v2890 = vshll.u32 2131351028, %v2881
        %v2891 = vshrl.u32 2102212464, %v2882
        %v2892 = vor.u32 %v2890, %v2891
        %v2893 = vshll.u32 2102212464, %v2881
        %v2894 = vshrl.u32 920167782, %v2882
        %v2895 = vor.u32 %v2893, %v2894
        %v2896 = vshll.u32 920167782, %v2881
        %v2897 = vshrl.u32 1326507024, %v2882
        %v2898 = vor.u32 %v2896, %v2897
        %vm2899 = vcmp.lt.s32.totalorder %v2880, 1
        %vm2900 = vcmp.lt.s32.totalorder %v2880, 2
        %vm2901 = vcmp.lt.s32.totalorder %v2880, 3
        %vm2902 = vcmp.lt.s32.totalorder %v2880, 4
        %v2903 = vsel %vm2899, %v2883, %v2886
        %v2904 = vsel %vm2902, %v2892, 2102212464
        %v2905 = vsel %vm2901, %v2889, %v2904
        %v2906 = vsel %vm2900, %v2903, %v2905
        %v2907 = vsel %vm2899, %v2886, %v2889
        %v2908 = vsel %vm2902, %v2895, 920167782
        %v2909 = vsel %vm2901, %v2892, %v2908
        %v2910 = vsel %vm2900, %v2907, %v2909
        %v2911 = vsel %vm2899, %v2889, %v2892
        %v2912 = vsel %vm2902, %v2898, 1326507024
        %v2913 = vsel %vm2901, %v2895, %v2912
        %v2914 = vsel %vm2900, %v2911, %v2913
        %v2915 = vshll.u32 %v2875, 8
        %v2916 = vmul.u32.u64.compose %v2915, %v2914
        %v2917 = vextract.low.u32 %v2916
        %v2918 = vextract.high.u32 %v2916
        %v2919 = vmul.u32.u64.compose %v2915, %v2910
        %v2920 = vextract.low.u32 %v2919
        %v2921 = vextract.high.u32 %v2919
        %v2922 = vmul.u32 %v2915, %v2906
        %v2923 = vadd.s32 %v2918, %v2920
        %vm2924 = vc.u32 %v2918, %v2920
        %v2925 = vadd.s32 %v2921, 1
        %v2926 = vsel %vm2924, %v2925, %v2921
        %v2927 = vadd.s32 %v2922, %v2926
        %v2928 = vadd.s32 %v2927, 536870912
        %v2929 = vshrl.u32 %v2928, 30
        %v2930 = vshll.u32 %v2929, 30
        %v2931 = vsub.s32 %v2927, %v2930
        %vm2932 = vcmp.lt.s32.totalorder %v2931, 0
        %v2933 = vsub.s32 0, %v2931
        %v2934 = vsel %vm2932, %v2933, %v2931
        %v2935 = vclz %v2934
        %v2936 = vsub.s32 %v2935, 2
        %vm2937 = vcmp.gt.s32.totalorder 0, %v2936
        %v2938 = vsel %vm2937, 0, %v2936
        %v2939 = vsub.s32 32, %v2938
        %v2940 = vshll.u32 %v2931, %v2938
        %v2941 = vshrl.u32 %v2923, %v2939
        %v2942 = vor.u32 %v2940, %v2941
        %v2943 = vsub.s32 4294967266, %v2938
        %v2944 = vadd.s32 %v2943, 127
        %v2945 = vshll.u32 %v2944, 23
        %v2946 = vor.u32 4788187, %v2945
        %v2947 = vand.u32 2147483647, %v2946
        %v2949 = vcvt.s32.f32 %v2942
        %v2950 = vmul.f32 %v2949, %v2947
        %v2951 = vxor.u32 %v2950, 2147483648
        %v2952 = vsel %vm2869, %v2951, %v2950
        %v2953 = vsub.s32 4, %v2929
        %v2954 = vsel %vm2869, %v2953, %v2929
        %v2955 = vsel %vm2868, %v202, %v2952
        %v2956 = vsel %vm2868, 0, %v2954
        %v2957 = vcosq.f32.pop %v2955
        %v2958 = vsinq.f32.pop %v2955
        %vm2959 = vweird.f32 %v202
        %v2960 = vadd.s32 %v2956, 3
        %v2961 = vand.u32 %v2960, 3
        %vm2962 = vcmp.lt.s32.totalorder %v2961, 2
        %vm2963 = vcmp.eq.s32.totalorder %v2961, 0
        %v2964 = vxor.u32 %v2958, 2147483648
        %v2965 = vsel %vm2963, %v2957, %v2964
        %vm2966 = vcmp.eq.s32.totalorder %v2961, 2
        %v2967 = vxor.u32 %v2957, 2147483648
        %v2968 = vsel %vm2966, %v2967, %v2958
        %v2969 = vsel %vm2962, %v2965, %v2968
        %v2970 = vsel %vm2959, nan, %v2969
        %v2971 = vand.u32 2147483647, %v203
        %vm2972 = vcmp.le.f32.partialorder %v2971, 0.7853982
        %vm2973 = vcmp.lt.s32.totalorder %v203, 0
        %v2974 = vand.u32 %v203, 2139095040
        %v2975 = vshrl.u32 %v2974, 23
        %v2976 = vsub.s32 %v2975, 127
        %v2977 = vand.u32 2147483647, %v203
        %v2978 = vand.u32 %v2977, 8388607
        %v2979 = vor.u32 %v2978, 8388608
        %v2980 = vsub.s32 0, %v2979
        %v2981 = vadd.s32 %v2976, 1
        %vm2982 = vcmp.gt.s32.totalorder %v2981, 0
        %v2983 = vsel %vm2982, %v2981, 0
        %v2984 = vshrl.u32 %v2983, 5
        %v2985 = vand.u32 %v2983, 31
        %v2986 = vsub.s32 32, %v2985
        %v2987 = vshrl.u32 683565275, %v2986
        %v2988 = vshll.u32 683565275, %v2985
        %v2989 = vshrl.u32 2475754826, %v2986
        %v2990 = vor.u32 %v2988, %v2989
        %v2991 = vshll.u32 2475754826, %v2985
        %v2992 = vshrl.u32 2131351028, %v2986
        %v2993 = vor.u32 %v2991, %v2992
        %v2994 = vshll.u32 2131351028, %v2985
        %v2995 = vshrl.u32 2102212464, %v2986
        %v2996 = vor.u32 %v2994, %v2995
        %v2997 = vshll.u32 2102212464, %v2985
        %v2998 = vshrl.u32 920167782, %v2986
        %v2999 = vor.u32 %v2997, %v2998
        %v3000 = vshll.u32 920167782, %v2985
        %v3001 = vshrl.u32 1326507024, %v2986
        %v3002 = vor.u32 %v3000, %v3001
        %vm3003 = vcmp.lt.s32.totalorder %v2984, 1
        %vm3004 = vcmp.lt.s32.totalorder %v2984, 2
        %vm3005 = vcmp.lt.s32.totalorder %v2984, 3
        %vm3006 = vcmp.lt.s32.totalorder %v2984, 4
        %v3007 = vsel %vm3003, %v2987, %v2990
        %v3008 = vsel %vm3006, %v2996, 2102212464
        %v3009 = vsel %vm3005, %v2993, %v3008
        %v3010 = vsel %vm3004, %v3007, %v3009
        %v3011 = vsel %vm3003, %v2990, %v2993
        %v3012 = vsel %vm3006, %v2999, 920167782
        %v3013 = vsel %vm3005, %v2996, %v3012
        %v3014 = vsel %vm3004, %v3011, %v3013
        %v3015 = vsel %vm3003, %v2993, %v2996
        %v3016 = vsel %vm3006, %v3002, 1326507024
        %v3017 = vsel %vm3005, %v2999, %v3016
        %v3018 = vsel %vm3004, %v3015, %v3017
        %v3019 = vshll.u32 %v2979, 8
        %v3020 = vmul.u32.u64.compose %v3019, %v3018
        %v3021 = vextract.low.u32 %v3020
        %v3022 = vextract.high.u32 %v3020
        %v3023 = vmul.u32.u64.compose %v3019, %v3014
        %v3024 = vextract.low.u32 %v3023
        %v3025 = vextract.high.u32 %v3023
        %v3026 = vmul.u32 %v3019, %v3010
        %v3027 = vadd.s32 %v3022, %v3024
        %vm3028 = vc.u32 %v3022, %v3024
        %v3029 = vadd.s32 %v3025, 1
        %v3030 = vsel %vm3028, %v3029, %v3025
        %v3031 = vadd.s32 %v3026, %v3030
        %v3032 = vadd.s32 %v3031, 536870912
        %v3033 = vshrl.u32 %v3032, 30
        %v3034 = vshll.u32 %v3033, 30
        %v3035 = vsub.s32 %v3031, %v3034
        %vm3036 = vcmp.lt.s32.totalorder %v3035, 0
        %v3037 = vsub.s32 0, %v3035
        %v3038 = vsel %vm3036, %v3037, %v3035
        %v3039 = vclz %v3038
        %v3040 = vsub.s32 %v3039, 2
        %vm3041 = vcmp.gt.s32.totalorder 0, %v3040
        %v3042 = vsel %vm3041, 0, %v3040
        %v3043 = vsub.s32 32, %v3042
        %v3044 = vshll.u32 %v3035, %v3042
        %v3045 = vshrl.u32 %v3027, %v3043
        %v3046 = vor.u32 %v3044, %v3045
        %v3047 = vsub.s32 4294967266, %v3042
        %v3048 = vadd.s32 %v3047, 127
        %v3049 = vshll.u32 %v3048, 23
        %v3050 = vor.u32 4788187, %v3049
        %v3051 = vand.u32 2147483647, %v3050
        %v3053 = vcvt.s32.f32 %v3046
        %v3054 = vmul.f32 %v3053, %v3051
        %v3055 = vxor.u32 %v3054, 2147483648
        %v3056 = vsel %vm2973, %v3055, %v3054
        %v3057 = vsub.s32 4, %v3033
        %v3058 = vsel %vm2973, %v3057, %v3033
        %v3059 = vsel %vm2972, %v203, %v3056
        %v3060 = vsel %vm2972, 0, %v3058
        %v3061 = vcosq.f32.pop %v3059
        %v3062 = vsinq.f32.pop %v3059
        %vm3063 = vweird.f32 %v203
        %v3064 = vadd.s32 %v3060, 3
        %v3065 = vand.u32 %v3064, 3
        %vm3066 = vcmp.lt.s32.totalorder %v3065, 2
        %vm3067 = vcmp.eq.s32.totalorder %v3065, 0
        %v3068 = vxor.u32 %v3062, 2147483648
        %v3069 = vsel %vm3067, %v3061, %v3068
        %vm3070 = vcmp.eq.s32.totalorder %v3065, 2
        %v3071 = vxor.u32 %v3061, 2147483648
        %v3072 = vsel %vm3070, %v3071, %v3062
        %v3073 = vsel %vm3066, %v3069, %v3072
        %v3074 = vsel %vm3063, nan, %v3073
        %v3075 = vand.u32 2147483647, %v204
        %vm3076 = vcmp.le.f32.partialorder %v3075, 0.7853982
        %vm3077 = vcmp.lt.s32.totalorder %v204, 0
        %v3078 = vand.u32 %v204, 2139095040
        %v3079 = vshrl.u32 %v3078, 23
        %v3080 = vsub.s32 %v3079, 127
        %v3081 = vand.u32 2147483647, %v204
        %v3082 = vand.u32 %v3081, 8388607
        %v3083 = vor.u32 %v3082, 8388608
        %v3084 = vsub.s32 0, %v3083
        %v3085 = vadd.s32 %v3080, 1
        %vm3086 = vcmp.gt.s32.totalorder %v3085, 0
        %v3087 = vsel %vm3086, %v3085, 0
        %v3088 = vshrl.u32 %v3087, 5
        %v3089 = vand.u32 %v3087, 31
        %v3090 = vsub.s32 32, %v3089
        %v3091 = vshrl.u32 683565275, %v3090
        %v3092 = vshll.u32 683565275, %v3089
        %v3093 = vshrl.u32 2475754826, %v3090
        %v3094 = vor.u32 %v3092, %v3093
        %v3095 = vshll.u32 2475754826, %v3089
        %v3096 = vshrl.u32 2131351028, %v3090
        %v3097 = vor.u32 %v3095, %v3096
        %v3098 = vshll.u32 2131351028, %v3089
        %v3099 = vshrl.u32 2102212464, %v3090
        %v3100 = vor.u32 %v3098, %v3099
        %v3101 = vshll.u32 2102212464, %v3089
        %v3102 = vshrl.u32 920167782, %v3090
        %v3103 = vor.u32 %v3101, %v3102
        %v3104 = vshll.u32 920167782, %v3089
        %v3105 = vshrl.u32 1326507024, %v3090
        %v3106 = vor.u32 %v3104, %v3105
        %vm3107 = vcmp.lt.s32.totalorder %v3088, 1
        %vm3108 = vcmp.lt.s32.totalorder %v3088, 2
        %vm3109 = vcmp.lt.s32.totalorder %v3088, 3
        %vm3110 = vcmp.lt.s32.totalorder %v3088, 4
        %v3111 = vsel %vm3107, %v3091, %v3094
        %v3112 = vsel %vm3110, %v3100, 2102212464
        %v3113 = vsel %vm3109, %v3097, %v3112
        %v3114 = vsel %vm3108, %v3111, %v3113
        %v3115 = vsel %vm3107, %v3094, %v3097
        %v3116 = vsel %vm3110, %v3103, 920167782
        %v3117 = vsel %vm3109, %v3100, %v3116
        %v3118 = vsel %vm3108, %v3115, %v3117
        %v3119 = vsel %vm3107, %v3097, %v3100
        %v3120 = vsel %vm3110, %v3106, 1326507024
        %v3121 = vsel %vm3109, %v3103, %v3120
        %v3122 = vsel %vm3108, %v3119, %v3121
        %v3123 = vshll.u32 %v3083, 8
        %v3124 = vmul.u32.u64.compose %v3123, %v3122
        %v3125 = vextract.low.u32 %v3124
        %v3126 = vextract.high.u32 %v3124
        %v3127 = vmul.u32.u64.compose %v3123, %v3118
        %v3128 = vextract.low.u32 %v3127
        %v3129 = vextract.high.u32 %v3127
        %v3130 = vmul.u32 %v3123, %v3114
        %v3131 = vadd.s32 %v3126, %v3128
        %vm3132 = vc.u32 %v3126, %v3128
        %v3133 = vadd.s32 %v3129, 1
        %v3134 = vsel %vm3132, %v3133, %v3129
        %v3135 = vadd.s32 %v3130, %v3134
        %v3136 = vadd.s32 %v3135, 536870912
        %v3137 = vshrl.u32 %v3136, 30
        %v3138 = vshll.u32 %v3137, 30
        %v3139 = vsub.s32 %v3135, %v3138
        %vm3140 = vcmp.lt.s32.totalorder %v3139, 0
        %v3141 = vsub.s32 0, %v3139
        %v3142 = vsel %vm3140, %v3141, %v3139
        %v3143 = vclz %v3142
        %v3144 = vsub.s32 %v3143, 2
        %vm3145 = vcmp.gt.s32.totalorder 0, %v3144
        %v3146 = vsel %vm3145, 0, %v3144
        %v3147 = vsub.s32 32, %v3146
        %v3148 = vshll.u32 %v3139, %v3146
        %v3149 = vshrl.u32 %v3131, %v3147
        %v3150 = vor.u32 %v3148, %v3149
        %v3151 = vsub.s32 4294967266, %v3146
        %v3152 = vadd.s32 %v3151, 127
        %v3153 = vshll.u32 %v3152, 23
        %v3154 = vor.u32 4788187, %v3153
        %v3155 = vand.u32 2147483647, %v3154
        %v3157 = vcvt.s32.f32 %v3150
        %v3158 = vmul.f32 %v3157, %v3155
        %v3159 = vxor.u32 %v3158, 2147483648
        %v3160 = vsel %vm3077, %v3159, %v3158
        %v3161 = vsub.s32 4, %v3137
        %v3162 = vsel %vm3077, %v3161, %v3137
        %v3163 = vsel %vm3076, %v204, %v3160
        %v3164 = vsel %vm3076, 0, %v3162
        %v3165 = vcosq.f32.pop %v3163
        %v3166 = vsinq.f32.pop %v3163
        %vm3167 = vweird.f32 %v204
        %v3168 = vadd.s32 %v3164, 3
        %v3169 = vand.u32 %v3168, 3
        %vm3170 = vcmp.lt.s32.totalorder %v3169, 2
        %vm3171 = vcmp.eq.s32.totalorder %v3169, 0
        %v3172 = vxor.u32 %v3166, 2147483648
        %v3173 = vsel %vm3171, %v3165, %v3172
        %vm3174 = vcmp.eq.s32.totalorder %v3169, 2
        %v3175 = vxor.u32 %v3165, 2147483648
        %v3176 = vsel %vm3174, %v3175, %v3166
        %v3177 = vsel %vm3170, %v3173, %v3176
        %v3178 = vsel %vm3167, nan, %v3177
        %v3179 = vand.u32 2147483647, %v205
        %vm3180 = vcmp.le.f32.partialorder %v3179, 0.7853982
        %vm3181 = vcmp.lt.s32.totalorder %v205, 0
        %v3182 = vand.u32 %v205, 2139095040
        %v3183 = vshrl.u32 %v3182, 23
        %v3184 = vsub.s32 %v3183, 127
        %v3185 = vand.u32 2147483647, %v205
        %v3186 = vand.u32 %v3185, 8388607
        %v3187 = vor.u32 %v3186, 8388608
        %v3188 = vsub.s32 0, %v3187
        %v3189 = vadd.s32 %v3184, 1
        %vm3190 = vcmp.gt.s32.totalorder %v3189, 0
        %v3191 = vsel %vm3190, %v3189, 0
        %v3192 = vshrl.u32 %v3191, 5
        %v3193 = vand.u32 %v3191, 31
        %v3194 = vsub.s32 32, %v3193
        %v3195 = vshrl.u32 683565275, %v3194
        %v3196 = vshll.u32 683565275, %v3193
        %v3197 = vshrl.u32 2475754826, %v3194
        %v3198 = vor.u32 %v3196, %v3197
        %v3199 = vshll.u32 2475754826, %v3193
        %v3200 = vshrl.u32 2131351028, %v3194
        %v3201 = vor.u32 %v3199, %v3200
        %v3202 = vshll.u32 2131351028, %v3193
        %v3203 = vshrl.u32 2102212464, %v3194
        %v3204 = vor.u32 %v3202, %v3203
        %v3205 = vshll.u32 2102212464, %v3193
        %v3206 = vshrl.u32 920167782, %v3194
        %v3207 = vor.u32 %v3205, %v3206
        %v3208 = vshll.u32 920167782, %v3193
        %v3209 = vshrl.u32 1326507024, %v3194
        %v3210 = vor.u32 %v3208, %v3209
        %vm3211 = vcmp.lt.s32.totalorder %v3192, 1
        %vm3212 = vcmp.lt.s32.totalorder %v3192, 2
        %vm3213 = vcmp.lt.s32.totalorder %v3192, 3
        %vm3214 = vcmp.lt.s32.totalorder %v3192, 4
        %v3215 = vsel %vm3211, %v3195, %v3198
        %v3216 = vsel %vm3214, %v3204, 2102212464
        %v3217 = vsel %vm3213, %v3201, %v3216
        %v3218 = vsel %vm3212, %v3215, %v3217
        %v3219 = vsel %vm3211, %v3198, %v3201
        %v3220 = vsel %vm3214, %v3207, 920167782
        %v3221 = vsel %vm3213, %v3204, %v3220
        %v3222 = vsel %vm3212, %v3219, %v3221
        %v3223 = vsel %vm3211, %v3201, %v3204
        %v3224 = vsel %vm3214, %v3210, 1326507024
        %v3225 = vsel %vm3213, %v3207, %v3224
        %v3226 = vsel %vm3212, %v3223, %v3225
        %v3227 = vshll.u32 %v3187, 8
        %v3228 = vmul.u32.u64.compose %v3227, %v3226
        %v3229 = vextract.low.u32 %v3228
        %v3230 = vextract.high.u32 %v3228
        %v3231 = vmul.u32.u64.compose %v3227, %v3222
        %v3232 = vextract.low.u32 %v3231
        %v3233 = vextract.high.u32 %v3231
        %v3234 = vmul.u32 %v3227, %v3218
        %v3235 = vadd.s32 %v3230, %v3232
        %vm3236 = vc.u32 %v3230, %v3232
        %v3237 = vadd.s32 %v3233, 1
        %v3238 = vsel %vm3236, %v3237, %v3233
        %v3239 = vadd.s32 %v3234, %v3238
        %v3240 = vadd.s32 %v3239, 536870912
        %v3241 = vshrl.u32 %v3240, 30
        %v3242 = vshll.u32 %v3241, 30
        %v3243 = vsub.s32 %v3239, %v3242
        %vm3244 = vcmp.lt.s32.totalorder %v3243, 0
        %v3245 = vsub.s32 0, %v3243
        %v3246 = vsel %vm3244, %v3245, %v3243
        %v3247 = vclz %v3246
        %v3248 = vsub.s32 %v3247, 2
        %vm3249 = vcmp.gt.s32.totalorder 0, %v3248
        %v3250 = vsel %vm3249, 0, %v3248
        %v3251 = vsub.s32 32, %v3250
        %v3252 = vshll.u32 %v3243, %v3250
        %v3253 = vshrl.u32 %v3235, %v3251
        %v3254 = vor.u32 %v3252, %v3253
        %v3255 = vsub.s32 4294967266, %v3250
        %v3256 = vadd.s32 %v3255, 127
        %v3257 = vshll.u32 %v3256, 23
        %v3258 = vor.u32 4788187, %v3257
        %v3259 = vand.u32 2147483647, %v3258
        %v3261 = vcvt.s32.f32 %v3254
        %v3262 = vmul.f32 %v3261, %v3259
        %v3263 = vxor.u32 %v3262, 2147483648
        %v3264 = vsel %vm3181, %v3263, %v3262
        %v3265 = vsub.s32 4, %v3241
        %v3266 = vsel %vm3181, %v3265, %v3241
        %v3267 = vsel %vm3180, %v205, %v3264
        %v3268 = vsel %vm3180, 0, %v3266
        %v3269 = vcosq.f32.pop %v3267
        %v3270 = vsinq.f32.pop %v3267
        %vm3271 = vweird.f32 %v205
        %v3272 = vadd.s32 %v3268, 3
        %v3273 = vand.u32 %v3272, 3
        %vm3274 = vcmp.lt.s32.totalorder %v3273, 2
        %vm3275 = vcmp.eq.s32.totalorder %v3273, 0
        %v3276 = vxor.u32 %v3270, 2147483648
        %v3277 = vsel %vm3275, %v3269, %v3276
        %vm3278 = vcmp.eq.s32.totalorder %v3273, 2
        %v3279 = vxor.u32 %v3269, 2147483648
        %v3280 = vsel %vm3278, %v3279, %v3270
        %v3281 = vsel %vm3274, %v3277, %v3280
        %v3282 = vsel %vm3271, nan, %v3281
        %v3283 = vand.u32 2147483647, %v206
        %vm3284 = vcmp.le.f32.partialorder %v3283, 0.7853982
        %vm3285 = vcmp.lt.s32.totalorder %v206, 0
        %v3286 = vand.u32 %v206, 2139095040
        %v3287 = vshrl.u32 %v3286, 23
        %v3288 = vsub.s32 %v3287, 127
        %v3289 = vand.u32 2147483647, %v206
        %v3290 = vand.u32 %v3289, 8388607
        %v3291 = vor.u32 %v3290, 8388608
        %v3292 = vsub.s32 0, %v3291
        %v3293 = vadd.s32 %v3288, 1
        %vm3294 = vcmp.gt.s32.totalorder %v3293, 0
        %v3295 = vsel %vm3294, %v3293, 0
        %v3296 = vshrl.u32 %v3295, 5
        %v3297 = vand.u32 %v3295, 31
        %v3298 = vsub.s32 32, %v3297
        %v3299 = vshrl.u32 683565275, %v3298
        %v3300 = vshll.u32 683565275, %v3297
        %v3301 = vshrl.u32 2475754826, %v3298
        %v3302 = vor.u32 %v3300, %v3301
        %v3303 = vshll.u32 2475754826, %v3297
        %v3304 = vshrl.u32 2131351028, %v3298
        %v3305 = vor.u32 %v3303, %v3304
        %v3306 = vshll.u32 2131351028, %v3297
        %v3307 = vshrl.u32 2102212464, %v3298
        %v3308 = vor.u32 %v3306, %v3307
        %v3309 = vshll.u32 2102212464, %v3297
        %v3310 = vshrl.u32 920167782, %v3298
        %v3311 = vor.u32 %v3309, %v3310
        %v3312 = vshll.u32 920167782, %v3297
        %v3313 = vshrl.u32 1326507024, %v3298
        %v3314 = vor.u32 %v3312, %v3313
        %vm3315 = vcmp.lt.s32.totalorder %v3296, 1
        %vm3316 = vcmp.lt.s32.totalorder %v3296, 2
        %vm3317 = vcmp.lt.s32.totalorder %v3296, 3
        %vm3318 = vcmp.lt.s32.totalorder %v3296, 4
        %v3319 = vsel %vm3315, %v3299, %v3302
        %v3320 = vsel %vm3318, %v3308, 2102212464
        %v3321 = vsel %vm3317, %v3305, %v3320
        %v3322 = vsel %vm3316, %v3319, %v3321
        %v3323 = vsel %vm3315, %v3302, %v3305
        %v3324 = vsel %vm3318, %v3311, 920167782
        %v3325 = vsel %vm3317, %v3308, %v3324
        %v3326 = vsel %vm3316, %v3323, %v3325
        %v3327 = vsel %vm3315, %v3305, %v3308
        %v3328 = vsel %vm3318, %v3314, 1326507024
        %v3329 = vsel %vm3317, %v3311, %v3328
        %v3330 = vsel %vm3316, %v3327, %v3329
        %v3331 = vshll.u32 %v3291, 8
        %v3332 = vmul.u32.u64.compose %v3331, %v3330
        %v3333 = vextract.low.u32 %v3332
        %v3334 = vextract.high.u32 %v3332
        %v3335 = vmul.u32.u64.compose %v3331, %v3326
        %v3336 = vextract.low.u32 %v3335
        %v3337 = vextract.high.u32 %v3335
        %v3338 = vmul.u32 %v3331, %v3322
        %v3339 = vadd.s32 %v3334, %v3336
        %vm3340 = vc.u32 %v3334, %v3336
        %v3341 = vadd.s32 %v3337, 1
        %v3342 = vsel %vm3340, %v3341, %v3337
        %v3343 = vadd.s32 %v3338, %v3342
        %v3344 = vadd.s32 %v3343, 536870912
        %v3345 = vshrl.u32 %v3344, 30
        %v3346 = vshll.u32 %v3345, 30
        %v3347 = vsub.s32 %v3343, %v3346
        %vm3348 = vcmp.lt.s32.totalorder %v3347, 0
        %v3349 = vsub.s32 0, %v3347
        %v3350 = vsel %vm3348, %v3349, %v3347
        %v3351 = vclz %v3350
        %v3352 = vsub.s32 %v3351, 2
        %vm3353 = vcmp.gt.s32.totalorder 0, %v3352
        %v3354 = vsel %vm3353, 0, %v3352
        %v3355 = vsub.s32 32, %v3354
        %v3356 = vshll.u32 %v3347, %v3354
        %v3357 = vshrl.u32 %v3339, %v3355
        %v3358 = vor.u32 %v3356, %v3357
        %v3359 = vsub.s32 4294967266, %v3354
        %v3360 = vadd.s32 %v3359, 127
        %v3361 = vshll.u32 %v3360, 23
        %v3362 = vor.u32 4788187, %v3361
        %v3363 = vand.u32 2147483647, %v3362
        %v3365 = vcvt.s32.f32 %v3358
        %v3366 = vmul.f32 %v3365, %v3363
        %v3367 = vxor.u32 %v3366, 2147483648
        %v3368 = vsel %vm3285, %v3367, %v3366
        %v3369 = vsub.s32 4, %v3345
        %v3370 = vsel %vm3285, %v3369, %v3345
        %v3371 = vsel %vm3284, %v206, %v3368
        %v3372 = vsel %vm3284, 0, %v3370
        %v3373 = vcosq.f32.pop %v3371
        %v3374 = vsinq.f32.pop %v3371
        %vm3375 = vweird.f32 %v206
        %v3376 = vadd.s32 %v3372, 3
        %v3377 = vand.u32 %v3376, 3
        %vm3378 = vcmp.lt.s32.totalorder %v3377, 2
        %vm3379 = vcmp.eq.s32.totalorder %v3377, 0
        %v3380 = vxor.u32 %v3374, 2147483648
        %v3381 = vsel %vm3379, %v3373, %v3380
        %vm3382 = vcmp.eq.s32.totalorder %v3377, 2
        %v3383 = vxor.u32 %v3373, 2147483648
        %v3384 = vsel %vm3382, %v3383, %v3374
        %v3385 = vsel %vm3378, %v3381, %v3384
        %v3386 = vsel %vm3375, nan, %v3385
        %v3387 = vand.u32 2147483647, %v207
        %vm3388 = vcmp.le.f32.partialorder %v3387, 0.7853982
        %vm3389 = vcmp.lt.s32.totalorder %v207, 0
        %v3390 = vand.u32 %v207, 2139095040
        %v3391 = vshrl.u32 %v3390, 23
        %v3392 = vsub.s32 %v3391, 127
        %v3393 = vand.u32 2147483647, %v207
        %v3394 = vand.u32 %v3393, 8388607
        %v3395 = vor.u32 %v3394, 8388608
        %v3396 = vsub.s32 0, %v3395
        %v3397 = vadd.s32 %v3392, 1
        %vm3398 = vcmp.gt.s32.totalorder %v3397, 0
        %v3399 = vsel %vm3398, %v3397, 0
        %v3400 = vshrl.u32 %v3399, 5
        %v3401 = vand.u32 %v3399, 31
        %v3402 = vsub.s32 32, %v3401
        %v3403 = vshrl.u32 683565275, %v3402
        %v3404 = vshll.u32 683565275, %v3401
        %v3405 = vshrl.u32 2475754826, %v3402
        %v3406 = vor.u32 %v3404, %v3405
        %v3407 = vshll.u32 2475754826, %v3401
        %v3408 = vshrl.u32 2131351028, %v3402
        %v3409 = vor.u32 %v3407, %v3408
        %v3410 = vshll.u32 2131351028, %v3401
        %v3411 = vshrl.u32 2102212464, %v3402
        %v3412 = vor.u32 %v3410, %v3411
        %v3413 = vshll.u32 2102212464, %v3401
        %v3414 = vshrl.u32 920167782, %v3402
        %v3415 = vor.u32 %v3413, %v3414
        %v3416 = vshll.u32 920167782, %v3401
        %v3417 = vshrl.u32 1326507024, %v3402
        %v3418 = vor.u32 %v3416, %v3417
        %vm3419 = vcmp.lt.s32.totalorder %v3400, 1
        %vm3420 = vcmp.lt.s32.totalorder %v3400, 2
        %vm3421 = vcmp.lt.s32.totalorder %v3400, 3
        %vm3422 = vcmp.lt.s32.totalorder %v3400, 4
        %v3423 = vsel %vm3419, %v3403, %v3406
        %v3424 = vsel %vm3422, %v3412, 2102212464
        %v3425 = vsel %vm3421, %v3409, %v3424
        %v3426 = vsel %vm3420, %v3423, %v3425
        %v3427 = vsel %vm3419, %v3406, %v3409
        %v3428 = vsel %vm3422, %v3415, 920167782
        %v3429 = vsel %vm3421, %v3412, %v3428
        %v3430 = vsel %vm3420, %v3427, %v3429
        %v3431 = vsel %vm3419, %v3409, %v3412
        %v3432 = vsel %vm3422, %v3418, 1326507024
        %v3433 = vsel %vm3421, %v3415, %v3432
        %v3434 = vsel %vm3420, %v3431, %v3433
        %v3435 = vshll.u32 %v3395, 8
        %v3436 = vmul.u32.u64.compose %v3435, %v3434
        %v3437 = vextract.low.u32 %v3436
        %v3438 = vextract.high.u32 %v3436
        %v3439 = vmul.u32.u64.compose %v3435, %v3430
        %v3440 = vextract.low.u32 %v3439
        %v3441 = vextract.high.u32 %v3439
        %v3442 = vmul.u32 %v3435, %v3426
        %v3443 = vadd.s32 %v3438, %v3440
        %vm3444 = vc.u32 %v3438, %v3440
        %v3445 = vadd.s32 %v3441, 1
        %v3446 = vsel %vm3444, %v3445, %v3441
        %v3447 = vadd.s32 %v3442, %v3446
        %v3448 = vadd.s32 %v3447, 536870912
        %v3449 = vshrl.u32 %v3448, 30
        %v3450 = vshll.u32 %v3449, 30
        %v3451 = vsub.s32 %v3447, %v3450
        %vm3452 = vcmp.lt.s32.totalorder %v3451, 0
        %v3453 = vsub.s32 0, %v3451
        %v3454 = vsel %vm3452, %v3453, %v3451
        %v3455 = vclz %v3454
        %v3456 = vsub.s32 %v3455, 2
        %vm3457 = vcmp.gt.s32.totalorder 0, %v3456
        %v3458 = vsel %vm3457, 0, %v3456
        %v3459 = vsub.s32 32, %v3458
        %v3460 = vshll.u32 %v3451, %v3458
        %v3461 = vshrl.u32 %v3443, %v3459
        %v3462 = vor.u32 %v3460, %v3461
        %v3463 = vsub.s32 4294967266, %v3458
        %v3464 = vadd.s32 %v3463, 127
        %v3465 = vshll.u32 %v3464, 23
        %v3466 = vor.u32 4788187, %v3465
        %v3467 = vand.u32 2147483647, %v3466
        %v3469 = vcvt.s32.f32 %v3462
        %v3470 = vmul.f32 %v3469, %v3467
        %v3471 = vxor.u32 %v3470, 2147483648
        %v3472 = vsel %vm3389, %v3471, %v3470
        %v3473 = vsub.s32 4, %v3449
        %v3474 = vsel %vm3389, %v3473, %v3449
        %v3475 = vsel %vm3388, %v207, %v3472
        %v3476 = vsel %vm3388, 0, %v3474
        %v3477 = vcosq.f32.pop %v3475
        %v3478 = vsinq.f32.pop %v3475
        %vm3479 = vweird.f32 %v207
        %v3480 = vadd.s32 %v3476, 3
        %v3481 = vand.u32 %v3480, 3
        %vm3482 = vcmp.lt.s32.totalorder %v3481, 2
        %vm3483 = vcmp.eq.s32.totalorder %v3481, 0
        %v3484 = vxor.u32 %v3478, 2147483648
        %v3485 = vsel %vm3483, %v3477, %v3484
        %vm3486 = vcmp.eq.s32.totalorder %v3481, 2
        %v3487 = vxor.u32 %v3477, 2147483648
        %v3488 = vsel %vm3486, %v3487, %v3478
        %v3489 = vsel %vm3482, %v3485, %v3488
        %v3490 = vsel %vm3479, nan, %v3489
        %v3491 = vand.u32 2147483647, %v208
        %vm3492 = vcmp.le.f32.partialorder %v3491, 0.7853982
        %vm3493 = vcmp.lt.s32.totalorder %v208, 0
        %v3494 = vand.u32 %v208, 2139095040
        %v3495 = vshrl.u32 %v3494, 23
        %v3496 = vsub.s32 %v3495, 127
        %v3497 = vand.u32 2147483647, %v208
        %v3498 = vand.u32 %v3497, 8388607
        %v3499 = vor.u32 %v3498, 8388608
        %v3500 = vsub.s32 0, %v3499
        %v3501 = vadd.s32 %v3496, 1
        %vm3502 = vcmp.gt.s32.totalorder %v3501, 0
        %v3503 = vsel %vm3502, %v3501, 0
        %v3504 = vshrl.u32 %v3503, 5
        %v3505 = vand.u32 %v3503, 31
        %v3506 = vsub.s32 32, %v3505
        %v3507 = vshrl.u32 683565275, %v3506
        %v3508 = vshll.u32 683565275, %v3505
        %v3509 = vshrl.u32 2475754826, %v3506
        %v3510 = vor.u32 %v3508, %v3509
        %v3511 = vshll.u32 2475754826, %v3505
        %v3512 = vshrl.u32 2131351028, %v3506
        %v3513 = vor.u32 %v3511, %v3512
        %v3514 = vshll.u32 2131351028, %v3505
        %v3515 = vshrl.u32 2102212464, %v3506
        %v3516 = vor.u32 %v3514, %v3515
        %v3517 = vshll.u32 2102212464, %v3505
        %v3518 = vshrl.u32 920167782, %v3506
        %v3519 = vor.u32 %v3517, %v3518
        %v3520 = vshll.u32 920167782, %v3505
        %v3521 = vshrl.u32 1326507024, %v3506
        %v3522 = vor.u32 %v3520, %v3521
        %vm3523 = vcmp.lt.s32.totalorder %v3504, 1
        %vm3524 = vcmp.lt.s32.totalorder %v3504, 2
        %vm3525 = vcmp.lt.s32.totalorder %v3504, 3
        %vm3526 = vcmp.lt.s32.totalorder %v3504, 4
        %v3527 = vsel %vm3523, %v3507, %v3510
        %v3528 = vsel %vm3526, %v3516, 2102212464
        %v3529 = vsel %vm3525, %v3513, %v3528
        %v3530 = vsel %vm3524, %v3527, %v3529
        %v3531 = vsel %vm3523, %v3510, %v3513
        %v3532 = vsel %vm3526, %v3519, 920167782
        %v3533 = vsel %vm3525, %v3516, %v3532
        %v3534 = vsel %vm3524, %v3531, %v3533
        %v3535 = vsel %vm3523, %v3513, %v3516
        %v3536 = vsel %vm3526, %v3522, 1326507024
        %v3537 = vsel %vm3525, %v3519, %v3536
        %v3538 = vsel %vm3524, %v3535, %v3537
        %v3539 = vshll.u32 %v3499, 8
        %v3540 = vmul.u32.u64.compose %v3539, %v3538
        %v3541 = vextract.low.u32 %v3540
        %v3542 = vextract.high.u32 %v3540
        %v3543 = vmul.u32.u64.compose %v3539, %v3534
        %v3544 = vextract.low.u32 %v3543
        %v3545 = vextract.high.u32 %v3543
        %v3546 = vmul.u32 %v3539, %v3530
        %v3547 = vadd.s32 %v3542, %v3544
        %vm3548 = vc.u32 %v3542, %v3544
        %v3549 = vadd.s32 %v3545, 1
        %v3550 = vsel %vm3548, %v3549, %v3545
        %v3551 = vadd.s32 %v3546, %v3550
        %v3552 = vadd.s32 %v3551, 536870912
        %v3553 = vshrl.u32 %v3552, 30
        %v3554 = vshll.u32 %v3553, 30
        %v3555 = vsub.s32 %v3551, %v3554
        %vm3556 = vcmp.lt.s32.totalorder %v3555, 0
        %v3557 = vsub.s32 0, %v3555
        %v3558 = vsel %vm3556, %v3557, %v3555
        %v3559 = vclz %v3558
        %v3560 = vsub.s32 %v3559, 2
        %vm3561 = vcmp.gt.s32.totalorder 0, %v3560
        %v3562 = vsel %vm3561, 0, %v3560
        %v3563 = vsub.s32 32, %v3562
        %v3564 = vshll.u32 %v3555, %v3562
        %v3565 = vshrl.u32 %v3547, %v3563
        %v3566 = vor.u32 %v3564, %v3565
        %v3567 = vsub.s32 4294967266, %v3562
        %v3568 = vadd.s32 %v3567, 127
        %v3569 = vshll.u32 %v3568, 23
        %v3570 = vor.u32 4788187, %v3569
        %v3571 = vand.u32 2147483647, %v3570
        %v3573 = vcvt.s32.f32 %v3566
        %v3574 = vmul.f32 %v3573, %v3571
        %v3575 = vxor.u32 %v3574, 2147483648
        %v3576 = vsel %vm3493, %v3575, %v3574
        %v3577 = vsub.s32 4, %v3553
        %v3578 = vsel %vm3493, %v3577, %v3553
        %v3579 = vsel %vm3492, %v208, %v3576
        %v3580 = vsel %vm3492, 0, %v3578
        %v3581 = vcosq.f32.pop %v3579
        %v3582 = vsinq.f32.pop %v3579
        %vm3583 = vweird.f32 %v208
        %v3584 = vadd.s32 %v3580, 3
        %v3585 = vand.u32 %v3584, 3
        %vm3586 = vcmp.lt.s32.totalorder %v3585, 2
        %vm3587 = vcmp.eq.s32.totalorder %v3585, 0
        %v3588 = vxor.u32 %v3582, 2147483648
        %v3589 = vsel %vm3587, %v3581, %v3588
        %vm3590 = vcmp.eq.s32.totalorder %v3585, 2
        %v3591 = vxor.u32 %v3581, 2147483648
        %v3592 = vsel %vm3590, %v3591, %v3582
        %v3593 = vsel %vm3586, %v3589, %v3592
        %v3594 = vsel %vm3583, nan, %v3593
        %v3595 = vand.u32 2147483647, %v209
        %vm3596 = vcmp.le.f32.partialorder %v3595, 0.7853982
        %vm3597 = vcmp.lt.s32.totalorder %v209, 0
        %v3598 = vand.u32 %v209, 2139095040
        %v3599 = vshrl.u32 %v3598, 23
        %v3600 = vsub.s32 %v3599, 127
        %v3601 = vand.u32 2147483647, %v209
        %v3602 = vand.u32 %v3601, 8388607
        %v3603 = vor.u32 %v3602, 8388608
        %v3604 = vsub.s32 0, %v3603
        %v3605 = vadd.s32 %v3600, 1
        %vm3606 = vcmp.gt.s32.totalorder %v3605, 0
        %v3607 = vsel %vm3606, %v3605, 0
        %v3608 = vshrl.u32 %v3607, 5
        %v3609 = vand.u32 %v3607, 31
        %v3610 = vsub.s32 32, %v3609
        %v3611 = vshrl.u32 683565275, %v3610
        %v3612 = vshll.u32 683565275, %v3609
        %v3613 = vshrl.u32 2475754826, %v3610
        %v3614 = vor.u32 %v3612, %v3613
        %v3615 = vshll.u32 2475754826, %v3609
        %v3616 = vshrl.u32 2131351028, %v3610
        %v3617 = vor.u32 %v3615, %v3616
        %v3618 = vshll.u32 2131351028, %v3609
        %v3619 = vshrl.u32 2102212464, %v3610
        %v3620 = vor.u32 %v3618, %v3619
        %v3621 = vshll.u32 2102212464, %v3609
        %v3622 = vshrl.u32 920167782, %v3610
        %v3623 = vor.u32 %v3621, %v3622
        %v3624 = vshll.u32 920167782, %v3609
        %v3625 = vshrl.u32 1326507024, %v3610
        %v3626 = vor.u32 %v3624, %v3625
        %vm3627 = vcmp.lt.s32.totalorder %v3608, 1
        %vm3628 = vcmp.lt.s32.totalorder %v3608, 2
        %vm3629 = vcmp.lt.s32.totalorder %v3608, 3
        %vm3630 = vcmp.lt.s32.totalorder %v3608, 4
        %v3631 = vsel %vm3627, %v3611, %v3614
        %v3632 = vsel %vm3630, %v3620, 2102212464
        %v3633 = vsel %vm3629, %v3617, %v3632
        %v3634 = vsel %vm3628, %v3631, %v3633
        %v3635 = vsel %vm3627, %v3614, %v3617
        %v3636 = vsel %vm3630, %v3623, 920167782
        %v3637 = vsel %vm3629, %v3620, %v3636
        %v3638 = vsel %vm3628, %v3635, %v3637
        %v3639 = vsel %vm3627, %v3617, %v3620
        %v3640 = vsel %vm3630, %v3626, 1326507024
        %v3641 = vsel %vm3629, %v3623, %v3640
        %v3642 = vsel %vm3628, %v3639, %v3641
        %v3643 = vshll.u32 %v3603, 8
        %v3644 = vmul.u32.u64.compose %v3643, %v3642
        %v3645 = vextract.low.u32 %v3644
        %v3646 = vextract.high.u32 %v3644
        %v3647 = vmul.u32.u64.compose %v3643, %v3638
        %v3648 = vextract.low.u32 %v3647
        %v3649 = vextract.high.u32 %v3647
        %v3650 = vmul.u32 %v3643, %v3634
        %v3651 = vadd.s32 %v3646, %v3648
        %vm3652 = vc.u32 %v3646, %v3648
        %v3653 = vadd.s32 %v3649, 1
        %v3654 = vsel %vm3652, %v3653, %v3649
        %v3655 = vadd.s32 %v3650, %v3654
        %v3656 = vadd.s32 %v3655, 536870912
        %v3657 = vshrl.u32 %v3656, 30
        %v3658 = vshll.u32 %v3657, 30
        %v3659 = vsub.s32 %v3655, %v3658
        %vm3660 = vcmp.lt.s32.totalorder %v3659, 0
        %v3661 = vsub.s32 0, %v3659
        %v3662 = vsel %vm3660, %v3661, %v3659
        %v3663 = vclz %v3662
        %v3664 = vsub.s32 %v3663, 2
        %vm3665 = vcmp.gt.s32.totalorder 0, %v3664
        %v3666 = vsel %vm3665, 0, %v3664
        %v3667 = vsub.s32 32, %v3666
        %v3668 = vshll.u32 %v3659, %v3666
        %v3669 = vshrl.u32 %v3651, %v3667
        %v3670 = vor.u32 %v3668, %v3669
        %v3671 = vsub.s32 4294967266, %v3666
        %v3672 = vadd.s32 %v3671, 127
        %v3673 = vshll.u32 %v3672, 23
        %v3674 = vor.u32 4788187, %v3673
        %v3675 = vand.u32 2147483647, %v3674
        %v3677 = vcvt.s32.f32 %v3670
        %v3678 = vmul.f32 %v3677, %v3675
        %v3679 = vxor.u32 %v3678, 2147483648
        %v3680 = vsel %vm3597, %v3679, %v3678
        %v3681 = vsub.s32 4, %v3657
        %v3682 = vsel %vm3597, %v3681, %v3657
        %v3683 = vsel %vm3596, %v209, %v3680
        %v3684 = vsel %vm3596, 0, %v3682
        %v3685 = vcosq.f32.pop %v3683
        %v3686 = vsinq.f32.pop %v3683
        %vm3687 = vweird.f32 %v209
        %v3688 = vadd.s32 %v3684, 3
        %v3689 = vand.u32 %v3688, 3
        %vm3690 = vcmp.lt.s32.totalorder %v3689, 2
        %vm3691 = vcmp.eq.s32.totalorder %v3689, 0
        %v3692 = vxor.u32 %v3686, 2147483648
        %v3693 = vsel %vm3691, %v3685, %v3692
        %vm3694 = vcmp.eq.s32.totalorder %v3689, 2
        %v3695 = vxor.u32 %v3685, 2147483648
        %v3696 = vsel %vm3694, %v3695, %v3686
        %v3697 = vsel %vm3690, %v3693, %v3696
        %v3698 = vsel %vm3687, nan, %v3697
        %v3699 = vand.u32 2147483647, %v210
        %vm3700 = vcmp.le.f32.partialorder %v3699, 0.7853982
        %vm3701 = vcmp.lt.s32.totalorder %v210, 0
        %v3702 = vand.u32 %v210, 2139095040
        %v3703 = vshrl.u32 %v3702, 23
        %v3704 = vsub.s32 %v3703, 127
        %v3705 = vand.u32 2147483647, %v210
        %v3706 = vand.u32 %v3705, 8388607
        %v3707 = vor.u32 %v3706, 8388608
        %v3708 = vsub.s32 0, %v3707
        %v3709 = vadd.s32 %v3704, 1
        %vm3710 = vcmp.gt.s32.totalorder %v3709, 0
        %v3711 = vsel %vm3710, %v3709, 0
        %v3712 = vshrl.u32 %v3711, 5
        %v3713 = vand.u32 %v3711, 31
        %v3714 = vsub.s32 32, %v3713
        %v3715 = vshrl.u32 683565275, %v3714
        %v3716 = vshll.u32 683565275, %v3713
        %v3717 = vshrl.u32 2475754826, %v3714
        %v3718 = vor.u32 %v3716, %v3717
        %v3719 = vshll.u32 2475754826, %v3713
        %v3720 = vshrl.u32 2131351028, %v3714
        %v3721 = vor.u32 %v3719, %v3720
        %v3722 = vshll.u32 2131351028, %v3713
        %v3723 = vshrl.u32 2102212464, %v3714
        %v3724 = vor.u32 %v3722, %v3723
        %v3725 = vshll.u32 2102212464, %v3713
        %v3726 = vshrl.u32 920167782, %v3714
        %v3727 = vor.u32 %v3725, %v3726
        %v3728 = vshll.u32 920167782, %v3713
        %v3729 = vshrl.u32 1326507024, %v3714
        %v3730 = vor.u32 %v3728, %v3729
        %vm3731 = vcmp.lt.s32.totalorder %v3712, 1
        %vm3732 = vcmp.lt.s32.totalorder %v3712, 2
        %vm3733 = vcmp.lt.s32.totalorder %v3712, 3
        %vm3734 = vcmp.lt.s32.totalorder %v3712, 4
        %v3735 = vsel %vm3731, %v3715, %v3718
        %v3736 = vsel %vm3734, %v3724, 2102212464
        %v3737 = vsel %vm3733, %v3721, %v3736
        %v3738 = vsel %vm3732, %v3735, %v3737
        %v3739 = vsel %vm3731, %v3718, %v3721
        %v3740 = vsel %vm3734, %v3727, 920167782
        %v3741 = vsel %vm3733, %v3724, %v3740
        %v3742 = vsel %vm3732, %v3739, %v3741
        %v3743 = vsel %vm3731, %v3721, %v3724
        %v3744 = vsel %vm3734, %v3730, 1326507024
        %v3745 = vsel %vm3733, %v3727, %v3744
        %v3746 = vsel %vm3732, %v3743, %v3745
        %v3747 = vshll.u32 %v3707, 8
        %v3748 = vmul.u32.u64.compose %v3747, %v3746
        %v3749 = vextract.low.u32 %v3748
        %v3750 = vextract.high.u32 %v3748
        %v3751 = vmul.u32.u64.compose %v3747, %v3742
        %v3752 = vextract.low.u32 %v3751
        %v3753 = vextract.high.u32 %v3751
        %v3754 = vmul.u32 %v3747, %v3738
        %v3755 = vadd.s32 %v3750, %v3752
        %vm3756 = vc.u32 %v3750, %v3752
        %v3757 = vadd.s32 %v3753, 1
        %v3758 = vsel %vm3756, %v3757, %v3753
        %v3759 = vadd.s32 %v3754, %v3758
        %v3760 = vadd.s32 %v3759, 536870912
        %v3761 = vshrl.u32 %v3760, 30
        %v3762 = vshll.u32 %v3761, 30
        %v3763 = vsub.s32 %v3759, %v3762
        %vm3764 = vcmp.lt.s32.totalorder %v3763, 0
        %v3765 = vsub.s32 0, %v3763
        %v3766 = vsel %vm3764, %v3765, %v3763
        %v3767 = vclz %v3766
        %v3768 = vsub.s32 %v3767, 2
        %vm3769 = vcmp.gt.s32.totalorder 0, %v3768
        %v3770 = vsel %vm3769, 0, %v3768
        %v3771 = vsub.s32 32, %v3770
        %v3772 = vshll.u32 %v3763, %v3770
        %v3773 = vshrl.u32 %v3755, %v3771
        %v3774 = vor.u32 %v3772, %v3773
        %v3775 = vsub.s32 4294967266, %v3770
        %v3776 = vadd.s32 %v3775, 127
        %v3777 = vshll.u32 %v3776, 23
        %v3778 = vor.u32 4788187, %v3777
        %v3779 = vand.u32 2147483647, %v3778
        %v3781 = vcvt.s32.f32 %v3774
        %v3782 = vmul.f32 %v3781, %v3779
        %v3783 = vxor.u32 %v3782, 2147483648
        %v3784 = vsel %vm3701, %v3783, %v3782
        %v3785 = vsub.s32 4, %v3761
        %v3786 = vsel %vm3701, %v3785, %v3761
        %v3787 = vsel %vm3700, %v210, %v3784
        %v3788 = vsel %vm3700, 0, %v3786
        %v3789 = vcosq.f32.pop %v3787
        %v3790 = vsinq.f32.pop %v3787
        %vm3791 = vweird.f32 %v210
        %v3792 = vadd.s32 %v3788, 3
        %v3793 = vand.u32 %v3792, 3
        %vm3794 = vcmp.lt.s32.totalorder %v3793, 2
        %vm3795 = vcmp.eq.s32.totalorder %v3793, 0
        %v3796 = vxor.u32 %v3790, 2147483648
        %v3797 = vsel %vm3795, %v3789, %v3796
        %vm3798 = vcmp.eq.s32.totalorder %v3793, 2
        %v3799 = vxor.u32 %v3789, 2147483648
        %v3800 = vsel %vm3798, %v3799, %v3790
        %v3801 = vsel %vm3794, %v3797, %v3800
        %v3802 = vsel %vm3791, nan, %v3801
        %v3803 = vand.u32 2147483647, %v211
        %vm3804 = vcmp.le.f32.partialorder %v3803, 0.7853982
        %vm3805 = vcmp.lt.s32.totalorder %v211, 0
        %v3806 = vand.u32 %v211, 2139095040
        %v3807 = vshrl.u32 %v3806, 23
        %v3808 = vsub.s32 %v3807, 127
        %v3809 = vand.u32 2147483647, %v211
        %v3810 = vand.u32 %v3809, 8388607
        %v3811 = vor.u32 %v3810, 8388608
        %v3812 = vsub.s32 0, %v3811
        %v3813 = vadd.s32 %v3808, 1
        %vm3814 = vcmp.gt.s32.totalorder %v3813, 0
        %v3815 = vsel %vm3814, %v3813, 0
        %v3816 = vshrl.u32 %v3815, 5
        %v3817 = vand.u32 %v3815, 31
        %v3818 = vsub.s32 32, %v3817
        %v3819 = vshrl.u32 683565275, %v3818
        %v3820 = vshll.u32 683565275, %v3817
        %v3821 = vshrl.u32 2475754826, %v3818
        %v3822 = vor.u32 %v3820, %v3821
        %v3823 = vshll.u32 2475754826, %v3817
        %v3824 = vshrl.u32 2131351028, %v3818
        %v3825 = vor.u32 %v3823, %v3824
        %v3826 = vshll.u32 2131351028, %v3817
        %v3827 = vshrl.u32 2102212464, %v3818
        %v3828 = vor.u32 %v3826, %v3827
        %v3829 = vshll.u32 2102212464, %v3817
        %v3830 = vshrl.u32 920167782, %v3818
        %v3831 = vor.u32 %v3829, %v3830
        %v3832 = vshll.u32 920167782, %v3817
        %v3833 = vshrl.u32 1326507024, %v3818
        %v3834 = vor.u32 %v3832, %v3833
        %vm3835 = vcmp.lt.s32.totalorder %v3816, 1
        %vm3836 = vcmp.lt.s32.totalorder %v3816, 2
        %vm3837 = vcmp.lt.s32.totalorder %v3816, 3
        %vm3838 = vcmp.lt.s32.totalorder %v3816, 4
        %v3839 = vsel %vm3835, %v3819, %v3822
        %v3840 = vsel %vm3838, %v3828, 2102212464
        %v3841 = vsel %vm3837, %v3825, %v3840
        %v3842 = vsel %vm3836, %v3839, %v3841
        %v3843 = vsel %vm3835, %v3822, %v3825
        %v3844 = vsel %vm3838, %v3831, 920167782
        %v3845 = vsel %vm3837, %v3828, %v3844
        %v3846 = vsel %vm3836, %v3843, %v3845
        %v3847 = vsel %vm3835, %v3825, %v3828
        %v3848 = vsel %vm3838, %v3834, 1326507024
        %v3849 = vsel %vm3837, %v3831, %v3848
        %v3850 = vsel %vm3836, %v3847, %v3849
        %v3851 = vshll.u32 %v3811, 8
        %v3852 = vmul.u32.u64.compose %v3851, %v3850
        %v3853 = vextract.low.u32 %v3852
        %v3854 = vextract.high.u32 %v3852
        %v3855 = vmul.u32.u64.compose %v3851, %v3846
        %v3856 = vextract.low.u32 %v3855
        %v3857 = vextract.high.u32 %v3855
        %v3858 = vmul.u32 %v3851, %v3842
        %v3859 = vadd.s32 %v3854, %v3856
        %vm3860 = vc.u32 %v3854, %v3856
        %v3861 = vadd.s32 %v3857, 1
        %v3862 = vsel %vm3860, %v3861, %v3857
        %v3863 = vadd.s32 %v3858, %v3862
        %v3864 = vadd.s32 %v3863, 536870912
        %v3865 = vshrl.u32 %v3864, 30
        %v3866 = vshll.u32 %v3865, 30
        %v3867 = vsub.s32 %v3863, %v3866
        %vm3868 = vcmp.lt.s32.totalorder %v3867, 0
        %v3869 = vsub.s32 0, %v3867
        %v3870 = vsel %vm3868, %v3869, %v3867
        %v3871 = vclz %v3870
        %v3872 = vsub.s32 %v3871, 2
        %vm3873 = vcmp.gt.s32.totalorder 0, %v3872
        %v3874 = vsel %vm3873, 0, %v3872
        %v3875 = vsub.s32 32, %v3874
        %v3876 = vshll.u32 %v3867, %v3874
        %v3877 = vshrl.u32 %v3859, %v3875
        %v3878 = vor.u32 %v3876, %v3877
        %v3879 = vsub.s32 4294967266, %v3874
        %v3880 = vadd.s32 %v3879, 127
        %v3881 = vshll.u32 %v3880, 23
        %v3882 = vor.u32 4788187, %v3881
        %v3883 = vand.u32 2147483647, %v3882
        %v3885 = vcvt.s32.f32 %v3878
        %v3886 = vmul.f32 %v3885, %v3883
        %v3887 = vxor.u32 %v3886, 2147483648
        %v3888 = vsel %vm3805, %v3887, %v3886
        %v3889 = vsub.s32 4, %v3865
        %v3890 = vsel %vm3805, %v3889, %v3865
        %v3891 = vsel %vm3804, %v211, %v3888
        %v3892 = vsel %vm3804, 0, %v3890
        %v3893 = vcosq.f32.pop %v3891
        %v3894 = vsinq.f32.pop %v3891
        %vm3895 = vweird.f32 %v211
        %v3896 = vadd.s32 %v3892, 3
        %v3897 = vand.u32 %v3896, 3
        %vm3898 = vcmp.lt.s32.totalorder %v3897, 2
        %vm3899 = vcmp.eq.s32.totalorder %v3897, 0
        %v3900 = vxor.u32 %v3894, 2147483648
        %v3901 = vsel %vm3899, %v3893, %v3900
        %vm3902 = vcmp.eq.s32.totalorder %v3897, 2
        %v3903 = vxor.u32 %v3893, 2147483648
        %v3904 = vsel %vm3902, %v3903, %v3894
        %v3905 = vsel %vm3898, %v3901, %v3904
        %v3906 = vsel %vm3895, nan, %v3905
        %v3907 = vand.u32 2147483647, %v212
        %vm3908 = vcmp.le.f32.partialorder %v3907, 0.7853982
        %vm3909 = vcmp.lt.s32.totalorder %v212, 0
        %v3910 = vand.u32 %v212, 2139095040
        %v3911 = vshrl.u32 %v3910, 23
        %v3912 = vsub.s32 %v3911, 127
        %v3913 = vand.u32 2147483647, %v212
        %v3914 = vand.u32 %v3913, 8388607
        %v3915 = vor.u32 %v3914, 8388608
        %v3916 = vsub.s32 0, %v3915
        %v3917 = vadd.s32 %v3912, 1
        %vm3918 = vcmp.gt.s32.totalorder %v3917, 0
        %v3919 = vsel %vm3918, %v3917, 0
        %v3920 = vshrl.u32 %v3919, 5
        %v3921 = vand.u32 %v3919, 31
        %v3922 = vsub.s32 32, %v3921
        %v3923 = vshrl.u32 683565275, %v3922
        %v3924 = vshll.u32 683565275, %v3921
        %v3925 = vshrl.u32 2475754826, %v3922
        %v3926 = vor.u32 %v3924, %v3925
        %v3927 = vshll.u32 2475754826, %v3921
        %v3928 = vshrl.u32 2131351028, %v3922
        %v3929 = vor.u32 %v3927, %v3928
        %v3930 = vshll.u32 2131351028, %v3921
        %v3931 = vshrl.u32 2102212464, %v3922
        %v3932 = vor.u32 %v3930, %v3931
        %v3933 = vshll.u32 2102212464, %v3921
        %v3934 = vshrl.u32 920167782, %v3922
        %v3935 = vor.u32 %v3933, %v3934
        %v3936 = vshll.u32 920167782, %v3921
        %v3937 = vshrl.u32 1326507024, %v3922
        %v3938 = vor.u32 %v3936, %v3937
        %vm3939 = vcmp.lt.s32.totalorder %v3920, 1
        %vm3940 = vcmp.lt.s32.totalorder %v3920, 2
        %vm3941 = vcmp.lt.s32.totalorder %v3920, 3
        %vm3942 = vcmp.lt.s32.totalorder %v3920, 4
        %v3943 = vsel %vm3939, %v3923, %v3926
        %v3944 = vsel %vm3942, %v3932, 2102212464
        %v3945 = vsel %vm3941, %v3929, %v3944
        %v3946 = vsel %vm3940, %v3943, %v3945
        %v3947 = vsel %vm3939, %v3926, %v3929
        %v3948 = vsel %vm3942, %v3935, 920167782
        %v3949 = vsel %vm3941, %v3932, %v3948
        %v3950 = vsel %vm3940, %v3947, %v3949
        %v3951 = vsel %vm3939, %v3929, %v3932
        %v3952 = vsel %vm3942, %v3938, 1326507024
        %v3953 = vsel %vm3941, %v3935, %v3952
        %v3954 = vsel %vm3940, %v3951, %v3953
        %v3955 = vshll.u32 %v3915, 8
        %v3956 = vmul.u32.u64.compose %v3955, %v3954
        %v3957 = vextract.low.u32 %v3956
        %v3958 = vextract.high.u32 %v3956
        %v3959 = vmul.u32.u64.compose %v3955, %v3950
        %v3960 = vextract.low.u32 %v3959
        %v3961 = vextract.high.u32 %v3959
        %v3962 = vmul.u32 %v3955, %v3946
        %v3963 = vadd.s32 %v3958, %v3960
        %vm3964 = vc.u32 %v3958, %v3960
        %v3965 = vadd.s32 %v3961, 1
        %v3966 = vsel %vm3964, %v3965, %v3961
        %v3967 = vadd.s32 %v3962, %v3966
        %v3968 = vadd.s32 %v3967, 536870912
        %v3969 = vshrl.u32 %v3968, 30
        %v3970 = vshll.u32 %v3969, 30
        %v3971 = vsub.s32 %v3967, %v3970
        %vm3972 = vcmp.lt.s32.totalorder %v3971, 0
        %v3973 = vsub.s32 0, %v3971
        %v3974 = vsel %vm3972, %v3973, %v3971
        %v3975 = vclz %v3974
        %v3976 = vsub.s32 %v3975, 2
        %vm3977 = vcmp.gt.s32.totalorder 0, %v3976
        %v3978 = vsel %vm3977, 0, %v3976
        %v3979 = vsub.s32 32, %v3978
        %v3980 = vshll.u32 %v3971, %v3978
        %v3981 = vshrl.u32 %v3963, %v3979
        %v3982 = vor.u32 %v3980, %v3981
        %v3983 = vsub.s32 4294967266, %v3978
        %v3984 = vadd.s32 %v3983, 127
        %v3985 = vshll.u32 %v3984, 23
        %v3986 = vor.u32 4788187, %v3985
        %v3987 = vand.u32 2147483647, %v3986
        %v3989 = vcvt.s32.f32 %v3982
        %v3990 = vmul.f32 %v3989, %v3987
        %v3991 = vxor.u32 %v3990, 2147483648
        %v3992 = vsel %vm3909, %v3991, %v3990
        %v3993 = vsub.s32 4, %v3969
        %v3994 = vsel %vm3909, %v3993, %v3969
        %v3995 = vsel %vm3908, %v212, %v3992
        %v3996 = vsel %vm3908, 0, %v3994
        %v3997 = vcosq.f32.pop %v3995
        %v3998 = vsinq.f32.pop %v3995
        %vm3999 = vweird.f32 %v212
        %v4000 = vadd.s32 %v3996, 3
        %v4001 = vand.u32 %v4000, 3
        %vm4002 = vcmp.lt.s32.totalorder %v4001, 2
        %vm4003 = vcmp.eq.s32.totalorder %v4001, 0
        %v4004 = vxor.u32 %v3998, 2147483648
        %v4005 = vsel %vm4003, %v3997, %v4004
        %vm4006 = vcmp.eq.s32.totalorder %v4001, 2
        %v4007 = vxor.u32 %v3997, 2147483648
        %v4008 = vsel %vm4006, %v4007, %v3998
        %v4009 = vsel %vm4002, %v4005, %v4008
        %v4010 = vsel %vm3999, nan, %v4009
        %v4011 = vand.u32 2147483647, %v213
        %vm4012 = vcmp.le.f32.partialorder %v4011, 0.7853982
        %vm4013 = vcmp.lt.s32.totalorder %v213, 0
        %v4014 = vand.u32 %v213, 2139095040
        %v4015 = vshrl.u32 %v4014, 23
        %v4016 = vsub.s32 %v4015, 127
        %v4017 = vand.u32 2147483647, %v213
        %v4018 = vand.u32 %v4017, 8388607
        %v4019 = vor.u32 %v4018, 8388608
        %v4020 = vsub.s32 0, %v4019
        %v4021 = vadd.s32 %v4016, 1
        %vm4022 = vcmp.gt.s32.totalorder %v4021, 0
        %v4023 = vsel %vm4022, %v4021, 0
        %v4024 = vshrl.u32 %v4023, 5
        %v4025 = vand.u32 %v4023, 31
        %v4026 = vsub.s32 32, %v4025
        %v4027 = vshrl.u32 683565275, %v4026
        %v4028 = vshll.u32 683565275, %v4025
        %v4029 = vshrl.u32 2475754826, %v4026
        %v4030 = vor.u32 %v4028, %v4029
        %v4031 = vshll.u32 2475754826, %v4025
        %v4032 = vshrl.u32 2131351028, %v4026
        %v4033 = vor.u32 %v4031, %v4032
        %v4034 = vshll.u32 2131351028, %v4025
        %v4035 = vshrl.u32 2102212464, %v4026
        %v4036 = vor.u32 %v4034, %v4035
        %v4037 = vshll.u32 2102212464, %v4025
        %v4038 = vshrl.u32 920167782, %v4026
        %v4039 = vor.u32 %v4037, %v4038
        %v4040 = vshll.u32 920167782, %v4025
        %v4041 = vshrl.u32 1326507024, %v4026
        %v4042 = vor.u32 %v4040, %v4041
        %vm4043 = vcmp.lt.s32.totalorder %v4024, 1
        %vm4044 = vcmp.lt.s32.totalorder %v4024, 2
        %vm4045 = vcmp.lt.s32.totalorder %v4024, 3
        %vm4046 = vcmp.lt.s32.totalorder %v4024, 4
        %v4047 = vsel %vm4043, %v4027, %v4030
        %v4048 = vsel %vm4046, %v4036, 2102212464
        %v4049 = vsel %vm4045, %v4033, %v4048
        %v4050 = vsel %vm4044, %v4047, %v4049
        %v4051 = vsel %vm4043, %v4030, %v4033
        %v4052 = vsel %vm4046, %v4039, 920167782
        %v4053 = vsel %vm4045, %v4036, %v4052
        %v4054 = vsel %vm4044, %v4051, %v4053
        %v4055 = vsel %vm4043, %v4033, %v4036
        %v4056 = vsel %vm4046, %v4042, 1326507024
        %v4057 = vsel %vm4045, %v4039, %v4056
        %v4058 = vsel %vm4044, %v4055, %v4057
        %v4059 = vshll.u32 %v4019, 8
        %v4060 = vmul.u32.u64.compose %v4059, %v4058
        %v4061 = vextract.low.u32 %v4060
        %v4062 = vextract.high.u32 %v4060
        %v4063 = vmul.u32.u64.compose %v4059, %v4054
        %v4064 = vextract.low.u32 %v4063
        %v4065 = vextract.high.u32 %v4063
        %v4066 = vmul.u32 %v4059, %v4050
        %v4067 = vadd.s32 %v4062, %v4064
        %vm4068 = vc.u32 %v4062, %v4064
        %v4069 = vadd.s32 %v4065, 1
        %v4070 = vsel %vm4068, %v4069, %v4065
        %v4071 = vadd.s32 %v4066, %v4070
        %v4072 = vadd.s32 %v4071, 536870912
        %v4073 = vshrl.u32 %v4072, 30
        %v4074 = vshll.u32 %v4073, 30
        %v4075 = vsub.s32 %v4071, %v4074
        %vm4076 = vcmp.lt.s32.totalorder %v4075, 0
        %v4077 = vsub.s32 0, %v4075
        %v4078 = vsel %vm4076, %v4077, %v4075
        %v4079 = vclz %v4078
        %v4080 = vsub.s32 %v4079, 2
        %vm4081 = vcmp.gt.s32.totalorder 0, %v4080
        %v4082 = vsel %vm4081, 0, %v4080
        %v4083 = vsub.s32 32, %v4082
        %v4084 = vshll.u32 %v4075, %v4082
        %v4085 = vshrl.u32 %v4067, %v4083
        %v4086 = vor.u32 %v4084, %v4085
        %v4087 = vsub.s32 4294967266, %v4082
        %v4088 = vadd.s32 %v4087, 127
        %v4089 = vshll.u32 %v4088, 23
        %v4090 = vor.u32 4788187, %v4089
        %v4091 = vand.u32 2147483647, %v4090
        %v4093 = vcvt.s32.f32 %v4086
        %v4094 = vmul.f32 %v4093, %v4091
        %v4095 = vxor.u32 %v4094, 2147483648
        %v4096 = vsel %vm4013, %v4095, %v4094
        %v4097 = vsub.s32 4, %v4073
        %v4098 = vsel %vm4013, %v4097, %v4073
        %v4099 = vsel %vm4012, %v213, %v4096
        %v4100 = vsel %vm4012, 0, %v4098
        %v4101 = vcosq.f32.pop %v4099
        %v4102 = vsinq.f32.pop %v4099
        %vm4103 = vweird.f32 %v213
        %v4104 = vadd.s32 %v4100, 3
        %v4105 = vand.u32 %v4104, 3
        %vm4106 = vcmp.lt.s32.totalorder %v4105, 2
        %vm4107 = vcmp.eq.s32.totalorder %v4105, 0
        %v4108 = vxor.u32 %v4102, 2147483648
        %v4109 = vsel %vm4107, %v4101, %v4108
        %vm4110 = vcmp.eq.s32.totalorder %v4105, 2
        %v4111 = vxor.u32 %v4101, 2147483648
        %v4112 = vsel %vm4110, %v4111, %v4102
        %v4113 = vsel %vm4106, %v4109, %v4112
        %v4114 = vsel %vm4103, nan, %v4113
        %v4115 = vand.u32 2147483647, %v214
        %vm4116 = vcmp.le.f32.partialorder %v4115, 0.7853982
        %vm4117 = vcmp.lt.s32.totalorder %v214, 0
        %v4118 = vand.u32 %v214, 2139095040
        %v4119 = vshrl.u32 %v4118, 23
        %v4120 = vsub.s32 %v4119, 127
        %v4121 = vand.u32 2147483647, %v214
        %v4122 = vand.u32 %v4121, 8388607
        %v4123 = vor.u32 %v4122, 8388608
        %v4124 = vsub.s32 0, %v4123
        %v4125 = vadd.s32 %v4120, 1
        %vm4126 = vcmp.gt.s32.totalorder %v4125, 0
        %v4127 = vsel %vm4126, %v4125, 0
        %v4128 = vshrl.u32 %v4127, 5
        %v4129 = vand.u32 %v4127, 31
        %v4130 = vsub.s32 32, %v4129
        %v4131 = vshrl.u32 683565275, %v4130
        %v4132 = vshll.u32 683565275, %v4129
        %v4133 = vshrl.u32 2475754826, %v4130
        %v4134 = vor.u32 %v4132, %v4133
        %v4135 = vshll.u32 2475754826, %v4129
        %v4136 = vshrl.u32 2131351028, %v4130
        %v4137 = vor.u32 %v4135, %v4136
        %v4138 = vshll.u32 2131351028, %v4129
        %v4139 = vshrl.u32 2102212464, %v4130
        %v4140 = vor.u32 %v4138, %v4139
        %v4141 = vshll.u32 2102212464, %v4129
        %v4142 = vshrl.u32 920167782, %v4130
        %v4143 = vor.u32 %v4141, %v4142
        %v4144 = vshll.u32 920167782, %v4129
        %v4145 = vshrl.u32 1326507024, %v4130
        %v4146 = vor.u32 %v4144, %v4145
        %vm4147 = vcmp.lt.s32.totalorder %v4128, 1
        %vm4148 = vcmp.lt.s32.totalorder %v4128, 2
        %vm4149 = vcmp.lt.s32.totalorder %v4128, 3
        %vm4150 = vcmp.lt.s32.totalorder %v4128, 4
        %v4151 = vsel %vm4147, %v4131, %v4134
        %v4152 = vsel %vm4150, %v4140, 2102212464
        %v4153 = vsel %vm4149, %v4137, %v4152
        %v4154 = vsel %vm4148, %v4151, %v4153
        %v4155 = vsel %vm4147, %v4134, %v4137
        %v4156 = vsel %vm4150, %v4143, 920167782
        %v4157 = vsel %vm4149, %v4140, %v4156
        %v4158 = vsel %vm4148, %v4155, %v4157
        %v4159 = vsel %vm4147, %v4137, %v4140
        %v4160 = vsel %vm4150, %v4146, 1326507024
        %v4161 = vsel %vm4149, %v4143, %v4160
        %v4162 = vsel %vm4148, %v4159, %v4161
        %v4163 = vshll.u32 %v4123, 8
        %v4164 = vmul.u32.u64.compose %v4163, %v4162
        %v4165 = vextract.low.u32 %v4164
        %v4166 = vextract.high.u32 %v4164
        %v4167 = vmul.u32.u64.compose %v4163, %v4158
        %v4168 = vextract.low.u32 %v4167
        %v4169 = vextract.high.u32 %v4167
        %v4170 = vmul.u32 %v4163, %v4154
        %v4171 = vadd.s32 %v4166, %v4168
        %vm4172 = vc.u32 %v4166, %v4168
        %v4173 = vadd.s32 %v4169, 1
        %v4174 = vsel %vm4172, %v4173, %v4169
        %v4175 = vadd.s32 %v4170, %v4174
        %v4176 = vadd.s32 %v4175, 536870912
        %v4177 = vshrl.u32 %v4176, 30
        %v4178 = vshll.u32 %v4177, 30
        %v4179 = vsub.s32 %v4175, %v4178
        %vm4180 = vcmp.lt.s32.totalorder %v4179, 0
        %v4181 = vsub.s32 0, %v4179
        %v4182 = vsel %vm4180, %v4181, %v4179
        %v4183 = vclz %v4182
        %v4184 = vsub.s32 %v4183, 2
        %vm4185 = vcmp.gt.s32.totalorder 0, %v4184
        %v4186 = vsel %vm4185, 0, %v4184
        %v4187 = vsub.s32 32, %v4186
        %v4188 = vshll.u32 %v4179, %v4186
        %v4189 = vshrl.u32 %v4171, %v4187
        %v4190 = vor.u32 %v4188, %v4189
        %v4191 = vsub.s32 4294967266, %v4186
        %v4192 = vadd.s32 %v4191, 127
        %v4193 = vshll.u32 %v4192, 23
        %v4194 = vor.u32 4788187, %v4193
        %v4195 = vand.u32 2147483647, %v4194
        %v4197 = vcvt.s32.f32 %v4190
        %v4198 = vmul.f32 %v4197, %v4195
        %v4199 = vxor.u32 %v4198, 2147483648
        %v4200 = vsel %vm4117, %v4199, %v4198
        %v4201 = vsub.s32 4, %v4177
        %v4202 = vsel %vm4117, %v4201, %v4177
        %v4203 = vsel %vm4116, %v214, %v4200
        %v4204 = vsel %vm4116, 0, %v4202
        %v4205 = vcosq.f32.pop %v4203
        %v4206 = vsinq.f32.pop %v4203
        %vm4207 = vweird.f32 %v214
        %v4208 = vadd.s32 %v4204, 3
        %v4209 = vand.u32 %v4208, 3
        %vm4210 = vcmp.lt.s32.totalorder %v4209, 2
        %vm4211 = vcmp.eq.s32.totalorder %v4209, 0
        %v4212 = vxor.u32 %v4206, 2147483648
        %v4213 = vsel %vm4211, %v4205, %v4212
        %vm4214 = vcmp.eq.s32.totalorder %v4209, 2
        %v4215 = vxor.u32 %v4205, 2147483648
        %v4216 = vsel %vm4214, %v4215, %v4206
        %v4217 = vsel %vm4210, %v4213, %v4216
        %v4218 = vsel %vm4207, nan, %v4217
        %v4219 = vand.u32 2147483647, %v215
        %vm4220 = vcmp.le.f32.partialorder %v4219, 0.7853982
        %vm4221 = vcmp.lt.s32.totalorder %v215, 0
        %v4222 = vand.u32 %v215, 2139095040
        %v4223 = vshrl.u32 %v4222, 23
        %v4224 = vsub.s32 %v4223, 127
        %v4225 = vand.u32 2147483647, %v215
        %v4226 = vand.u32 %v4225, 8388607
        %v4227 = vor.u32 %v4226, 8388608
        %v4228 = vsub.s32 0, %v4227
        %v4229 = vadd.s32 %v4224, 1
        %vm4230 = vcmp.gt.s32.totalorder %v4229, 0
        %v4231 = vsel %vm4230, %v4229, 0
        %v4232 = vshrl.u32 %v4231, 5
        %v4233 = vand.u32 %v4231, 31
        %v4234 = vsub.s32 32, %v4233
        %v4235 = vshrl.u32 683565275, %v4234
        %v4236 = vshll.u32 683565275, %v4233
        %v4237 = vshrl.u32 2475754826, %v4234
        %v4238 = vor.u32 %v4236, %v4237
        %v4239 = vshll.u32 2475754826, %v4233
        %v4240 = vshrl.u32 2131351028, %v4234
        %v4241 = vor.u32 %v4239, %v4240
        %v4242 = vshll.u32 2131351028, %v4233
        %v4243 = vshrl.u32 2102212464, %v4234
        %v4244 = vor.u32 %v4242, %v4243
        %v4245 = vshll.u32 2102212464, %v4233
        %v4246 = vshrl.u32 920167782, %v4234
        %v4247 = vor.u32 %v4245, %v4246
        %v4248 = vshll.u32 920167782, %v4233
        %v4249 = vshrl.u32 1326507024, %v4234
        %v4250 = vor.u32 %v4248, %v4249
        %vm4251 = vcmp.lt.s32.totalorder %v4232, 1
        %vm4252 = vcmp.lt.s32.totalorder %v4232, 2
        %vm4253 = vcmp.lt.s32.totalorder %v4232, 3
        %vm4254 = vcmp.lt.s32.totalorder %v4232, 4
        %v4255 = vsel %vm4251, %v4235, %v4238
        %v4256 = vsel %vm4254, %v4244, 2102212464
        %v4257 = vsel %vm4253, %v4241, %v4256
        %v4258 = vsel %vm4252, %v4255, %v4257
        %v4259 = vsel %vm4251, %v4238, %v4241
        %v4260 = vsel %vm4254, %v4247, 920167782
        %v4261 = vsel %vm4253, %v4244, %v4260
        %v4262 = vsel %vm4252, %v4259, %v4261
        %v4263 = vsel %vm4251, %v4241, %v4244
        %v4264 = vsel %vm4254, %v4250, 1326507024
        %v4265 = vsel %vm4253, %v4247, %v4264
        %v4266 = vsel %vm4252, %v4263, %v4265
        %v4267 = vshll.u32 %v4227, 8
        %v4268 = vmul.u32.u64.compose %v4267, %v4266
        %v4269 = vextract.low.u32 %v4268
        %v4270 = vextract.high.u32 %v4268
        %v4271 = vmul.u32.u64.compose %v4267, %v4262
        %v4272 = vextract.low.u32 %v4271
        %v4273 = vextract.high.u32 %v4271
        %v4274 = vmul.u32 %v4267, %v4258
        %v4275 = vadd.s32 %v4270, %v4272
        %vm4276 = vc.u32 %v4270, %v4272
        %v4277 = vadd.s32 %v4273, 1
        %v4278 = vsel %vm4276, %v4277, %v4273
        %v4279 = vadd.s32 %v4274, %v4278
        %v4280 = vadd.s32 %v4279, 536870912
        %v4281 = vshrl.u32 %v4280, 30
        %v4282 = vshll.u32 %v4281, 30
        %v4283 = vsub.s32 %v4279, %v4282
        %vm4284 = vcmp.lt.s32.totalorder %v4283, 0
        %v4285 = vsub.s32 0, %v4283
        %v4286 = vsel %vm4284, %v4285, %v4283
        %v4287 = vclz %v4286
        %v4288 = vsub.s32 %v4287, 2
        %vm4289 = vcmp.gt.s32.totalorder 0, %v4288
        %v4290 = vsel %vm4289, 0, %v4288
        %v4291 = vsub.s32 32, %v4290
        %v4292 = vshll.u32 %v4283, %v4290
        %v4293 = vshrl.u32 %v4275, %v4291
        %v4294 = vor.u32 %v4292, %v4293
        %v4295 = vsub.s32 4294967266, %v4290
        %v4296 = vadd.s32 %v4295, 127
        %v4297 = vshll.u32 %v4296, 23
        %v4298 = vor.u32 4788187, %v4297
        %v4299 = vand.u32 2147483647, %v4298
        %v4301 = vcvt.s32.f32 %v4294
        %v4302 = vmul.f32 %v4301, %v4299
        %v4303 = vxor.u32 %v4302, 2147483648
        %v4304 = vsel %vm4221, %v4303, %v4302
        %v4305 = vsub.s32 4, %v4281
        %v4306 = vsel %vm4221, %v4305, %v4281
        %v4307 = vsel %vm4220, %v215, %v4304
        %v4308 = vsel %vm4220, 0, %v4306
        %v4309 = vcosq.f32.pop %v4307
        %v4310 = vsinq.f32.pop %v4307
        %vm4311 = vweird.f32 %v215
        %v4312 = vadd.s32 %v4308, 3
        %v4313 = vand.u32 %v4312, 3
        %vm4314 = vcmp.lt.s32.totalorder %v4313, 2
        %vm4315 = vcmp.eq.s32.totalorder %v4313, 0
        %v4316 = vxor.u32 %v4310, 2147483648
        %v4317 = vsel %vm4315, %v4309, %v4316
        %vm4318 = vcmp.eq.s32.totalorder %v4313, 2
        %v4319 = vxor.u32 %v4309, 2147483648
        %v4320 = vsel %vm4318, %v4319, %v4310
        %v4321 = vsel %vm4314, %v4317, %v4320
        %v4322 = vsel %vm4311, nan, %v4321
        %v4323 = vand.u32 2147483647, %v216
        %vm4324 = vcmp.le.f32.partialorder %v4323, 0.7853982
        %vm4325 = vcmp.lt.s32.totalorder %v216, 0
        %v4326 = vand.u32 %v216, 2139095040
        %v4327 = vshrl.u32 %v4326, 23
        %v4328 = vsub.s32 %v4327, 127
        %v4329 = vand.u32 2147483647, %v216
        %v4330 = vand.u32 %v4329, 8388607
        %v4331 = vor.u32 %v4330, 8388608
        %v4332 = vsub.s32 0, %v4331
        %v4333 = vadd.s32 %v4328, 1
        %vm4334 = vcmp.gt.s32.totalorder %v4333, 0
        %v4335 = vsel %vm4334, %v4333, 0
        %v4336 = vshrl.u32 %v4335, 5
        %v4337 = vand.u32 %v4335, 31
        %v4338 = vsub.s32 32, %v4337
        %v4339 = vshrl.u32 683565275, %v4338
        %v4340 = vshll.u32 683565275, %v4337
        %v4341 = vshrl.u32 2475754826, %v4338
        %v4342 = vor.u32 %v4340, %v4341
        %v4343 = vshll.u32 2475754826, %v4337
        %v4344 = vshrl.u32 2131351028, %v4338
        %v4345 = vor.u32 %v4343, %v4344
        %v4346 = vshll.u32 2131351028, %v4337
        %v4347 = vshrl.u32 2102212464, %v4338
        %v4348 = vor.u32 %v4346, %v4347
        %v4349 = vshll.u32 2102212464, %v4337
        %v4350 = vshrl.u32 920167782, %v4338
        %v4351 = vor.u32 %v4349, %v4350
        %v4352 = vshll.u32 920167782, %v4337
        %v4353 = vshrl.u32 1326507024, %v4338
        %v4354 = vor.u32 %v4352, %v4353
        %vm4355 = vcmp.lt.s32.totalorder %v4336, 1
        %vm4356 = vcmp.lt.s32.totalorder %v4336, 2
        %vm4357 = vcmp.lt.s32.totalorder %v4336, 3
        %vm4358 = vcmp.lt.s32.totalorder %v4336, 4
        %v4359 = vsel %vm4355, %v4339, %v4342
        %v4360 = vsel %vm4358, %v4348, 2102212464
        %v4361 = vsel %vm4357, %v4345, %v4360
        %v4362 = vsel %vm4356, %v4359, %v4361
        %v4363 = vsel %vm4355, %v4342, %v4345
        %v4364 = vsel %vm4358, %v4351, 920167782
        %v4365 = vsel %vm4357, %v4348, %v4364
        %v4366 = vsel %vm4356, %v4363, %v4365
        %v4367 = vsel %vm4355, %v4345, %v4348
        %v4368 = vsel %vm4358, %v4354, 1326507024
        %v4369 = vsel %vm4357, %v4351, %v4368
        %v4370 = vsel %vm4356, %v4367, %v4369
        %v4371 = vshll.u32 %v4331, 8
        %v4372 = vmul.u32.u64.compose %v4371, %v4370
        %v4373 = vextract.low.u32 %v4372
        %v4374 = vextract.high.u32 %v4372
        %v4375 = vmul.u32.u64.compose %v4371, %v4366
        %v4376 = vextract.low.u32 %v4375
        %v4377 = vextract.high.u32 %v4375
        %v4378 = vmul.u32 %v4371, %v4362
        %v4379 = vadd.s32 %v4374, %v4376
        %vm4380 = vc.u32 %v4374, %v4376
        %v4381 = vadd.s32 %v4377, 1
        %v4382 = vsel %vm4380, %v4381, %v4377
        %v4383 = vadd.s32 %v4378, %v4382
        %v4384 = vadd.s32 %v4383, 536870912
        %v4385 = vshrl.u32 %v4384, 30
        %v4386 = vshll.u32 %v4385, 30
        %v4387 = vsub.s32 %v4383, %v4386
        %vm4388 = vcmp.lt.s32.totalorder %v4387, 0
        %v4389 = vsub.s32 0, %v4387
        %v4390 = vsel %vm4388, %v4389, %v4387
        %v4391 = vclz %v4390
        %v4392 = vsub.s32 %v4391, 2
        %vm4393 = vcmp.gt.s32.totalorder 0, %v4392
        %v4394 = vsel %vm4393, 0, %v4392
        %v4395 = vsub.s32 32, %v4394
        %v4396 = vshll.u32 %v4387, %v4394
        %v4397 = vshrl.u32 %v4379, %v4395
        %v4398 = vor.u32 %v4396, %v4397
        %v4399 = vsub.s32 4294967266, %v4394
        %v4400 = vadd.s32 %v4399, 127
        %v4401 = vshll.u32 %v4400, 23
        %v4402 = vor.u32 4788187, %v4401
        %v4403 = vand.u32 2147483647, %v4402
        %v4405 = vcvt.s32.f32 %v4398
        %v4406 = vmul.f32 %v4405, %v4403
        %v4407 = vxor.u32 %v4406, 2147483648
        %v4408 = vsel %vm4325, %v4407, %v4406
        %v4409 = vsub.s32 4, %v4385
        %v4410 = vsel %vm4325, %v4409, %v4385
        %v4411 = vsel %vm4324, %v216, %v4408
        %v4412 = vsel %vm4324, 0, %v4410
        %v4413 = vcosq.f32.pop %v4411
        %v4414 = vsinq.f32.pop %v4411
        %vm4415 = vweird.f32 %v216
        %v4416 = vadd.s32 %v4412, 3
        %v4417 = vand.u32 %v4416, 3
        %vm4418 = vcmp.lt.s32.totalorder %v4417, 2
        %vm4419 = vcmp.eq.s32.totalorder %v4417, 0
        %v4420 = vxor.u32 %v4414, 2147483648
        %v4421 = vsel %vm4419, %v4413, %v4420
        %vm4422 = vcmp.eq.s32.totalorder %v4417, 2
        %v4423 = vxor.u32 %v4413, 2147483648
        %v4424 = vsel %vm4422, %v4423, %v4414
        %v4425 = vsel %vm4418, %v4421, %v4424
        %v4426 = vsel %vm4415, nan, %v4425
        %v4427 = vand.u32 2147483647, %v217
        %vm4428 = vcmp.le.f32.partialorder %v4427, 0.7853982
        %vm4429 = vcmp.lt.s32.totalorder %v217, 0
        %v4430 = vand.u32 %v217, 2139095040
        %v4431 = vshrl.u32 %v4430, 23
        %v4432 = vsub.s32 %v4431, 127
        %v4433 = vand.u32 2147483647, %v217
        %v4434 = vand.u32 %v4433, 8388607
        %v4435 = vor.u32 %v4434, 8388608
        %v4436 = vsub.s32 0, %v4435
        %v4437 = vadd.s32 %v4432, 1
        %vm4438 = vcmp.gt.s32.totalorder %v4437, 0
        %v4439 = vsel %vm4438, %v4437, 0
        %v4440 = vshrl.u32 %v4439, 5
        %v4441 = vand.u32 %v4439, 31
        %v4442 = vsub.s32 32, %v4441
        %v4443 = vshrl.u32 683565275, %v4442
        %v4444 = vshll.u32 683565275, %v4441
        %v4445 = vshrl.u32 2475754826, %v4442
        %v4446 = vor.u32 %v4444, %v4445
        %v4447 = vshll.u32 2475754826, %v4441
        %v4448 = vshrl.u32 2131351028, %v4442
        %v4449 = vor.u32 %v4447, %v4448
        %v4450 = vshll.u32 2131351028, %v4441
        %v4451 = vshrl.u32 2102212464, %v4442
        %v4452 = vor.u32 %v4450, %v4451
        %v4453 = vshll.u32 2102212464, %v4441
        %v4454 = vshrl.u32 920167782, %v4442
        %v4455 = vor.u32 %v4453, %v4454
        %v4456 = vshll.u32 920167782, %v4441
        %v4457 = vshrl.u32 1326507024, %v4442
        %v4458 = vor.u32 %v4456, %v4457
        %vm4459 = vcmp.lt.s32.totalorder %v4440, 1
        %vm4460 = vcmp.lt.s32.totalorder %v4440, 2
        %vm4461 = vcmp.lt.s32.totalorder %v4440, 3
        %vm4462 = vcmp.lt.s32.totalorder %v4440, 4
        %v4463 = vsel %vm4459, %v4443, %v4446
        %v4464 = vsel %vm4462, %v4452, 2102212464
        %v4465 = vsel %vm4461, %v4449, %v4464
        %v4466 = vsel %vm4460, %v4463, %v4465
        %v4467 = vsel %vm4459, %v4446, %v4449
        %v4468 = vsel %vm4462, %v4455, 920167782
        %v4469 = vsel %vm4461, %v4452, %v4468
        %v4470 = vsel %vm4460, %v4467, %v4469
        %v4471 = vsel %vm4459, %v4449, %v4452
        %v4472 = vsel %vm4462, %v4458, 1326507024
        %v4473 = vsel %vm4461, %v4455, %v4472
        %v4474 = vsel %vm4460, %v4471, %v4473
        %v4475 = vshll.u32 %v4435, 8
        %v4476 = vmul.u32.u64.compose %v4475, %v4474
        %v4477 = vextract.low.u32 %v4476
        %v4478 = vextract.high.u32 %v4476
        %v4479 = vmul.u32.u64.compose %v4475, %v4470
        %v4480 = vextract.low.u32 %v4479
        %v4481 = vextract.high.u32 %v4479
        %v4482 = vmul.u32 %v4475, %v4466
        %v4483 = vadd.s32 %v4478, %v4480
        %vm4484 = vc.u32 %v4478, %v4480
        %v4485 = vadd.s32 %v4481, 1
        %v4486 = vsel %vm4484, %v4485, %v4481
        %v4487 = vadd.s32 %v4482, %v4486
        %v4488 = vadd.s32 %v4487, 536870912
        %v4489 = vshrl.u32 %v4488, 30
        %v4490 = vshll.u32 %v4489, 30
        %v4491 = vsub.s32 %v4487, %v4490
        %vm4492 = vcmp.lt.s32.totalorder %v4491, 0
        %v4493 = vsub.s32 0, %v4491
        %v4494 = vsel %vm4492, %v4493, %v4491
        %v4495 = vclz %v4494
        %v4496 = vsub.s32 %v4495, 2
        %vm4497 = vcmp.gt.s32.totalorder 0, %v4496
        %v4498 = vsel %vm4497, 0, %v4496
        %v4499 = vsub.s32 32, %v4498
        %v4500 = vshll.u32 %v4491, %v4498
        %v4501 = vshrl.u32 %v4483, %v4499
        %v4502 = vor.u32 %v4500, %v4501
        %v4503 = vsub.s32 4294967266, %v4498
        %v4504 = vadd.s32 %v4503, 127
        %v4505 = vshll.u32 %v4504, 23
        %v4506 = vor.u32 4788187, %v4505
        %v4507 = vand.u32 2147483647, %v4506
        %v4509 = vcvt.s32.f32 %v4502
        %v4510 = vmul.f32 %v4509, %v4507
        %v4511 = vxor.u32 %v4510, 2147483648
        %v4512 = vsel %vm4429, %v4511, %v4510
        %v4513 = vsub.s32 4, %v4489
        %v4514 = vsel %vm4429, %v4513, %v4489
        %v4515 = vsel %vm4428, %v217, %v4512
        %v4516 = vsel %vm4428, 0, %v4514
        %v4517 = vcosq.f32.pop %v4515
        %v4518 = vsinq.f32.pop %v4515
        %vm4519 = vweird.f32 %v217
        %v4520 = vadd.s32 %v4516, 3
        %v4521 = vand.u32 %v4520, 3
        %vm4522 = vcmp.lt.s32.totalorder %v4521, 2
        %vm4523 = vcmp.eq.s32.totalorder %v4521, 0
        %v4524 = vxor.u32 %v4518, 2147483648
        %v4525 = vsel %vm4523, %v4517, %v4524
        %vm4526 = vcmp.eq.s32.totalorder %v4521, 2
        %v4527 = vxor.u32 %v4517, 2147483648
        %v4528 = vsel %vm4526, %v4527, %v4518
        %v4529 = vsel %vm4522, %v4525, %v4528
        %v4530 = vsel %vm4519, nan, %v4529
        %v4531 = vand.u32 2147483647, %v218
        %vm4532 = vcmp.le.f32.partialorder %v4531, 0.7853982
        %vm4533 = vcmp.lt.s32.totalorder %v218, 0
        %v4534 = vand.u32 %v218, 2139095040
        %v4535 = vshrl.u32 %v4534, 23
        %v4536 = vsub.s32 %v4535, 127
        %v4537 = vand.u32 2147483647, %v218
        %v4538 = vand.u32 %v4537, 8388607
        %v4539 = vor.u32 %v4538, 8388608
        %v4540 = vsub.s32 0, %v4539
        %v4541 = vadd.s32 %v4536, 1
        %vm4542 = vcmp.gt.s32.totalorder %v4541, 0
        %v4543 = vsel %vm4542, %v4541, 0
        %v4544 = vshrl.u32 %v4543, 5
        %v4545 = vand.u32 %v4543, 31
        %v4546 = vsub.s32 32, %v4545
        %v4547 = vshrl.u32 683565275, %v4546
        %v4548 = vshll.u32 683565275, %v4545
        %v4549 = vshrl.u32 2475754826, %v4546
        %v4550 = vor.u32 %v4548, %v4549
        %v4551 = vshll.u32 2475754826, %v4545
        %v4552 = vshrl.u32 2131351028, %v4546
        %v4553 = vor.u32 %v4551, %v4552
        %v4554 = vshll.u32 2131351028, %v4545
        %v4555 = vshrl.u32 2102212464, %v4546
        %v4556 = vor.u32 %v4554, %v4555
        %v4557 = vshll.u32 2102212464, %v4545
        %v4558 = vshrl.u32 920167782, %v4546
        %v4559 = vor.u32 %v4557, %v4558
        %v4560 = vshll.u32 920167782, %v4545
        %v4561 = vshrl.u32 1326507024, %v4546
        %v4562 = vor.u32 %v4560, %v4561
        %vm4563 = vcmp.lt.s32.totalorder %v4544, 1
        %vm4564 = vcmp.lt.s32.totalorder %v4544, 2
        %vm4565 = vcmp.lt.s32.totalorder %v4544, 3
        %vm4566 = vcmp.lt.s32.totalorder %v4544, 4
        %v4567 = vsel %vm4563, %v4547, %v4550
        %v4568 = vsel %vm4566, %v4556, 2102212464
        %v4569 = vsel %vm4565, %v4553, %v4568
        %v4570 = vsel %vm4564, %v4567, %v4569
        %v4571 = vsel %vm4563, %v4550, %v4553
        %v4572 = vsel %vm4566, %v4559, 920167782
        %v4573 = vsel %vm4565, %v4556, %v4572
        %v4574 = vsel %vm4564, %v4571, %v4573
        %v4575 = vsel %vm4563, %v4553, %v4556
        %v4576 = vsel %vm4566, %v4562, 1326507024
        %v4577 = vsel %vm4565, %v4559, %v4576
        %v4578 = vsel %vm4564, %v4575, %v4577
        %v4579 = vshll.u32 %v4539, 8
        %v4580 = vmul.u32.u64.compose %v4579, %v4578
        %v4581 = vextract.low.u32 %v4580
        %v4582 = vextract.high.u32 %v4580
        %v4583 = vmul.u32.u64.compose %v4579, %v4574
        %v4584 = vextract.low.u32 %v4583
        %v4585 = vextract.high.u32 %v4583
        %v4586 = vmul.u32 %v4579, %v4570
        %v4587 = vadd.s32 %v4582, %v4584
        %vm4588 = vc.u32 %v4582, %v4584
        %v4589 = vadd.s32 %v4585, 1
        %v4590 = vsel %vm4588, %v4589, %v4585
        %v4591 = vadd.s32 %v4586, %v4590
        %v4592 = vadd.s32 %v4591, 536870912
        %v4593 = vshrl.u32 %v4592, 30
        %v4594 = vshll.u32 %v4593, 30
        %v4595 = vsub.s32 %v4591, %v4594
        %vm4596 = vcmp.lt.s32.totalorder %v4595, 0
        %v4597 = vsub.s32 0, %v4595
        %v4598 = vsel %vm4596, %v4597, %v4595
        %v4599 = vclz %v4598
        %v4600 = vsub.s32 %v4599, 2
        %vm4601 = vcmp.gt.s32.totalorder 0, %v4600
        %v4602 = vsel %vm4601, 0, %v4600
        %v4603 = vsub.s32 32, %v4602
        %v4604 = vshll.u32 %v4595, %v4602
        %v4605 = vshrl.u32 %v4587, %v4603
        %v4606 = vor.u32 %v4604, %v4605
        %v4607 = vsub.s32 4294967266, %v4602
        %v4608 = vadd.s32 %v4607, 127
        %v4609 = vshll.u32 %v4608, 23
        %v4610 = vor.u32 4788187, %v4609
        %v4611 = vand.u32 2147483647, %v4610
        %v4613 = vcvt.s32.f32 %v4606
        %v4614 = vmul.f32 %v4613, %v4611
        %v4615 = vxor.u32 %v4614, 2147483648
        %v4616 = vsel %vm4533, %v4615, %v4614
        %v4617 = vsub.s32 4, %v4593
        %v4618 = vsel %vm4533, %v4617, %v4593
        %v4619 = vsel %vm4532, %v218, %v4616
        %v4620 = vsel %vm4532, 0, %v4618
        %v4621 = vcosq.f32.pop %v4619
        %v4622 = vsinq.f32.pop %v4619
        %vm4623 = vweird.f32 %v218
        %v4624 = vadd.s32 %v4620, 3
        %v4625 = vand.u32 %v4624, 3
        %vm4626 = vcmp.lt.s32.totalorder %v4625, 2
        %vm4627 = vcmp.eq.s32.totalorder %v4625, 0
        %v4628 = vxor.u32 %v4622, 2147483648
        %v4629 = vsel %vm4627, %v4621, %v4628
        %vm4630 = vcmp.eq.s32.totalorder %v4625, 2
        %v4631 = vxor.u32 %v4621, 2147483648
        %v4632 = vsel %vm4630, %v4631, %v4622
        %v4633 = vsel %vm4626, %v4629, %v4632
        %v4634 = vsel %vm4623, nan, %v4633
        %v4635 = vand.u32 2147483647, %v219
        %vm4636 = vcmp.le.f32.partialorder %v4635, 0.7853982
        %vm4637 = vcmp.lt.s32.totalorder %v219, 0
        %v4638 = vand.u32 %v219, 2139095040
        %v4639 = vshrl.u32 %v4638, 23
        %v4640 = vsub.s32 %v4639, 127
        %v4641 = vand.u32 2147483647, %v219
        %v4642 = vand.u32 %v4641, 8388607
        %v4643 = vor.u32 %v4642, 8388608
        %v4644 = vsub.s32 0, %v4643
        %v4645 = vadd.s32 %v4640, 1
        %vm4646 = vcmp.gt.s32.totalorder %v4645, 0
        %v4647 = vsel %vm4646, %v4645, 0
        %v4648 = vshrl.u32 %v4647, 5
        %v4649 = vand.u32 %v4647, 31
        %v4650 = vsub.s32 32, %v4649
        %v4651 = vshrl.u32 683565275, %v4650
        %v4652 = vshll.u32 683565275, %v4649
        %v4653 = vshrl.u32 2475754826, %v4650
        %v4654 = vor.u32 %v4652, %v4653
        %v4655 = vshll.u32 2475754826, %v4649
        %v4656 = vshrl.u32 2131351028, %v4650
        %v4657 = vor.u32 %v4655, %v4656
        %v4658 = vshll.u32 2131351028, %v4649
        %v4659 = vshrl.u32 2102212464, %v4650
        %v4660 = vor.u32 %v4658, %v4659
        %v4661 = vshll.u32 2102212464, %v4649
        %v4662 = vshrl.u32 920167782, %v4650
        %v4663 = vor.u32 %v4661, %v4662
        %v4664 = vshll.u32 920167782, %v4649
        %v4665 = vshrl.u32 1326507024, %v4650
        %v4666 = vor.u32 %v4664, %v4665
        %vm4667 = vcmp.lt.s32.totalorder %v4648, 1
        %vm4668 = vcmp.lt.s32.totalorder %v4648, 2
        %vm4669 = vcmp.lt.s32.totalorder %v4648, 3
        %vm4670 = vcmp.lt.s32.totalorder %v4648, 4
        %v4671 = vsel %vm4667, %v4651, %v4654
        %v4672 = vsel %vm4670, %v4660, 2102212464
        %v4673 = vsel %vm4669, %v4657, %v4672
        %v4674 = vsel %vm4668, %v4671, %v4673
        %v4675 = vsel %vm4667, %v4654, %v4657
        %v4676 = vsel %vm4670, %v4663, 920167782
        %v4677 = vsel %vm4669, %v4660, %v4676
        %v4678 = vsel %vm4668, %v4675, %v4677
        %v4679 = vsel %vm4667, %v4657, %v4660
        %v4680 = vsel %vm4670, %v4666, 1326507024
        %v4681 = vsel %vm4669, %v4663, %v4680
        %v4682 = vsel %vm4668, %v4679, %v4681
        %v4683 = vshll.u32 %v4643, 8
        %v4684 = vmul.u32.u64.compose %v4683, %v4682
        %v4685 = vextract.low.u32 %v4684
        %v4686 = vextract.high.u32 %v4684
        %v4687 = vmul.u32.u64.compose %v4683, %v4678
        %v4688 = vextract.low.u32 %v4687
        %v4689 = vextract.high.u32 %v4687
        %v4690 = vmul.u32 %v4683, %v4674
        %v4691 = vadd.s32 %v4686, %v4688
        %vm4692 = vc.u32 %v4686, %v4688
        %v4693 = vadd.s32 %v4689, 1
        %v4694 = vsel %vm4692, %v4693, %v4689
        %v4695 = vadd.s32 %v4690, %v4694
        %v4696 = vadd.s32 %v4695, 536870912
        %v4697 = vshrl.u32 %v4696, 30
        %v4698 = vshll.u32 %v4697, 30
        %v4699 = vsub.s32 %v4695, %v4698
        %vm4700 = vcmp.lt.s32.totalorder %v4699, 0
        %v4701 = vsub.s32 0, %v4699
        %v4702 = vsel %vm4700, %v4701, %v4699
        %v4703 = vclz %v4702
        %v4704 = vsub.s32 %v4703, 2
        %vm4705 = vcmp.gt.s32.totalorder 0, %v4704
        %v4706 = vsel %vm4705, 0, %v4704
        %v4707 = vsub.s32 32, %v4706
        %v4708 = vshll.u32 %v4699, %v4706
        %v4709 = vshrl.u32 %v4691, %v4707
        %v4710 = vor.u32 %v4708, %v4709
        %v4711 = vsub.s32 4294967266, %v4706
        %v4712 = vadd.s32 %v4711, 127
        %v4713 = vshll.u32 %v4712, 23
        %v4714 = vor.u32 4788187, %v4713
        %v4715 = vand.u32 2147483647, %v4714
        %v4717 = vcvt.s32.f32 %v4710
        %v4718 = vmul.f32 %v4717, %v4715
        %v4719 = vxor.u32 %v4718, 2147483648
        %v4720 = vsel %vm4637, %v4719, %v4718
        %v4721 = vsub.s32 4, %v4697
        %v4722 = vsel %vm4637, %v4721, %v4697
        %v4723 = vsel %vm4636, %v219, %v4720
        %v4724 = vsel %vm4636, 0, %v4722
        %v4725 = vcosq.f32.pop %v4723
        %v4726 = vsinq.f32.pop %v4723
        %vm4727 = vweird.f32 %v219
        %v4728 = vadd.s32 %v4724, 3
        %v4729 = vand.u32 %v4728, 3
        %vm4730 = vcmp.lt.s32.totalorder %v4729, 2
        %vm4731 = vcmp.eq.s32.totalorder %v4729, 0
        %v4732 = vxor.u32 %v4726, 2147483648
        %v4733 = vsel %vm4731, %v4725, %v4732
        %vm4734 = vcmp.eq.s32.totalorder %v4729, 2
        %v4735 = vxor.u32 %v4725, 2147483648
        %v4736 = vsel %vm4734, %v4735, %v4726
        %v4737 = vsel %vm4730, %v4733, %v4736
        %v4738 = vsel %vm4727, nan, %v4737
        %v4739 = vand.u32 2147483647, %v220
        %vm4740 = vcmp.le.f32.partialorder %v4739, 0.7853982
        %vm4741 = vcmp.lt.s32.totalorder %v220, 0
        %v4742 = vand.u32 %v220, 2139095040
        %v4743 = vshrl.u32 %v4742, 23
        %v4744 = vsub.s32 %v4743, 127
        %v4745 = vand.u32 2147483647, %v220
        %v4746 = vand.u32 %v4745, 8388607
        %v4747 = vor.u32 %v4746, 8388608
        %v4748 = vsub.s32 0, %v4747
        %v4749 = vadd.s32 %v4744, 1
        %vm4750 = vcmp.gt.s32.totalorder %v4749, 0
        %v4751 = vsel %vm4750, %v4749, 0
        %v4752 = vshrl.u32 %v4751, 5
        %v4753 = vand.u32 %v4751, 31
        %v4754 = vsub.s32 32, %v4753
        %v4755 = vshrl.u32 683565275, %v4754
        %v4756 = vshll.u32 683565275, %v4753
        %v4757 = vshrl.u32 2475754826, %v4754
        %v4758 = vor.u32 %v4756, %v4757
        %v4759 = vshll.u32 2475754826, %v4753
        %v4760 = vshrl.u32 2131351028, %v4754
        %v4761 = vor.u32 %v4759, %v4760
        %v4762 = vshll.u32 2131351028, %v4753
        %v4763 = vshrl.u32 2102212464, %v4754
        %v4764 = vor.u32 %v4762, %v4763
        %v4765 = vshll.u32 2102212464, %v4753
        %v4766 = vshrl.u32 920167782, %v4754
        %v4767 = vor.u32 %v4765, %v4766
        %v4768 = vshll.u32 920167782, %v4753
        %v4769 = vshrl.u32 1326507024, %v4754
        %v4770 = vor.u32 %v4768, %v4769
        %vm4771 = vcmp.lt.s32.totalorder %v4752, 1
        %vm4772 = vcmp.lt.s32.totalorder %v4752, 2
        %vm4773 = vcmp.lt.s32.totalorder %v4752, 3
        %vm4774 = vcmp.lt.s32.totalorder %v4752, 4
        %v4775 = vsel %vm4771, %v4755, %v4758
        %v4776 = vsel %vm4774, %v4764, 2102212464
        %v4777 = vsel %vm4773, %v4761, %v4776
        %v4778 = vsel %vm4772, %v4775, %v4777
        %v4779 = vsel %vm4771, %v4758, %v4761
        %v4780 = vsel %vm4774, %v4767, 920167782
        %v4781 = vsel %vm4773, %v4764, %v4780
        %v4782 = vsel %vm4772, %v4779, %v4781
        %v4783 = vsel %vm4771, %v4761, %v4764
        %v4784 = vsel %vm4774, %v4770, 1326507024
        %v4785 = vsel %vm4773, %v4767, %v4784
        %v4786 = vsel %vm4772, %v4783, %v4785
        %v4787 = vshll.u32 %v4747, 8
        %v4788 = vmul.u32.u64.compose %v4787, %v4786
        %v4789 = vextract.low.u32 %v4788
        %v4790 = vextract.high.u32 %v4788
        %v4791 = vmul.u32.u64.compose %v4787, %v4782
        %v4792 = vextract.low.u32 %v4791
        %v4793 = vextract.high.u32 %v4791
        %v4794 = vmul.u32 %v4787, %v4778
        %v4795 = vadd.s32 %v4790, %v4792
        %vm4796 = vc.u32 %v4790, %v4792
        %v4797 = vadd.s32 %v4793, 1
        %v4798 = vsel %vm4796, %v4797, %v4793
        %v4799 = vadd.s32 %v4794, %v4798
        %v4800 = vadd.s32 %v4799, 536870912
        %v4801 = vshrl.u32 %v4800, 30
        %v4802 = vshll.u32 %v4801, 30
        %v4803 = vsub.s32 %v4799, %v4802
        %vm4804 = vcmp.lt.s32.totalorder %v4803, 0
        %v4805 = vsub.s32 0, %v4803
        %v4806 = vsel %vm4804, %v4805, %v4803
        %v4807 = vclz %v4806
        %v4808 = vsub.s32 %v4807, 2
        %vm4809 = vcmp.gt.s32.totalorder 0, %v4808
        %v4810 = vsel %vm4809, 0, %v4808
        %v4811 = vsub.s32 32, %v4810
        %v4812 = vshll.u32 %v4803, %v4810
        %v4813 = vshrl.u32 %v4795, %v4811
        %v4814 = vor.u32 %v4812, %v4813
        %v4815 = vsub.s32 4294967266, %v4810
        %v4816 = vadd.s32 %v4815, 127
        %v4817 = vshll.u32 %v4816, 23
        %v4818 = vor.u32 4788187, %v4817
        %v4819 = vand.u32 2147483647, %v4818
        %v4821 = vcvt.s32.f32 %v4814
        %v4822 = vmul.f32 %v4821, %v4819
        %v4823 = vxor.u32 %v4822, 2147483648
        %v4824 = vsel %vm4741, %v4823, %v4822
        %v4825 = vsub.s32 4, %v4801
        %v4826 = vsel %vm4741, %v4825, %v4801
        %v4827 = vsel %vm4740, %v220, %v4824
        %v4828 = vsel %vm4740, 0, %v4826
        %v4829 = vcosq.f32.pop %v4827
        %v4830 = vsinq.f32.pop %v4827
        %vm4831 = vweird.f32 %v220
        %v4832 = vadd.s32 %v4828, 3
        %v4833 = vand.u32 %v4832, 3
        %vm4834 = vcmp.lt.s32.totalorder %v4833, 2
        %vm4835 = vcmp.eq.s32.totalorder %v4833, 0
        %v4836 = vxor.u32 %v4830, 2147483648
        %v4837 = vsel %vm4835, %v4829, %v4836
        %vm4838 = vcmp.eq.s32.totalorder %v4833, 2
        %v4839 = vxor.u32 %v4829, 2147483648
        %v4840 = vsel %vm4838, %v4839, %v4830
        %v4841 = vsel %vm4834, %v4837, %v4840
        %v4842 = vsel %vm4831, nan, %v4841
        %v4843 = vand.u32 2147483647, %v221
        %vm4844 = vcmp.le.f32.partialorder %v4843, 0.7853982
        %vm4845 = vcmp.lt.s32.totalorder %v221, 0
        %v4846 = vand.u32 %v221, 2139095040
        %v4847 = vshrl.u32 %v4846, 23
        %v4848 = vsub.s32 %v4847, 127
        %v4849 = vand.u32 2147483647, %v221
        %v4850 = vand.u32 %v4849, 8388607
        %v4851 = vor.u32 %v4850, 8388608
        %v4852 = vsub.s32 0, %v4851
        %v4853 = vadd.s32 %v4848, 1
        %vm4854 = vcmp.gt.s32.totalorder %v4853, 0
        %v4855 = vsel %vm4854, %v4853, 0
        %v4856 = vshrl.u32 %v4855, 5
        %v4857 = vand.u32 %v4855, 31
        %v4858 = vsub.s32 32, %v4857
        %v4859 = vshrl.u32 683565275, %v4858
        %v4860 = vshll.u32 683565275, %v4857
        %v4861 = vshrl.u32 2475754826, %v4858
        %v4862 = vor.u32 %v4860, %v4861
        %v4863 = vshll.u32 2475754826, %v4857
        %v4864 = vshrl.u32 2131351028, %v4858
        %v4865 = vor.u32 %v4863, %v4864
        %v4866 = vshll.u32 2131351028, %v4857
        %v4867 = vshrl.u32 2102212464, %v4858
        %v4868 = vor.u32 %v4866, %v4867
        %v4869 = vshll.u32 2102212464, %v4857
        %v4870 = vshrl.u32 920167782, %v4858
        %v4871 = vor.u32 %v4869, %v4870
        %v4872 = vshll.u32 920167782, %v4857
        %v4873 = vshrl.u32 1326507024, %v4858
        %v4874 = vor.u32 %v4872, %v4873
        %vm4875 = vcmp.lt.s32.totalorder %v4856, 1
        %vm4876 = vcmp.lt.s32.totalorder %v4856, 2
        %vm4877 = vcmp.lt.s32.totalorder %v4856, 3
        %vm4878 = vcmp.lt.s32.totalorder %v4856, 4
        %v4879 = vsel %vm4875, %v4859, %v4862
        %v4880 = vsel %vm4878, %v4868, 2102212464
        %v4881 = vsel %vm4877, %v4865, %v4880
        %v4882 = vsel %vm4876, %v4879, %v4881
        %v4883 = vsel %vm4875, %v4862, %v4865
        %v4884 = vsel %vm4878, %v4871, 920167782
        %v4885 = vsel %vm4877, %v4868, %v4884
        %v4886 = vsel %vm4876, %v4883, %v4885
        %v4887 = vsel %vm4875, %v4865, %v4868
        %v4888 = vsel %vm4878, %v4874, 1326507024
        %v4889 = vsel %vm4877, %v4871, %v4888
        %v4890 = vsel %vm4876, %v4887, %v4889
        %v4891 = vshll.u32 %v4851, 8
        %v4892 = vmul.u32.u64.compose %v4891, %v4890
        %v4893 = vextract.low.u32 %v4892
        %v4894 = vextract.high.u32 %v4892
        %v4895 = vmul.u32.u64.compose %v4891, %v4886
        %v4896 = vextract.low.u32 %v4895
        %v4897 = vextract.high.u32 %v4895
        %v4898 = vmul.u32 %v4891, %v4882
        %v4899 = vadd.s32 %v4894, %v4896
        %vm4900 = vc.u32 %v4894, %v4896
        %v4901 = vadd.s32 %v4897, 1
        %v4902 = vsel %vm4900, %v4901, %v4897
        %v4903 = vadd.s32 %v4898, %v4902
        %v4904 = vadd.s32 %v4903, 536870912
        %v4905 = vshrl.u32 %v4904, 30
        %v4906 = vshll.u32 %v4905, 30
        %v4907 = vsub.s32 %v4903, %v4906
        %vm4908 = vcmp.lt.s32.totalorder %v4907, 0
        %v4909 = vsub.s32 0, %v4907
        %v4910 = vsel %vm4908, %v4909, %v4907
        %v4911 = vclz %v4910
        %v4912 = vsub.s32 %v4911, 2
        %vm4913 = vcmp.gt.s32.totalorder 0, %v4912
        %v4914 = vsel %vm4913, 0, %v4912
        %v4915 = vsub.s32 32, %v4914
        %v4916 = vshll.u32 %v4907, %v4914
        %v4917 = vshrl.u32 %v4899, %v4915
        %v4918 = vor.u32 %v4916, %v4917
        %v4919 = vsub.s32 4294967266, %v4914
        %v4920 = vadd.s32 %v4919, 127
        %v4921 = vshll.u32 %v4920, 23
        %v4922 = vor.u32 4788187, %v4921
        %v4923 = vand.u32 2147483647, %v4922
        %v4925 = vcvt.s32.f32 %v4918
        %v4926 = vmul.f32 %v4925, %v4923
        %v4927 = vxor.u32 %v4926, 2147483648
        %v4928 = vsel %vm4845, %v4927, %v4926
        %v4929 = vsub.s32 4, %v4905
        %v4930 = vsel %vm4845, %v4929, %v4905
        %v4931 = vsel %vm4844, %v221, %v4928
        %v4932 = vsel %vm4844, 0, %v4930
        %v4933 = vcosq.f32.pop %v4931
        %v4934 = vsinq.f32.pop %v4931
        %vm4935 = vweird.f32 %v221
        %v4936 = vadd.s32 %v4932, 3
        %v4937 = vand.u32 %v4936, 3
        %vm4938 = vcmp.lt.s32.totalorder %v4937, 2
        %vm4939 = vcmp.eq.s32.totalorder %v4937, 0
        %v4940 = vxor.u32 %v4934, 2147483648
        %v4941 = vsel %vm4939, %v4933, %v4940
        %vm4942 = vcmp.eq.s32.totalorder %v4937, 2
        %v4943 = vxor.u32 %v4933, 2147483648
        %v4944 = vsel %vm4942, %v4943, %v4934
        %v4945 = vsel %vm4938, %v4941, %v4944
        %v4946 = vsel %vm4935, nan, %v4945
        %v4947 = vand.u32 2147483647, %v222
        %vm4948 = vcmp.le.f32.partialorder %v4947, 0.7853982
        %vm4949 = vcmp.lt.s32.totalorder %v222, 0
        %v4950 = vand.u32 %v222, 2139095040
        %v4951 = vshrl.u32 %v4950, 23
        %v4952 = vsub.s32 %v4951, 127
        %v4953 = vand.u32 2147483647, %v222
        %v4954 = vand.u32 %v4953, 8388607
        %v4955 = vor.u32 %v4954, 8388608
        %v4956 = vsub.s32 0, %v4955
        %v4957 = vadd.s32 %v4952, 1
        %vm4958 = vcmp.gt.s32.totalorder %v4957, 0
        %v4959 = vsel %vm4958, %v4957, 0
        %v4960 = vshrl.u32 %v4959, 5
        %v4961 = vand.u32 %v4959, 31
        %v4962 = vsub.s32 32, %v4961
        %v4963 = vshrl.u32 683565275, %v4962
        %v4964 = vshll.u32 683565275, %v4961
        %v4965 = vshrl.u32 2475754826, %v4962
        %v4966 = vor.u32 %v4964, %v4965
        %v4967 = vshll.u32 2475754826, %v4961
        %v4968 = vshrl.u32 2131351028, %v4962
        %v4969 = vor.u32 %v4967, %v4968
        %v4970 = vshll.u32 2131351028, %v4961
        %v4971 = vshrl.u32 2102212464, %v4962
        %v4972 = vor.u32 %v4970, %v4971
        %v4973 = vshll.u32 2102212464, %v4961
        %v4974 = vshrl.u32 920167782, %v4962
        %v4975 = vor.u32 %v4973, %v4974
        %v4976 = vshll.u32 920167782, %v4961
        %v4977 = vshrl.u32 1326507024, %v4962
        %v4978 = vor.u32 %v4976, %v4977
        %vm4979 = vcmp.lt.s32.totalorder %v4960, 1
        %vm4980 = vcmp.lt.s32.totalorder %v4960, 2
        %vm4981 = vcmp.lt.s32.totalorder %v4960, 3
        %vm4982 = vcmp.lt.s32.totalorder %v4960, 4
        %v4983 = vsel %vm4979, %v4963, %v4966
        %v4984 = vsel %vm4982, %v4972, 2102212464
        %v4985 = vsel %vm4981, %v4969, %v4984
        %v4986 = vsel %vm4980, %v4983, %v4985
        %v4987 = vsel %vm4979, %v4966, %v4969
        %v4988 = vsel %vm4982, %v4975, 920167782
        %v4989 = vsel %vm4981, %v4972, %v4988
        %v4990 = vsel %vm4980, %v4987, %v4989
        %v4991 = vsel %vm4979, %v4969, %v4972
        %v4992 = vsel %vm4982, %v4978, 1326507024
        %v4993 = vsel %vm4981, %v4975, %v4992
        %v4994 = vsel %vm4980, %v4991, %v4993
        %v4995 = vshll.u32 %v4955, 8
        %v4996 = vmul.u32.u64.compose %v4995, %v4994
        %v4997 = vextract.low.u32 %v4996
        %v4998 = vextract.high.u32 %v4996
        %v4999 = vmul.u32.u64.compose %v4995, %v4990
        %v5000 = vextract.low.u32 %v4999
        %v5001 = vextract.high.u32 %v4999
        %v5002 = vmul.u32 %v4995, %v4986
        %v5003 = vadd.s32 %v4998, %v5000
        %vm5004 = vc.u32 %v4998, %v5000
        %v5005 = vadd.s32 %v5001, 1
        %v5006 = vsel %vm5004, %v5005, %v5001
        %v5007 = vadd.s32 %v5002, %v5006
        %v5008 = vadd.s32 %v5007, 536870912
        %v5009 = vshrl.u32 %v5008, 30
        %v5010 = vshll.u32 %v5009, 30
        %v5011 = vsub.s32 %v5007, %v5010
        %vm5012 = vcmp.lt.s32.totalorder %v5011, 0
        %v5013 = vsub.s32 0, %v5011
        %v5014 = vsel %vm5012, %v5013, %v5011
        %v5015 = vclz %v5014
        %v5016 = vsub.s32 %v5015, 2
        %vm5017 = vcmp.gt.s32.totalorder 0, %v5016
        %v5018 = vsel %vm5017, 0, %v5016
        %v5019 = vsub.s32 32, %v5018
        %v5020 = vshll.u32 %v5011, %v5018
        %v5021 = vshrl.u32 %v5003, %v5019
        %v5022 = vor.u32 %v5020, %v5021
        %v5023 = vsub.s32 4294967266, %v5018
        %v5024 = vadd.s32 %v5023, 127
        %v5025 = vshll.u32 %v5024, 23
        %v5026 = vor.u32 4788187, %v5025
        %v5027 = vand.u32 2147483647, %v5026
        %v5029 = vcvt.s32.f32 %v5022
        %v5030 = vmul.f32 %v5029, %v5027
        %v5031 = vxor.u32 %v5030, 2147483648
        %v5032 = vsel %vm4949, %v5031, %v5030
        %v5033 = vsub.s32 4, %v5009
        %v5034 = vsel %vm4949, %v5033, %v5009
        %v5035 = vsel %vm4948, %v222, %v5032
        %v5036 = vsel %vm4948, 0, %v5034
        %v5037 = vcosq.f32.pop %v5035
        %v5038 = vsinq.f32.pop %v5035
        %vm5039 = vweird.f32 %v222
        %v5040 = vadd.s32 %v5036, 3
        %v5041 = vand.u32 %v5040, 3
        %vm5042 = vcmp.lt.s32.totalorder %v5041, 2
        %vm5043 = vcmp.eq.s32.totalorder %v5041, 0
        %v5044 = vxor.u32 %v5038, 2147483648
        %v5045 = vsel %vm5043, %v5037, %v5044
        %vm5046 = vcmp.eq.s32.totalorder %v5041, 2
        %v5047 = vxor.u32 %v5037, 2147483648
        %v5048 = vsel %vm5046, %v5047, %v5038
        %v5049 = vsel %vm5042, %v5045, %v5048
        %v5050 = vsel %vm5039, nan, %v5049
        %v5051 = vand.u32 2147483647, %v223
        %vm5052 = vcmp.le.f32.partialorder %v5051, 0.7853982
        %vm5053 = vcmp.lt.s32.totalorder %v223, 0
        %v5054 = vand.u32 %v223, 2139095040
        %v5055 = vshrl.u32 %v5054, 23
        %v5056 = vsub.s32 %v5055, 127
        %v5057 = vand.u32 2147483647, %v223
        %v5058 = vand.u32 %v5057, 8388607
        %v5059 = vor.u32 %v5058, 8388608
        %v5060 = vsub.s32 0, %v5059
        %v5061 = vadd.s32 %v5056, 1
        %vm5062 = vcmp.gt.s32.totalorder %v5061, 0
        %v5063 = vsel %vm5062, %v5061, 0
        %v5064 = vshrl.u32 %v5063, 5
        %v5065 = vand.u32 %v5063, 31
        %v5066 = vsub.s32 32, %v5065
        %v5067 = vshrl.u32 683565275, %v5066
        %v5068 = vshll.u32 683565275, %v5065
        %v5069 = vshrl.u32 2475754826, %v5066
        %v5070 = vor.u32 %v5068, %v5069
        %v5071 = vshll.u32 2475754826, %v5065
        %v5072 = vshrl.u32 2131351028, %v5066
        %v5073 = vor.u32 %v5071, %v5072
        %v5074 = vshll.u32 2131351028, %v5065
        %v5075 = vshrl.u32 2102212464, %v5066
        %v5076 = vor.u32 %v5074, %v5075
        %v5077 = vshll.u32 2102212464, %v5065
        %v5078 = vshrl.u32 920167782, %v5066
        %v5079 = vor.u32 %v5077, %v5078
        %v5080 = vshll.u32 920167782, %v5065
        %v5081 = vshrl.u32 1326507024, %v5066
        %v5082 = vor.u32 %v5080, %v5081
        %vm5083 = vcmp.lt.s32.totalorder %v5064, 1
        %vm5084 = vcmp.lt.s32.totalorder %v5064, 2
        %vm5085 = vcmp.lt.s32.totalorder %v5064, 3
        %vm5086 = vcmp.lt.s32.totalorder %v5064, 4
        %v5087 = vsel %vm5083, %v5067, %v5070
        %v5088 = vsel %vm5086, %v5076, 2102212464
        %v5089 = vsel %vm5085, %v5073, %v5088
        %v5090 = vsel %vm5084, %v5087, %v5089
        %v5091 = vsel %vm5083, %v5070, %v5073
        %v5092 = vsel %vm5086, %v5079, 920167782
        %v5093 = vsel %vm5085, %v5076, %v5092
        %v5094 = vsel %vm5084, %v5091, %v5093
        %v5095 = vsel %vm5083, %v5073, %v5076
        %v5096 = vsel %vm5086, %v5082, 1326507024
        %v5097 = vsel %vm5085, %v5079, %v5096
        %v5098 = vsel %vm5084, %v5095, %v5097
        %v5099 = vshll.u32 %v5059, 8
        %v5100 = vmul.u32.u64.compose %v5099, %v5098
        %v5101 = vextract.low.u32 %v5100
        %v5102 = vextract.high.u32 %v5100
        %v5103 = vmul.u32.u64.compose %v5099, %v5094
        %v5104 = vextract.low.u32 %v5103
        %v5105 = vextract.high.u32 %v5103
        %v5106 = vmul.u32 %v5099, %v5090
        %v5107 = vadd.s32 %v5102, %v5104
        %vm5108 = vc.u32 %v5102, %v5104
        %v5109 = vadd.s32 %v5105, 1
        %v5110 = vsel %vm5108, %v5109, %v5105
        %v5111 = vadd.s32 %v5106, %v5110
        %v5112 = vadd.s32 %v5111, 536870912
        %v5113 = vshrl.u32 %v5112, 30
        %v5114 = vshll.u32 %v5113, 30
        %v5115 = vsub.s32 %v5111, %v5114
        %vm5116 = vcmp.lt.s32.totalorder %v5115, 0
        %v5117 = vsub.s32 0, %v5115
        %v5118 = vsel %vm5116, %v5117, %v5115
        %v5119 = vclz %v5118
        %v5120 = vsub.s32 %v5119, 2
        %vm5121 = vcmp.gt.s32.totalorder 0, %v5120
        %v5122 = vsel %vm5121, 0, %v5120
        %v5123 = vsub.s32 32, %v5122
        %v5124 = vshll.u32 %v5115, %v5122
        %v5125 = vshrl.u32 %v5107, %v5123
        %v5126 = vor.u32 %v5124, %v5125
        %v5127 = vsub.s32 4294967266, %v5122
        %v5128 = vadd.s32 %v5127, 127
        %v5129 = vshll.u32 %v5128, 23
        %v5130 = vor.u32 4788187, %v5129
        %v5131 = vand.u32 2147483647, %v5130
        %v5133 = vcvt.s32.f32 %v5126
        %v5134 = vmul.f32 %v5133, %v5131
        %v5135 = vxor.u32 %v5134, 2147483648
        %v5136 = vsel %vm5053, %v5135, %v5134
        %v5137 = vsub.s32 4, %v5113
        %v5138 = vsel %vm5053, %v5137, %v5113
        %v5139 = vsel %vm5052, %v223, %v5136
        %v5140 = vsel %vm5052, 0, %v5138
        %v5141 = vcosq.f32.pop %v5139
        %v5142 = vsinq.f32.pop %v5139
        %vm5143 = vweird.f32 %v223
        %v5144 = vadd.s32 %v5140, 3
        %v5145 = vand.u32 %v5144, 3
        %vm5146 = vcmp.lt.s32.totalorder %v5145, 2
        %vm5147 = vcmp.eq.s32.totalorder %v5145, 0
        %v5148 = vxor.u32 %v5142, 2147483648
        %v5149 = vsel %vm5147, %v5141, %v5148
        %vm5150 = vcmp.eq.s32.totalorder %v5145, 2
        %v5151 = vxor.u32 %v5141, 2147483648
        %v5152 = vsel %vm5150, %v5151, %v5142
        %v5153 = vsel %vm5146, %v5149, %v5152
        %v5154 = vsel %vm5143, nan, %v5153
        %v5155 = vand.u32 2147483647, %v224
        %vm5156 = vcmp.le.f32.partialorder %v5155, 0.7853982
        %vm5157 = vcmp.lt.s32.totalorder %v224, 0
        %v5158 = vand.u32 %v224, 2139095040
        %v5159 = vshrl.u32 %v5158, 23
        %v5160 = vsub.s32 %v5159, 127
        %v5161 = vand.u32 2147483647, %v224
        %v5162 = vand.u32 %v5161, 8388607
        %v5163 = vor.u32 %v5162, 8388608
        %v5164 = vsub.s32 0, %v5163
        %v5165 = vadd.s32 %v5160, 1
        %vm5166 = vcmp.gt.s32.totalorder %v5165, 0
        %v5167 = vsel %vm5166, %v5165, 0
        %v5168 = vshrl.u32 %v5167, 5
        %v5169 = vand.u32 %v5167, 31
        %v5170 = vsub.s32 32, %v5169
        %v5171 = vshrl.u32 683565275, %v5170
        %v5172 = vshll.u32 683565275, %v5169
        %v5173 = vshrl.u32 2475754826, %v5170
        %v5174 = vor.u32 %v5172, %v5173
        %v5175 = vshll.u32 2475754826, %v5169
        %v5176 = vshrl.u32 2131351028, %v5170
        %v5177 = vor.u32 %v5175, %v5176
        %v5178 = vshll.u32 2131351028, %v5169
        %v5179 = vshrl.u32 2102212464, %v5170
        %v5180 = vor.u32 %v5178, %v5179
        %v5181 = vshll.u32 2102212464, %v5169
        %v5182 = vshrl.u32 920167782, %v5170
        %v5183 = vor.u32 %v5181, %v5182
        %v5184 = vshll.u32 920167782, %v5169
        %v5185 = vshrl.u32 1326507024, %v5170
        %v5186 = vor.u32 %v5184, %v5185
        %vm5187 = vcmp.lt.s32.totalorder %v5168, 1
        %vm5188 = vcmp.lt.s32.totalorder %v5168, 2
        %vm5189 = vcmp.lt.s32.totalorder %v5168, 3
        %vm5190 = vcmp.lt.s32.totalorder %v5168, 4
        %v5191 = vsel %vm5187, %v5171, %v5174
        %v5192 = vsel %vm5190, %v5180, 2102212464
        %v5193 = vsel %vm5189, %v5177, %v5192
        %v5194 = vsel %vm5188, %v5191, %v5193
        %v5195 = vsel %vm5187, %v5174, %v5177
        %v5196 = vsel %vm5190, %v5183, 920167782
        %v5197 = vsel %vm5189, %v5180, %v5196
        %v5198 = vsel %vm5188, %v5195, %v5197
        %v5199 = vsel %vm5187, %v5177, %v5180
        %v5200 = vsel %vm5190, %v5186, 1326507024
        %v5201 = vsel %vm5189, %v5183, %v5200
        %v5202 = vsel %vm5188, %v5199, %v5201
        %v5203 = vshll.u32 %v5163, 8
        %v5204 = vmul.u32.u64.compose %v5203, %v5202
        %v5205 = vextract.low.u32 %v5204
        %v5206 = vextract.high.u32 %v5204
        %v5207 = vmul.u32.u64.compose %v5203, %v5198
        %v5208 = vextract.low.u32 %v5207
        %v5209 = vextract.high.u32 %v5207
        %v5210 = vmul.u32 %v5203, %v5194
        %v5211 = vadd.s32 %v5206, %v5208
        %vm5212 = vc.u32 %v5206, %v5208
        %v5213 = vadd.s32 %v5209, 1
        %v5214 = vsel %vm5212, %v5213, %v5209
        %v5215 = vadd.s32 %v5210, %v5214
        %v5216 = vadd.s32 %v5215, 536870912
        %v5217 = vshrl.u32 %v5216, 30
        %v5218 = vshll.u32 %v5217, 30
        %v5219 = vsub.s32 %v5215, %v5218
        %vm5220 = vcmp.lt.s32.totalorder %v5219, 0
        %v5221 = vsub.s32 0, %v5219
        %v5222 = vsel %vm5220, %v5221, %v5219
        %v5223 = vclz %v5222
        %v5224 = vsub.s32 %v5223, 2
        %vm5225 = vcmp.gt.s32.totalorder 0, %v5224
        %v5226 = vsel %vm5225, 0, %v5224
        %v5227 = vsub.s32 32, %v5226
        %v5228 = vshll.u32 %v5219, %v5226
        %v5229 = vshrl.u32 %v5211, %v5227
        %v5230 = vor.u32 %v5228, %v5229
        %v5231 = vsub.s32 4294967266, %v5226
        %v5232 = vadd.s32 %v5231, 127
        %v5233 = vshll.u32 %v5232, 23
        %v5234 = vor.u32 4788187, %v5233
        %v5235 = vand.u32 2147483647, %v5234
        %v5237 = vcvt.s32.f32 %v5230
        %v5238 = vmul.f32 %v5237, %v5235
        %v5239 = vxor.u32 %v5238, 2147483648
        %v5240 = vsel %vm5157, %v5239, %v5238
        %v5241 = vsub.s32 4, %v5217
        %v5242 = vsel %vm5157, %v5241, %v5217
        %v5243 = vsel %vm5156, %v224, %v5240
        %v5244 = vsel %vm5156, 0, %v5242
        %v5245 = vcosq.f32.pop %v5243
        %v5246 = vsinq.f32.pop %v5243
        %vm5247 = vweird.f32 %v224
        %v5248 = vadd.s32 %v5244, 3
        %v5249 = vand.u32 %v5248, 3
        %vm5250 = vcmp.lt.s32.totalorder %v5249, 2
        %vm5251 = vcmp.eq.s32.totalorder %v5249, 0
        %v5252 = vxor.u32 %v5246, 2147483648
        %v5253 = vsel %vm5251, %v5245, %v5252
        %vm5254 = vcmp.eq.s32.totalorder %v5249, 2
        %v5255 = vxor.u32 %v5245, 2147483648
        %v5256 = vsel %vm5254, %v5255, %v5246
        %v5257 = vsel %vm5250, %v5253, %v5256
        %v5258 = vsel %vm5247, nan, %v5257
        %v5259 = vand.u32 2147483647, %v225
        %vm5260 = vcmp.le.f32.partialorder %v5259, 0.7853982
        %vm5261 = vcmp.lt.s32.totalorder %v225, 0
        %v5262 = vand.u32 %v225, 2139095040
        %v5263 = vshrl.u32 %v5262, 23
        %v5264 = vsub.s32 %v5263, 127
        %v5265 = vand.u32 2147483647, %v225
        %v5266 = vand.u32 %v5265, 8388607
        %v5267 = vor.u32 %v5266, 8388608
        %v5268 = vsub.s32 0, %v5267
        %v5269 = vadd.s32 %v5264, 1
        %vm5270 = vcmp.gt.s32.totalorder %v5269, 0
        %v5271 = vsel %vm5270, %v5269, 0
        %v5272 = vshrl.u32 %v5271, 5
        %v5273 = vand.u32 %v5271, 31
        %v5274 = vsub.s32 32, %v5273
        %v5275 = vshrl.u32 683565275, %v5274
        %v5276 = vshll.u32 683565275, %v5273
        %v5277 = vshrl.u32 2475754826, %v5274
        %v5278 = vor.u32 %v5276, %v5277
        %v5279 = vshll.u32 2475754826, %v5273
        %v5280 = vshrl.u32 2131351028, %v5274
        %v5281 = vor.u32 %v5279, %v5280
        %v5282 = vshll.u32 2131351028, %v5273
        %v5283 = vshrl.u32 2102212464, %v5274
        %v5284 = vor.u32 %v5282, %v5283
        %v5285 = vshll.u32 2102212464, %v5273
        %v5286 = vshrl.u32 920167782, %v5274
        %v5287 = vor.u32 %v5285, %v5286
        %v5288 = vshll.u32 920167782, %v5273
        %v5289 = vshrl.u32 1326507024, %v5274
        %v5290 = vor.u32 %v5288, %v5289
        %vm5291 = vcmp.lt.s32.totalorder %v5272, 1
        %vm5292 = vcmp.lt.s32.totalorder %v5272, 2
        %vm5293 = vcmp.lt.s32.totalorder %v5272, 3
        %vm5294 = vcmp.lt.s32.totalorder %v5272, 4
        %v5295 = vsel %vm5291, %v5275, %v5278
        %v5296 = vsel %vm5294, %v5284, 2102212464
        %v5297 = vsel %vm5293, %v5281, %v5296
        %v5298 = vsel %vm5292, %v5295, %v5297
        %v5299 = vsel %vm5291, %v5278, %v5281
        %v5300 = vsel %vm5294, %v5287, 920167782
        %v5301 = vsel %vm5293, %v5284, %v5300
        %v5302 = vsel %vm5292, %v5299, %v5301
        %v5303 = vsel %vm5291, %v5281, %v5284
        %v5304 = vsel %vm5294, %v5290, 1326507024
        %v5305 = vsel %vm5293, %v5287, %v5304
        %v5306 = vsel %vm5292, %v5303, %v5305
        %v5307 = vshll.u32 %v5267, 8
        %v5308 = vmul.u32.u64.compose %v5307, %v5306
        %v5309 = vextract.low.u32 %v5308
        %v5310 = vextract.high.u32 %v5308
        %v5311 = vmul.u32.u64.compose %v5307, %v5302
        %v5312 = vextract.low.u32 %v5311
        %v5313 = vextract.high.u32 %v5311
        %v5314 = vmul.u32 %v5307, %v5298
        %v5315 = vadd.s32 %v5310, %v5312
        %vm5316 = vc.u32 %v5310, %v5312
        %v5317 = vadd.s32 %v5313, 1
        %v5318 = vsel %vm5316, %v5317, %v5313
        %v5319 = vadd.s32 %v5314, %v5318
        %v5320 = vadd.s32 %v5319, 536870912
        %v5321 = vshrl.u32 %v5320, 30
        %v5322 = vshll.u32 %v5321, 30
        %v5323 = vsub.s32 %v5319, %v5322
        %vm5324 = vcmp.lt.s32.totalorder %v5323, 0
        %v5325 = vsub.s32 0, %v5323
        %v5326 = vsel %vm5324, %v5325, %v5323
        %v5327 = vclz %v5326
        %v5328 = vsub.s32 %v5327, 2
        %vm5329 = vcmp.gt.s32.totalorder 0, %v5328
        %v5330 = vsel %vm5329, 0, %v5328
        %v5331 = vsub.s32 32, %v5330
        %v5332 = vshll.u32 %v5323, %v5330
        %v5333 = vshrl.u32 %v5315, %v5331
        %v5334 = vor.u32 %v5332, %v5333
        %v5335 = vsub.s32 4294967266, %v5330
        %v5336 = vadd.s32 %v5335, 127
        %v5337 = vshll.u32 %v5336, 23
        %v5338 = vor.u32 4788187, %v5337
        %v5339 = vand.u32 2147483647, %v5338
        %v5341 = vcvt.s32.f32 %v5334
        %v5342 = vmul.f32 %v5341, %v5339
        %v5343 = vxor.u32 %v5342, 2147483648
        %v5344 = vsel %vm5261, %v5343, %v5342
        %v5345 = vsub.s32 4, %v5321
        %v5346 = vsel %vm5261, %v5345, %v5321
        %v5347 = vsel %vm5260, %v225, %v5344
        %v5348 = vsel %vm5260, 0, %v5346
        %v5349 = vcosq.f32.pop %v5347
        %v5350 = vsinq.f32.pop %v5347
        %vm5351 = vweird.f32 %v225
        %v5352 = vadd.s32 %v5348, 3
        %v5353 = vand.u32 %v5352, 3
        %vm5354 = vcmp.lt.s32.totalorder %v5353, 2
        %vm5355 = vcmp.eq.s32.totalorder %v5353, 0
        %v5356 = vxor.u32 %v5350, 2147483648
        %v5357 = vsel %vm5355, %v5349, %v5356
        %vm5358 = vcmp.eq.s32.totalorder %v5353, 2
        %v5359 = vxor.u32 %v5349, 2147483648
        %v5360 = vsel %vm5358, %v5359, %v5350
        %v5361 = vsel %vm5354, %v5357, %v5360
        %v5362 = vsel %vm5351, nan, %v5361
        %v5363 = vand.u32 2147483647, %v226
        %vm5364 = vcmp.le.f32.partialorder %v5363, 0.7853982
        %vm5365 = vcmp.lt.s32.totalorder %v226, 0
        %v5366 = vand.u32 %v226, 2139095040
        %v5367 = vshrl.u32 %v5366, 23
        %v5368 = vsub.s32 %v5367, 127
        %v5369 = vand.u32 2147483647, %v226
        %v5370 = vand.u32 %v5369, 8388607
        %v5371 = vor.u32 %v5370, 8388608
        %v5372 = vsub.s32 0, %v5371
        %v5373 = vadd.s32 %v5368, 1
        %vm5374 = vcmp.gt.s32.totalorder %v5373, 0
        %v5375 = vsel %vm5374, %v5373, 0
        %v5376 = vshrl.u32 %v5375, 5
        %v5377 = vand.u32 %v5375, 31
        %v5378 = vsub.s32 32, %v5377
        %v5379 = vshrl.u32 683565275, %v5378
        %v5380 = vshll.u32 683565275, %v5377
        %v5381 = vshrl.u32 2475754826, %v5378
        %v5382 = vor.u32 %v5380, %v5381
        %v5383 = vshll.u32 2475754826, %v5377
        %v5384 = vshrl.u32 2131351028, %v5378
        %v5385 = vor.u32 %v5383, %v5384
        %v5386 = vshll.u32 2131351028, %v5377
        %v5387 = vshrl.u32 2102212464, %v5378
        %v5388 = vor.u32 %v5386, %v5387
        %v5389 = vshll.u32 2102212464, %v5377
        %v5390 = vshrl.u32 920167782, %v5378
        %v5391 = vor.u32 %v5389, %v5390
        %v5392 = vshll.u32 920167782, %v5377
        %v5393 = vshrl.u32 1326507024, %v5378
        %v5394 = vor.u32 %v5392, %v5393
        %vm5395 = vcmp.lt.s32.totalorder %v5376, 1
        %vm5396 = vcmp.lt.s32.totalorder %v5376, 2
        %vm5397 = vcmp.lt.s32.totalorder %v5376, 3
        %vm5398 = vcmp.lt.s32.totalorder %v5376, 4
        %v5399 = vsel %vm5395, %v5379, %v5382
        %v5400 = vsel %vm5398, %v5388, 2102212464
        %v5401 = vsel %vm5397, %v5385, %v5400
        %v5402 = vsel %vm5396, %v5399, %v5401
        %v5403 = vsel %vm5395, %v5382, %v5385
        %v5404 = vsel %vm5398, %v5391, 920167782
        %v5405 = vsel %vm5397, %v5388, %v5404
        %v5406 = vsel %vm5396, %v5403, %v5405
        %v5407 = vsel %vm5395, %v5385, %v5388
        %v5408 = vsel %vm5398, %v5394, 1326507024
        %v5409 = vsel %vm5397, %v5391, %v5408
        %v5410 = vsel %vm5396, %v5407, %v5409
        %v5411 = vshll.u32 %v5371, 8
        %v5412 = vmul.u32.u64.compose %v5411, %v5410
        %v5413 = vextract.low.u32 %v5412
        %v5414 = vextract.high.u32 %v5412
        %v5415 = vmul.u32.u64.compose %v5411, %v5406
        %v5416 = vextract.low.u32 %v5415
        %v5417 = vextract.high.u32 %v5415
        %v5418 = vmul.u32 %v5411, %v5402
        %v5419 = vadd.s32 %v5414, %v5416
        %vm5420 = vc.u32 %v5414, %v5416
        %v5421 = vadd.s32 %v5417, 1
        %v5422 = vsel %vm5420, %v5421, %v5417
        %v5423 = vadd.s32 %v5418, %v5422
        %v5424 = vadd.s32 %v5423, 536870912
        %v5425 = vshrl.u32 %v5424, 30
        %v5426 = vshll.u32 %v5425, 30
        %v5427 = vsub.s32 %v5423, %v5426
        %vm5428 = vcmp.lt.s32.totalorder %v5427, 0
        %v5429 = vsub.s32 0, %v5427
        %v5430 = vsel %vm5428, %v5429, %v5427
        %v5431 = vclz %v5430
        %v5432 = vsub.s32 %v5431, 2
        %vm5433 = vcmp.gt.s32.totalorder 0, %v5432
        %v5434 = vsel %vm5433, 0, %v5432
        %v5435 = vsub.s32 32, %v5434
        %v5436 = vshll.u32 %v5427, %v5434
        %v5437 = vshrl.u32 %v5419, %v5435
        %v5438 = vor.u32 %v5436, %v5437
        %v5439 = vsub.s32 4294967266, %v5434
        %v5440 = vadd.s32 %v5439, 127
        %v5441 = vshll.u32 %v5440, 23
        %v5442 = vor.u32 4788187, %v5441
        %v5443 = vand.u32 2147483647, %v5442
        %v5445 = vcvt.s32.f32 %v5438
        %v5446 = vmul.f32 %v5445, %v5443
        %v5447 = vxor.u32 %v5446, 2147483648
        %v5448 = vsel %vm5365, %v5447, %v5446
        %v5449 = vsub.s32 4, %v5425
        %v5450 = vsel %vm5365, %v5449, %v5425
        %v5451 = vsel %vm5364, %v226, %v5448
        %v5452 = vsel %vm5364, 0, %v5450
        %v5453 = vcosq.f32.pop %v5451
        %v5454 = vsinq.f32.pop %v5451
        %vm5455 = vweird.f32 %v226
        %v5456 = vadd.s32 %v5452, 3
        %v5457 = vand.u32 %v5456, 3
        %vm5458 = vcmp.lt.s32.totalorder %v5457, 2
        %vm5459 = vcmp.eq.s32.totalorder %v5457, 0
        %v5460 = vxor.u32 %v5454, 2147483648
        %v5461 = vsel %vm5459, %v5453, %v5460
        %vm5462 = vcmp.eq.s32.totalorder %v5457, 2
        %v5463 = vxor.u32 %v5453, 2147483648
        %v5464 = vsel %vm5462, %v5463, %v5454
        %v5465 = vsel %vm5458, %v5461, %v5464
        %v5466 = vsel %vm5455, nan, %v5465
        %v5467 = vand.u32 2147483647, %v227
        %vm5468 = vcmp.le.f32.partialorder %v5467, 0.7853982
        %vm5469 = vcmp.lt.s32.totalorder %v227, 0
        %v5470 = vand.u32 %v227, 2139095040
        %v5471 = vshrl.u32 %v5470, 23
        %v5472 = vsub.s32 %v5471, 127
        %v5473 = vand.u32 2147483647, %v227
        %v5474 = vand.u32 %v5473, 8388607
        %v5475 = vor.u32 %v5474, 8388608
        %v5476 = vsub.s32 0, %v5475
        %v5477 = vadd.s32 %v5472, 1
        %vm5478 = vcmp.gt.s32.totalorder %v5477, 0
        %v5479 = vsel %vm5478, %v5477, 0
        %v5480 = vshrl.u32 %v5479, 5
        %v5481 = vand.u32 %v5479, 31
        %v5482 = vsub.s32 32, %v5481
        %v5483 = vshrl.u32 683565275, %v5482
        %v5484 = vshll.u32 683565275, %v5481
        %v5485 = vshrl.u32 2475754826, %v5482
        %v5486 = vor.u32 %v5484, %v5485
        %v5487 = vshll.u32 2475754826, %v5481
        %v5488 = vshrl.u32 2131351028, %v5482
        %v5489 = vor.u32 %v5487, %v5488
        %v5490 = vshll.u32 2131351028, %v5481
        %v5491 = vshrl.u32 2102212464, %v5482
        %v5492 = vor.u32 %v5490, %v5491
        %v5493 = vshll.u32 2102212464, %v5481
        %v5494 = vshrl.u32 920167782, %v5482
        %v5495 = vor.u32 %v5493, %v5494
        %v5496 = vshll.u32 920167782, %v5481
        %v5497 = vshrl.u32 1326507024, %v5482
        %v5498 = vor.u32 %v5496, %v5497
        %vm5499 = vcmp.lt.s32.totalorder %v5480, 1
        %vm5500 = vcmp.lt.s32.totalorder %v5480, 2
        %vm5501 = vcmp.lt.s32.totalorder %v5480, 3
        %vm5502 = vcmp.lt.s32.totalorder %v5480, 4
        %v5503 = vsel %vm5499, %v5483, %v5486
        %v5504 = vsel %vm5502, %v5492, 2102212464
        %v5505 = vsel %vm5501, %v5489, %v5504
        %v5506 = vsel %vm5500, %v5503, %v5505
        %v5507 = vsel %vm5499, %v5486, %v5489
        %v5508 = vsel %vm5502, %v5495, 920167782
        %v5509 = vsel %vm5501, %v5492, %v5508
        %v5510 = vsel %vm5500, %v5507, %v5509
        %v5511 = vsel %vm5499, %v5489, %v5492
        %v5512 = vsel %vm5502, %v5498, 1326507024
        %v5513 = vsel %vm5501, %v5495, %v5512
        %v5514 = vsel %vm5500, %v5511, %v5513
        %v5515 = vshll.u32 %v5475, 8
        %v5516 = vmul.u32.u64.compose %v5515, %v5514
        %v5517 = vextract.low.u32 %v5516
        %v5518 = vextract.high.u32 %v5516
        %v5519 = vmul.u32.u64.compose %v5515, %v5510
        %v5520 = vextract.low.u32 %v5519
        %v5521 = vextract.high.u32 %v5519
        %v5522 = vmul.u32 %v5515, %v5506
        %v5523 = vadd.s32 %v5518, %v5520
        %vm5524 = vc.u32 %v5518, %v5520
        %v5525 = vadd.s32 %v5521, 1
        %v5526 = vsel %vm5524, %v5525, %v5521
        %v5527 = vadd.s32 %v5522, %v5526
        %v5528 = vadd.s32 %v5527, 536870912
        %v5529 = vshrl.u32 %v5528, 30
        %v5530 = vshll.u32 %v5529, 30
        %v5531 = vsub.s32 %v5527, %v5530
        %vm5532 = vcmp.lt.s32.totalorder %v5531, 0
        %v5533 = vsub.s32 0, %v5531
        %v5534 = vsel %vm5532, %v5533, %v5531
        %v5535 = vclz %v5534
        %v5536 = vsub.s32 %v5535, 2
        %vm5537 = vcmp.gt.s32.totalorder 0, %v5536
        %v5538 = vsel %vm5537, 0, %v5536
        %v5539 = vsub.s32 32, %v5538
        %v5540 = vshll.u32 %v5531, %v5538
        %v5541 = vshrl.u32 %v5523, %v5539
        %v5542 = vor.u32 %v5540, %v5541
        %v5543 = vsub.s32 4294967266, %v5538
        %v5544 = vadd.s32 %v5543, 127
        %v5545 = vshll.u32 %v5544, 23
        %v5546 = vor.u32 4788187, %v5545
        %v5547 = vand.u32 2147483647, %v5546
        %v5549 = vcvt.s32.f32 %v5542
        %v5550 = vmul.f32 %v5549, %v5547
        %v5551 = vxor.u32 %v5550, 2147483648
        %v5552 = vsel %vm5469, %v5551, %v5550
        %v5553 = vsub.s32 4, %v5529
        %v5554 = vsel %vm5469, %v5553, %v5529
        %v5555 = vsel %vm5468, %v227, %v5552
        %v5556 = vsel %vm5468, 0, %v5554
        %v5557 = vcosq.f32.pop %v5555
        %v5558 = vsinq.f32.pop %v5555
        %vm5559 = vweird.f32 %v227
        %v5560 = vadd.s32 %v5556, 3
        %v5561 = vand.u32 %v5560, 3
        %vm5562 = vcmp.lt.s32.totalorder %v5561, 2
        %vm5563 = vcmp.eq.s32.totalorder %v5561, 0
        %v5564 = vxor.u32 %v5558, 2147483648
        %v5565 = vsel %vm5563, %v5557, %v5564
        %vm5566 = vcmp.eq.s32.totalorder %v5561, 2
        %v5567 = vxor.u32 %v5557, 2147483648
        %v5568 = vsel %vm5566, %v5567, %v5558
        %v5569 = vsel %vm5562, %v5565, %v5568
        %v5570 = vsel %vm5559, nan, %v5569
        %v5571 = vand.u32 2147483647, %v228
        %vm5572 = vcmp.le.f32.partialorder %v5571, 0.7853982
        %vm5573 = vcmp.lt.s32.totalorder %v228, 0
        %v5574 = vand.u32 %v228, 2139095040
        %v5575 = vshrl.u32 %v5574, 23
        %v5576 = vsub.s32 %v5575, 127
        %v5577 = vand.u32 2147483647, %v228
        %v5578 = vand.u32 %v5577, 8388607
        %v5579 = vor.u32 %v5578, 8388608
        %v5580 = vsub.s32 0, %v5579
        %v5581 = vadd.s32 %v5576, 1
        %vm5582 = vcmp.gt.s32.totalorder %v5581, 0
        %v5583 = vsel %vm5582, %v5581, 0
        %v5584 = vshrl.u32 %v5583, 5
        %v5585 = vand.u32 %v5583, 31
        %v5586 = vsub.s32 32, %v5585
        %v5587 = vshrl.u32 683565275, %v5586
        %v5588 = vshll.u32 683565275, %v5585
        %v5589 = vshrl.u32 2475754826, %v5586
        %v5590 = vor.u32 %v5588, %v5589
        %v5591 = vshll.u32 2475754826, %v5585
        %v5592 = vshrl.u32 2131351028, %v5586
        %v5593 = vor.u32 %v5591, %v5592
        %v5594 = vshll.u32 2131351028, %v5585
        %v5595 = vshrl.u32 2102212464, %v5586
        %v5596 = vor.u32 %v5594, %v5595
        %v5597 = vshll.u32 2102212464, %v5585
        %v5598 = vshrl.u32 920167782, %v5586
        %v5599 = vor.u32 %v5597, %v5598
        %v5600 = vshll.u32 920167782, %v5585
        %v5601 = vshrl.u32 1326507024, %v5586
        %v5602 = vor.u32 %v5600, %v5601
        %vm5603 = vcmp.lt.s32.totalorder %v5584, 1
        %vm5604 = vcmp.lt.s32.totalorder %v5584, 2
        %vm5605 = vcmp.lt.s32.totalorder %v5584, 3
        %vm5606 = vcmp.lt.s32.totalorder %v5584, 4
        %v5607 = vsel %vm5603, %v5587, %v5590
        %v5608 = vsel %vm5606, %v5596, 2102212464
        %v5609 = vsel %vm5605, %v5593, %v5608
        %v5610 = vsel %vm5604, %v5607, %v5609
        %v5611 = vsel %vm5603, %v5590, %v5593
        %v5612 = vsel %vm5606, %v5599, 920167782
        %v5613 = vsel %vm5605, %v5596, %v5612
        %v5614 = vsel %vm5604, %v5611, %v5613
        %v5615 = vsel %vm5603, %v5593, %v5596
        %v5616 = vsel %vm5606, %v5602, 1326507024
        %v5617 = vsel %vm5605, %v5599, %v5616
        %v5618 = vsel %vm5604, %v5615, %v5617
        %v5619 = vshll.u32 %v5579, 8
        %v5620 = vmul.u32.u64.compose %v5619, %v5618
        %v5621 = vextract.low.u32 %v5620
        %v5622 = vextract.high.u32 %v5620
        %v5623 = vmul.u32.u64.compose %v5619, %v5614
        %v5624 = vextract.low.u32 %v5623
        %v5625 = vextract.high.u32 %v5623
        %v5626 = vmul.u32 %v5619, %v5610
        %v5627 = vadd.s32 %v5622, %v5624
        %vm5628 = vc.u32 %v5622, %v5624
        %v5629 = vadd.s32 %v5625, 1
        %v5630 = vsel %vm5628, %v5629, %v5625
        %v5631 = vadd.s32 %v5626, %v5630
        %v5632 = vadd.s32 %v5631, 536870912
        %v5633 = vshrl.u32 %v5632, 30
        %v5634 = vshll.u32 %v5633, 30
        %v5635 = vsub.s32 %v5631, %v5634
        %vm5636 = vcmp.lt.s32.totalorder %v5635, 0
        %v5637 = vsub.s32 0, %v5635
        %v5638 = vsel %vm5636, %v5637, %v5635
        %v5639 = vclz %v5638
        %v5640 = vsub.s32 %v5639, 2
        %vm5641 = vcmp.gt.s32.totalorder 0, %v5640
        %v5642 = vsel %vm5641, 0, %v5640
        %v5643 = vsub.s32 32, %v5642
        %v5644 = vshll.u32 %v5635, %v5642
        %v5645 = vshrl.u32 %v5627, %v5643
        %v5646 = vor.u32 %v5644, %v5645
        %v5647 = vsub.s32 4294967266, %v5642
        %v5648 = vadd.s32 %v5647, 127
        %v5649 = vshll.u32 %v5648, 23
        %v5650 = vor.u32 4788187, %v5649
        %v5651 = vand.u32 2147483647, %v5650
        %v5653 = vcvt.s32.f32 %v5646
        %v5654 = vmul.f32 %v5653, %v5651
        %v5655 = vxor.u32 %v5654, 2147483648
        %v5656 = vsel %vm5573, %v5655, %v5654
        %v5657 = vsub.s32 4, %v5633
        %v5658 = vsel %vm5573, %v5657, %v5633
        %v5659 = vsel %vm5572, %v228, %v5656
        %v5660 = vsel %vm5572, 0, %v5658
        %v5661 = vcosq.f32.pop %v5659
        %v5662 = vsinq.f32.pop %v5659
        %vm5663 = vweird.f32 %v228
        %v5664 = vadd.s32 %v5660, 3
        %v5665 = vand.u32 %v5664, 3
        %vm5666 = vcmp.lt.s32.totalorder %v5665, 2
        %vm5667 = vcmp.eq.s32.totalorder %v5665, 0
        %v5668 = vxor.u32 %v5662, 2147483648
        %v5669 = vsel %vm5667, %v5661, %v5668
        %vm5670 = vcmp.eq.s32.totalorder %v5665, 2
        %v5671 = vxor.u32 %v5661, 2147483648
        %v5672 = vsel %vm5670, %v5671, %v5662
        %v5673 = vsel %vm5666, %v5669, %v5672
        %v5674 = vsel %vm5663, nan, %v5673
        %v5675 = vand.u32 2147483647, %v229
        %vm5676 = vcmp.le.f32.partialorder %v5675, 0.7853982
        %vm5677 = vcmp.lt.s32.totalorder %v229, 0
        %v5678 = vand.u32 %v229, 2139095040
        %v5679 = vshrl.u32 %v5678, 23
        %v5680 = vsub.s32 %v5679, 127
        %v5681 = vand.u32 2147483647, %v229
        %v5682 = vand.u32 %v5681, 8388607
        %v5683 = vor.u32 %v5682, 8388608
        %v5684 = vsub.s32 0, %v5683
        %v5685 = vadd.s32 %v5680, 1
        %vm5686 = vcmp.gt.s32.totalorder %v5685, 0
        %v5687 = vsel %vm5686, %v5685, 0
        %v5688 = vshrl.u32 %v5687, 5
        %v5689 = vand.u32 %v5687, 31
        %v5690 = vsub.s32 32, %v5689
        %v5691 = vshrl.u32 683565275, %v5690
        %v5692 = vshll.u32 683565275, %v5689
        %v5693 = vshrl.u32 2475754826, %v5690
        %v5694 = vor.u32 %v5692, %v5693
        %v5695 = vshll.u32 2475754826, %v5689
        %v5696 = vshrl.u32 2131351028, %v5690
        %v5697 = vor.u32 %v5695, %v5696
        %v5698 = vshll.u32 2131351028, %v5689
        %v5699 = vshrl.u32 2102212464, %v5690
        %v5700 = vor.u32 %v5698, %v5699
        %v5701 = vshll.u32 2102212464, %v5689
        %v5702 = vshrl.u32 920167782, %v5690
        %v5703 = vor.u32 %v5701, %v5702
        %v5704 = vshll.u32 920167782, %v5689
        %v5705 = vshrl.u32 1326507024, %v5690
        %v5706 = vor.u32 %v5704, %v5705
        %vm5707 = vcmp.lt.s32.totalorder %v5688, 1
        %vm5708 = vcmp.lt.s32.totalorder %v5688, 2
        %vm5709 = vcmp.lt.s32.totalorder %v5688, 3
        %vm5710 = vcmp.lt.s32.totalorder %v5688, 4
        %v5711 = vsel %vm5707, %v5691, %v5694
        %v5712 = vsel %vm5710, %v5700, 2102212464
        %v5713 = vsel %vm5709, %v5697, %v5712
        %v5714 = vsel %vm5708, %v5711, %v5713
        %v5715 = vsel %vm5707, %v5694, %v5697
        %v5716 = vsel %vm5710, %v5703, 920167782
        %v5717 = vsel %vm5709, %v5700, %v5716
        %v5718 = vsel %vm5708, %v5715, %v5717
        %v5719 = vsel %vm5707, %v5697, %v5700
        %v5720 = vsel %vm5710, %v5706, 1326507024
        %v5721 = vsel %vm5709, %v5703, %v5720
        %v5722 = vsel %vm5708, %v5719, %v5721
        %v5723 = vshll.u32 %v5683, 8
        %v5724 = vmul.u32.u64.compose %v5723, %v5722
        %v5725 = vextract.low.u32 %v5724
        %v5726 = vextract.high.u32 %v5724
        %v5727 = vmul.u32.u64.compose %v5723, %v5718
        %v5728 = vextract.low.u32 %v5727
        %v5729 = vextract.high.u32 %v5727
        %v5730 = vmul.u32 %v5723, %v5714
        %v5731 = vadd.s32 %v5726, %v5728
        %vm5732 = vc.u32 %v5726, %v5728
        %v5733 = vadd.s32 %v5729, 1
        %v5734 = vsel %vm5732, %v5733, %v5729
        %v5735 = vadd.s32 %v5730, %v5734
        %v5736 = vadd.s32 %v5735, 536870912
        %v5737 = vshrl.u32 %v5736, 30
        %v5738 = vshll.u32 %v5737, 30
        %v5739 = vsub.s32 %v5735, %v5738
        %vm5740 = vcmp.lt.s32.totalorder %v5739, 0
        %v5741 = vsub.s32 0, %v5739
        %v5742 = vsel %vm5740, %v5741, %v5739
        %v5743 = vclz %v5742
        %v5744 = vsub.s32 %v5743, 2
        %vm5745 = vcmp.gt.s32.totalorder 0, %v5744
        %v5746 = vsel %vm5745, 0, %v5744
        %v5747 = vsub.s32 32, %v5746
        %v5748 = vshll.u32 %v5739, %v5746
        %v5749 = vshrl.u32 %v5731, %v5747
        %v5750 = vor.u32 %v5748, %v5749
        %v5751 = vsub.s32 4294967266, %v5746
        %v5752 = vadd.s32 %v5751, 127
        %v5753 = vshll.u32 %v5752, 23
        %v5754 = vor.u32 4788187, %v5753
        %v5755 = vand.u32 2147483647, %v5754
        %v5757 = vcvt.s32.f32 %v5750
        %v5758 = vmul.f32 %v5757, %v5755
        %v5759 = vxor.u32 %v5758, 2147483648
        %v5760 = vsel %vm5677, %v5759, %v5758
        %v5761 = vsub.s32 4, %v5737
        %v5762 = vsel %vm5677, %v5761, %v5737
        %v5763 = vsel %vm5676, %v229, %v5760
        %v5764 = vsel %vm5676, 0, %v5762
        %v5765 = vcosq.f32.pop %v5763
        %v5766 = vsinq.f32.pop %v5763
        %vm5767 = vweird.f32 %v229
        %v5768 = vadd.s32 %v5764, 3
        %v5769 = vand.u32 %v5768, 3
        %vm5770 = vcmp.lt.s32.totalorder %v5769, 2
        %vm5771 = vcmp.eq.s32.totalorder %v5769, 0
        %v5772 = vxor.u32 %v5766, 2147483648
        %v5773 = vsel %vm5771, %v5765, %v5772
        %vm5774 = vcmp.eq.s32.totalorder %v5769, 2
        %v5775 = vxor.u32 %v5765, 2147483648
        %v5776 = vsel %vm5774, %v5775, %v5766
        %v5777 = vsel %vm5770, %v5773, %v5776
        %v5778 = vsel %vm5767, nan, %v5777
        %v5779 = vand.u32 2147483647, %v230
        %vm5780 = vcmp.le.f32.partialorder %v5779, 0.7853982
        %vm5781 = vcmp.lt.s32.totalorder %v230, 0
        %v5782 = vand.u32 %v230, 2139095040
        %v5783 = vshrl.u32 %v5782, 23
        %v5784 = vsub.s32 %v5783, 127
        %v5785 = vand.u32 2147483647, %v230
        %v5786 = vand.u32 %v5785, 8388607
        %v5787 = vor.u32 %v5786, 8388608
        %v5788 = vsub.s32 0, %v5787
        %v5789 = vadd.s32 %v5784, 1
        %vm5790 = vcmp.gt.s32.totalorder %v5789, 0
        %v5791 = vsel %vm5790, %v5789, 0
        %v5792 = vshrl.u32 %v5791, 5
        %v5793 = vand.u32 %v5791, 31
        %v5794 = vsub.s32 32, %v5793
        %v5795 = vshrl.u32 683565275, %v5794
        %v5796 = vshll.u32 683565275, %v5793
        %v5797 = vshrl.u32 2475754826, %v5794
        %v5798 = vor.u32 %v5796, %v5797
        %v5799 = vshll.u32 2475754826, %v5793
        %v5800 = vshrl.u32 2131351028, %v5794
        %v5801 = vor.u32 %v5799, %v5800
        %v5802 = vshll.u32 2131351028, %v5793
        %v5803 = vshrl.u32 2102212464, %v5794
        %v5804 = vor.u32 %v5802, %v5803
        %v5805 = vshll.u32 2102212464, %v5793
        %v5806 = vshrl.u32 920167782, %v5794
        %v5807 = vor.u32 %v5805, %v5806
        %v5808 = vshll.u32 920167782, %v5793
        %v5809 = vshrl.u32 1326507024, %v5794
        %v5810 = vor.u32 %v5808, %v5809
        %vm5811 = vcmp.lt.s32.totalorder %v5792, 1
        %vm5812 = vcmp.lt.s32.totalorder %v5792, 2
        %vm5813 = vcmp.lt.s32.totalorder %v5792, 3
        %vm5814 = vcmp.lt.s32.totalorder %v5792, 4
        %v5815 = vsel %vm5811, %v5795, %v5798
        %v5816 = vsel %vm5814, %v5804, 2102212464
        %v5817 = vsel %vm5813, %v5801, %v5816
        %v5818 = vsel %vm5812, %v5815, %v5817
        %v5819 = vsel %vm5811, %v5798, %v5801
        %v5820 = vsel %vm5814, %v5807, 920167782
        %v5821 = vsel %vm5813, %v5804, %v5820
        %v5822 = vsel %vm5812, %v5819, %v5821
        %v5823 = vsel %vm5811, %v5801, %v5804
        %v5824 = vsel %vm5814, %v5810, 1326507024
        %v5825 = vsel %vm5813, %v5807, %v5824
        %v5826 = vsel %vm5812, %v5823, %v5825
        %v5827 = vshll.u32 %v5787, 8
        %v5828 = vmul.u32.u64.compose %v5827, %v5826
        %v5829 = vextract.low.u32 %v5828
        %v5830 = vextract.high.u32 %v5828
        %v5831 = vmul.u32.u64.compose %v5827, %v5822
        %v5832 = vextract.low.u32 %v5831
        %v5833 = vextract.high.u32 %v5831
        %v5834 = vmul.u32 %v5827, %v5818
        %v5835 = vadd.s32 %v5830, %v5832
        %vm5836 = vc.u32 %v5830, %v5832
        %v5837 = vadd.s32 %v5833, 1
        %v5838 = vsel %vm5836, %v5837, %v5833
        %v5839 = vadd.s32 %v5834, %v5838
        %v5840 = vadd.s32 %v5839, 536870912
        %v5841 = vshrl.u32 %v5840, 30
        %v5842 = vshll.u32 %v5841, 30
        %v5843 = vsub.s32 %v5839, %v5842
        %vm5844 = vcmp.lt.s32.totalorder %v5843, 0
        %v5845 = vsub.s32 0, %v5843
        %v5846 = vsel %vm5844, %v5845, %v5843
        %v5847 = vclz %v5846
        %v5848 = vsub.s32 %v5847, 2
        %vm5849 = vcmp.gt.s32.totalorder 0, %v5848
        %v5850 = vsel %vm5849, 0, %v5848
        %v5851 = vsub.s32 32, %v5850
        %v5852 = vshll.u32 %v5843, %v5850
        %v5853 = vshrl.u32 %v5835, %v5851
        %v5854 = vor.u32 %v5852, %v5853
        %v5855 = vsub.s32 4294967266, %v5850
        %v5856 = vadd.s32 %v5855, 127
        %v5857 = vshll.u32 %v5856, 23
        %v5858 = vor.u32 4788187, %v5857
        %v5859 = vand.u32 2147483647, %v5858
        %v5861 = vcvt.s32.f32 %v5854
        %v5862 = vmul.f32 %v5861, %v5859
        %v5863 = vxor.u32 %v5862, 2147483648
        %v5864 = vsel %vm5781, %v5863, %v5862
        %v5865 = vsub.s32 4, %v5841
        %v5866 = vsel %vm5781, %v5865, %v5841
        %v5867 = vsel %vm5780, %v230, %v5864
        %v5868 = vsel %vm5780, 0, %v5866
        %v5869 = vcosq.f32.pop %v5867
        %v5870 = vsinq.f32.pop %v5867
        %vm5871 = vweird.f32 %v230
        %v5872 = vadd.s32 %v5868, 3
        %v5873 = vand.u32 %v5872, 3
        %vm5874 = vcmp.lt.s32.totalorder %v5873, 2
        %vm5875 = vcmp.eq.s32.totalorder %v5873, 0
        %v5876 = vxor.u32 %v5870, 2147483648
        %v5877 = vsel %vm5875, %v5869, %v5876
        %vm5878 = vcmp.eq.s32.totalorder %v5873, 2
        %v5879 = vxor.u32 %v5869, 2147483648
        %v5880 = vsel %vm5878, %v5879, %v5870
        %v5881 = vsel %vm5874, %v5877, %v5880
        %v5882 = vsel %vm5871, nan, %v5881
        %v5883 = vand.u32 2147483647, %v231
        %vm5884 = vcmp.le.f32.partialorder %v5883, 0.7853982
        %vm5885 = vcmp.lt.s32.totalorder %v231, 0
        %v5886 = vand.u32 %v231, 2139095040
        %v5887 = vshrl.u32 %v5886, 23
        %v5888 = vsub.s32 %v5887, 127
        %v5889 = vand.u32 2147483647, %v231
        %v5890 = vand.u32 %v5889, 8388607
        %v5891 = vor.u32 %v5890, 8388608
        %v5892 = vsub.s32 0, %v5891
        %v5893 = vadd.s32 %v5888, 1
        %vm5894 = vcmp.gt.s32.totalorder %v5893, 0
        %v5895 = vsel %vm5894, %v5893, 0
        %v5896 = vshrl.u32 %v5895, 5
        %v5897 = vand.u32 %v5895, 31
        %v5898 = vsub.s32 32, %v5897
        %v5899 = vshrl.u32 683565275, %v5898
        %v5900 = vshll.u32 683565275, %v5897
        %v5901 = vshrl.u32 2475754826, %v5898
        %v5902 = vor.u32 %v5900, %v5901
        %v5903 = vshll.u32 2475754826, %v5897
        %v5904 = vshrl.u32 2131351028, %v5898
        %v5905 = vor.u32 %v5903, %v5904
        %v5906 = vshll.u32 2131351028, %v5897
        %v5907 = vshrl.u32 2102212464, %v5898
        %v5908 = vor.u32 %v5906, %v5907
        %v5909 = vshll.u32 2102212464, %v5897
        %v5910 = vshrl.u32 920167782, %v5898
        %v5911 = vor.u32 %v5909, %v5910
        %v5912 = vshll.u32 920167782, %v5897
        %v5913 = vshrl.u32 1326507024, %v5898
        %v5914 = vor.u32 %v5912, %v5913
        %vm5915 = vcmp.lt.s32.totalorder %v5896, 1
        %vm5916 = vcmp.lt.s32.totalorder %v5896, 2
        %vm5917 = vcmp.lt.s32.totalorder %v5896, 3
        %vm5918 = vcmp.lt.s32.totalorder %v5896, 4
        %v5919 = vsel %vm5915, %v5899, %v5902
        %v5920 = vsel %vm5918, %v5908, 2102212464
        %v5921 = vsel %vm5917, %v5905, %v5920
        %v5922 = vsel %vm5916, %v5919, %v5921
        %v5923 = vsel %vm5915, %v5902, %v5905
        %v5924 = vsel %vm5918, %v5911, 920167782
        %v5925 = vsel %vm5917, %v5908, %v5924
        %v5926 = vsel %vm5916, %v5923, %v5925
        %v5927 = vsel %vm5915, %v5905, %v5908
        %v5928 = vsel %vm5918, %v5914, 1326507024
        %v5929 = vsel %vm5917, %v5911, %v5928
        %v5930 = vsel %vm5916, %v5927, %v5929
        %v5931 = vshll.u32 %v5891, 8
        %v5932 = vmul.u32.u64.compose %v5931, %v5930
        %v5933 = vextract.low.u32 %v5932
        %v5934 = vextract.high.u32 %v5932
        %v5935 = vmul.u32.u64.compose %v5931, %v5926
        %v5936 = vextract.low.u32 %v5935
        %v5937 = vextract.high.u32 %v5935
        %v5938 = vmul.u32 %v5931, %v5922
        %v5939 = vadd.s32 %v5934, %v5936
        %vm5940 = vc.u32 %v5934, %v5936
        %v5941 = vadd.s32 %v5937, 1
        %v5942 = vsel %vm5940, %v5941, %v5937
        %v5943 = vadd.s32 %v5938, %v5942
        %v5944 = vadd.s32 %v5943, 536870912
        %v5945 = vshrl.u32 %v5944, 30
        %v5946 = vshll.u32 %v5945, 30
        %v5947 = vsub.s32 %v5943, %v5946
        %vm5948 = vcmp.lt.s32.totalorder %v5947, 0
        %v5949 = vsub.s32 0, %v5947
        %v5950 = vsel %vm5948, %v5949, %v5947
        %v5951 = vclz %v5950
        %v5952 = vsub.s32 %v5951, 2
        %vm5953 = vcmp.gt.s32.totalorder 0, %v5952
        %v5954 = vsel %vm5953, 0, %v5952
        %v5955 = vsub.s32 32, %v5954
        %v5956 = vshll.u32 %v5947, %v5954
        %v5957 = vshrl.u32 %v5939, %v5955
        %v5958 = vor.u32 %v5956, %v5957
        %v5959 = vsub.s32 4294967266, %v5954
        %v5960 = vadd.s32 %v5959, 127
        %v5961 = vshll.u32 %v5960, 23
        %v5962 = vor.u32 4788187, %v5961
        %v5963 = vand.u32 2147483647, %v5962
        %v5965 = vcvt.s32.f32 %v5958
        %v5966 = vmul.f32 %v5965, %v5963
        %v5967 = vxor.u32 %v5966, 2147483648
        %v5968 = vsel %vm5885, %v5967, %v5966
        %v5969 = vsub.s32 4, %v5945
        %v5970 = vsel %vm5885, %v5969, %v5945
        %v5971 = vsel %vm5884, %v231, %v5968
        %v5972 = vsel %vm5884, 0, %v5970
        %v5973 = vcosq.f32.pop %v5971
        %v5974 = vsinq.f32.pop %v5971
        %vm5975 = vweird.f32 %v231
        %v5976 = vadd.s32 %v5972, 3
        %v5977 = vand.u32 %v5976, 3
        %vm5978 = vcmp.lt.s32.totalorder %v5977, 2
        %vm5979 = vcmp.eq.s32.totalorder %v5977, 0
        %v5980 = vxor.u32 %v5974, 2147483648
        %v5981 = vsel %vm5979, %v5973, %v5980
        %vm5982 = vcmp.eq.s32.totalorder %v5977, 2
        %v5983 = vxor.u32 %v5973, 2147483648
        %v5984 = vsel %vm5982, %v5983, %v5974
        %v5985 = vsel %vm5978, %v5981, %v5984
        %v5986 = vsel %vm5975, nan, %v5985
        %v5987 = vand.u32 2147483647, %v232
        %vm5988 = vcmp.le.f32.partialorder %v5987, 0.7853982
        %vm5989 = vcmp.lt.s32.totalorder %v232, 0
        %v5990 = vand.u32 %v232, 2139095040
        %v5991 = vshrl.u32 %v5990, 23
        %v5992 = vsub.s32 %v5991, 127
        %v5993 = vand.u32 2147483647, %v232
        %v5994 = vand.u32 %v5993, 8388607
        %v5995 = vor.u32 %v5994, 8388608
        %v5996 = vsub.s32 0, %v5995
        %v5997 = vadd.s32 %v5992, 1
        %vm5998 = vcmp.gt.s32.totalorder %v5997, 0
        %v5999 = vsel %vm5998, %v5997, 0
        %v6000 = vshrl.u32 %v5999, 5
        %v6001 = vand.u32 %v5999, 31
        %v6002 = vsub.s32 32, %v6001
        %v6003 = vshrl.u32 683565275, %v6002
        %v6004 = vshll.u32 683565275, %v6001
        %v6005 = vshrl.u32 2475754826, %v6002
        %v6006 = vor.u32 %v6004, %v6005
        %v6007 = vshll.u32 2475754826, %v6001
        %v6008 = vshrl.u32 2131351028, %v6002
        %v6009 = vor.u32 %v6007, %v6008
        %v6010 = vshll.u32 2131351028, %v6001
        %v6011 = vshrl.u32 2102212464, %v6002
        %v6012 = vor.u32 %v6010, %v6011
        %v6013 = vshll.u32 2102212464, %v6001
        %v6014 = vshrl.u32 920167782, %v6002
        %v6015 = vor.u32 %v6013, %v6014
        %v6016 = vshll.u32 920167782, %v6001
        %v6017 = vshrl.u32 1326507024, %v6002
        %v6018 = vor.u32 %v6016, %v6017
        %vm6019 = vcmp.lt.s32.totalorder %v6000, 1
        %vm6020 = vcmp.lt.s32.totalorder %v6000, 2
        %vm6021 = vcmp.lt.s32.totalorder %v6000, 3
        %vm6022 = vcmp.lt.s32.totalorder %v6000, 4
        %v6023 = vsel %vm6019, %v6003, %v6006
        %v6024 = vsel %vm6022, %v6012, 2102212464
        %v6025 = vsel %vm6021, %v6009, %v6024
        %v6026 = vsel %vm6020, %v6023, %v6025
        %v6027 = vsel %vm6019, %v6006, %v6009
        %v6028 = vsel %vm6022, %v6015, 920167782
        %v6029 = vsel %vm6021, %v6012, %v6028
        %v6030 = vsel %vm6020, %v6027, %v6029
        %v6031 = vsel %vm6019, %v6009, %v6012
        %v6032 = vsel %vm6022, %v6018, 1326507024
        %v6033 = vsel %vm6021, %v6015, %v6032
        %v6034 = vsel %vm6020, %v6031, %v6033
        %v6035 = vshll.u32 %v5995, 8
        %v6036 = vmul.u32.u64.compose %v6035, %v6034
        %v6037 = vextract.low.u32 %v6036
        %v6038 = vextract.high.u32 %v6036
        %v6039 = vmul.u32.u64.compose %v6035, %v6030
        %v6040 = vextract.low.u32 %v6039
        %v6041 = vextract.high.u32 %v6039
        %v6042 = vmul.u32 %v6035, %v6026
        %v6043 = vadd.s32 %v6038, %v6040
        %vm6044 = vc.u32 %v6038, %v6040
        %v6045 = vadd.s32 %v6041, 1
        %v6046 = vsel %vm6044, %v6045, %v6041
        %v6047 = vadd.s32 %v6042, %v6046
        %v6048 = vadd.s32 %v6047, 536870912
        %v6049 = vshrl.u32 %v6048, 30
        %v6050 = vshll.u32 %v6049, 30
        %v6051 = vsub.s32 %v6047, %v6050
        %vm6052 = vcmp.lt.s32.totalorder %v6051, 0
        %v6053 = vsub.s32 0, %v6051
        %v6054 = vsel %vm6052, %v6053, %v6051
        %v6055 = vclz %v6054
        %v6056 = vsub.s32 %v6055, 2
        %vm6057 = vcmp.gt.s32.totalorder 0, %v6056
        %v6058 = vsel %vm6057, 0, %v6056
        %v6059 = vsub.s32 32, %v6058
        %v6060 = vshll.u32 %v6051, %v6058
        %v6061 = vshrl.u32 %v6043, %v6059
        %v6062 = vor.u32 %v6060, %v6061
        %v6063 = vsub.s32 4294967266, %v6058
        %v6064 = vadd.s32 %v6063, 127
        %v6065 = vshll.u32 %v6064, 23
        %v6066 = vor.u32 4788187, %v6065
        %v6067 = vand.u32 2147483647, %v6066
        %v6069 = vcvt.s32.f32 %v6062
        %v6070 = vmul.f32 %v6069, %v6067
        %v6071 = vxor.u32 %v6070, 2147483648
        %v6072 = vsel %vm5989, %v6071, %v6070
        %v6073 = vsub.s32 4, %v6049
        %v6074 = vsel %vm5989, %v6073, %v6049
        %v6075 = vsel %vm5988, %v232, %v6072
        %v6076 = vsel %vm5988, 0, %v6074
        %v6077 = vcosq.f32.pop %v6075
        %v6078 = vsinq.f32.pop %v6075
        %vm6079 = vweird.f32 %v232
        %v6080 = vadd.s32 %v6076, 3
        %v6081 = vand.u32 %v6080, 3
        %vm6082 = vcmp.lt.s32.totalorder %v6081, 2
        %vm6083 = vcmp.eq.s32.totalorder %v6081, 0
        %v6084 = vxor.u32 %v6078, 2147483648
        %v6085 = vsel %vm6083, %v6077, %v6084
        %vm6086 = vcmp.eq.s32.totalorder %v6081, 2
        %v6087 = vxor.u32 %v6077, 2147483648
        %v6088 = vsel %vm6086, %v6087, %v6078
        %v6089 = vsel %vm6082, %v6085, %v6088
        %v6090 = vsel %vm6079, nan, %v6089
        %v6091 = vand.u32 2147483647, %v233
        %vm6092 = vcmp.le.f32.partialorder %v6091, 0.7853982
        %vm6093 = vcmp.lt.s32.totalorder %v233, 0
        %v6094 = vand.u32 %v233, 2139095040
        %v6095 = vshrl.u32 %v6094, 23
        %v6096 = vsub.s32 %v6095, 127
        %v6097 = vand.u32 2147483647, %v233
        %v6098 = vand.u32 %v6097, 8388607
        %v6099 = vor.u32 %v6098, 8388608
        %v6100 = vsub.s32 0, %v6099
        %v6101 = vadd.s32 %v6096, 1
        %vm6102 = vcmp.gt.s32.totalorder %v6101, 0
        %v6103 = vsel %vm6102, %v6101, 0
        %v6104 = vshrl.u32 %v6103, 5
        %v6105 = vand.u32 %v6103, 31
        %v6106 = vsub.s32 32, %v6105
        %v6107 = vshrl.u32 683565275, %v6106
        %v6108 = vshll.u32 683565275, %v6105
        %v6109 = vshrl.u32 2475754826, %v6106
        %v6110 = vor.u32 %v6108, %v6109
        %v6111 = vshll.u32 2475754826, %v6105
        %v6112 = vshrl.u32 2131351028, %v6106
        %v6113 = vor.u32 %v6111, %v6112
        %v6114 = vshll.u32 2131351028, %v6105
        %v6115 = vshrl.u32 2102212464, %v6106
        %v6116 = vor.u32 %v6114, %v6115
        %v6117 = vshll.u32 2102212464, %v6105
        %v6118 = vshrl.u32 920167782, %v6106
        %v6119 = vor.u32 %v6117, %v6118
        %v6120 = vshll.u32 920167782, %v6105
        %v6121 = vshrl.u32 1326507024, %v6106
        %v6122 = vor.u32 %v6120, %v6121
        %vm6123 = vcmp.lt.s32.totalorder %v6104, 1
        %vm6124 = vcmp.lt.s32.totalorder %v6104, 2
        %vm6125 = vcmp.lt.s32.totalorder %v6104, 3
        %vm6126 = vcmp.lt.s32.totalorder %v6104, 4
        %v6127 = vsel %vm6123, %v6107, %v6110
        %v6128 = vsel %vm6126, %v6116, 2102212464
        %v6129 = vsel %vm6125, %v6113, %v6128
        %v6130 = vsel %vm6124, %v6127, %v6129
        %v6131 = vsel %vm6123, %v6110, %v6113
        %v6132 = vsel %vm6126, %v6119, 920167782
        %v6133 = vsel %vm6125, %v6116, %v6132
        %v6134 = vsel %vm6124, %v6131, %v6133
        %v6135 = vsel %vm6123, %v6113, %v6116
        %v6136 = vsel %vm6126, %v6122, 1326507024
        %v6137 = vsel %vm6125, %v6119, %v6136
        %v6138 = vsel %vm6124, %v6135, %v6137
        %v6139 = vshll.u32 %v6099, 8
        %v6140 = vmul.u32.u64.compose %v6139, %v6138
        %v6141 = vextract.low.u32 %v6140
        %v6142 = vextract.high.u32 %v6140
        %v6143 = vmul.u32.u64.compose %v6139, %v6134
        %v6144 = vextract.low.u32 %v6143
        %v6145 = vextract.high.u32 %v6143
        %v6146 = vmul.u32 %v6139, %v6130
        %v6147 = vadd.s32 %v6142, %v6144
        %vm6148 = vc.u32 %v6142, %v6144
        %v6149 = vadd.s32 %v6145, 1
        %v6150 = vsel %vm6148, %v6149, %v6145
        %v6151 = vadd.s32 %v6146, %v6150
        %v6152 = vadd.s32 %v6151, 536870912
        %v6153 = vshrl.u32 %v6152, 30
        %v6154 = vshll.u32 %v6153, 30
        %v6155 = vsub.s32 %v6151, %v6154
        %vm6156 = vcmp.lt.s32.totalorder %v6155, 0
        %v6157 = vsub.s32 0, %v6155
        %v6158 = vsel %vm6156, %v6157, %v6155
        %v6159 = vclz %v6158
        %v6160 = vsub.s32 %v6159, 2
        %vm6161 = vcmp.gt.s32.totalorder 0, %v6160
        %v6162 = vsel %vm6161, 0, %v6160
        %v6163 = vsub.s32 32, %v6162
        %v6164 = vshll.u32 %v6155, %v6162
        %v6165 = vshrl.u32 %v6147, %v6163
        %v6166 = vor.u32 %v6164, %v6165
        %v6167 = vsub.s32 4294967266, %v6162
        %v6168 = vadd.s32 %v6167, 127
        %v6169 = vshll.u32 %v6168, 23
        %v6170 = vor.u32 4788187, %v6169
        %v6171 = vand.u32 2147483647, %v6170
        %v6173 = vcvt.s32.f32 %v6166
        %v6174 = vmul.f32 %v6173, %v6171
        %v6175 = vxor.u32 %v6174, 2147483648
        %v6176 = vsel %vm6093, %v6175, %v6174
        %v6177 = vsub.s32 4, %v6153
        %v6178 = vsel %vm6093, %v6177, %v6153
        %v6179 = vsel %vm6092, %v233, %v6176
        %v6180 = vsel %vm6092, 0, %v6178
        %v6181 = vcosq.f32.pop %v6179
        %v6182 = vsinq.f32.pop %v6179
        %vm6183 = vweird.f32 %v233
        %v6184 = vadd.s32 %v6180, 3
        %v6185 = vand.u32 %v6184, 3
        %vm6186 = vcmp.lt.s32.totalorder %v6185, 2
        %vm6187 = vcmp.eq.s32.totalorder %v6185, 0
        %v6188 = vxor.u32 %v6182, 2147483648
        %v6189 = vsel %vm6187, %v6181, %v6188
        %vm6190 = vcmp.eq.s32.totalorder %v6185, 2
        %v6191 = vxor.u32 %v6181, 2147483648
        %v6192 = vsel %vm6190, %v6191, %v6182
        %v6193 = vsel %vm6186, %v6189, %v6192
        %v6194 = vsel %vm6183, nan, %v6193
        %v6195 = vand.u32 2147483647, %v234
        %vm6196 = vcmp.le.f32.partialorder %v6195, 0.7853982
        %vm6197 = vcmp.lt.s32.totalorder %v234, 0
        %v6198 = vand.u32 %v234, 2139095040
        %v6199 = vshrl.u32 %v6198, 23
        %v6200 = vsub.s32 %v6199, 127
        %v6201 = vand.u32 2147483647, %v234
        %v6202 = vand.u32 %v6201, 8388607
        %v6203 = vor.u32 %v6202, 8388608
        %v6204 = vsub.s32 0, %v6203
        %v6205 = vadd.s32 %v6200, 1
        %vm6206 = vcmp.gt.s32.totalorder %v6205, 0
        %v6207 = vsel %vm6206, %v6205, 0
        %v6208 = vshrl.u32 %v6207, 5
        %v6209 = vand.u32 %v6207, 31
        %v6210 = vsub.s32 32, %v6209
        %v6211 = vshrl.u32 683565275, %v6210
        %v6212 = vshll.u32 683565275, %v6209
        %v6213 = vshrl.u32 2475754826, %v6210
        %v6214 = vor.u32 %v6212, %v6213
        %v6215 = vshll.u32 2475754826, %v6209
        %v6216 = vshrl.u32 2131351028, %v6210
        %v6217 = vor.u32 %v6215, %v6216
        %v6218 = vshll.u32 2131351028, %v6209
        %v6219 = vshrl.u32 2102212464, %v6210
        %v6220 = vor.u32 %v6218, %v6219
        %v6221 = vshll.u32 2102212464, %v6209
        %v6222 = vshrl.u32 920167782, %v6210
        %v6223 = vor.u32 %v6221, %v6222
        %v6224 = vshll.u32 920167782, %v6209
        %v6225 = vshrl.u32 1326507024, %v6210
        %v6226 = vor.u32 %v6224, %v6225
        %vm6227 = vcmp.lt.s32.totalorder %v6208, 1
        %vm6228 = vcmp.lt.s32.totalorder %v6208, 2
        %vm6229 = vcmp.lt.s32.totalorder %v6208, 3
        %vm6230 = vcmp.lt.s32.totalorder %v6208, 4
        %v6231 = vsel %vm6227, %v6211, %v6214
        %v6232 = vsel %vm6230, %v6220, 2102212464
        %v6233 = vsel %vm6229, %v6217, %v6232
        %v6234 = vsel %vm6228, %v6231, %v6233
        %v6235 = vsel %vm6227, %v6214, %v6217
        %v6236 = vsel %vm6230, %v6223, 920167782
        %v6237 = vsel %vm6229, %v6220, %v6236
        %v6238 = vsel %vm6228, %v6235, %v6237
        %v6239 = vsel %vm6227, %v6217, %v6220
        %v6240 = vsel %vm6230, %v6226, 1326507024
        %v6241 = vsel %vm6229, %v6223, %v6240
        %v6242 = vsel %vm6228, %v6239, %v6241
        %v6243 = vshll.u32 %v6203, 8
        %v6244 = vmul.u32.u64.compose %v6243, %v6242
        %v6245 = vextract.low.u32 %v6244
        %v6246 = vextract.high.u32 %v6244
        %v6247 = vmul.u32.u64.compose %v6243, %v6238
        %v6248 = vextract.low.u32 %v6247
        %v6249 = vextract.high.u32 %v6247
        %v6250 = vmul.u32 %v6243, %v6234
        %v6251 = vadd.s32 %v6246, %v6248
        %vm6252 = vc.u32 %v6246, %v6248
        %v6253 = vadd.s32 %v6249, 1
        %v6254 = vsel %vm6252, %v6253, %v6249
        %v6255 = vadd.s32 %v6250, %v6254
        %v6256 = vadd.s32 %v6255, 536870912
        %v6257 = vshrl.u32 %v6256, 30
        %v6258 = vshll.u32 %v6257, 30
        %v6259 = vsub.s32 %v6255, %v6258
        %vm6260 = vcmp.lt.s32.totalorder %v6259, 0
        %v6261 = vsub.s32 0, %v6259
        %v6262 = vsel %vm6260, %v6261, %v6259
        %v6263 = vclz %v6262
        %v6264 = vsub.s32 %v6263, 2
        %vm6265 = vcmp.gt.s32.totalorder 0, %v6264
        %v6266 = vsel %vm6265, 0, %v6264
        %v6267 = vsub.s32 32, %v6266
        %v6268 = vshll.u32 %v6259, %v6266
        %v6269 = vshrl.u32 %v6251, %v6267
        %v6270 = vor.u32 %v6268, %v6269
        %v6271 = vsub.s32 4294967266, %v6266
        %v6272 = vadd.s32 %v6271, 127
        %v6273 = vshll.u32 %v6272, 23
        %v6274 = vor.u32 4788187, %v6273
        %v6275 = vand.u32 2147483647, %v6274
        %v6277 = vcvt.s32.f32 %v6270
        %v6278 = vmul.f32 %v6277, %v6275
        %v6279 = vxor.u32 %v6278, 2147483648
        %v6280 = vsel %vm6197, %v6279, %v6278
        %v6281 = vsub.s32 4, %v6257
        %v6282 = vsel %vm6197, %v6281, %v6257
        %v6283 = vsel %vm6196, %v234, %v6280
        %v6284 = vsel %vm6196, 0, %v6282
        %v6285 = vcosq.f32.pop %v6283
        %v6286 = vsinq.f32.pop %v6283
        %vm6287 = vweird.f32 %v234
        %v6288 = vadd.s32 %v6284, 3
        %v6289 = vand.u32 %v6288, 3
        %vm6290 = vcmp.lt.s32.totalorder %v6289, 2
        %vm6291 = vcmp.eq.s32.totalorder %v6289, 0
        %v6292 = vxor.u32 %v6286, 2147483648
        %v6293 = vsel %vm6291, %v6285, %v6292
        %vm6294 = vcmp.eq.s32.totalorder %v6289, 2
        %v6295 = vxor.u32 %v6285, 2147483648
        %v6296 = vsel %vm6294, %v6295, %v6286
        %v6297 = vsel %vm6290, %v6293, %v6296
        %v6298 = vsel %vm6287, nan, %v6297
        %v6299 = vand.u32 2147483647, %v235
        %vm6300 = vcmp.le.f32.partialorder %v6299, 0.7853982
        %vm6301 = vcmp.lt.s32.totalorder %v235, 0
        %v6302 = vand.u32 %v235, 2139095040
        %v6303 = vshrl.u32 %v6302, 23
        %v6304 = vsub.s32 %v6303, 127
        %v6305 = vand.u32 2147483647, %v235
        %v6306 = vand.u32 %v6305, 8388607
        %v6307 = vor.u32 %v6306, 8388608
        %v6308 = vsub.s32 0, %v6307
        %v6309 = vadd.s32 %v6304, 1
        %vm6310 = vcmp.gt.s32.totalorder %v6309, 0
        %v6311 = vsel %vm6310, %v6309, 0
        %v6312 = vshrl.u32 %v6311, 5
        %v6313 = vand.u32 %v6311, 31
        %v6314 = vsub.s32 32, %v6313
        %v6315 = vshrl.u32 683565275, %v6314
        %v6316 = vshll.u32 683565275, %v6313
        %v6317 = vshrl.u32 2475754826, %v6314
        %v6318 = vor.u32 %v6316, %v6317
        %v6319 = vshll.u32 2475754826, %v6313
        %v6320 = vshrl.u32 2131351028, %v6314
        %v6321 = vor.u32 %v6319, %v6320
        %v6322 = vshll.u32 2131351028, %v6313
        %v6323 = vshrl.u32 2102212464, %v6314
        %v6324 = vor.u32 %v6322, %v6323
        %v6325 = vshll.u32 2102212464, %v6313
        %v6326 = vshrl.u32 920167782, %v6314
        %v6327 = vor.u32 %v6325, %v6326
        %v6328 = vshll.u32 920167782, %v6313
        %v6329 = vshrl.u32 1326507024, %v6314
        %v6330 = vor.u32 %v6328, %v6329
        %vm6331 = vcmp.lt.s32.totalorder %v6312, 1
        %vm6332 = vcmp.lt.s32.totalorder %v6312, 2
        %vm6333 = vcmp.lt.s32.totalorder %v6312, 3
        %vm6334 = vcmp.lt.s32.totalorder %v6312, 4
        %v6335 = vsel %vm6331, %v6315, %v6318
        %v6336 = vsel %vm6334, %v6324, 2102212464
        %v6337 = vsel %vm6333, %v6321, %v6336
        %v6338 = vsel %vm6332, %v6335, %v6337
        %v6339 = vsel %vm6331, %v6318, %v6321
        %v6340 = vsel %vm6334, %v6327, 920167782
        %v6341 = vsel %vm6333, %v6324, %v6340
        %v6342 = vsel %vm6332, %v6339, %v6341
        %v6343 = vsel %vm6331, %v6321, %v6324
        %v6344 = vsel %vm6334, %v6330, 1326507024
        %v6345 = vsel %vm6333, %v6327, %v6344
        %v6346 = vsel %vm6332, %v6343, %v6345
        %v6347 = vshll.u32 %v6307, 8
        %v6348 = vmul.u32.u64.compose %v6347, %v6346
        %v6349 = vextract.low.u32 %v6348
        %v6350 = vextract.high.u32 %v6348
        %v6351 = vmul.u32.u64.compose %v6347, %v6342
        %v6352 = vextract.low.u32 %v6351
        %v6353 = vextract.high.u32 %v6351
        %v6354 = vmul.u32 %v6347, %v6338
        %v6355 = vadd.s32 %v6350, %v6352
        %vm6356 = vc.u32 %v6350, %v6352
        %v6357 = vadd.s32 %v6353, 1
        %v6358 = vsel %vm6356, %v6357, %v6353
        %v6359 = vadd.s32 %v6354, %v6358
        %v6360 = vadd.s32 %v6359, 536870912
        %v6361 = vshrl.u32 %v6360, 30
        %v6362 = vshll.u32 %v6361, 30
        %v6363 = vsub.s32 %v6359, %v6362
        %vm6364 = vcmp.lt.s32.totalorder %v6363, 0
        %v6365 = vsub.s32 0, %v6363
        %v6366 = vsel %vm6364, %v6365, %v6363
        %v6367 = vclz %v6366
        %v6368 = vsub.s32 %v6367, 2
        %vm6369 = vcmp.gt.s32.totalorder 0, %v6368
        %v6370 = vsel %vm6369, 0, %v6368
        %v6371 = vsub.s32 32, %v6370
        %v6372 = vshll.u32 %v6363, %v6370
        %v6373 = vshrl.u32 %v6355, %v6371
        %v6374 = vor.u32 %v6372, %v6373
        %v6375 = vsub.s32 4294967266, %v6370
        %v6376 = vadd.s32 %v6375, 127
        %v6377 = vshll.u32 %v6376, 23
        %v6378 = vor.u32 4788187, %v6377
        %v6379 = vand.u32 2147483647, %v6378
        %v6381 = vcvt.s32.f32 %v6374
        %v6382 = vmul.f32 %v6381, %v6379
        %v6383 = vxor.u32 %v6382, 2147483648
        %v6384 = vsel %vm6301, %v6383, %v6382
        %v6385 = vsub.s32 4, %v6361
        %v6386 = vsel %vm6301, %v6385, %v6361
        %v6387 = vsel %vm6300, %v235, %v6384
        %v6388 = vsel %vm6300, 0, %v6386
        %v6389 = vcosq.f32.pop %v6387
        %v6390 = vsinq.f32.pop %v6387
        %vm6391 = vweird.f32 %v235
        %v6392 = vadd.s32 %v6388, 3
        %v6393 = vand.u32 %v6392, 3
        %vm6394 = vcmp.lt.s32.totalorder %v6393, 2
        %vm6395 = vcmp.eq.s32.totalorder %v6393, 0
        %v6396 = vxor.u32 %v6390, 2147483648
        %v6397 = vsel %vm6395, %v6389, %v6396
        %vm6398 = vcmp.eq.s32.totalorder %v6393, 2
        %v6399 = vxor.u32 %v6389, 2147483648
        %v6400 = vsel %vm6398, %v6399, %v6390
        %v6401 = vsel %vm6394, %v6397, %v6400
        %v6402 = vsel %vm6391, nan, %v6401
        %v6403 = vand.u32 2147483647, %v236
        %vm6404 = vcmp.le.f32.partialorder %v6403, 0.7853982
        %vm6405 = vcmp.lt.s32.totalorder %v236, 0
        %v6406 = vand.u32 %v236, 2139095040
        %v6407 = vshrl.u32 %v6406, 23
        %v6408 = vsub.s32 %v6407, 127
        %v6409 = vand.u32 2147483647, %v236
        %v6410 = vand.u32 %v6409, 8388607
        %v6411 = vor.u32 %v6410, 8388608
        %v6412 = vsub.s32 0, %v6411
        %v6413 = vadd.s32 %v6408, 1
        %vm6414 = vcmp.gt.s32.totalorder %v6413, 0
        %v6415 = vsel %vm6414, %v6413, 0
        %v6416 = vshrl.u32 %v6415, 5
        %v6417 = vand.u32 %v6415, 31
        %v6418 = vsub.s32 32, %v6417
        %v6419 = vshrl.u32 683565275, %v6418
        %v6420 = vshll.u32 683565275, %v6417
        %v6421 = vshrl.u32 2475754826, %v6418
        %v6422 = vor.u32 %v6420, %v6421
        %v6423 = vshll.u32 2475754826, %v6417
        %v6424 = vshrl.u32 2131351028, %v6418
        %v6425 = vor.u32 %v6423, %v6424
        %v6426 = vshll.u32 2131351028, %v6417
        %v6427 = vshrl.u32 2102212464, %v6418
        %v6428 = vor.u32 %v6426, %v6427
        %v6429 = vshll.u32 2102212464, %v6417
        %v6430 = vshrl.u32 920167782, %v6418
        %v6431 = vor.u32 %v6429, %v6430
        %v6432 = vshll.u32 920167782, %v6417
        %v6433 = vshrl.u32 1326507024, %v6418
        %v6434 = vor.u32 %v6432, %v6433
        %vm6435 = vcmp.lt.s32.totalorder %v6416, 1
        %vm6436 = vcmp.lt.s32.totalorder %v6416, 2
        %vm6437 = vcmp.lt.s32.totalorder %v6416, 3
        %vm6438 = vcmp.lt.s32.totalorder %v6416, 4
        %v6439 = vsel %vm6435, %v6419, %v6422
        %v6440 = vsel %vm6438, %v6428, 2102212464
        %v6441 = vsel %vm6437, %v6425, %v6440
        %v6442 = vsel %vm6436, %v6439, %v6441
        %v6443 = vsel %vm6435, %v6422, %v6425
        %v6444 = vsel %vm6438, %v6431, 920167782
        %v6445 = vsel %vm6437, %v6428, %v6444
        %v6446 = vsel %vm6436, %v6443, %v6445
        %v6447 = vsel %vm6435, %v6425, %v6428
        %v6448 = vsel %vm6438, %v6434, 1326507024
        %v6449 = vsel %vm6437, %v6431, %v6448
        %v6450 = vsel %vm6436, %v6447, %v6449
        %v6451 = vshll.u32 %v6411, 8
        %v6452 = vmul.u32.u64.compose %v6451, %v6450
        %v6453 = vextract.low.u32 %v6452
        %v6454 = vextract.high.u32 %v6452
        %v6455 = vmul.u32.u64.compose %v6451, %v6446
        %v6456 = vextract.low.u32 %v6455
        %v6457 = vextract.high.u32 %v6455
        %v6458 = vmul.u32 %v6451, %v6442
        %v6459 = vadd.s32 %v6454, %v6456
        %vm6460 = vc.u32 %v6454, %v6456
        %v6461 = vadd.s32 %v6457, 1
        %v6462 = vsel %vm6460, %v6461, %v6457
        %v6463 = vadd.s32 %v6458, %v6462
        %v6464 = vadd.s32 %v6463, 536870912
        %v6465 = vshrl.u32 %v6464, 30
        %v6466 = vshll.u32 %v6465, 30
        %v6467 = vsub.s32 %v6463, %v6466
        %vm6468 = vcmp.lt.s32.totalorder %v6467, 0
        %v6469 = vsub.s32 0, %v6467
        %v6470 = vsel %vm6468, %v6469, %v6467
        %v6471 = vclz %v6470
        %v6472 = vsub.s32 %v6471, 2
        %vm6473 = vcmp.gt.s32.totalorder 0, %v6472
        %v6474 = vsel %vm6473, 0, %v6472
        %v6475 = vsub.s32 32, %v6474
        %v6476 = vshll.u32 %v6467, %v6474
        %v6477 = vshrl.u32 %v6459, %v6475
        %v6478 = vor.u32 %v6476, %v6477
        %v6479 = vsub.s32 4294967266, %v6474
        %v6480 = vadd.s32 %v6479, 127
        %v6481 = vshll.u32 %v6480, 23
        %v6482 = vor.u32 4788187, %v6481
        %v6483 = vand.u32 2147483647, %v6482
        %v6485 = vcvt.s32.f32 %v6478
        %v6486 = vmul.f32 %v6485, %v6483
        %v6487 = vxor.u32 %v6486, 2147483648
        %v6488 = vsel %vm6405, %v6487, %v6486
        %v6489 = vsub.s32 4, %v6465
        %v6490 = vsel %vm6405, %v6489, %v6465
        %v6491 = vsel %vm6404, %v236, %v6488
        %v6492 = vsel %vm6404, 0, %v6490
        %v6493 = vcosq.f32.pop %v6491
        %v6494 = vsinq.f32.pop %v6491
        %vm6495 = vweird.f32 %v236
        %v6496 = vadd.s32 %v6492, 3
        %v6497 = vand.u32 %v6496, 3
        %vm6498 = vcmp.lt.s32.totalorder %v6497, 2
        %vm6499 = vcmp.eq.s32.totalorder %v6497, 0
        %v6500 = vxor.u32 %v6494, 2147483648
        %v6501 = vsel %vm6499, %v6493, %v6500
        %vm6502 = vcmp.eq.s32.totalorder %v6497, 2
        %v6503 = vxor.u32 %v6493, 2147483648
        %v6504 = vsel %vm6502, %v6503, %v6494
        %v6505 = vsel %vm6498, %v6501, %v6504
        %v6506 = vsel %vm6495, nan, %v6505
        %v6507 = vand.u32 2147483647, %v237
        %vm6508 = vcmp.le.f32.partialorder %v6507, 0.7853982
        %vm6509 = vcmp.lt.s32.totalorder %v237, 0
        %v6510 = vand.u32 %v237, 2139095040
        %v6511 = vshrl.u32 %v6510, 23
        %v6512 = vsub.s32 %v6511, 127
        %v6513 = vand.u32 2147483647, %v237
        %v6514 = vand.u32 %v6513, 8388607
        %v6515 = vor.u32 %v6514, 8388608
        %v6516 = vsub.s32 0, %v6515
        %v6517 = vadd.s32 %v6512, 1
        %vm6518 = vcmp.gt.s32.totalorder %v6517, 0
        %v6519 = vsel %vm6518, %v6517, 0
        %v6520 = vshrl.u32 %v6519, 5
        %v6521 = vand.u32 %v6519, 31
        %v6522 = vsub.s32 32, %v6521
        %v6523 = vshrl.u32 683565275, %v6522
        %v6524 = vshll.u32 683565275, %v6521
        %v6525 = vshrl.u32 2475754826, %v6522
        %v6526 = vor.u32 %v6524, %v6525
        %v6527 = vshll.u32 2475754826, %v6521
        %v6528 = vshrl.u32 2131351028, %v6522
        %v6529 = vor.u32 %v6527, %v6528
        %v6530 = vshll.u32 2131351028, %v6521
        %v6531 = vshrl.u32 2102212464, %v6522
        %v6532 = vor.u32 %v6530, %v6531
        %v6533 = vshll.u32 2102212464, %v6521
        %v6534 = vshrl.u32 920167782, %v6522
        %v6535 = vor.u32 %v6533, %v6534
        %v6536 = vshll.u32 920167782, %v6521
        %v6537 = vshrl.u32 1326507024, %v6522
        %v6538 = vor.u32 %v6536, %v6537
        %vm6539 = vcmp.lt.s32.totalorder %v6520, 1
        %vm6540 = vcmp.lt.s32.totalorder %v6520, 2
        %vm6541 = vcmp.lt.s32.totalorder %v6520, 3
        %vm6542 = vcmp.lt.s32.totalorder %v6520, 4
        %v6543 = vsel %vm6539, %v6523, %v6526
        %v6544 = vsel %vm6542, %v6532, 2102212464
        %v6545 = vsel %vm6541, %v6529, %v6544
        %v6546 = vsel %vm6540, %v6543, %v6545
        %v6547 = vsel %vm6539, %v6526, %v6529
        %v6548 = vsel %vm6542, %v6535, 920167782
        %v6549 = vsel %vm6541, %v6532, %v6548
        %v6550 = vsel %vm6540, %v6547, %v6549
        %v6551 = vsel %vm6539, %v6529, %v6532
        %v6552 = vsel %vm6542, %v6538, 1326507024
        %v6553 = vsel %vm6541, %v6535, %v6552
        %v6554 = vsel %vm6540, %v6551, %v6553
        %v6555 = vshll.u32 %v6515, 8
        %v6556 = vmul.u32.u64.compose %v6555, %v6554
        %v6557 = vextract.low.u32 %v6556
        %v6558 = vextract.high.u32 %v6556
        %v6559 = vmul.u32.u64.compose %v6555, %v6550
        %v6560 = vextract.low.u32 %v6559
        %v6561 = vextract.high.u32 %v6559
        %v6562 = vmul.u32 %v6555, %v6546
        %v6563 = vadd.s32 %v6558, %v6560
        %vm6564 = vc.u32 %v6558, %v6560
        %v6565 = vadd.s32 %v6561, 1
        %v6566 = vsel %vm6564, %v6565, %v6561
        %v6567 = vadd.s32 %v6562, %v6566
        %v6568 = vadd.s32 %v6567, 536870912
        %v6569 = vshrl.u32 %v6568, 30
        %v6570 = vshll.u32 %v6569, 30
        %v6571 = vsub.s32 %v6567, %v6570
        %vm6572 = vcmp.lt.s32.totalorder %v6571, 0
        %v6573 = vsub.s32 0, %v6571
        %v6574 = vsel %vm6572, %v6573, %v6571
        %v6575 = vclz %v6574
        %v6576 = vsub.s32 %v6575, 2
        %vm6577 = vcmp.gt.s32.totalorder 0, %v6576
        %v6578 = vsel %vm6577, 0, %v6576
        %v6579 = vsub.s32 32, %v6578
        %v6580 = vshll.u32 %v6571, %v6578
        %v6581 = vshrl.u32 %v6563, %v6579
        %v6582 = vor.u32 %v6580, %v6581
        %v6583 = vsub.s32 4294967266, %v6578
        %v6584 = vadd.s32 %v6583, 127
        %v6585 = vshll.u32 %v6584, 23
        %v6586 = vor.u32 4788187, %v6585
        %v6587 = vand.u32 2147483647, %v6586
        %v6589 = vcvt.s32.f32 %v6582
        %v6590 = vmul.f32 %v6589, %v6587
        %v6591 = vxor.u32 %v6590, 2147483648
        %v6592 = vsel %vm6509, %v6591, %v6590
        %v6593 = vsub.s32 4, %v6569
        %v6594 = vsel %vm6509, %v6593, %v6569
        %v6595 = vsel %vm6508, %v237, %v6592
        %v6596 = vsel %vm6508, 0, %v6594
        %v6597 = vcosq.f32.pop %v6595
        %v6598 = vsinq.f32.pop %v6595
        %vm6599 = vweird.f32 %v237
        %v6600 = vadd.s32 %v6596, 3
        %v6601 = vand.u32 %v6600, 3
        %vm6602 = vcmp.lt.s32.totalorder %v6601, 2
        %vm6603 = vcmp.eq.s32.totalorder %v6601, 0
        %v6604 = vxor.u32 %v6598, 2147483648
        %v6605 = vsel %vm6603, %v6597, %v6604
        %vm6606 = vcmp.eq.s32.totalorder %v6601, 2
        %v6607 = vxor.u32 %v6597, 2147483648
        %v6608 = vsel %vm6606, %v6607, %v6598
        %v6609 = vsel %vm6602, %v6605, %v6608
        %v6610 = vsel %vm6599, nan, %v6609
        %v6611 = vand.u32 2147483647, %v238
        %vm6612 = vcmp.le.f32.partialorder %v6611, 0.7853982
        %vm6613 = vcmp.lt.s32.totalorder %v238, 0
        %v6614 = vand.u32 %v238, 2139095040
        %v6615 = vshrl.u32 %v6614, 23
        %v6616 = vsub.s32 %v6615, 127
        %v6617 = vand.u32 2147483647, %v238
        %v6618 = vand.u32 %v6617, 8388607
        %v6619 = vor.u32 %v6618, 8388608
        %v6620 = vsub.s32 0, %v6619
        %v6621 = vadd.s32 %v6616, 1
        %vm6622 = vcmp.gt.s32.totalorder %v6621, 0
        %v6623 = vsel %vm6622, %v6621, 0
        %v6624 = vshrl.u32 %v6623, 5
        %v6625 = vand.u32 %v6623, 31
        %v6626 = vsub.s32 32, %v6625
        %v6627 = vshrl.u32 683565275, %v6626
        %v6628 = vshll.u32 683565275, %v6625
        %v6629 = vshrl.u32 2475754826, %v6626
        %v6630 = vor.u32 %v6628, %v6629
        %v6631 = vshll.u32 2475754826, %v6625
        %v6632 = vshrl.u32 2131351028, %v6626
        %v6633 = vor.u32 %v6631, %v6632
        %v6634 = vshll.u32 2131351028, %v6625
        %v6635 = vshrl.u32 2102212464, %v6626
        %v6636 = vor.u32 %v6634, %v6635
        %v6637 = vshll.u32 2102212464, %v6625
        %v6638 = vshrl.u32 920167782, %v6626
        %v6639 = vor.u32 %v6637, %v6638
        %v6640 = vshll.u32 920167782, %v6625
        %v6641 = vshrl.u32 1326507024, %v6626
        %v6642 = vor.u32 %v6640, %v6641
        %vm6643 = vcmp.lt.s32.totalorder %v6624, 1
        %vm6644 = vcmp.lt.s32.totalorder %v6624, 2
        %vm6645 = vcmp.lt.s32.totalorder %v6624, 3
        %vm6646 = vcmp.lt.s32.totalorder %v6624, 4
        %v6647 = vsel %vm6643, %v6627, %v6630
        %v6648 = vsel %vm6646, %v6636, 2102212464
        %v6649 = vsel %vm6645, %v6633, %v6648
        %v6650 = vsel %vm6644, %v6647, %v6649
        %v6651 = vsel %vm6643, %v6630, %v6633
        %v6652 = vsel %vm6646, %v6639, 920167782
        %v6653 = vsel %vm6645, %v6636, %v6652
        %v6654 = vsel %vm6644, %v6651, %v6653
        %v6655 = vsel %vm6643, %v6633, %v6636
        %v6656 = vsel %vm6646, %v6642, 1326507024
        %v6657 = vsel %vm6645, %v6639, %v6656
        %v6658 = vsel %vm6644, %v6655, %v6657
        %v6659 = vshll.u32 %v6619, 8
        %v6660 = vmul.u32.u64.compose %v6659, %v6658
        %v6661 = vextract.low.u32 %v6660
        %v6662 = vextract.high.u32 %v6660
        %v6663 = vmul.u32.u64.compose %v6659, %v6654
        %v6664 = vextract.low.u32 %v6663
        %v6665 = vextract.high.u32 %v6663
        %v6666 = vmul.u32 %v6659, %v6650
        %v6667 = vadd.s32 %v6662, %v6664
        %vm6668 = vc.u32 %v6662, %v6664
        %v6669 = vadd.s32 %v6665, 1
        %v6670 = vsel %vm6668, %v6669, %v6665
        %v6671 = vadd.s32 %v6666, %v6670
        %v6672 = vadd.s32 %v6671, 536870912
        %v6673 = vshrl.u32 %v6672, 30
        %v6674 = vshll.u32 %v6673, 30
        %v6675 = vsub.s32 %v6671, %v6674
        %vm6676 = vcmp.lt.s32.totalorder %v6675, 0
        %v6677 = vsub.s32 0, %v6675
        %v6678 = vsel %vm6676, %v6677, %v6675
        %v6679 = vclz %v6678
        %v6680 = vsub.s32 %v6679, 2
        %vm6681 = vcmp.gt.s32.totalorder 0, %v6680
        %v6682 = vsel %vm6681, 0, %v6680
        %v6683 = vsub.s32 32, %v6682
        %v6684 = vshll.u32 %v6675, %v6682
        %v6685 = vshrl.u32 %v6667, %v6683
        %v6686 = vor.u32 %v6684, %v6685
        %v6687 = vsub.s32 4294967266, %v6682
        %v6688 = vadd.s32 %v6687, 127
        %v6689 = vshll.u32 %v6688, 23
        %v6690 = vor.u32 4788187, %v6689
        %v6691 = vand.u32 2147483647, %v6690
        %v6693 = vcvt.s32.f32 %v6686
        %v6694 = vmul.f32 %v6693, %v6691
        %v6695 = vxor.u32 %v6694, 2147483648
        %v6696 = vsel %vm6613, %v6695, %v6694
        %v6697 = vsub.s32 4, %v6673
        %v6698 = vsel %vm6613, %v6697, %v6673
        %v6699 = vsel %vm6612, %v238, %v6696
        %v6700 = vsel %vm6612, 0, %v6698
        %v6701 = vcosq.f32.pop %v6699
        %v6702 = vsinq.f32.pop %v6699
        %vm6703 = vweird.f32 %v238
        %v6704 = vadd.s32 %v6700, 3
        %v6705 = vand.u32 %v6704, 3
        %vm6706 = vcmp.lt.s32.totalorder %v6705, 2
        %vm6707 = vcmp.eq.s32.totalorder %v6705, 0
        %v6708 = vxor.u32 %v6702, 2147483648
        %v6709 = vsel %vm6707, %v6701, %v6708
        %vm6710 = vcmp.eq.s32.totalorder %v6705, 2
        %v6711 = vxor.u32 %v6701, 2147483648
        %v6712 = vsel %vm6710, %v6711, %v6702
        %v6713 = vsel %vm6706, %v6709, %v6712
        %v6714 = vsel %vm6703, nan, %v6713
        %v6715 = vand.u32 2147483647, %v239
        %vm6716 = vcmp.le.f32.partialorder %v6715, 0.7853982
        %vm6717 = vcmp.lt.s32.totalorder %v239, 0
        %v6718 = vand.u32 %v239, 2139095040
        %v6719 = vshrl.u32 %v6718, 23
        %v6720 = vsub.s32 %v6719, 127
        %v6721 = vand.u32 2147483647, %v239
        %v6722 = vand.u32 %v6721, 8388607
        %v6723 = vor.u32 %v6722, 8388608
        %v6724 = vsub.s32 0, %v6723
        %v6725 = vadd.s32 %v6720, 1
        %vm6726 = vcmp.gt.s32.totalorder %v6725, 0
        %v6727 = vsel %vm6726, %v6725, 0
        %v6728 = vshrl.u32 %v6727, 5
        %v6729 = vand.u32 %v6727, 31
        %v6730 = vsub.s32 32, %v6729
        %v6731 = vshrl.u32 683565275, %v6730
        %v6732 = vshll.u32 683565275, %v6729
        %v6733 = vshrl.u32 2475754826, %v6730
        %v6734 = vor.u32 %v6732, %v6733
        %v6735 = vshll.u32 2475754826, %v6729
        %v6736 = vshrl.u32 2131351028, %v6730
        %v6737 = vor.u32 %v6735, %v6736
        %v6738 = vshll.u32 2131351028, %v6729
        %v6739 = vshrl.u32 2102212464, %v6730
        %v6740 = vor.u32 %v6738, %v6739
        %v6741 = vshll.u32 2102212464, %v6729
        %v6742 = vshrl.u32 920167782, %v6730
        %v6743 = vor.u32 %v6741, %v6742
        %v6744 = vshll.u32 920167782, %v6729
        %v6745 = vshrl.u32 1326507024, %v6730
        %v6746 = vor.u32 %v6744, %v6745
        %vm6747 = vcmp.lt.s32.totalorder %v6728, 1
        %vm6748 = vcmp.lt.s32.totalorder %v6728, 2
        %vm6749 = vcmp.lt.s32.totalorder %v6728, 3
        %vm6750 = vcmp.lt.s32.totalorder %v6728, 4
        %v6751 = vsel %vm6747, %v6731, %v6734
        %v6752 = vsel %vm6750, %v6740, 2102212464
        %v6753 = vsel %vm6749, %v6737, %v6752
        %v6754 = vsel %vm6748, %v6751, %v6753
        %v6755 = vsel %vm6747, %v6734, %v6737
        %v6756 = vsel %vm6750, %v6743, 920167782
        %v6757 = vsel %vm6749, %v6740, %v6756
        %v6758 = vsel %vm6748, %v6755, %v6757
        %v6759 = vsel %vm6747, %v6737, %v6740
        %v6760 = vsel %vm6750, %v6746, 1326507024
        %v6761 = vsel %vm6749, %v6743, %v6760
        %v6762 = vsel %vm6748, %v6759, %v6761
        %v6763 = vshll.u32 %v6723, 8
        %v6764 = vmul.u32.u64.compose %v6763, %v6762
        %v6765 = vextract.low.u32 %v6764
        %v6766 = vextract.high.u32 %v6764
        %v6767 = vmul.u32.u64.compose %v6763, %v6758
        %v6768 = vextract.low.u32 %v6767
        %v6769 = vextract.high.u32 %v6767
        %v6770 = vmul.u32 %v6763, %v6754
        %v6771 = vadd.s32 %v6766, %v6768
        %vm6772 = vc.u32 %v6766, %v6768
        %v6773 = vadd.s32 %v6769, 1
        %v6774 = vsel %vm6772, %v6773, %v6769
        %v6775 = vadd.s32 %v6770, %v6774
        %v6776 = vadd.s32 %v6775, 536870912
        %v6777 = vshrl.u32 %v6776, 30
        %v6778 = vshll.u32 %v6777, 30
        %v6779 = vsub.s32 %v6775, %v6778
        %vm6780 = vcmp.lt.s32.totalorder %v6779, 0
        %v6781 = vsub.s32 0, %v6779
        %v6782 = vsel %vm6780, %v6781, %v6779
        %v6783 = vclz %v6782
        %v6784 = vsub.s32 %v6783, 2
        %vm6785 = vcmp.gt.s32.totalorder 0, %v6784
        %v6786 = vsel %vm6785, 0, %v6784
        %v6787 = vsub.s32 32, %v6786
        %v6788 = vshll.u32 %v6779, %v6786
        %v6789 = vshrl.u32 %v6771, %v6787
        %v6790 = vor.u32 %v6788, %v6789
        %v6791 = vsub.s32 4294967266, %v6786
        %v6792 = vadd.s32 %v6791, 127
        %v6793 = vshll.u32 %v6792, 23
        %v6794 = vor.u32 4788187, %v6793
        %v6795 = vand.u32 2147483647, %v6794
        %v6797 = vcvt.s32.f32 %v6790
        %v6798 = vmul.f32 %v6797, %v6795
        %v6799 = vxor.u32 %v6798, 2147483648
        %v6800 = vsel %vm6717, %v6799, %v6798
        %v6801 = vsub.s32 4, %v6777
        %v6802 = vsel %vm6717, %v6801, %v6777
        %v6803 = vsel %vm6716, %v239, %v6800
        %v6804 = vsel %vm6716, 0, %v6802
        %v6805 = vcosq.f32.pop %v6803
        %v6806 = vsinq.f32.pop %v6803
        %vm6807 = vweird.f32 %v239
        %v6808 = vadd.s32 %v6804, 3
        %v6809 = vand.u32 %v6808, 3
        %vm6810 = vcmp.lt.s32.totalorder %v6809, 2
        %vm6811 = vcmp.eq.s32.totalorder %v6809, 0
        %v6812 = vxor.u32 %v6806, 2147483648
        %v6813 = vsel %vm6811, %v6805, %v6812
        %vm6814 = vcmp.eq.s32.totalorder %v6809, 2
        %v6815 = vxor.u32 %v6805, 2147483648
        %v6816 = vsel %vm6814, %v6815, %v6806
        %v6817 = vsel %vm6810, %v6813, %v6816
        %v6818 = vsel %vm6807, nan, %v6817
        %v6819 = vand.u32 2147483647, %v240
        %vm6820 = vcmp.le.f32.partialorder %v6819, 0.7853982
        %vm6821 = vcmp.lt.s32.totalorder %v240, 0
        %v6822 = vand.u32 %v240, 2139095040
        %v6823 = vshrl.u32 %v6822, 23
        %v6824 = vsub.s32 %v6823, 127
        %v6825 = vand.u32 2147483647, %v240
        %v6826 = vand.u32 %v6825, 8388607
        %v6827 = vor.u32 %v6826, 8388608
        %v6828 = vsub.s32 0, %v6827
        %v6829 = vadd.s32 %v6824, 1
        %vm6830 = vcmp.gt.s32.totalorder %v6829, 0
        %v6831 = vsel %vm6830, %v6829, 0
        %v6832 = vshrl.u32 %v6831, 5
        %v6833 = vand.u32 %v6831, 31
        %v6834 = vsub.s32 32, %v6833
        %v6835 = vshrl.u32 683565275, %v6834
        %v6836 = vshll.u32 683565275, %v6833
        %v6837 = vshrl.u32 2475754826, %v6834
        %v6838 = vor.u32 %v6836, %v6837
        %v6839 = vshll.u32 2475754826, %v6833
        %v6840 = vshrl.u32 2131351028, %v6834
        %v6841 = vor.u32 %v6839, %v6840
        %v6842 = vshll.u32 2131351028, %v6833
        %v6843 = vshrl.u32 2102212464, %v6834
        %v6844 = vor.u32 %v6842, %v6843
        %v6845 = vshll.u32 2102212464, %v6833
        %v6846 = vshrl.u32 920167782, %v6834
        %v6847 = vor.u32 %v6845, %v6846
        %v6848 = vshll.u32 920167782, %v6833
        %v6849 = vshrl.u32 1326507024, %v6834
        %v6850 = vor.u32 %v6848, %v6849
        %vm6851 = vcmp.lt.s32.totalorder %v6832, 1
        %vm6852 = vcmp.lt.s32.totalorder %v6832, 2
        %vm6853 = vcmp.lt.s32.totalorder %v6832, 3
        %vm6854 = vcmp.lt.s32.totalorder %v6832, 4
        %v6855 = vsel %vm6851, %v6835, %v6838
        %v6856 = vsel %vm6854, %v6844, 2102212464
        %v6857 = vsel %vm6853, %v6841, %v6856
        %v6858 = vsel %vm6852, %v6855, %v6857
        %v6859 = vsel %vm6851, %v6838, %v6841
        %v6860 = vsel %vm6854, %v6847, 920167782
        %v6861 = vsel %vm6853, %v6844, %v6860
        %v6862 = vsel %vm6852, %v6859, %v6861
        %v6863 = vsel %vm6851, %v6841, %v6844
        %v6864 = vsel %vm6854, %v6850, 1326507024
        %v6865 = vsel %vm6853, %v6847, %v6864
        %v6866 = vsel %vm6852, %v6863, %v6865
        %v6867 = vshll.u32 %v6827, 8
        %v6868 = vmul.u32.u64.compose %v6867, %v6866
        %v6869 = vextract.low.u32 %v6868
        %v6870 = vextract.high.u32 %v6868
        %v6871 = vmul.u32.u64.compose %v6867, %v6862
        %v6872 = vextract.low.u32 %v6871
        %v6873 = vextract.high.u32 %v6871
        %v6874 = vmul.u32 %v6867, %v6858
        %v6875 = vadd.s32 %v6870, %v6872
        %vm6876 = vc.u32 %v6870, %v6872
        %v6877 = vadd.s32 %v6873, 1
        %v6878 = vsel %vm6876, %v6877, %v6873
        %v6879 = vadd.s32 %v6874, %v6878
        %v6880 = vadd.s32 %v6879, 536870912
        %v6881 = vshrl.u32 %v6880, 30
        %v6882 = vshll.u32 %v6881, 30
        %v6883 = vsub.s32 %v6879, %v6882
        %vm6884 = vcmp.lt.s32.totalorder %v6883, 0
        %v6885 = vsub.s32 0, %v6883
        %v6886 = vsel %vm6884, %v6885, %v6883
        %v6887 = vclz %v6886
        %v6888 = vsub.s32 %v6887, 2
        %vm6889 = vcmp.gt.s32.totalorder 0, %v6888
        %v6890 = vsel %vm6889, 0, %v6888
        %v6891 = vsub.s32 32, %v6890
        %v6892 = vshll.u32 %v6883, %v6890
        %v6893 = vshrl.u32 %v6875, %v6891
        %v6894 = vor.u32 %v6892, %v6893
        %v6895 = vsub.s32 4294967266, %v6890
        %v6896 = vadd.s32 %v6895, 127
        %v6897 = vshll.u32 %v6896, 23
        %v6898 = vor.u32 4788187, %v6897
        %v6899 = vand.u32 2147483647, %v6898
        %v6901 = vcvt.s32.f32 %v6894
        %v6902 = vmul.f32 %v6901, %v6899
        %v6903 = vxor.u32 %v6902, 2147483648
        %v6904 = vsel %vm6821, %v6903, %v6902
        %v6905 = vsub.s32 4, %v6881
        %v6906 = vsel %vm6821, %v6905, %v6881
        %v6907 = vsel %vm6820, %v240, %v6904
        %v6908 = vsel %vm6820, 0, %v6906
        %v6909 = vcosq.f32.pop %v6907
        %v6910 = vsinq.f32.pop %v6907
        %vm6911 = vweird.f32 %v240
        %v6912 = vadd.s32 %v6908, 3
        %v6913 = vand.u32 %v6912, 3
        %vm6914 = vcmp.lt.s32.totalorder %v6913, 2
        %vm6915 = vcmp.eq.s32.totalorder %v6913, 0
        %v6916 = vxor.u32 %v6910, 2147483648
        %v6917 = vsel %vm6915, %v6909, %v6916
        %vm6918 = vcmp.eq.s32.totalorder %v6913, 2
        %v6919 = vxor.u32 %v6909, 2147483648
        %v6920 = vsel %vm6918, %v6919, %v6910
        %v6921 = vsel %vm6914, %v6917, %v6920
        %v6922 = vsel %vm6911, nan, %v6921
        %v6923 = vand.u32 2147483647, %v241
        %vm6924 = vcmp.le.f32.partialorder %v6923, 0.7853982
        %vm6925 = vcmp.lt.s32.totalorder %v241, 0
        %v6926 = vand.u32 %v241, 2139095040
        %v6927 = vshrl.u32 %v6926, 23
        %v6928 = vsub.s32 %v6927, 127
        %v6929 = vand.u32 2147483647, %v241
        %v6930 = vand.u32 %v6929, 8388607
        %v6931 = vor.u32 %v6930, 8388608
        %v6932 = vsub.s32 0, %v6931
        %v6933 = vadd.s32 %v6928, 1
        %vm6934 = vcmp.gt.s32.totalorder %v6933, 0
        %v6935 = vsel %vm6934, %v6933, 0
        %v6936 = vshrl.u32 %v6935, 5
        %v6937 = vand.u32 %v6935, 31
        %v6938 = vsub.s32 32, %v6937
        %v6939 = vshrl.u32 683565275, %v6938
        %v6940 = vshll.u32 683565275, %v6937
        %v6941 = vshrl.u32 2475754826, %v6938
        %v6942 = vor.u32 %v6940, %v6941
        %v6943 = vshll.u32 2475754826, %v6937
        %v6944 = vshrl.u32 2131351028, %v6938
        %v6945 = vor.u32 %v6943, %v6944
        %v6946 = vshll.u32 2131351028, %v6937
        %v6947 = vshrl.u32 2102212464, %v6938
        %v6948 = vor.u32 %v6946, %v6947
        %v6949 = vshll.u32 2102212464, %v6937
        %v6950 = vshrl.u32 920167782, %v6938
        %v6951 = vor.u32 %v6949, %v6950
        %v6952 = vshll.u32 920167782, %v6937
        %v6953 = vshrl.u32 1326507024, %v6938
        %v6954 = vor.u32 %v6952, %v6953
        %vm6955 = vcmp.lt.s32.totalorder %v6936, 1
        %vm6956 = vcmp.lt.s32.totalorder %v6936, 2
        %vm6957 = vcmp.lt.s32.totalorder %v6936, 3
        %vm6958 = vcmp.lt.s32.totalorder %v6936, 4
        %v6959 = vsel %vm6955, %v6939, %v6942
        %v6960 = vsel %vm6958, %v6948, 2102212464
        %v6961 = vsel %vm6957, %v6945, %v6960
        %v6962 = vsel %vm6956, %v6959, %v6961
        %v6963 = vsel %vm6955, %v6942, %v6945
        %v6964 = vsel %vm6958, %v6951, 920167782
        %v6965 = vsel %vm6957, %v6948, %v6964
        %v6966 = vsel %vm6956, %v6963, %v6965
        %v6967 = vsel %vm6955, %v6945, %v6948
        %v6968 = vsel %vm6958, %v6954, 1326507024
        %v6969 = vsel %vm6957, %v6951, %v6968
        %v6970 = vsel %vm6956, %v6967, %v6969
        %v6971 = vshll.u32 %v6931, 8
        %v6972 = vmul.u32.u64.compose %v6971, %v6970
        %v6973 = vextract.low.u32 %v6972
        %v6974 = vextract.high.u32 %v6972
        %v6975 = vmul.u32.u64.compose %v6971, %v6966
        %v6976 = vextract.low.u32 %v6975
        %v6977 = vextract.high.u32 %v6975
        %v6978 = vmul.u32 %v6971, %v6962
        %v6979 = vadd.s32 %v6974, %v6976
        %vm6980 = vc.u32 %v6974, %v6976
        %v6981 = vadd.s32 %v6977, 1
        %v6982 = vsel %vm6980, %v6981, %v6977
        %v6983 = vadd.s32 %v6978, %v6982
        %v6984 = vadd.s32 %v6983, 536870912
        %v6985 = vshrl.u32 %v6984, 30
        %v6986 = vshll.u32 %v6985, 30
        %v6987 = vsub.s32 %v6983, %v6986
        %vm6988 = vcmp.lt.s32.totalorder %v6987, 0
        %v6989 = vsub.s32 0, %v6987
        %v6990 = vsel %vm6988, %v6989, %v6987
        %v6991 = vclz %v6990
        %v6992 = vsub.s32 %v6991, 2
        %vm6993 = vcmp.gt.s32.totalorder 0, %v6992
        %v6994 = vsel %vm6993, 0, %v6992
        %v6995 = vsub.s32 32, %v6994
        %v6996 = vshll.u32 %v6987, %v6994
        %v6997 = vshrl.u32 %v6979, %v6995
        %v6998 = vor.u32 %v6996, %v6997
        %v6999 = vsub.s32 4294967266, %v6994
        %v7000 = vadd.s32 %v6999, 127
        %v7001 = vshll.u32 %v7000, 23
        %v7002 = vor.u32 4788187, %v7001
        %v7003 = vand.u32 2147483647, %v7002
        %v7005 = vcvt.s32.f32 %v6998
        %v7006 = vmul.f32 %v7005, %v7003
        %v7007 = vxor.u32 %v7006, 2147483648
        %v7008 = vsel %vm6925, %v7007, %v7006
        %v7009 = vsub.s32 4, %v6985
        %v7010 = vsel %vm6925, %v7009, %v6985
        %v7011 = vsel %vm6924, %v241, %v7008
        %v7012 = vsel %vm6924, 0, %v7010
        %v7013 = vcosq.f32.pop %v7011
        %v7014 = vsinq.f32.pop %v7011
        %vm7015 = vweird.f32 %v241
        %v7016 = vadd.s32 %v7012, 3
        %v7017 = vand.u32 %v7016, 3
        %vm7018 = vcmp.lt.s32.totalorder %v7017, 2
        %vm7019 = vcmp.eq.s32.totalorder %v7017, 0
        %v7020 = vxor.u32 %v7014, 2147483648
        %v7021 = vsel %vm7019, %v7013, %v7020
        %vm7022 = vcmp.eq.s32.totalorder %v7017, 2
        %v7023 = vxor.u32 %v7013, 2147483648
        %v7024 = vsel %vm7022, %v7023, %v7014
        %v7025 = vsel %vm7018, %v7021, %v7024
        %v7026 = vsel %vm7015, nan, %v7025
        %v7027 = vstv %s370
        %v7028 = vmul.f32 %v7027, %v474
        %v7029 = vmul.f32 %v7027, %v578
        %v7030 = vmul.f32 %v7027, %v682
        %v7031 = vmul.f32 %v7027, %v786
        %v7032 = vmul.f32 %v7027, %v890
        %v7033 = vmul.f32 %v7027, %v994
        %v7034 = vmul.f32 %v7027, %v1098
        %v7035 = vmul.f32 %v7027, %v1202
        %v7036 = vmul.f32 %v7027, %v1306
        %v7037 = vmul.f32 %v7027, %v1410
        %v7038 = vmul.f32 %v7027, %v1514
        %v7039 = vmul.f32 %v7027, %v1618
        %v7040 = vmul.f32 %v7027, %v1722
        %v7041 = vmul.f32 %v7027, %v1826
        %v7042 = vmul.f32 %v7027, %v1930
        %v7043 = vmul.f32 %v7027, %v2034
        %v7044 = vmul.f32 %v7027, %v2138
        %v7045 = vmul.f32 %v7027, %v2242
        %v7046 = vmul.f32 %v7027, %v2346
        %v7047 = vmul.f32 %v7027, %v2450
        %v7048 = vmul.f32 %v7027, %v2554
        %v7049 = vmul.f32 %v7027, %v2658
        %v7050 = vmul.f32 %v7027, %v2762
        %v7051 = vmul.f32 %v7027, %v2866
        %v7052 = vmul.f32 %v7027, %v2970
        %v7053 = vmul.f32 %v7027, %v3074
        %v7054 = vmul.f32 %v7027, %v3178
        %v7055 = vmul.f32 %v7027, %v3282
        %v7056 = vmul.f32 %v7027, %v3386
        %v7057 = vmul.f32 %v7027, %v3490
        %v7058 = vmul.f32 %v7027, %v3594
        %v7059 = vmul.f32 %v7027, %v3698
        %v7060 = vmul.f32 %v7027, %v3802
        %v7061 = vmul.f32 %v7027, %v3906
        %v7062 = vmul.f32 %v7027, %v4010
        %v7063 = vmul.f32 %v7027, %v4114
        %v7064 = vmul.f32 %v7027, %v4218
        %v7065 = vmul.f32 %v7027, %v4322
        %v7066 = vmul.f32 %v7027, %v4426
        %v7067 = vmul.f32 %v7027, %v4530
        %v7068 = vmul.f32 %v7027, %v4634
        %v7069 = vmul.f32 %v7027, %v4738
        %v7070 = vmul.f32 %v7027, %v4842
        %v7071 = vmul.f32 %v7027, %v4946
        %v7072 = vmul.f32 %v7027, %v5050
        %v7073 = vmul.f32 %v7027, %v5154
        %v7074 = vmul.f32 %v7027, %v5258
        %v7075 = vmul.f32 %v7027, %v5362
        %v7076 = vmul.f32 %v7027, %v5466
        %v7077 = vmul.f32 %v7027, %v5570
        %v7078 = vmul.f32 %v7027, %v5674
        %v7079 = vmul.f32 %v7027, %v5778
        %v7080 = vmul.f32 %v7027, %v5882
        %v7081 = vmul.f32 %v7027, %v5986
        %v7082 = vmul.f32 %v7027, %v6090
        %v7083 = vmul.f32 %v7027, %v6194
        %v7084 = vmul.f32 %v7027, %v6298
        %v7085 = vmul.f32 %v7027, %v6402
        %v7086 = vmul.f32 %v7027, %v6506
        %v7087 = vmul.f32 %v7027, %v6610
        %v7088 = vmul.f32 %v7027, %v6714
        %v7089 = vmul.f32 %v7027, %v6818
        %v7090 = vmul.f32 %v7027, %v6922
        %v7091 = vmul.f32 %v7027, %v7026
        %7092 = vst [vmem:[%s174 + $0x40] sm:$0xff] %v7028
        %7093 = vst [vmem:[%s174 + $0x48] sm:$0xff] %v7029
        %7094 = vst [vmem:[%s174 + $0x50] sm:$0xff] %v7030
        %7095 = vst [vmem:[%s174 + $0x58] sm:$0xff] %v7031
        %7096 = vst [vmem:[%s174 + $0x60] sm:$0xff] %v7032
        %7097 = vst [vmem:[%s174 + $0x68] sm:$0xff] %v7033
        %7098 = vst [vmem:[%s174 + $0x70] sm:$0xff] %v7034
        %7099 = vst [vmem:[%s174 + $0x78] sm:$0xff] %v7035
        %7100 = vst [vmem:[%s174 + $0xc0] sm:$0xff] %v7036
        %7101 = vst [vmem:[%s174 + $0xc8] sm:$0xff] %v7037
        %7102 = vst [vmem:[%s174 + $0xd0] sm:$0xff] %v7038
        %7103 = vst [vmem:[%s174 + $0xd8] sm:$0xff] %v7039
        %7104 = vst [vmem:[%s174 + $0xe0] sm:$0xff] %v7040
        %7105 = vst [vmem:[%s174 + $0xe8] sm:$0xff] %v7041
        %7106 = vst [vmem:[%s174 + $0xf0] sm:$0xff] %v7042
        %7107 = vst [vmem:[%s174 + $0xf8] sm:$0xff] %v7043
        %7108 = vst [vmem:[%s174 + $0x140] sm:$0xff] %v7044
        %7109 = vst [vmem:[%s174 + $0x148] sm:$0xff] %v7045
        %7110 = vst [vmem:[%s174 + $0x150] sm:$0xff] %v7046
        %7111 = vst [vmem:[%s174 + $0x158] sm:$0xff] %v7047
        %7112 = vst [vmem:[%s174 + $0x160] sm:$0xff] %v7048
        %7113 = vst [vmem:[%s174 + $0x168] sm:$0xff] %v7049
        %7114 = vst [vmem:[%s174 + $0x170] sm:$0xff] %v7050
        %7115 = vst [vmem:[%s174 + $0x178] sm:$0xff] %v7051
        %7116 = vst [vmem:[%s174 + $0x1c0] sm:$0xff] %v7052
        %7117 = vst [vmem:[%s174 + $0x1c8] sm:$0xff] %v7053
        %7118 = vst [vmem:[%s174 + $0x1d0] sm:$0xff] %v7054
        %7119 = vst [vmem:[%s174 + $0x1d8] sm:$0xff] %v7055
        %7120 = vst [vmem:[%s174 + $0x1e0] sm:$0xff] %v7056
        %7121 = vst [vmem:[%s174 + $0x1e8] sm:$0xff] %v7057
        %7122 = vst [vmem:[%s174 + $0x1f0] sm:$0xff] %v7058
        %7123 = vst [vmem:[%s174 + $0x1f8] sm:$0xff] %v7059
        %7124 = vst [vmem:[%s174 + $0x240] sm:$0xff] %v7060
        %7125 = vst [vmem:[%s174 + $0x248] sm:$0xff] %v7061
        %7126 = vst [vmem:[%s174 + $0x250] sm:$0xff] %v7062
        %7127 = vst [vmem:[%s174 + $0x258] sm:$0xff] %v7063
        %7128 = vst [vmem:[%s174 + $0x260] sm:$0xff] %v7064
        %7129 = vst [vmem:[%s174 + $0x268] sm:$0xff] %v7065
        %7130 = vst [vmem:[%s174 + $0x270] sm:$0xff] %v7066
        %7131 = vst [vmem:[%s174 + $0x278] sm:$0xff] %v7067
        %7132 = vst [vmem:[%s174 + $0x2c0] sm:$0xff] %v7068
        %7133 = vst [vmem:[%s174 + $0x2c8] sm:$0xff] %v7069
        %7134 = vst [vmem:[%s174 + $0x2d0] sm:$0xff] %v7070
        %7135 = vst [vmem:[%s174 + $0x2d8] sm:$0xff] %v7071
        %7136 = vst [vmem:[%s174 + $0x2e0] sm:$0xff] %v7072
        %7137 = vst [vmem:[%s174 + $0x2e8] sm:$0xff] %v7073
        %7138 = vst [vmem:[%s174 + $0x2f0] sm:$0xff] %v7074
        %7139 = vst [vmem:[%s174 + $0x2f8] sm:$0xff] %v7075
        %7140 = vst [vmem:[%s174 + $0x340] sm:$0xff] %v7076
        %7141 = vst [vmem:[%s174 + $0x348] sm:$0xff] %v7077
        %7142 = vst [vmem:[%s174 + $0x350] sm:$0xff] %v7078
        %7143 = vst [vmem:[%s174 + $0x358] sm:$0xff] %v7079
        %7144 = vst [vmem:[%s174 + $0x360] sm:$0xff] %v7080
        %7145 = vst [vmem:[%s174 + $0x368] sm:$0xff] %v7081
        %7146 = vst [vmem:[%s174 + $0x370] sm:$0xff] %v7082
        %7147 = vst [vmem:[%s174 + $0x378] sm:$0xff] %v7083
        %7148 = vst [vmem:[%s174 + $0x3c0] sm:$0xff] %v7084
        %7149 = vst [vmem:[%s174 + $0x3c8] sm:$0xff] %v7085
        %7150 = vst [vmem:[%s174 + $0x3d0] sm:$0xff] %v7086
        %7151 = vst [vmem:[%s174 + $0x3d8] sm:$0xff] %v7087
        %7152 = vst [vmem:[%s174 + $0x3e0] sm:$0xff] %v7088
        %7153 = vst [vmem:[%s174 + $0x3e8] sm:$0xff] %v7089
        %7154 = vst [vmem:[%s174 + $0x3f0] sm:$0xff] %v7090
        %7155 = vst [vmem:[%s174 + $0x3f8] sm:$0xff] %v7091
        %s7156 = sand.u32 %s75, 1
        %s7157 = scalar_lea.sflag [#allocation4], %s7156
        %s7158 = sand.u32 %s75, 1
        %s7159 = smul.addr %s7158, 1024
        %s7160 = scalar_lea.vmem [#allocation7], %s7159
        // Predicated region
        $region37: #{tpu_custom_call.1} parent=27 // pred_check
          %p7161 = pneg %p85
        $region38: #{tpu_custom_call.1} parent=27 // pred_check_branch
          %7163 = sbr.rel (%p7161) target = $region40
        $region39: #{tpu_custom_call.1} parent=27 // pred_region
          %s7164 = smul.u32 8, %s20
          %s7166 = ssub.s32 16384, 16384
          %7167 = vsyncadd %s7157, %s7166
          %s7168 = smul.addr %s7164, 16
          %s7169 = smul.addr %s7168, 128
          %s7170 = scalar_lea.hbm %s2, %s7169
          %s7171 = sshll.u32 %s7160, 4
          %s7172 = int_to_ptr.vmem [resolvable:$true] %s7171
          %7177 = dma.vmem_to_hbm [thread:$0]  %s7172, 16384, %s7170, %s7157, 2048, 2048, 128
        $region40: #{tpu_custom_call.1} parent=27 // pred_fallthru
          _
      $region28: #{tpu_custom_call.1} parent=5 // pred_fallthru
        _
      %p7178 = scmp.le.s32.totalorder 2, %s15
      // Predicated region
      $region41: #{tpu_custom_call.1} parent=5 // pred_check
        %p7179 = pneg %p7178
      $region42: #{tpu_custom_call.1} parent=5 // pred_check_branch
        %7181 = sbr.rel (%p7179) target = $region44
      $region43: #{tpu_custom_call.1} parent=5 // pred_region
        %s7182 = ssub.s32 %s15, 2
        // Predicated region
        $region45: #{tpu_custom_call.1} parent=43 // pred_check
          %p7183 = pneg %p91
        $region46: #{tpu_custom_call.1} parent=43 // pred_check_branch
          %7185 = sbr.rel (%p7183) target = $region48
        $region47: #{tpu_custom_call.1} parent=43 // pred_region
          %s7186 = sand.u32 %s76, 1
          %s7187 = scalar_lea.sflag [#allocation4], %s7186
          %s7188 = sand.u32 %s76, 1
          %s7189 = smul.addr %s7188, 1024
          %s7190 = scalar_lea.vmem [#allocation7], %s7189
          %7191 = dma.done %s7187, 16384
        $region48: #{tpu_custom_call.1} parent=43 // pred_fallthru
          _
      $region44: #{tpu_custom_call.1} parent=5 // pred_fallthru
        _
    $region6: #{tpu_custom_call.1} parent=1 // loop_footer
      %s19 = sadd.s32 1, %s15
    $region7: #{tpu_custom_call.1} parent=1 // loop_footer_branch
      %14 = sbr.rel target = $region3
    $region8: #{tpu_custom_call.1} parent=1 // loop_exit
      _
    %7192 = vsyncpa [#allocation3], 1
    %s7193 = scalar_lea.sflag [#allocation3], 1
    %7194 = vsyncpa %s7193, 1
    %7195 = vsyncpa [#allocation4], 1
    %s7196 = scalar_lea.sflag [#allocation4], 1
    %7197 = vsyncpa %s7196, 1
    %7198 = vsyncpa [#allocation5], 1
    %s7199 = scalar_lea.sflag [#allocation5], 1
    %7200 = vsyncpa %s7199, 1

</llo_original>
